<compile_context>
chip_gen: v5e
topology: v5e:2x2
jax: 0.10.0
libtpu: 0.0.40
codegen_flags: <defaults>
</compile_context>

<pallas_src>
import functools
import math

import jax
import jax.numpy as jnp
from jax.experimental import pallas as pl
from jax.experimental.pallas import tpu as pltpu


def _layer_norm(x, a, b, eps=1e-6):
    # onmt.modules.LayerNorm: unbiased (d-1) std, eps added to sigma (not var).
    d = x.shape[-1]
    mu = jnp.mean(x, axis=-1, keepdims=True)
    var = jnp.sum((x - mu) ** 2, axis=-1, keepdims=True) / (d - 1)
    sigma = jnp.sqrt(var)
    # Exact divide here: approx-reciprocal error would compound across layers.
    return (x - mu) / (sigma + eps) * a + b


def mha_stack_kernel(x_ref,
                     wq_ref, bq_ref, wk_ref, bk_ref, wv_ref, bv_ref,
                     wo_ref, bo_ref,
                     ln_a_ref, ln_b_ref,
                     ff_ln_a_ref, ff_ln_b_ref,
                     w1_ref, b1_ref, w2_ref, b2_ref,
                     o_ref,
                     q_scr, k_scr, v_scr, ctx_scr,
                     *, head_count, ffn_chunk):
    layer = pl.program_id(1)
    n_layer = pl.num_programs(1)

    Bt, S, D = o_ref.shape
    dh = D // head_count
    scale = 1.0 / math.sqrt(dh)

    # Residual stream is carried across layers in the resident output block
    # (o_ref only flushes to HBM when the batch block index changes).
    @pl.when(layer == 0)
    def _():
        o_ref[...] = x_ref[...].astype(jnp.float32)

    ln_a = ln_a_ref[...]            # shared LayerNorm (per-layer and final)
    ln_b = ln_b_ref[...]

    x = o_ref[...].reshape(Bt * S, D)            # residual stream, f32

    # ---- multi-headed self-attention sublayer ------------------------------
    xn = _layer_norm(x, ln_a, ln_b).astype(jnp.bfloat16)
    q_scr[...] = ((jnp.dot(xn, wq_ref[0], preferred_element_type=jnp.float32)
                   + bq_ref[0]) * scale).astype(jnp.bfloat16)   # onmt scales q
    k_scr[...] = (jnp.dot(xn, wk_ref[0], preferred_element_type=jnp.float32)
                  + bk_ref[0]).astype(jnp.bfloat16)
    v_scr[...] = (jnp.dot(xn, wv_ref[0], preferred_element_type=jnp.float32)
                  + bv_ref[0]).astype(jnp.bfloat16)

    # Static head loop; per-head views come from static VMEM-scratch ref slices.
    # TODO(synk): for dh < 128 the QK^T contraction under-fills the MXU; for
    # long S tile the KV sequence with an online-softmax inner loop instead of
    # materializing (Bt, S, S) scores.
    for h in range(head_count):
        sl = slice(h * dh, (h + 1) * dh)
        qh = q_scr[:, sl].reshape(Bt, S, dh)
        kh = k_scr[:, sl].reshape(Bt, S, dh)
        vh = v_scr[:, sl].reshape(Bt, S, dh)
        s = jnp.einsum('bqd,bkd->bqk', qh, kh,
                       preferred_element_type=jnp.float32)          # (Bt,S,S)
        s = s - jnp.max(s, axis=-1, keepdims=True)
        e = jnp.exp(s)
        p = e * pl.reciprocal(jnp.sum(e, axis=-1, keepdims=True), approx=True)
        # TODO(synk): attention-prob dropout is identity (inference mode).
        ch = jnp.einsum('bqk,bkd->bqd', p.astype(jnp.bfloat16), vh,
                        preferred_element_type=jnp.float32)         # (Bt,S,dh)
        ctx_scr[:, sl] = ch.reshape(Bt * S, dh).astype(jnp.bfloat16)

    attn_out = (jnp.dot(ctx_scr[...], wo_ref[0],
                        preferred_element_type=jnp.float32) + bo_ref[0])
    # TODO(synk): post-attention dropout is identity (inference mode).
    x = x + attn_out

    # ---- position-wise feed-forward (shared instance), chunked hidden dim ---
    xn2 = _layer_norm(x, ff_ln_a_ref[...], ff_ln_b_ref[...]).astype(jnp.bfloat16)
    hidden = w1_ref.shape[1]
    ff = jnp.zeros((Bt * S, D), jnp.float32)
    for c in range(hidden // ffn_chunk):
        cs = slice(c * ffn_chunk, (c + 1) * ffn_chunk)
        inter = jnp.maximum(
            jnp.dot(xn2, w1_ref[:, cs], preferred_element_type=jnp.float32)
            + b1_ref[:, cs], 0.0)
        # TODO(synk): FFN dropouts are identity (inference mode).
        ff = ff + jnp.dot(inter.astype(jnp.bfloat16), w2_ref[cs, :],
                          preferred_element_type=jnp.float32)
    x = x + ff + b2_ref[...]

    # Final shared LayerNorm; module returns (layer_norm(memory_bank), None).
    @pl.when(layer == n_layer - 1)
    def _():
        o_ref[...] = _layer_norm(x, ln_a, ln_b).reshape(Bt, S, D).astype(o_ref.dtype)

    @pl.when(layer != n_layer - 1)
    def _():
        o_ref[...] = x.reshape(Bt, S, D)


def _default_vmem_limit_bytes():
    # Leave headroom below physical VMEM (128 MiB v5e/v6e, 64 MiB per TC v7x).
    try:
        cap = pltpu.get_tpu_info().vmem_capacity_bytes
    except Exception:
        cap = 64 * 1024 * 1024
    return int(cap * 0.85)


def _pick_batch_tile(B):
    # Prefer >= 2 batch tiles so the "parallel" axis lands on both v7x TCs.
    # For realistic shapes override batch_tile from the weight-streaming
    # roofline (Bt*S >= ~256 on v5e, ~640 on v6e, ~320 per TC on v7x).
    if B >= 2 and B % 2 == 0:
        return B // 2
    return B


def multi_layer_mha(x, params, *, n_layer, head_count,
                    batch_tile=None, ffn_chunk=512):
    B, S, D = x.shape
    hidden = params["w1"].shape[1]
    assert D % head_count == 0
    Bt = _pick_batch_tile(B) if batch_tile is None else batch_tile
    assert B % Bt == 0
    if hidden % ffn_chunk != 0:
        ffn_chunk = hidden

    kernel = functools.partial(mha_stack_kernel, head_count=head_count,
                               ffn_chunk=ffn_chunk)

    # Weights are stored in bf16 once (init_params); this cast is a no-op then
    # and avoids re-writing all weights to HBM on every forward call.
    bf16 = lambda w: w if w.dtype == jnp.bfloat16 else w.astype(jnp.bfloat16)

    args = (x,
            bf16(params["wq"]), params["bq"], bf16(params["wk"]), params["bk"],
            bf16(params["wv"]), params["bv"], bf16(params["wo"]), params["bo"],
            params["ln_a"], params["ln_b"],
            params["ff_ln_a"], params["ff_ln_b"],
            bf16(params["w1"]), params["b1"], bf16(params["w2"]), params["b2"])

    vmem_limit = _default_vmem_limit_bytes()

    def build(single_buffer_resident):
        resident = ({"pipeline_mode": pl.Buffered(1)}
                    if single_buffer_resident else {})

        def shared(shape):       # block index never changes -> single buffer
            nd = len(shape)
            return pl.BlockSpec(shape, lambda b, l: (0,) * nd, **resident)

        def per_layer(shape):    # streamed one layer at a time; keep default
            nd = len(shape)      # double-buffering for next-layer prefetch.
            return pl.BlockSpec((1,) + tuple(shape[1:]),
                                lambda b, l: (l,) + (0,) * (nd - 1))

        in_specs = [
            pl.BlockSpec((Bt, S, D), lambda b, l: (b, 0, 0), **resident),  # x
            per_layer((n_layer, D, D)), per_layer((n_layer, 1, D)),   # wq, bq
            per_layer((n_layer, D, D)), per_layer((n_layer, 1, D)),   # wk, bk
            per_layer((n_layer, D, D)), per_layer((n_layer, 1, D)),   # wv, bv
            per_layer((n_layer, D, D)), per_layer((n_layer, 1, D)),   # wo, bo
            shared((1, D)), shared((1, D)),                     # shared LN a,b
            shared((1, D)), shared((1, D)),                     # FFN LN a,b
            shared((D, hidden)), shared((1, hidden)),           # FFN w1, b1
            shared((hidden, D)), shared((1, D)),                # FFN w2, b2
        ]

        return pl.pallas_call(
            kernel,
            out_shape=jax.ShapeDtypeStruct((B, S, D), jnp.float32),
            grid=(B // Bt, n_layer),
            in_specs=in_specs,
            out_specs=pl.BlockSpec((Bt, S, D), lambda b, l: (b, 0, 0),
                                   **resident),
            scratch_shapes=[pltpu.VMEM((Bt * S, D), jnp.bfloat16)
                            for _ in range(4)],        # q, k, v, ctx staging
            compiler_params=pltpu.CompilerParams(
                dimension_semantics=("parallel", "arbitrary"),
                vmem_limit_bytes=vmem_limit),
        )

    try:
        return build(True)(*args)
    except Exception:
        # TODO(synk): pipeline_mode=pl.Buffered(1) unsupported on this JAX
        # version; fall back to default double-buffering.
        return build(False)(*args)


def init_params(key, *, n_layer, size, hidden):
    ks = jax.random.split(key, 12)
    s = 0.02
    wdt = jnp.bfloat16   # weights pre-cast ONCE: halves DMA, feeds MXU in bf16
    return {
        # attention projections in "math" layout (in, out): y = x @ W + b
        "wq": (s * jax.random.normal(ks[0], (n_layer, size, size))).astype(wdt),
        "wk": (s * jax.random.normal(ks[1], (n_layer, size, size))).astype(wdt),
        "wv": (s * jax.random.normal(ks[2], (n_layer, size, size))).astype(wdt),
        "wo": (s * jax.random.normal(ks[3], (n_layer, size, size))).astype(wdt),
        "bq": s * jax.random.normal(ks[4], (n_layer, 1, size), jnp.float32),
        "bk": s * jax.random.normal(ks[5], (n_layer, 1, size), jnp.float32),
        "bv": s * jax.random.normal(ks[6], (n_layer, 1, size), jnp.float32),
        "bo": s * jax.random.normal(ks[7], (n_layer, 1, size), jnp.float32),
        # shared layer norm (used inside the loop and as the final norm)
        "ln_a": jnp.ones((1, size), jnp.float32),
        "ln_b": jnp.zeros((1, size), jnp.float32),
        # PositionwiseFeedForward (one instance shared across layers)
        "ff_ln_a": jnp.ones((1, size), jnp.float32),
        "ff_ln_b": jnp.zeros((1, size), jnp.float32),
        "w1": (s * jax.random.normal(ks[8], (size, hidden))).astype(wdt),
        "b1": s * jax.random.normal(ks[9], (1, hidden), jnp.float32),
        "w2": (s * jax.random.normal(ks[10], (hidden, size))).astype(wdt),
        "b2": s * jax.random.normal(ks[11], (1, size), jnp.float32),
    }


if __name__ == "__main__":
    n_layer = 2
    head_count = 4
    size = 32          # model dim
    hidden = 2048      # PositionwiseFeedForward hidden size (as in the module)
    B, S = 2, 8        # batch, seq_len

    key = jax.random.PRNGKey(0)
    kx, kp = jax.random.split(key)
    x = jax.random.normal(kx, (B, S, size), jnp.float32)
    params = init_params(kp, n_layer=n_layer, size=size, hidden=hidden)

    out = multi_layer_mha(x, params, n_layer=n_layer, head_count=head_count)
    out = jax.block_until_ready(out)
    assert out.shape == (B, S, size) and out.dtype == jnp.float32
    assert bool(jnp.all(jnp.isfinite(out)))
    print("KERNEL_OK")
</pallas_src>

<mosaic_0001>
module attributes {stable_mosaic.version = 11 : i64} {
  func.func @mha_stack_kernel(%arg0: i32, %arg1: i32, %arg2: memref<1x8x32xf32, #tpu.memory_space<vmem>>, %arg3: memref<1x32x32xbf16, #tpu.memory_space<vmem>>, %arg4: memref<1x1x32xf32, #tpu.memory_space<vmem>>, %arg5: memref<1x32x32xbf16, #tpu.memory_space<vmem>>, %arg6: memref<1x1x32xf32, #tpu.memory_space<vmem>>, %arg7: memref<1x32x32xbf16, #tpu.memory_space<vmem>>, %arg8: memref<1x1x32xf32, #tpu.memory_space<vmem>>, %arg9: memref<1x32x32xbf16, #tpu.memory_space<vmem>>, %arg10: memref<1x1x32xf32, #tpu.memory_space<vmem>>, %arg11: memref<1x32xf32, #tpu.memory_space<vmem>>, %arg12: memref<1x32xf32, #tpu.memory_space<vmem>>, %arg13: memref<1x32xf32, #tpu.memory_space<vmem>>, %arg14: memref<1x32xf32, #tpu.memory_space<vmem>>, %arg15: memref<32x2048xbf16, #tpu.memory_space<vmem>>, %arg16: memref<1x2048xf32, #tpu.memory_space<vmem>>, %arg17: memref<2048x32xbf16, #tpu.memory_space<vmem>>, %arg18: memref<1x32xf32, #tpu.memory_space<vmem>>, %arg19: memref<1x8x32xf32, #tpu.memory_space<vmem>>, %arg20: memref<8x32xbf16, #tpu.memory_space<vmem>>, %arg21: memref<8x32xbf16, #tpu.memory_space<vmem>>, %arg22: memref<8x32xbf16, #tpu.memory_space<vmem>>, %arg23: memref<8x32xbf16, #tpu.memory_space<vmem>>) attributes {dimension_semantics = [#tpu.dimension_semantics<parallel>, #tpu.dimension_semantics<arbitrary>], iteration_bounds = array<i64: 2, 2>, scalar_prefetch = 0 : i64, scratch_operands = 4 : i64, tpu.core_type = #tpu.core_type<tc>, window_params = [{pipeline_mode = #tpu.pipeline_mode<synchronous>, transform_indices = @transform_0, window_bounds = array<i64: 1, 8, 32>}, {transform_indices = @transform_1, window_bounds = array<i64: 1, 32, 32>}, {transform_indices = @transform_2, window_bounds = array<i64: 1, 1, 32>}, {transform_indices = @transform_3, window_bounds = array<i64: 1, 32, 32>}, {transform_indices = @transform_4, window_bounds = array<i64: 1, 1, 32>}, {transform_indices = @transform_5, window_bounds = array<i64: 1, 32, 32>}, {transform_indices = @transform_6, window_bounds = array<i64: 1, 1, 32>}, {transform_indices = @transform_7, window_bounds = array<i64: 1, 32, 32>}, {transform_indices = @transform_8, window_bounds = array<i64: 1, 1, 32>}, {pipeline_mode = #tpu.pipeline_mode<synchronous>, transform_indices = @transform_9, window_bounds = array<i64: 1, 32>}, {pipeline_mode = #tpu.pipeline_mode<synchronous>, transform_indices = @transform_10, window_bounds = array<i64: 1, 32>}, {pipeline_mode = #tpu.pipeline_mode<synchronous>, transform_indices = @transform_11, window_bounds = array<i64: 1, 32>}, {pipeline_mode = #tpu.pipeline_mode<synchronous>, transform_indices = @transform_12, window_bounds = array<i64: 1, 32>}, {pipeline_mode = #tpu.pipeline_mode<synchronous>, transform_indices = @transform_13, window_bounds = array<i64: 32, 2048>}, {pipeline_mode = #tpu.pipeline_mode<synchronous>, transform_indices = @transform_14, window_bounds = array<i64: 1, 2048>}, {pipeline_mode = #tpu.pipeline_mode<synchronous>, transform_indices = @transform_15, window_bounds = array<i64: 2048, 32>}, {pipeline_mode = #tpu.pipeline_mode<synchronous>, transform_indices = @transform_16, window_bounds = array<i64: 1, 32>}, {pipeline_mode = #tpu.pipeline_mode<synchronous>, transform_indices = @transform_17, window_bounds = array<i64: 1, 8, 32>}]} {
    %c0_i32 = arith.constant 0 : i32
    %0 = arith.cmpi eq, %arg1, %c0_i32 : i32
    %1 = arith.extui %0 : i1 to i32
    %c0_i32_0 = arith.constant 0 : i32
    %2 = arith.cmpi ne, %1, %c0_i32_0 : i32
    scf.if %2 {
      %c0_141 = arith.constant 0 : index
      %c0_142 = arith.constant 0 : index
      %c0_143 = arith.constant 0 : index
      %236 = vector.load %arg2[%c0_141, %c0_142, %c0_143] : memref<1x8x32xf32, #tpu.memory_space<vmem>>, vector<1x8x32xf32>
      %c0_144 = arith.constant 0 : index
      %c0_145 = arith.constant 0 : index
      %c0_146 = arith.constant 0 : index
      %237 = vector.load %arg19[%c0_144, %c0_145, %c0_146] : memref<1x8x32xf32, #tpu.memory_space<vmem>>, vector<1x8x32xf32>
      tpu.vector_store %arg19[%c0_144, %c0_145, %c0_146], %236 {strides = array<i32>} : memref<1x8x32xf32, #tpu.memory_space<vmem>>, vector<1x8x32xf32>,
    } else {
    }
    %c0 = arith.constant 0 : index
    %c0_1 = arith.constant 0 : index
    %3 = vector.load %arg11[%c0, %c0_1] : memref<1x32xf32, #tpu.memory_space<vmem>>, vector<1x32xf32>
    %c0_2 = arith.constant 0 : index
    %c0_3 = arith.constant 0 : index
    %4 = vector.load %arg12[%c0_2, %c0_3] : memref<1x32xf32, #tpu.memory_space<vmem>>, vector<1x32xf32>
    %c0_4 = arith.constant 0 : index
    %c0_5 = arith.constant 0 : index
    %c0_6 = arith.constant 0 : index
    %5 = vector.load %arg19[%c0_4, %c0_5, %c0_6] : memref<1x8x32xf32, #tpu.memory_space<vmem>>, vector<1x8x32xf32>
    %6 = vector.shape_cast %5 : vector<1x8x32xf32> to vector<8x32xf32>
    %cst = arith.constant dense<0.000000e+00> : vector<8xf32>
    %7 = vector.multi_reduction <add>, %6, %cst [1] : vector<8x32xf32> to vector<8xf32>
    %8 = vector.shape_cast %7 : vector<8xf32> to vector<8x1xf32>
    %cst_7 = arith.constant 3.200000e+01 : f32
    %9 = vector.broadcast %cst_7 : f32 to vector<8x1xf32>
    %10 = arith.divf %8, %9 : vector<8x1xf32>
    %11 = vector.broadcast %10 : vector<8x1xf32> to vector<8x32xf32>
    %12 = arith.subf %6, %11 : vector<8x32xf32>
    %13 = arith.mulf %12, %12 : vector<8x32xf32>
    %cst_8 = arith.constant dense<0.000000e+00> : vector<8xf32>
    %14 = vector.multi_reduction <add>, %13, %cst_8 [1] : vector<8x32xf32> to vector<8xf32>
    %15 = vector.shape_cast %14 : vector<8xf32> to vector<8x1xf32>
    %cst_9 = arith.constant 3.100000e+01 : f32
    %16 = vector.broadcast %cst_9 : f32 to vector<8x1xf32>
    %17 = arith.divf %15, %16 : vector<8x1xf32>
    %18 = math.sqrt %17 : vector<8x1xf32>
    %19 = vector.broadcast %10 : vector<8x1xf32> to vector<8x32xf32>
    %20 = arith.subf %6, %19 : vector<8x32xf32>
    %cst_10 = arith.constant 9.99999997E-7 : f32
    %21 = vector.broadcast %cst_10 : f32 to vector<8x1xf32>
    %22 = arith.addf %18, %21 : vector<8x1xf32>
    %23 = vector.broadcast %22 : vector<8x1xf32> to vector<8x32xf32>
    %24 = arith.divf %20, %23 : vector<8x32xf32>
    %25 = vector.broadcast %3 : vector<1x32xf32> to vector<8x32xf32>
    %26 = arith.mulf %24, %25 : vector<8x32xf32>
    %27 = vector.broadcast %4 : vector<1x32xf32> to vector<8x32xf32>
    %28 = arith.addf %26, %27 : vector<8x32xf32>
    %29 = arith.truncf %28 : vector<8x32xf32> to vector<8x32xbf16>
    %c0_11 = arith.constant 0 : index
    %c0_12 = arith.constant 0 : index
    %c0_13 = arith.constant 0 : index
    %30 = vector.load %arg3[%c0_11, %c0_12, %c0_13] : memref<1x32x32xbf16, #tpu.memory_space<vmem>>, vector<1x32x32xbf16>
    %31 = vector.shape_cast %30 : vector<1x32x32xbf16> to vector<32x32xbf16>
    %cst_14 = arith.constant dense<0.000000e+00> : vector<8x32xf32>
    %32 = tpu.matmul %29, %31, %cst_14 {dimension_numbers = #tpu.dot_dimension_numbers<[1], [0], [0], [1], [0, 0, 1, 1], [], []>} : vector<8x32xbf16>, vector<32x32xbf16>, vector<8x32xf32> -> vector<8x32xf32>
    %c0_15 = arith.constant 0 : index
    %c0_16 = arith.constant 0 : index
    %c0_17 = arith.constant 0 : index
    %33 = vector.load %arg4[%c0_15, %c0_16, %c0_17] : memref<1x1x32xf32, #tpu.memory_space<vmem>>, vector<1x1x32xf32>
    %34 = vector.shape_cast %33 : vector<1x1x32xf32> to vector<1x32xf32>
    %35 = vector.broadcast %34 : vector<1x32xf32> to vector<8x32xf32>
    %36 = arith.addf %32, %35 : vector<8x32xf32>
    %cst_18 = arith.constant 0.353553385 : f32
    %37 = vector.broadcast %cst_18 : f32 to vector<8x32xf32>
    %38 = arith.mulf %36, %37 : vector<8x32xf32>
    %39 = arith.truncf %38 : vector<8x32xf32> to vector<8x32xbf16>
    %c0_19 = arith.constant 0 : index
    %c0_20 = arith.constant 0 : index
    %40 = vector.load %arg20[%c0_19, %c0_20] : memref<8x32xbf16, #tpu.memory_space<vmem>>, vector<8x32xbf16>
    tpu.vector_store %arg20[%c0_19, %c0_20], %39 {strides = array<i32>} : memref<8x32xbf16, #tpu.memory_space<vmem>>, vector<8x32xbf16>,
    %c0_21 = arith.constant 0 : index
    %c0_22 = arith.constant 0 : index
    %c0_23 = arith.constant 0 : index
    %41 = vector.load %arg5[%c0_21, %c0_22, %c0_23] : memref<1x32x32xbf16, #tpu.memory_space<vmem>>, vector<1x32x32xbf16>
    %42 = vector.shape_cast %41 : vector<1x32x32xbf16> to vector<32x32xbf16>
    %cst_24 = arith.constant dense<0.000000e+00> : vector<8x32xf32>
    %43 = tpu.matmul %29, %42, %cst_24 {dimension_numbers = #tpu.dot_dimension_numbers<[1], [0], [0], [1], [0, 0, 1, 1], [], []>} : vector<8x32xbf16>, vector<32x32xbf16>, vector<8x32xf32> -> vector<8x32xf32>
    %c0_25 = arith.constant 0 : index
    %c0_26 = arith.constant 0 : index
    %c0_27 = arith.constant 0 : index
    %44 = vector.load %arg6[%c0_25, %c0_26, %c0_27] : memref<1x1x32xf32, #tpu.memory_space<vmem>>, vector<1x1x32xf32>
    %45 = vector.shape_cast %44 : vector<1x1x32xf32> to vector<1x32xf32>
    %46 = vector.broadcast %45 : vector<1x32xf32> to vector<8x32xf32>
    %47 = arith.addf %43, %46 : vector<8x32xf32>
    %48 = arith.truncf %47 : vector<8x32xf32> to vector<8x32xbf16>
    %c0_28 = arith.constant 0 : index
    %c0_29 = arith.constant 0 : index
    %49 = vector.load %arg21[%c0_28, %c0_29] : memref<8x32xbf16, #tpu.memory_space<vmem>>, vector<8x32xbf16>
    tpu.vector_store %arg21[%c0_28, %c0_29], %48 {strides = array<i32>} : memref<8x32xbf16, #tpu.memory_space<vmem>>, vector<8x32xbf16>,
    %c0_30 = arith.constant 0 : index
    %c0_31 = arith.constant 0 : index
    %c0_32 = arith.constant 0 : index
    %50 = vector.load %arg7[%c0_30, %c0_31, %c0_32] : memref<1x32x32xbf16, #tpu.memory_space<vmem>>, vector<1x32x32xbf16>
    %51 = vector.shape_cast %50 : vector<1x32x32xbf16> to vector<32x32xbf16>
    %cst_33 = arith.constant dense<0.000000e+00> : vector<8x32xf32>
    %52 = tpu.matmul %29, %51, %cst_33 {dimension_numbers = #tpu.dot_dimension_numbers<[1], [0], [0], [1], [0, 0, 1, 1], [], []>} : vector<8x32xbf16>, vector<32x32xbf16>, vector<8x32xf32> -> vector<8x32xf32>
    %c0_34 = arith.constant 0 : index
    %c0_35 = arith.constant 0 : index
    %c0_36 = arith.constant 0 : index
    %53 = vector.load %arg8[%c0_34, %c0_35, %c0_36] : memref<1x1x32xf32, #tpu.memory_space<vmem>>, vector<1x1x32xf32>
    %54 = vector.shape_cast %53 : vector<1x1x32xf32> to vector<1x32xf32>
    %55 = vector.broadcast %54 : vector<1x32xf32> to vector<8x32xf32>
    %56 = arith.addf %52, %55 : vector<8x32xf32>
    %57 = arith.truncf %56 : vector<8x32xf32> to vector<8x32xbf16>
    %c0_37 = arith.constant 0 : index
    %c0_38 = arith.constant 0 : index
    %58 = vector.load %arg22[%c0_37, %c0_38] : memref<8x32xbf16, #tpu.memory_space<vmem>>, vector<8x32xbf16>
    tpu.vector_store %arg22[%c0_37, %c0_38], %57 {strides = array<i32>} : memref<8x32xbf16, #tpu.memory_space<vmem>>, vector<8x32xbf16>,
    %c0_39 = arith.constant 0 : index
    %c0_40 = arith.constant 0 : index
    %59 = vector.load %arg20[%c0_39, %c0_40] : memref<8x32xbf16, #tpu.memory_space<vmem>>, vector<8x8xbf16>
    %60 = vector.shape_cast %59 : vector<8x8xbf16> to vector<1x8x8xbf16>
    %c0_41 = arith.constant 0 : index
    %c0_42 = arith.constant 0 : index
    %61 = vector.load %arg21[%c0_41, %c0_42] : memref<8x32xbf16, #tpu.memory_space<vmem>>, vector<8x8xbf16>
    %62 = vector.shape_cast %61 : vector<8x8xbf16> to vector<1x8x8xbf16>
    %c0_43 = arith.constant 0 : index
    %c0_44 = arith.constant 0 : index
    %63 = vector.load %arg22[%c0_43, %c0_44] : memref<8x32xbf16, #tpu.memory_space<vmem>>, vector<8x8xbf16>
    %64 = vector.shape_cast %63 : vector<8x8xbf16> to vector<1x8x8xbf16>
    "tpu.trace_start"() <{level = 10 : i32, message = "bqd,bkd->bqk"}> : () -> ()
    %cst_45 = arith.constant dense<0.000000e+00> : vector<1x8x8xf32>
    %65 = tpu.matmul %60, %62, %cst_45 {dimension_numbers = #tpu.dot_dimension_numbers<[2], [2], [1], [1], [0, 0, 0, 1, 1, 1], [0], [0]>} : vector<1x8x8xbf16>, vector<1x8x8xbf16>, vector<1x8x8xf32> -> vector<1x8x8xf32>
    "tpu.trace_stop"() : () -> ()
    %cst_46 = arith.constant dense<0xFF800000> : vector<1x8xf32>
    %66 = vector.multi_reduction <maximumf>, %65, %cst_46 [2] : vector<1x8x8xf32> to vector<1x8xf32>
    %67 = vector.shape_cast %66 : vector<1x8xf32> to vector<1x8x1xf32>
    %68 = vector.broadcast %67 : vector<1x8x1xf32> to vector<1x8x8xf32>
    %69 = arith.subf %65, %68 : vector<1x8x8xf32>
    %70 = math.exp %69 : vector<1x8x8xf32>
    %cst_47 = arith.constant dense<0.000000e+00> : vector<1x8xf32>
    %71 = vector.multi_reduction <add>, %70, %cst_47 [2] : vector<1x8x8xf32> to vector<1x8xf32>
    %72 = vector.shape_cast %71 : vector<1x8xf32> to vector<1x8x1xf32>
    %73 = tpu.reciprocal %72 {approx = true} : vector<1x8x1xf32> -> vector<1x8x1xf32>
    %74 = vector.broadcast %73 : vector<1x8x1xf32> to vector<1x8x8xf32>
    %75 = arith.mulf %70, %74 : vector<1x8x8xf32>
    %76 = arith.truncf %75 : vector<1x8x8xf32> to vector<1x8x8xbf16>
    "tpu.trace_start"() <{level = 10 : i32, message = "bqk,bkd->bqd"}> : () -> ()
    %cst_48 = arith.constant dense<0.000000e+00> : vector<1x8x8xf32>
    %77 = tpu.matmul %76, %64, %cst_48 {dimension_numbers = #tpu.dot_dimension_numbers<[2], [1], [1], [2], [0, 0, 0, 1, 1, 2], [0], [0]>} : vector<1x8x8xbf16>, vector<1x8x8xbf16>, vector<1x8x8xf32> -> vector<1x8x8xf32>
    "tpu.trace_stop"() : () -> ()
    %78 = vector.shape_cast %77 : vector<1x8x8xf32> to vector<8x8xf32>
    %79 = arith.truncf %78 : vector<8x8xf32> to vector<8x8xbf16>
    %c0_49 = arith.constant 0 : index
    %c0_50 = arith.constant 0 : index
    %80 = vector.load %arg23[%c0_49, %c0_50] : memref<8x32xbf16, #tpu.memory_space<vmem>>, vector<8x8xbf16>
    tpu.vector_store %arg23[%c0_49, %c0_50], %79 {strides = array<i32>} : memref<8x32xbf16, #tpu.memory_space<vmem>>, vector<8x8xbf16>,
    %c0_51 = arith.constant 0 : index
    %c8 = arith.constant 8 : index
    %81 = vector.load %arg20[%c0_51, %c8] : memref<8x32xbf16, #tpu.memory_space<vmem>>, vector<8x8xbf16>
    %82 = vector.shape_cast %81 : vector<8x8xbf16> to vector<1x8x8xbf16>
    %c0_52 = arith.constant 0 : index
    %c8_53 = arith.constant 8 : index
    %83 = vector.load %arg21[%c0_52, %c8_53] : memref<8x32xbf16, #tpu.memory_space<vmem>>, vector<8x8xbf16>
    %84 = vector.shape_cast %83 : vector<8x8xbf16> to vector<1x8x8xbf16>
    %c0_54 = arith.constant 0 : index
    %c8_55 = arith.constant 8 : index
    %85 = vector.load %arg22[%c0_54, %c8_55] : memref<8x32xbf16, #tpu.memory_space<vmem>>, vector<8x8xbf16>
    %86 = vector.shape_cast %85 : vector<8x8xbf16> to vector<1x8x8xbf16>
    "tpu.trace_start"() <{level = 10 : i32, message = "bqd,bkd->bqk"}> : () -> ()
    %cst_56 = arith.constant dense<0.000000e+00> : vector<1x8x8xf32>
    %87 = tpu.matmul %82, %84, %cst_56 {dimension_numbers = #tpu.dot_dimension_numbers<[2], [2], [1], [1], [0, 0, 0, 1, 1, 1], [0], [0]>} : vector<1x8x8xbf16>, vector<1x8x8xbf16>, vector<1x8x8xf32> -> vector<1x8x8xf32>
    "tpu.trace_stop"() : () -> ()
    %cst_57 = arith.constant dense<0xFF800000> : vector<1x8xf32>
    %88 = vector.multi_reduction <maximumf>, %87, %cst_57 [2] : vector<1x8x8xf32> to vector<1x8xf32>
    %89 = vector.shape_cast %88 : vector<1x8xf32> to vector<1x8x1xf32>
    %90 = vector.broadcast %89 : vector<1x8x1xf32> to vector<1x8x8xf32>
    %91 = arith.subf %87, %90 : vector<1x8x8xf32>
    %92 = math.exp %91 : vector<1x8x8xf32>
    %cst_58 = arith.constant dense<0.000000e+00> : vector<1x8xf32>
    %93 = vector.multi_reduction <add>, %92, %cst_58 [2] : vector<1x8x8xf32> to vector<1x8xf32>
    %94 = vector.shape_cast %93 : vector<1x8xf32> to vector<1x8x1xf32>
    %95 = tpu.reciprocal %94 {approx = true} : vector<1x8x1xf32> -> vector<1x8x1xf32>
    %96 = vector.broadcast %95 : vector<1x8x1xf32> to vector<1x8x8xf32>
    %97 = arith.mulf %92, %96 : vector<1x8x8xf32>
    %98 = arith.truncf %97 : vector<1x8x8xf32> to vector<1x8x8xbf16>
    "tpu.trace_start"() <{level = 10 : i32, message = "bqk,bkd->bqd"}> : () -> ()
    %cst_59 = arith.constant dense<0.000000e+00> : vector<1x8x8xf32>
    %99 = tpu.matmul %98, %86, %cst_59 {dimension_numbers = #tpu.dot_dimension_numbers<[2], [1], [1], [2], [0, 0, 0, 1, 1, 2], [0], [0]>} : vector<1x8x8xbf16>, vector<1x8x8xbf16>, vector<1x8x8xf32> -> vector<1x8x8xf32>
    "tpu.trace_stop"() : () -> ()
    %100 = vector.shape_cast %99 : vector<1x8x8xf32> to vector<8x8xf32>
    %101 = arith.truncf %100 : vector<8x8xf32> to vector<8x8xbf16>
    %c0_60 = arith.constant 0 : index
    %c8_61 = arith.constant 8 : index
    %102 = vector.load %arg23[%c0_60, %c8_61] : memref<8x32xbf16, #tpu.memory_space<vmem>>, vector<8x8xbf16>
    tpu.vector_store %arg23[%c0_60, %c8_61], %101 {strides = array<i32>} : memref<8x32xbf16, #tpu.memory_space<vmem>>, vector<8x8xbf16>,
    %c0_62 = arith.constant 0 : index
    %c16 = arith.constant 16 : index
    %103 = vector.load %arg20[%c0_62, %c16] : memref<8x32xbf16, #tpu.memory_space<vmem>>, vector<8x8xbf16>
    %104 = vector.shape_cast %103 : vector<8x8xbf16> to vector<1x8x8xbf16>
    %c0_63 = arith.constant 0 : index
    %c16_64 = arith.constant 16 : index
    %105 = vector.load %arg21[%c0_63, %c16_64] : memref<8x32xbf16, #tpu.memory_space<vmem>>, vector<8x8xbf16>
    %106 = vector.shape_cast %105 : vector<8x8xbf16> to vector<1x8x8xbf16>
    %c0_65 = arith.constant 0 : index
    %c16_66 = arith.constant 16 : index
    %107 = vector.load %arg22[%c0_65, %c16_66] : memref<8x32xbf16, #tpu.memory_space<vmem>>, vector<8x8xbf16>
    %108 = vector.shape_cast %107 : vector<8x8xbf16> to vector<1x8x8xbf16>
    "tpu.trace_start"() <{level = 10 : i32, message = "bqd,bkd->bqk"}> : () -> ()
    %cst_67 = arith.constant dense<0.000000e+00> : vector<1x8x8xf32>
    %109 = tpu.matmul %104, %106, %cst_67 {dimension_numbers = #tpu.dot_dimension_numbers<[2], [2], [1], [1], [0, 0, 0, 1, 1, 1], [0], [0]>} : vector<1x8x8xbf16>, vector<1x8x8xbf16>, vector<1x8x8xf32> -> vector<1x8x8xf32>
    "tpu.trace_stop"() : () -> ()
    %cst_68 = arith.constant dense<0xFF800000> : vector<1x8xf32>
    %110 = vector.multi_reduction <maximumf>, %109, %cst_68 [2] : vector<1x8x8xf32> to vector<1x8xf32>
    %111 = vector.shape_cast %110 : vector<1x8xf32> to vector<1x8x1xf32>
    %112 = vector.broadcast %111 : vector<1x8x1xf32> to vector<1x8x8xf32>
    %113 = arith.subf %109, %112 : vector<1x8x8xf32>
    %114 = math.exp %113 : vector<1x8x8xf32>
    %cst_69 = arith.constant dense<0.000000e+00> : vector<1x8xf32>
    %115 = vector.multi_reduction <add>, %114, %cst_69 [2] : vector<1x8x8xf32> to vector<1x8xf32>
    %116 = vector.shape_cast %115 : vector<1x8xf32> to vector<1x8x1xf32>
    %117 = tpu.reciprocal %116 {approx = true} : vector<1x8x1xf32> -> vector<1x8x1xf32>
    %118 = vector.broadcast %117 : vector<1x8x1xf32> to vector<1x8x8xf32>
    %119 = arith.mulf %114, %118 : vector<1x8x8xf32>
    %120 = arith.truncf %119 : vector<1x8x8xf32> to vector<1x8x8xbf16>
    "tpu.trace_start"() <{level = 10 : i32, message = "bqk,bkd->bqd"}> : () -> ()
    %cst_70 = arith.constant dense<0.000000e+00> : vector<1x8x8xf32>
    %121 = tpu.matmul %120, %108, %cst_70 {dimension_numbers = #tpu.dot_dimension_numbers<[2], [1], [1], [2], [0, 0, 0, 1, 1, 2], [0], [0]>} : vector<1x8x8xbf16>, vector<1x8x8xbf16>, vector<1x8x8xf32> -> vector<1x8x8xf32>
    "tpu.trace_stop"() : () -> ()
    %122 = vector.shape_cast %121 : vector<1x8x8xf32> to vector<8x8xf32>
    %123 = arith.truncf %122 : vector<8x8xf32> to vector<8x8xbf16>
    %c0_71 = arith.constant 0 : index
    %c16_72 = arith.constant 16 : index
    %124 = vector.load %arg23[%c0_71, %c16_72] : memref<8x32xbf16, #tpu.memory_space<vmem>>, vector<8x8xbf16>
    tpu.vector_store %arg23[%c0_71, %c16_72], %123 {strides = array<i32>} : memref<8x32xbf16, #tpu.memory_space<vmem>>, vector<8x8xbf16>,
    %c0_73 = arith.constant 0 : index
    %c24 = arith.constant 24 : index
    %125 = vector.load %arg20[%c0_73, %c24] : memref<8x32xbf16, #tpu.memory_space<vmem>>, vector<8x8xbf16>
    %126 = vector.shape_cast %125 : vector<8x8xbf16> to vector<1x8x8xbf16>
    %c0_74 = arith.constant 0 : index
    %c24_75 = arith.constant 24 : index
    %127 = vector.load %arg21[%c0_74, %c24_75] : memref<8x32xbf16, #tpu.memory_space<vmem>>, vector<8x8xbf16>
    %128 = vector.shape_cast %127 : vector<8x8xbf16> to vector<1x8x8xbf16>
    %c0_76 = arith.constant 0 : index
    %c24_77 = arith.constant 24 : index
    %129 = vector.load %arg22[%c0_76, %c24_77] : memref<8x32xbf16, #tpu.memory_space<vmem>>, vector<8x8xbf16>
    %130 = vector.shape_cast %129 : vector<8x8xbf16> to vector<1x8x8xbf16>
    "tpu.trace_start"() <{level = 10 : i32, message = "bqd,bkd->bqk"}> : () -> ()
    %cst_78 = arith.constant dense<0.000000e+00> : vector<1x8x8xf32>
    %131 = tpu.matmul %126, %128, %cst_78 {dimension_numbers = #tpu.dot_dimension_numbers<[2], [2], [1], [1], [0, 0, 0, 1, 1, 1], [0], [0]>} : vector<1x8x8xbf16>, vector<1x8x8xbf16>, vector<1x8x8xf32> -> vector<1x8x8xf32>
    "tpu.trace_stop"() : () -> ()
    %cst_79 = arith.constant dense<0xFF800000> : vector<1x8xf32>
    %132 = vector.multi_reduction <maximumf>, %131, %cst_79 [2] : vector<1x8x8xf32> to vector<1x8xf32>
    %133 = vector.shape_cast %132 : vector<1x8xf32> to vector<1x8x1xf32>
    %134 = vector.broadcast %133 : vector<1x8x1xf32> to vector<1x8x8xf32>
    %135 = arith.subf %131, %134 : vector<1x8x8xf32>
    %136 = math.exp %135 : vector<1x8x8xf32>
    %cst_80 = arith.constant dense<0.000000e+00> : vector<1x8xf32>
    %137 = vector.multi_reduction <add>, %136, %cst_80 [2] : vector<1x8x8xf32> to vector<1x8xf32>
    %138 = vector.shape_cast %137 : vector<1x8xf32> to vector<1x8x1xf32>
    %139 = tpu.reciprocal %138 {approx = true} : vector<1x8x1xf32> -> vector<1x8x1xf32>
    %140 = vector.broadcast %139 : vector<1x8x1xf32> to vector<1x8x8xf32>
    %141 = arith.mulf %136, %140 : vector<1x8x8xf32>
    %142 = arith.truncf %141 : vector<1x8x8xf32> to vector<1x8x8xbf16>
    "tpu.trace_start"() <{level = 10 : i32, message = "bqk,bkd->bqd"}> : () -> ()
    %cst_81 = arith.constant dense<0.000000e+00> : vector<1x8x8xf32>
    %143 = tpu.matmul %142, %130, %cst_81 {dimension_numbers = #tpu.dot_dimension_numbers<[2], [1], [1], [2], [0, 0, 0, 1, 1, 2], [0], [0]>} : vector<1x8x8xbf16>, vector<1x8x8xbf16>, vector<1x8x8xf32> -> vector<1x8x8xf32>
    "tpu.trace_stop"() : () -> ()
    %144 = vector.shape_cast %143 : vector<1x8x8xf32> to vector<8x8xf32>
    %145 = arith.truncf %144 : vector<8x8xf32> to vector<8x8xbf16>
    %c0_82 = arith.constant 0 : index
    %c24_83 = arith.constant 24 : index
    %146 = vector.load %arg23[%c0_82, %c24_83] : memref<8x32xbf16, #tpu.memory_space<vmem>>, vector<8x8xbf16>
    tpu.vector_store %arg23[%c0_82, %c24_83], %145 {strides = array<i32>} : memref<8x32xbf16, #tpu.memory_space<vmem>>, vector<8x8xbf16>,
    %c0_84 = arith.constant 0 : index
    %c0_85 = arith.constant 0 : index
    %147 = vector.load %arg23[%c0_84, %c0_85] : memref<8x32xbf16, #tpu.memory_space<vmem>>, vector<8x32xbf16>
    %c0_86 = arith.constant 0 : index
    %c0_87 = arith.constant 0 : index
    %c0_88 = arith.constant 0 : index
    %148 = vector.load %arg9[%c0_86, %c0_87, %c0_88] : memref<1x32x32xbf16, #tpu.memory_space<vmem>>, vector<1x32x32xbf16>
    %149 = vector.shape_cast %148 : vector<1x32x32xbf16> to vector<32x32xbf16>
    %cst_89 = arith.constant dense<0.000000e+00> : vector<8x32xf32>
    %150 = tpu.matmul %147, %149, %cst_89 {dimension_numbers = #tpu.dot_dimension_numbers<[1], [0], [0], [1], [0, 0, 1, 1], [], []>} : vector<8x32xbf16>, vector<32x32xbf16>, vector<8x32xf32> -> vector<8x32xf32>
    %c0_90 = arith.constant 0 : index
    %c0_91 = arith.constant 0 : index
    %c0_92 = arith.constant 0 : index
    %151 = vector.load %arg10[%c0_90, %c0_91, %c0_92] : memref<1x1x32xf32, #tpu.memory_space<vmem>>, vector<1x1x32xf32>
    %152 = vector.shape_cast %151 : vector<1x1x32xf32> to vector<1x32xf32>
    %153 = vector.broadcast %152 : vector<1x32xf32> to vector<8x32xf32>
    %154 = arith.addf %150, %153 : vector<8x32xf32>
    %155 = arith.addf %6, %154 : vector<8x32xf32>
    %c0_93 = arith.constant 0 : index
    %c0_94 = arith.constant 0 : index
    %156 = vector.load %arg13[%c0_93, %c0_94] : memref<1x32xf32, #tpu.memory_space<vmem>>, vector<1x32xf32>
    %c0_95 = arith.constant 0 : index
    %c0_96 = arith.constant 0 : index
    %157 = vector.load %arg14[%c0_95, %c0_96] : memref<1x32xf32, #tpu.memory_space<vmem>>, vector<1x32xf32>
    %cst_97 = arith.constant dense<0.000000e+00> : vector<8xf32>
    %158 = vector.multi_reduction <add>, %155, %cst_97 [1] : vector<8x32xf32> to vector<8xf32>
    %159 = vector.shape_cast %158 : vector<8xf32> to vector<8x1xf32>
    %cst_98 = arith.constant 3.200000e+01 : f32
    %160 = vector.broadcast %cst_98 : f32 to vector<8x1xf32>
    %161 = arith.divf %159, %160 : vector<8x1xf32>
    %162 = vector.broadcast %161 : vector<8x1xf32> to vector<8x32xf32>
    %163 = arith.subf %155, %162 : vector<8x32xf32>
    %164 = arith.mulf %163, %163 : vector<8x32xf32>
    %cst_99 = arith.constant dense<0.000000e+00> : vector<8xf32>
    %165 = vector.multi_reduction <add>, %164, %cst_99 [1] : vector<8x32xf32> to vector<8xf32>
    %166 = vector.shape_cast %165 : vector<8xf32> to vector<8x1xf32>
    %cst_100 = arith.constant 3.100000e+01 : f32
    %167 = vector.broadcast %cst_100 : f32 to vector<8x1xf32>
    %168 = arith.divf %166, %167 : vector<8x1xf32>
    %169 = math.sqrt %168 : vector<8x1xf32>
    %170 = vector.broadcast %161 : vector<8x1xf32> to vector<8x32xf32>
    %171 = arith.subf %155, %170 : vector<8x32xf32>
    %cst_101 = arith.constant 9.99999997E-7 : f32
    %172 = vector.broadcast %cst_101 : f32 to vector<8x1xf32>
    %173 = arith.addf %169, %172 : vector<8x1xf32>
    %174 = vector.broadcast %173 : vector<8x1xf32> to vector<8x32xf32>
    %175 = arith.divf %171, %174 : vector<8x32xf32>
    %176 = vector.broadcast %156 : vector<1x32xf32> to vector<8x32xf32>
    %177 = arith.mulf %175, %176 : vector<8x32xf32>
    %178 = vector.broadcast %157 : vector<1x32xf32> to vector<8x32xf32>
    %179 = arith.addf %177, %178 : vector<8x32xf32>
    %180 = arith.truncf %179 : vector<8x32xf32> to vector<8x32xbf16>
    %cst_102 = arith.constant 0.000000e+00 : f32
    %181 = vector.broadcast %cst_102 : f32 to vector<8x32xf32>
    %c0_103 = arith.constant 0 : index
    %c0_104 = arith.constant 0 : index
    %182 = vector.load %arg15[%c0_103, %c0_104] : memref<32x2048xbf16, #tpu.memory_space<vmem>>, vector<32x512xbf16>
    %cst_105 = arith.constant dense<0.000000e+00> : vector<8x512xf32>
    %183 = tpu.matmul %180, %182, %cst_105 {dimension_numbers = #tpu.dot_dimension_numbers<[1], [0], [0], [1], [0, 0, 1, 1], [], []>} : vector<8x32xbf16>, vector<32x512xbf16>, vector<8x512xf32> -> vector<8x512xf32>
    %c0_106 = arith.constant 0 : index
    %c0_107 = arith.constant 0 : index
    %184 = vector.load %arg16[%c0_106, %c0_107] : memref<1x2048xf32, #tpu.memory_space<vmem>>, vector<1x512xf32>
    %185 = vector.broadcast %184 : vector<1x512xf32> to vector<8x512xf32>
    %186 = arith.addf %183, %185 : vector<8x512xf32>
    %cst_108 = arith.constant 0.000000e+00 : f32
    %187 = vector.broadcast %cst_108 : f32 to vector<8x512xf32>
    %188 = arith.maximumf %186, %187 : vector<8x512xf32>
    %189 = arith.truncf %188 : vector<8x512xf32> to vector<8x512xbf16>
    %c0_109 = arith.constant 0 : index
    %c0_110 = arith.constant 0 : index
    %190 = vector.load %arg17[%c0_109, %c0_110] : memref<2048x32xbf16, #tpu.memory_space<vmem>>, vector<512x32xbf16>
    %cst_111 = arith.constant dense<0.000000e+00> : vector<8x32xf32>
    %191 = tpu.matmul %189, %190, %cst_111 {dimension_numbers = #tpu.dot_dimension_numbers<[1], [0], [0], [1], [0, 0, 1, 1], [], []>} : vector<8x512xbf16>, vector<512x32xbf16>, vector<8x32xf32> -> vector<8x32xf32>
    %192 = arith.addf %181, %191 : vector<8x32xf32>
    %c0_112 = arith.constant 0 : index
    %c512 = arith.constant 512 : index
    %193 = vector.load %arg15[%c0_112, %c512] : memref<32x2048xbf16, #tpu.memory_space<vmem>>, vector<32x512xbf16>
    %cst_113 = arith.constant dense<0.000000e+00> : vector<8x512xf32>
    %194 = tpu.matmul %180, %193, %cst_113 {dimension_numbers = #tpu.dot_dimension_numbers<[1], [0], [0], [1], [0, 0, 1, 1], [], []>} : vector<8x32xbf16>, vector<32x512xbf16>, vector<8x512xf32> -> vector<8x512xf32>
    %c0_114 = arith.constant 0 : index
    %c512_115 = arith.constant 512 : index
    %195 = vector.load %arg16[%c0_114, %c512_115] : memref<1x2048xf32, #tpu.memory_space<vmem>>, vector<1x512xf32>
    %196 = vector.broadcast %195 : vector<1x512xf32> to vector<8x512xf32>
    %197 = arith.addf %194, %196 : vector<8x512xf32>
    %cst_116 = arith.constant 0.000000e+00 : f32
    %198 = vector.broadcast %cst_116 : f32 to vector<8x512xf32>
    %199 = arith.maximumf %197, %198 : vector<8x512xf32>
    %200 = arith.truncf %199 : vector<8x512xf32> to vector<8x512xbf16>
    %c512_117 = arith.constant 512 : index
    %c0_118 = arith.constant 0 : index
    %201 = vector.load %arg17[%c512_117, %c0_118] : memref<2048x32xbf16, #tpu.memory_space<vmem>>, vector<512x32xbf16>
    %cst_119 = arith.constant dense<0.000000e+00> : vector<8x32xf32>
    %202 = tpu.matmul %200, %201, %cst_119 {dimension_numbers = #tpu.dot_dimension_numbers<[1], [0], [0], [1], [0, 0, 1, 1], [], []>} : vector<8x512xbf16>, vector<512x32xbf16>, vector<8x32xf32> -> vector<8x32xf32>
    %203 = arith.addf %192, %202 : vector<8x32xf32>
    %c0_120 = arith.constant 0 : index
    %c1024 = arith.constant 1024 : index
    %204 = vector.load %arg15[%c0_120, %c1024] : memref<32x2048xbf16, #tpu.memory_space<vmem>>, vector<32x512xbf16>
    %cst_121 = arith.constant dense<0.000000e+00> : vector<8x512xf32>
    %205 = tpu.matmul %180, %204, %cst_121 {dimension_numbers = #tpu.dot_dimension_numbers<[1], [0], [0], [1], [0, 0, 1, 1], [], []>} : vector<8x32xbf16>, vector<32x512xbf16>, vector<8x512xf32> -> vector<8x512xf32>
    %c0_122 = arith.constant 0 : index
    %c1024_123 = arith.constant 1024 : index
    %206 = vector.load %arg16[%c0_122, %c1024_123] : memref<1x2048xf32, #tpu.memory_space<vmem>>, vector<1x512xf32>
    %207 = vector.broadcast %206 : vector<1x512xf32> to vector<8x512xf32>
    %208 = arith.addf %205, %207 : vector<8x512xf32>
    %cst_124 = arith.constant 0.000000e+00 : f32
    %209 = vector.broadcast %cst_124 : f32 to vector<8x512xf32>
    %210 = arith.maximumf %208, %209 : vector<8x512xf32>
    %211 = arith.truncf %210 : vector<8x512xf32> to vector<8x512xbf16>
    %c1024_125 = arith.constant 1024 : index
    %c0_126 = arith.constant 0 : index
    %212 = vector.load %arg17[%c1024_125, %c0_126] : memref<2048x32xbf16, #tpu.memory_space<vmem>>, vector<512x32xbf16>
    %cst_127 = arith.constant dense<0.000000e+00> : vector<8x32xf32>
    %213 = tpu.matmul %211, %212, %cst_127 {dimension_numbers = #tpu.dot_dimension_numbers<[1], [0], [0], [1], [0, 0, 1, 1], [], []>} : vector<8x512xbf16>, vector<512x32xbf16>, vector<8x32xf32> -> vector<8x32xf32>
    %214 = arith.addf %203, %213 : vector<8x32xf32>
    %c0_128 = arith.constant 0 : index
    %c1536 = arith.constant 1536 : index
    %215 = vector.load %arg15[%c0_128, %c1536] : memref<32x2048xbf16, #tpu.memory_space<vmem>>, vector<32x512xbf16>
    %cst_129 = arith.constant dense<0.000000e+00> : vector<8x512xf32>
    %216 = tpu.matmul %180, %215, %cst_129 {dimension_numbers = #tpu.dot_dimension_numbers<[1], [0], [0], [1], [0, 0, 1, 1], [], []>} : vector<8x32xbf16>, vector<32x512xbf16>, vector<8x512xf32> -> vector<8x512xf32>
    %c0_130 = arith.constant 0 : index
    %c1536_131 = arith.constant 1536 : index
    %217 = vector.load %arg16[%c0_130, %c1536_131] : memref<1x2048xf32, #tpu.memory_space<vmem>>, vector<1x512xf32>
    %218 = vector.broadcast %217 : vector<1x512xf32> to vector<8x512xf32>
    %219 = arith.addf %216, %218 : vector<8x512xf32>
    %cst_132 = arith.constant 0.000000e+00 : f32
    %220 = vector.broadcast %cst_132 : f32 to vector<8x512xf32>
    %221 = arith.maximumf %219, %220 : vector<8x512xf32>
    %222 = arith.truncf %221 : vector<8x512xf32> to vector<8x512xbf16>
    %c1536_133 = arith.constant 1536 : index
    %c0_134 = arith.constant 0 : index
    %223 = vector.load %arg17[%c1536_133, %c0_134] : memref<2048x32xbf16, #tpu.memory_space<vmem>>, vector<512x32xbf16>
    %cst_135 = arith.constant dense<0.000000e+00> : vector<8x32xf32>
    %224 = tpu.matmul %222, %223, %cst_135 {dimension_numbers = #tpu.dot_dimension_numbers<[1], [0], [0], [1], [0, 0, 1, 1], [], []>} : vector<8x512xbf16>, vector<512x32xbf16>, vector<8x32xf32> -> vector<8x32xf32>
    %225 = arith.addf %214, %224 : vector<8x32xf32>
    %226 = arith.addf %155, %225 : vector<8x32xf32>
    %c0_136 = arith.constant 0 : index
    %c0_137 = arith.constant 0 : index
    %227 = vector.load %arg18[%c0_136, %c0_137] : memref<1x32xf32, #tpu.memory_space<vmem>>, vector<1x32xf32>
    %228 = vector.broadcast %227 : vector<1x32xf32> to vector<8x32xf32>
    %229 = arith.addf %226, %228 : vector<8x32xf32>
    %c1_i32 = arith.constant 1 : i32
    %230 = arith.cmpi eq, %arg1, %c1_i32 : i32
    %231 = arith.extui %230 : i1 to i32
    %c0_i32_138 = arith.constant 0 : i32
    %232 = arith.cmpi ne, %231, %c0_i32_138 : i32
    scf.if %232 {
      %cst_141 = arith.constant dense<0.000000e+00> : vector<8xf32>
      %236 = vector.multi_reduction <add>, %229, %cst_141 [1] : vector<8x32xf32> to vector<8xf32>
      %237 = vector.shape_cast %236 : vector<8xf32> to vector<8x1xf32>
      %cst_142 = arith.constant 3.200000e+01 : f32
      %238 = vector.broadcast %cst_142 : f32 to vector<8x1xf32>
      %239 = arith.divf %237, %238 : vector<8x1xf32>
      %240 = vector.broadcast %239 : vector<8x1xf32> to vector<8x32xf32>
      %241 = arith.subf %229, %240 : vector<8x32xf32>
      %242 = arith.mulf %241, %241 : vector<8x32xf32>
      %cst_143 = arith.constant dense<0.000000e+00> : vector<8xf32>
      %243 = vector.multi_reduction <add>, %242, %cst_143 [1] : vector<8x32xf32> to vector<8xf32>
      %244 = vector.shape_cast %243 : vector<8xf32> to vector<8x1xf32>
      %cst_144 = arith.constant 3.100000e+01 : f32
      %245 = vector.broadcast %cst_144 : f32 to vector<8x1xf32>
      %246 = arith.divf %244, %245 : vector<8x1xf32>
      %247 = math.sqrt %246 : vector<8x1xf32>
      %248 = vector.broadcast %239 : vector<8x1xf32> to vector<8x32xf32>
      %249 = arith.subf %229, %248 : vector<8x32xf32>
      %cst_145 = arith.constant 9.99999997E-7 : f32
      %250 = vector.broadcast %cst_145 : f32 to vector<8x1xf32>
      %251 = arith.addf %247, %250 : vector<8x1xf32>
      %252 = vector.broadcast %251 : vector<8x1xf32> to vector<8x32xf32>
      %253 = arith.divf %249, %252 : vector<8x32xf32>
      %254 = vector.broadcast %3 : vector<1x32xf32> to vector<8x32xf32>
      %255 = arith.mulf %253, %254 : vector<8x32xf32>
      %256 = vector.broadcast %4 : vector<1x32xf32> to vector<8x32xf32>
      %257 = arith.addf %255, %256 : vector<8x32xf32>
      %258 = vector.shape_cast %257 : vector<8x32xf32> to vector<1x8x32xf32>
      %c0_146 = arith.constant 0 : index
      %c0_147 = arith.constant 0 : index
      %c0_148 = arith.constant 0 : index
      %259 = vector.load %arg19[%c0_146, %c0_147, %c0_148] : memref<1x8x32xf32, #tpu.memory_space<vmem>>, vector<1x8x32xf32>
      tpu.vector_store %arg19[%c0_146, %c0_147, %c0_148], %258 {strides = array<i32>} : memref<1x8x32xf32, #tpu.memory_space<vmem>>, vector<1x8x32xf32>,
    } else {
    }
    %c1_i32_139 = arith.constant 1 : i32
    %233 = arith.cmpi ne, %arg1, %c1_i32_139 : i32
    %234 = arith.extui %233 : i1 to i32
    %c0_i32_140 = arith.constant 0 : i32
    %235 = arith.cmpi ne, %234, %c0_i32_140 : i32
    scf.if %235 {
      %236 = vector.shape_cast %229 : vector<8x32xf32> to vector<1x8x32xf32>
      %c0_141 = arith.constant 0 : index
      %c0_142 = arith.constant 0 : index
      %c0_143 = arith.constant 0 : index
      %237 = vector.load %arg19[%c0_141, %c0_142, %c0_143] : memref<1x8x32xf32, #tpu.memory_space<vmem>>, vector<1x8x32xf32>
      tpu.vector_store %arg19[%c0_141, %c0_142, %c0_143], %236 {strides = array<i32>} : memref<1x8x32xf32, #tpu.memory_space<vmem>>, vector<1x8x32xf32>,
    } else {
    }
    return
  }
  func.func @transform_0(%arg0: i32, %arg1: i32) -> (i32, i32, i32) {
    %c0_i32 = arith.constant 0 : i32
    %c0_i32_0 = arith.constant 0 : i32
    %c0_i32_1 = arith.constant 0 : i32
    return %arg0, %c0_i32, %c0_i32_0 : i32, i32, i32
  }
  func.func @transform_1(%arg0: i32, %arg1: i32) -> (i32, i32, i32) {
    %c0_i32 = arith.constant 0 : i32
    %c0_i32_0 = arith.constant 0 : i32
    %c0_i32_1 = arith.constant 0 : i32
    return %arg1, %c0_i32, %c0_i32_0 : i32, i32, i32
  }
  func.func @transform_2(%arg0: i32, %arg1: i32) -> (i32, i32, i32) {
    %c0_i32 = arith.constant 0 : i32
    %c0_i32_0 = arith.constant 0 : i32
    %c0_i32_1 = arith.constant 0 : i32
    return %arg1, %c0_i32, %c0_i32_0 : i32, i32, i32
  }
  func.func @transform_3(%arg0: i32, %arg1: i32) -> (i32, i32, i32) {
    %c0_i32 = arith.constant 0 : i32
    %c0_i32_0 = arith.constant 0 : i32
    %c0_i32_1 = arith.constant 0 : i32
    return %arg1, %c0_i32, %c0_i32_0 : i32, i32, i32
  }
  func.func @transform_4(%arg0: i32, %arg1: i32) -> (i32, i32, i32) {
    %c0_i32 = arith.constant 0 : i32
    %c0_i32_0 = arith.constant 0 : i32
    %c0_i32_1 = arith.constant 0 : i32
    return %arg1, %c0_i32, %c0_i32_0 : i32, i32, i32
  }
  func.func @transform_5(%arg0: i32, %arg1: i32) -> (i32, i32, i32) {
    %c0_i32 = arith.constant 0 : i32
    %c0_i32_0 = arith.constant 0 : i32
    %c0_i32_1 = arith.constant 0 : i32
    return %arg1, %c0_i32, %c0_i32_0 : i32, i32, i32
  }
  func.func @transform_6(%arg0: i32, %arg1: i32) -> (i32, i32, i32) {
    %c0_i32 = arith.constant 0 : i32
    %c0_i32_0 = arith.constant 0 : i32
    %c0_i32_1 = arith.constant 0 : i32
    return %arg1, %c0_i32, %c0_i32_0 : i32, i32, i32
  }
  func.func @transform_7(%arg0: i32, %arg1: i32) -> (i32, i32, i32) {
    %c0_i32 = arith.constant 0 : i32
    %c0_i32_0 = arith.constant 0 : i32
    %c0_i32_1 = arith.constant 0 : i32
    return %arg1, %c0_i32, %c0_i32_0 : i32, i32, i32
  }
  func.func @transform_8(%arg0: i32, %arg1: i32) -> (i32, i32, i32) {
    %c0_i32 = arith.constant 0 : i32
    %c0_i32_0 = arith.constant 0 : i32
    %c0_i32_1 = arith.constant 0 : i32
    return %arg1, %c0_i32, %c0_i32_0 : i32, i32, i32
  }
  func.func @transform_9(%arg0: i32, %arg1: i32) -> (i32, i32) {
    %c0_i32 = arith.constant 0 : i32
    %c0_i32_0 = arith.constant 0 : i32
    %c0_i32_1 = arith.constant 0 : i32
    return %c0_i32, %c0_i32_0 : i32, i32
  }
  func.func @transform_10(%arg0: i32, %arg1: i32) -> (i32, i32) {
    %c0_i32 = arith.constant 0 : i32
    %c0_i32_0 = arith.constant 0 : i32
    %c0_i32_1 = arith.constant 0 : i32
    return %c0_i32, %c0_i32_0 : i32, i32
  }
  func.func @transform_11(%arg0: i32, %arg1: i32) -> (i32, i32) {
    %c0_i32 = arith.constant 0 : i32
    %c0_i32_0 = arith.constant 0 : i32
    %c0_i32_1 = arith.constant 0 : i32
    return %c0_i32, %c0_i32_0 : i32, i32
  }
  func.func @transform_12(%arg0: i32, %arg1: i32) -> (i32, i32) {
    %c0_i32 = arith.constant 0 : i32
    %c0_i32_0 = arith.constant 0 : i32
    %c0_i32_1 = arith.constant 0 : i32
    return %c0_i32, %c0_i32_0 : i32, i32
  }
  func.func @transform_13(%arg0: i32, %arg1: i32) -> (i32, i32) {
    %c0_i32 = arith.constant 0 : i32
    %c0_i32_0 = arith.constant 0 : i32
    %c0_i32_1 = arith.constant 0 : i32
    return %c0_i32, %c0_i32_0 : i32, i32
  }
  func.func @transform_14(%arg0: i32, %arg1: i32) -> (i32, i32) {
    %c0_i32 = arith.constant 0 : i32
    %c0_i32_0 = arith.constant 0 : i32
    %c0_i32_1 = arith.constant 0 : i32
    return %c0_i32, %c0_i32_0 : i32, i32
  }
  func.func @transform_15(%arg0: i32, %arg1: i32) -> (i32, i32) {
    %c0_i32 = arith.constant 0 : i32
    %c0_i32_0 = arith.constant 0 : i32
    %c0_i32_1 = arith.constant 0 : i32
    return %c0_i32, %c0_i32_0 : i32, i32
  }
  func.func @transform_16(%arg0: i32, %arg1: i32) -> (i32, i32) {
    %c0_i32 = arith.constant 0 : i32
    %c0_i32_0 = arith.constant 0 : i32
    %c0_i32_1 = arith.constant 0 : i32
    return %c0_i32, %c0_i32_0 : i32, i32
  }
  func.func @transform_17(%arg0: i32, %arg1: i32) -> (i32, i32, i32) {
    %c0_i32 = arith.constant 0 : i32
    %c0_i32_0 = arith.constant 0 : i32
    %c0_i32_1 = arith.constant 0 : i32
    return %arg0, %c0_i32, %c0_i32_0 : i32, i32, i32
  }
}

module attributes {stable_mosaic.version = 11 : i64} {
  func.func @mha_stack_kernel(%arg0: i32, %arg1: i32, %arg2: memref<1x8x32xf32, #tpu.memory_space<vmem>>, %arg3: memref<1x32x32xbf16, #tpu.memory_space<vmem>>, %arg4: memref<1x1x32xf32, #tpu.memory_space<vmem>>, %arg5: memref<1x32x32xbf16, #tpu.memory_space<vmem>>, %arg6: memref<1x1x32xf32, #tpu.memory_space<vmem>>, %arg7: memref<1x32x32xbf16, #tpu.memory_space<vmem>>, %arg8: memref<1x1x32xf32, #tpu.memory_space<vmem>>, %arg9: memref<1x32x32xbf16, #tpu.memory_space<vmem>>, %arg10: memref<1x1x32xf32, #tpu.memory_space<vmem>>, %arg11: memref<1x32xf32, #tpu.memory_space<vmem>>, %arg12: memref<1x32xf32, #tpu.memory_space<vmem>>, %arg13: memref<1x32xf32, #tpu.memory_space<vmem>>, %arg14: memref<1x32xf32, #tpu.memory_space<vmem>>, %arg15: memref<32x2048xbf16, #tpu.memory_space<vmem>>, %arg16: memref<1x2048xf32, #tpu.memory_space<vmem>>, %arg17: memref<2048x32xbf16, #tpu.memory_space<vmem>>, %arg18: memref<1x32xf32, #tpu.memory_space<vmem>>, %arg19: memref<1x8x32xf32, #tpu.memory_space<vmem>>, %arg20: memref<8x32xbf16, #tpu.memory_space<vmem>>, %arg21: memref<8x32xbf16, #tpu.memory_space<vmem>>, %arg22: memref<8x32xbf16, #tpu.memory_space<vmem>>, %arg23: memref<8x32xbf16, #tpu.memory_space<vmem>>) attributes {dimension_semantics = [#tpu.dimension_semantics<parallel>, #tpu.dimension_semantics<arbitrary>], iteration_bounds = array<i64: 2, 2>, scalar_prefetch = 0 : i64, scratch_operands = 4 : i64, tpu.core_type = #tpu.core_type<tc>, window_params = [{transform_indices = @transform_0, window_bounds = array<i64: 1, 8, 32>}, {transform_indices = @transform_1, window_bounds = array<i64: 1, 32, 32>}, {transform_indices = @transform_2, window_bounds = array<i64: 1, 1, 32>}, {transform_indices = @transform_3, window_bounds = array<i64: 1, 32, 32>}, {transform_indices = @transform_4, window_bounds = array<i64: 1, 1, 32>}, {transform_indices = @transform_5, window_bounds = array<i64: 1, 32, 32>}, {transform_indices = @transform_6, window_bounds = array<i64: 1, 1, 32>}, {transform_indices = @transform_7, window_bounds = array<i64: 1, 32, 32>}, {transform_indices = @transform_8, window_bounds = array<i64: 1, 1, 32>}, {pipeline_mode = #tpu.pipeline_mode<synchronous>, transform_indices = @transform_9, window_bounds = array<i64: 1, 32>}, {pipeline_mode = #tpu.pipeline_mode<synchronous>, transform_indices = @transform_10, window_bounds = array<i64: 1, 32>}, {pipeline_mode = #tpu.pipeline_mode<synchronous>, transform_indices = @transform_11, window_bounds = array<i64: 1, 32>}, {pipeline_mode = #tpu.pipeline_mode<synchronous>, transform_indices = @transform_12, window_bounds = array<i64: 1, 32>}, {pipeline_mode = #tpu.pipeline_mode<synchronous>, transform_indices = @transform_13, window_bounds = array<i64: 32, 2048>}, {pipeline_mode = #tpu.pipeline_mode<synchronous>, transform_indices = @transform_14, window_bounds = array<i64: 1, 2048>}, {pipeline_mode = #tpu.pipeline_mode<synchronous>, transform_indices = @transform_15, window_bounds = array<i64: 2048, 32>}, {pipeline_mode = #tpu.pipeline_mode<synchronous>, transform_indices = @transform_16, window_bounds = array<i64: 1, 32>}, {transform_indices = @transform_17, window_bounds = array<i64: 1, 8, 32>}]} {
    %c0_i32 = arith.constant 0 : i32
    %0 = arith.cmpi eq, %arg1, %c0_i32 : i32
    %1 = arith.extui %0 : i1 to i32
    %c0_i32_0 = arith.constant 0 : i32
    %2 = arith.cmpi ne, %1, %c0_i32_0 : i32
    scf.if %2 {
      %c0_141 = arith.constant 0 : index
      %c0_142 = arith.constant 0 : index
      %c0_143 = arith.constant 0 : index
      %236 = vector.load %arg2[%c0_141, %c0_142, %c0_143] : memref<1x8x32xf32, #tpu.memory_space<vmem>>, vector<1x8x32xf32>
      %c0_144 = arith.constant 0 : index
      %c0_145 = arith.constant 0 : index
      %c0_146 = arith.constant 0 : index
      %237 = vector.load %arg19[%c0_144, %c0_145, %c0_146] : memref<1x8x32xf32, #tpu.memory_space<vmem>>, vector<1x8x32xf32>
      tpu.vector_store %arg19[%c0_144, %c0_145, %c0_146], %236 {strides = array<i32>} : memref<1x8x32xf32, #tpu.memory_space<vmem>>, vector<1x8x32xf32>,
    } else {
    }
    %c0 = arith.constant 0 : index
    %c0_1 = arith.constant 0 : index
    %3 = vector.load %arg11[%c0, %c0_1] : memref<1x32xf32, #tpu.memory_space<vmem>>, vector<1x32xf32>
    %c0_2 = arith.constant 0 : index
    %c0_3 = arith.constant 0 : index
    %4 = vector.load %arg12[%c0_2, %c0_3] : memref<1x32xf32, #tpu.memory_space<vmem>>, vector<1x32xf32>
    %c0_4 = arith.constant 0 : index
    %c0_5 = arith.constant 0 : index
    %c0_6 = arith.constant 0 : index
    %5 = vector.load %arg19[%c0_4, %c0_5, %c0_6] : memref<1x8x32xf32, #tpu.memory_space<vmem>>, vector<1x8x32xf32>
    %6 = vector.shape_cast %5 : vector<1x8x32xf32> to vector<8x32xf32>
    %cst = arith.constant dense<0.000000e+00> : vector<8xf32>
    %7 = vector.multi_reduction <add>, %6, %cst [1] : vector<8x32xf32> to vector<8xf32>
    %8 = vector.shape_cast %7 : vector<8xf32> to vector<8x1xf32>
    %cst_7 = arith.constant 3.200000e+01 : f32
    %9 = vector.broadcast %cst_7 : f32 to vector<8x1xf32>
    %10 = arith.divf %8, %9 : vector<8x1xf32>
    %11 = vector.broadcast %10 : vector<8x1xf32> to vector<8x32xf32>
    %12 = arith.subf %6, %11 : vector<8x32xf32>
    %13 = arith.mulf %12, %12 : vector<8x32xf32>
    %cst_8 = arith.constant dense<0.000000e+00> : vector<8xf32>
    %14 = vector.multi_reduction <add>, %13, %cst_8 [1] : vector<8x32xf32> to vector<8xf32>
    %15 = vector.shape_cast %14 : vector<8xf32> to vector<8x1xf32>
    %cst_9 = arith.constant 3.100000e+01 : f32
    %16 = vector.broadcast %cst_9 : f32 to vector<8x1xf32>
    %17 = arith.divf %15, %16 : vector<8x1xf32>
    %18 = math.sqrt %17 : vector<8x1xf32>
    %19 = vector.broadcast %10 : vector<8x1xf32> to vector<8x32xf32>
    %20 = arith.subf %6, %19 : vector<8x32xf32>
    %cst_10 = arith.constant 9.99999997E-7 : f32
    %21 = vector.broadcast %cst_10 : f32 to vector<8x1xf32>
    %22 = arith.addf %18, %21 : vector<8x1xf32>
    %23 = vector.broadcast %22 : vector<8x1xf32> to vector<8x32xf32>
    %24 = arith.divf %20, %23 : vector<8x32xf32>
    %25 = vector.broadcast %3 : vector<1x32xf32> to vector<8x32xf32>
    %26 = arith.mulf %24, %25 : vector<8x32xf32>
    %27 = vector.broadcast %4 : vector<1x32xf32> to vector<8x32xf32>
    %28 = arith.addf %26, %27 : vector<8x32xf32>
    %29 = arith.truncf %28 : vector<8x32xf32> to vector<8x32xbf16>
    %c0_11 = arith.constant 0 : index
    %c0_12 = arith.constant 0 : index
    %c0_13 = arith.constant 0 : index
    %30 = vector.load %arg3[%c0_11, %c0_12, %c0_13] : memref<1x32x32xbf16, #tpu.memory_space<vmem>>, vector<1x32x32xbf16>
    %31 = vector.shape_cast %30 : vector<1x32x32xbf16> to vector<32x32xbf16>
    %cst_14 = arith.constant dense<0.000000e+00> : vector<8x32xf32>
    %32 = tpu.matmul %29, %31, %cst_14 {dimension_numbers = #tpu.dot_dimension_numbers<[1], [0], [0], [1], [0, 0, 1, 1], [], []>} : vector<8x32xbf16>, vector<32x32xbf16>, vector<8x32xf32> -> vector<8x32xf32>
    %c0_15 = arith.constant 0 : index
    %c0_16 = arith.constant 0 : index
    %c0_17 = arith.constant 0 : index
    %33 = vector.load %arg4[%c0_15, %c0_16, %c0_17] : memref<1x1x32xf32, #tpu.memory_space<vmem>>, vector<1x1x32xf32>
    %34 = vector.shape_cast %33 : vector<1x1x32xf32> to vector<1x32xf32>
    %35 = vector.broadcast %34 : vector<1x32xf32> to vector<8x32xf32>
    %36 = arith.addf %32, %35 : vector<8x32xf32>
    %cst_18 = arith.constant 0.353553385 : f32
    %37 = vector.broadcast %cst_18 : f32 to vector<8x32xf32>
    %38 = arith.mulf %36, %37 : vector<8x32xf32>
    %39 = arith.truncf %38 : vector<8x32xf32> to vector<8x32xbf16>
    %c0_19 = arith.constant 0 : index
    %c0_20 = arith.constant 0 : index
    %40 = vector.load %arg20[%c0_19, %c0_20] : memref<8x32xbf16, #tpu.memory_space<vmem>>, vector<8x32xbf16>
    tpu.vector_store %arg20[%c0_19, %c0_20], %39 {strides = array<i32>} : memref<8x32xbf16, #tpu.memory_space<vmem>>, vector<8x32xbf16>,
    %c0_21 = arith.constant 0 : index
    %c0_22 = arith.constant 0 : index
    %c0_23 = arith.constant 0 : index
    %41 = vector.load %arg5[%c0_21, %c0_22, %c0_23] : memref<1x32x32xbf16, #tpu.memory_space<vmem>>, vector<1x32x32xbf16>
    %42 = vector.shape_cast %41 : vector<1x32x32xbf16> to vector<32x32xbf16>
    %cst_24 = arith.constant dense<0.000000e+00> : vector<8x32xf32>
    %43 = tpu.matmul %29, %42, %cst_24 {dimension_numbers = #tpu.dot_dimension_numbers<[1], [0], [0], [1], [0, 0, 1, 1], [], []>} : vector<8x32xbf16>, vector<32x32xbf16>, vector<8x32xf32> -> vector<8x32xf32>
    %c0_25 = arith.constant 0 : index
    %c0_26 = arith.constant 0 : index
    %c0_27 = arith.constant 0 : index
    %44 = vector.load %arg6[%c0_25, %c0_26, %c0_27] : memref<1x1x32xf32, #tpu.memory_space<vmem>>, vector<1x1x32xf32>
    %45 = vector.shape_cast %44 : vector<1x1x32xf32> to vector<1x32xf32>
    %46 = vector.broadcast %45 : vector<1x32xf32> to vector<8x32xf32>
    %47 = arith.addf %43, %46 : vector<8x32xf32>
    %48 = arith.truncf %47 : vector<8x32xf32> to vector<8x32xbf16>
    %c0_28 = arith.constant 0 : index
    %c0_29 = arith.constant 0 : index
    %49 = vector.load %arg21[%c0_28, %c0_29] : memref<8x32xbf16, #tpu.memory_space<vmem>>, vector<8x32xbf16>
    tpu.vector_store %arg21[%c0_28, %c0_29], %48 {strides = array<i32>} : memref<8x32xbf16, #tpu.memory_space<vmem>>, vector<8x32xbf16>,
    %c0_30 = arith.constant 0 : index
    %c0_31 = arith.constant 0 : index
    %c0_32 = arith.constant 0 : index
    %50 = vector.load %arg7[%c0_30, %c0_31, %c0_32] : memref<1x32x32xbf16, #tpu.memory_space<vmem>>, vector<1x32x32xbf16>
    %51 = vector.shape_cast %50 : vector<1x32x32xbf16> to vector<32x32xbf16>
    %cst_33 = arith.constant dense<0.000000e+00> : vector<8x32xf32>
    %52 = tpu.matmul %29, %51, %cst_33 {dimension_numbers = #tpu.dot_dimension_numbers<[1], [0], [0], [1], [0, 0, 1, 1], [], []>} : vector<8x32xbf16>, vector<32x32xbf16>, vector<8x32xf32> -> vector<8x32xf32>
    %c0_34 = arith.constant 0 : index
    %c0_35 = arith.constant 0 : index
    %c0_36 = arith.constant 0 : index
    %53 = vector.load %arg8[%c0_34, %c0_35, %c0_36] : memref<1x1x32xf32, #tpu.memory_space<vmem>>, vector<1x1x32xf32>
    %54 = vector.shape_cast %53 : vector<1x1x32xf32> to vector<1x32xf32>
    %55 = vector.broadcast %54 : vector<1x32xf32> to vector<8x32xf32>
    %56 = arith.addf %52, %55 : vector<8x32xf32>
    %57 = arith.truncf %56 : vector<8x32xf32> to vector<8x32xbf16>
    %c0_37 = arith.constant 0 : index
    %c0_38 = arith.constant 0 : index
    %58 = vector.load %arg22[%c0_37, %c0_38] : memref<8x32xbf16, #tpu.memory_space<vmem>>, vector<8x32xbf16>
    tpu.vector_store %arg22[%c0_37, %c0_38], %57 {strides = array<i32>} : memref<8x32xbf16, #tpu.memory_space<vmem>>, vector<8x32xbf16>,
    %c0_39 = arith.constant 0 : index
    %c0_40 = arith.constant 0 : index
    %59 = vector.load %arg20[%c0_39, %c0_40] : memref<8x32xbf16, #tpu.memory_space<vmem>>, vector<8x8xbf16>
    %60 = vector.shape_cast %59 : vector<8x8xbf16> to vector<1x8x8xbf16>
    %c0_41 = arith.constant 0 : index
    %c0_42 = arith.constant 0 : index
    %61 = vector.load %arg21[%c0_41, %c0_42] : memref<8x32xbf16, #tpu.memory_space<vmem>>, vector<8x8xbf16>
    %62 = vector.shape_cast %61 : vector<8x8xbf16> to vector<1x8x8xbf16>
    %c0_43 = arith.constant 0 : index
    %c0_44 = arith.constant 0 : index
    %63 = vector.load %arg22[%c0_43, %c0_44] : memref<8x32xbf16, #tpu.memory_space<vmem>>, vector<8x8xbf16>
    %64 = vector.shape_cast %63 : vector<8x8xbf16> to vector<1x8x8xbf16>
    "tpu.trace_start"() <{level = 10 : i32, message = "bqd,bkd->bqk"}> : () -> ()
    %cst_45 = arith.constant dense<0.000000e+00> : vector<1x8x8xf32>
    %65 = tpu.matmul %60, %62, %cst_45 {dimension_numbers = #tpu.dot_dimension_numbers<[2], [2], [1], [1], [0, 0, 0, 1, 1, 1], [0], [0]>} : vector<1x8x8xbf16>, vector<1x8x8xbf16>, vector<1x8x8xf32> -> vector<1x8x8xf32>
    "tpu.trace_stop"() : () -> ()
    %cst_46 = arith.constant dense<0xFF800000> : vector<1x8xf32>
    %66 = vector.multi_reduction <maximumf>, %65, %cst_46 [2] : vector<1x8x8xf32> to vector<1x8xf32>
    %67 = vector.shape_cast %66 : vector<1x8xf32> to vector<1x8x1xf32>
    %68 = vector.broadcast %67 : vector<1x8x1xf32> to vector<1x8x8xf32>
    %69 = arith.subf %65, %68 : vector<1x8x8xf32>
    %70 = math.exp %69 : vector<1x8x8xf32>
    %cst_47 = arith.constant dense<0.000000e+00> : vector<1x8xf32>
    %71 = vector.multi_reduction <add>, %70, %cst_47 [2] : vector<1x8x8xf32> to vector<1x8xf32>
    %72 = vector.shape_cast %71 : vector<1x8xf32> to vector<1x8x1xf32>
    %73 = tpu.reciprocal %72 {approx = true} : vector<1x8x1xf32> -> vector<1x8x1xf32>
    %74 = vector.broadcast %73 : vector<1x8x1xf32> to vector<1x8x8xf32>
    %75 = arith.mulf %70, %74 : vector<1x8x8xf32>
    %76 = arith.truncf %75 : vector<1x8x8xf32> to vector<1x8x8xbf16>
    "tpu.trace_start"() <{level = 10 : i32, message = "bqk,bkd->bqd"}> : () -> ()
    %cst_48 = arith.constant dense<0.000000e+00> : vector<1x8x8xf32>
    %77 = tpu.matmul %76, %64, %cst_48 {dimension_numbers = #tpu.dot_dimension_numbers<[2], [1], [1], [2], [0, 0, 0, 1, 1, 2], [0], [0]>} : vector<1x8x8xbf16>, vector<1x8x8xbf16>, vector<1x8x8xf32> -> vector<1x8x8xf32>
    "tpu.trace_stop"() : () -> ()
    %78 = vector.shape_cast %77 : vector<1x8x8xf32> to vector<8x8xf32>
    %79 = arith.truncf %78 : vector<8x8xf32> to vector<8x8xbf16>
    %c0_49 = arith.constant 0 : index
    %c0_50 = arith.constant 0 : index
    %80 = vector.load %arg23[%c0_49, %c0_50] : memref<8x32xbf16, #tpu.memory_space<vmem>>, vector<8x8xbf16>
    tpu.vector_store %arg23[%c0_49, %c0_50], %79 {strides = array<i32>} : memref<8x32xbf16, #tpu.memory_space<vmem>>, vector<8x8xbf16>,
    %c0_51 = arith.constant 0 : index
    %c8 = arith.constant 8 : index
    %81 = vector.load %arg20[%c0_51, %c8] : memref<8x32xbf16, #tpu.memory_space<vmem>>, vector<8x8xbf16>
    %82 = vector.shape_cast %81 : vector<8x8xbf16> to vector<1x8x8xbf16>
    %c0_52 = arith.constant 0 : index
    %c8_53 = arith.constant 8 : index
    %83 = vector.load %arg21[%c0_52, %c8_53] : memref<8x32xbf16, #tpu.memory_space<vmem>>, vector<8x8xbf16>
    %84 = vector.shape_cast %83 : vector<8x8xbf16> to vector<1x8x8xbf16>
    %c0_54 = arith.constant 0 : index
    %c8_55 = arith.constant 8 : index
    %85 = vector.load %arg22[%c0_54, %c8_55] : memref<8x32xbf16, #tpu.memory_space<vmem>>, vector<8x8xbf16>
    %86 = vector.shape_cast %85 : vector<8x8xbf16> to vector<1x8x8xbf16>
    "tpu.trace_start"() <{level = 10 : i32, message = "bqd,bkd->bqk"}> : () -> ()
    %cst_56 = arith.constant dense<0.000000e+00> : vector<1x8x8xf32>
    %87 = tpu.matmul %82, %84, %cst_56 {dimension_numbers = #tpu.dot_dimension_numbers<[2], [2], [1], [1], [0, 0, 0, 1, 1, 1], [0], [0]>} : vector<1x8x8xbf16>, vector<1x8x8xbf16>, vector<1x8x8xf32> -> vector<1x8x8xf32>
    "tpu.trace_stop"() : () -> ()
    %cst_57 = arith.constant dense<0xFF800000> : vector<1x8xf32>
    %88 = vector.multi_reduction <maximumf>, %87, %cst_57 [2] : vector<1x8x8xf32> to vector<1x8xf32>
    %89 = vector.shape_cast %88 : vector<1x8xf32> to vector<1x8x1xf32>
    %90 = vector.broadcast %89 : vector<1x8x1xf32> to vector<1x8x8xf32>
    %91 = arith.subf %87, %90 : vector<1x8x8xf32>
    %92 = math.exp %91 : vector<1x8x8xf32>
    %cst_58 = arith.constant dense<0.000000e+00> : vector<1x8xf32>
    %93 = vector.multi_reduction <add>, %92, %cst_58 [2] : vector<1x8x8xf32> to vector<1x8xf32>
    %94 = vector.shape_cast %93 : vector<1x8xf32> to vector<1x8x1xf32>
    %95 = tpu.reciprocal %94 {approx = true} : vector<1x8x1xf32> -> vector<1x8x1xf32>
    %96 = vector.broadcast %95 : vector<1x8x1xf32> to vector<1x8x8xf32>
    %97 = arith.mulf %92, %96 : vector<1x8x8xf32>
    %98 = arith.truncf %97 : vector<1x8x8xf32> to vector<1x8x8xbf16>
    "tpu.trace_start"() <{level = 10 : i32, message = "bqk,bkd->bqd"}> : () -> ()
    %cst_59 = arith.constant dense<0.000000e+00> : vector<1x8x8xf32>
    %99 = tpu.matmul %98, %86, %cst_59 {dimension_numbers = #tpu.dot_dimension_numbers<[2], [1], [1], [2], [0, 0, 0, 1, 1, 2], [0], [0]>} : vector<1x8x8xbf16>, vector<1x8x8xbf16>, vector<1x8x8xf32> -> vector<1x8x8xf32>
    "tpu.trace_stop"() : () -> ()
    %100 = vector.shape_cast %99 : vector<1x8x8xf32> to vector<8x8xf32>
    %101 = arith.truncf %100 : vector<8x8xf32> to vector<8x8xbf16>
    %c0_60 = arith.constant 0 : index
    %c8_61 = arith.constant 8 : index
    %102 = vector.load %arg23[%c0_60, %c8_61] : memref<8x32xbf16, #tpu.memory_space<vmem>>, vector<8x8xbf16>
    tpu.vector_store %arg23[%c0_60, %c8_61], %101 {strides = array<i32>} : memref<8x32xbf16, #tpu.memory_space<vmem>>, vector<8x8xbf16>,
    %c0_62 = arith.constant 0 : index
    %c16 = arith.constant 16 : index
    %103 = vector.load %arg20[%c0_62, %c16] : memref<8x32xbf16, #tpu.memory_space<vmem>>, vector<8x8xbf16>
    %104 = vector.shape_cast %103 : vector<8x8xbf16> to vector<1x8x8xbf16>
    %c0_63 = arith.constant 0 : index
    %c16_64 = arith.constant 16 : index
    %105 = vector.load %arg21[%c0_63, %c16_64] : memref<8x32xbf16, #tpu.memory_space<vmem>>, vector<8x8xbf16>
    %106 = vector.shape_cast %105 : vector<8x8xbf16> to vector<1x8x8xbf16>
    %c0_65 = arith.constant 0 : index
    %c16_66 = arith.constant 16 : index
    %107 = vector.load %arg22[%c0_65, %c16_66] : memref<8x32xbf16, #tpu.memory_space<vmem>>, vector<8x8xbf16>
    %108 = vector.shape_cast %107 : vector<8x8xbf16> to vector<1x8x8xbf16>
    "tpu.trace_start"() <{level = 10 : i32, message = "bqd,bkd->bqk"}> : () -> ()
    %cst_67 = arith.constant dense<0.000000e+00> : vector<1x8x8xf32>
    %109 = tpu.matmul %104, %106, %cst_67 {dimension_numbers = #tpu.dot_dimension_numbers<[2], [2], [1], [1], [0, 0, 0, 1, 1, 1], [0], [0]>} : vector<1x8x8xbf16>, vector<1x8x8xbf16>, vector<1x8x8xf32> -> vector<1x8x8xf32>
    "tpu.trace_stop"() : () -> ()
    %cst_68 = arith.constant dense<0xFF800000> : vector<1x8xf32>
    %110 = vector.multi_reduction <maximumf>, %109, %cst_68 [2] : vector<1x8x8xf32> to vector<1x8xf32>
    %111 = vector.shape_cast %110 : vector<1x8xf32> to vector<1x8x1xf32>
    %112 = vector.broadcast %111 : vector<1x8x1xf32> to vector<1x8x8xf32>
    %113 = arith.subf %109, %112 : vector<1x8x8xf32>
    %114 = math.exp %113 : vector<1x8x8xf32>
    %cst_69 = arith.constant dense<0.000000e+00> : vector<1x8xf32>
    %115 = vector.multi_reduction <add>, %114, %cst_69 [2] : vector<1x8x8xf32> to vector<1x8xf32>
    %116 = vector.shape_cast %115 : vector<1x8xf32> to vector<1x8x1xf32>
    %117 = tpu.reciprocal %116 {approx = true} : vector<1x8x1xf32> -> vector<1x8x1xf32>
    %118 = vector.broadcast %117 : vector<1x8x1xf32> to vector<1x8x8xf32>
    %119 = arith.mulf %114, %118 : vector<1x8x8xf32>
    %120 = arith.truncf %119 : vector<1x8x8xf32> to vector<1x8x8xbf16>
    "tpu.trace_start"() <{level = 10 : i32, message = "bqk,bkd->bqd"}> : () -> ()
    %cst_70 = arith.constant dense<0.000000e+00> : vector<1x8x8xf32>
    %121 = tpu.matmul %120, %108, %cst_70 {dimension_numbers = #tpu.dot_dimension_numbers<[2], [1], [1], [2], [0, 0, 0, 1, 1, 2], [0], [0]>} : vector<1x8x8xbf16>, vector<1x8x8xbf16>, vector<1x8x8xf32> -> vector<1x8x8xf32>
    "tpu.trace_stop"() : () -> ()
    %122 = vector.shape_cast %121 : vector<1x8x8xf32> to vector<8x8xf32>
    %123 = arith.truncf %122 : vector<8x8xf32> to vector<8x8xbf16>
    %c0_71 = arith.constant 0 : index
    %c16_72 = arith.constant 16 : index
    %124 = vector.load %arg23[%c0_71, %c16_72] : memref<8x32xbf16, #tpu.memory_space<vmem>>, vector<8x8xbf16>
    tpu.vector_store %arg23[%c0_71, %c16_72], %123 {strides = array<i32>} : memref<8x32xbf16, #tpu.memory_space<vmem>>, vector<8x8xbf16>,
    %c0_73 = arith.constant 0 : index
    %c24 = arith.constant 24 : index
    %125 = vector.load %arg20[%c0_73, %c24] : memref<8x32xbf16, #tpu.memory_space<vmem>>, vector<8x8xbf16>
    %126 = vector.shape_cast %125 : vector<8x8xbf16> to vector<1x8x8xbf16>
    %c0_74 = arith.constant 0 : index
    %c24_75 = arith.constant 24 : index
    %127 = vector.load %arg21[%c0_74, %c24_75] : memref<8x32xbf16, #tpu.memory_space<vmem>>, vector<8x8xbf16>
    %128 = vector.shape_cast %127 : vector<8x8xbf16> to vector<1x8x8xbf16>
    %c0_76 = arith.constant 0 : index
    %c24_77 = arith.constant 24 : index
    %129 = vector.load %arg22[%c0_76, %c24_77] : memref<8x32xbf16, #tpu.memory_space<vmem>>, vector<8x8xbf16>
    %130 = vector.shape_cast %129 : vector<8x8xbf16> to vector<1x8x8xbf16>
    "tpu.trace_start"() <{level = 10 : i32, message = "bqd,bkd->bqk"}> : () -> ()
    %cst_78 = arith.constant dense<0.000000e+00> : vector<1x8x8xf32>
    %131 = tpu.matmul %126, %128, %cst_78 {dimension_numbers = #tpu.dot_dimension_numbers<[2], [2], [1], [1], [0, 0, 0, 1, 1, 1], [0], [0]>} : vector<1x8x8xbf16>, vector<1x8x8xbf16>, vector<1x8x8xf32> -> vector<1x8x8xf32>
    "tpu.trace_stop"() : () -> ()
    %cst_79 = arith.constant dense<0xFF800000> : vector<1x8xf32>
    %132 = vector.multi_reduction <maximumf>, %131, %cst_79 [2] : vector<1x8x8xf32> to vector<1x8xf32>
    %133 = vector.shape_cast %132 : vector<1x8xf32> to vector<1x8x1xf32>
    %134 = vector.broadcast %133 : vector<1x8x1xf32> to vector<1x8x8xf32>
    %135 = arith.subf %131, %134 : vector<1x8x8xf32>
    %136 = math.exp %135 : vector<1x8x8xf32>
    %cst_80 = arith.constant dense<0.000000e+00> : vector<1x8xf32>
    %137 = vector.multi_reduction <add>, %136, %cst_80 [2] : vector<1x8x8xf32> to vector<1x8xf32>
    %138 = vector.shape_cast %137 : vector<1x8xf32> to vector<1x8x1xf32>
    %139 = tpu.reciprocal %138 {approx = true} : vector<1x8x1xf32> -> vector<1x8x1xf32>
    %140 = vector.broadcast %139 : vector<1x8x1xf32> to vector<1x8x8xf32>
    %141 = arith.mulf %136, %140 : vector<1x8x8xf32>
    %142 = arith.truncf %141 : vector<1x8x8xf32> to vector<1x8x8xbf16>
    "tpu.trace_start"() <{level = 10 : i32, message = "bqk,bkd->bqd"}> : () -> ()
    %cst_81 = arith.constant dense<0.000000e+00> : vector<1x8x8xf32>
    %143 = tpu.matmul %142, %130, %cst_81 {dimension_numbers = #tpu.dot_dimension_numbers<[2], [1], [1], [2], [0, 0, 0, 1, 1, 2], [0], [0]>} : vector<1x8x8xbf16>, vector<1x8x8xbf16>, vector<1x8x8xf32> -> vector<1x8x8xf32>
    "tpu.trace_stop"() : () -> ()
    %144 = vector.shape_cast %143 : vector<1x8x8xf32> to vector<8x8xf32>
    %145 = arith.truncf %144 : vector<8x8xf32> to vector<8x8xbf16>
    %c0_82 = arith.constant 0 : index
    %c24_83 = arith.constant 24 : index
    %146 = vector.load %arg23[%c0_82, %c24_83] : memref<8x32xbf16, #tpu.memory_space<vmem>>, vector<8x8xbf16>
    tpu.vector_store %arg23[%c0_82, %c24_83], %145 {strides = array<i32>} : memref<8x32xbf16, #tpu.memory_space<vmem>>, vector<8x8xbf16>,
    %c0_84 = arith.constant 0 : index
    %c0_85 = arith.constant 0 : index
    %147 = vector.load %arg23[%c0_84, %c0_85] : memref<8x32xbf16, #tpu.memory_space<vmem>>, vector<8x32xbf16>
    %c0_86 = arith.constant 0 : index
    %c0_87 = arith.constant 0 : index
    %c0_88 = arith.constant 0 : index
    %148 = vector.load %arg9[%c0_86, %c0_87, %c0_88] : memref<1x32x32xbf16, #tpu.memory_space<vmem>>, vector<1x32x32xbf16>
    %149 = vector.shape_cast %148 : vector<1x32x32xbf16> to vector<32x32xbf16>
    %cst_89 = arith.constant dense<0.000000e+00> : vector<8x32xf32>
    %150 = tpu.matmul %147, %149, %cst_89 {dimension_numbers = #tpu.dot_dimension_numbers<[1], [0], [0], [1], [0, 0, 1, 1], [], []>} : vector<8x32xbf16>, vector<32x32xbf16>, vector<8x32xf32> -> vector<8x32xf32>
    %c0_90 = arith.constant 0 : index
    %c0_91 = arith.constant 0 : index
    %c0_92 = arith.constant 0 : index
    %151 = vector.load %arg10[%c0_90, %c0_91, %c0_92] : memref<1x1x32xf32, #tpu.memory_space<vmem>>, vector<1x1x32xf32>
    %152 = vector.shape_cast %151 : vector<1x1x32xf32> to vector<1x32xf32>
    %153 = vector.broadcast %152 : vector<1x32xf32> to vector<8x32xf32>
    %154 = arith.addf %150, %153 : vector<8x32xf32>
    %155 = arith.addf %6, %154 : vector<8x32xf32>
    %c0_93 = arith.constant 0 : index
    %c0_94 = arith.constant 0 : index
    %156 = vector.load %arg13[%c0_93, %c0_94] : memref<1x32xf32, #tpu.memory_space<vmem>>, vector<1x32xf32>
    %c0_95 = arith.constant 0 : index
    %c0_96 = arith.constant 0 : index
    %157 = vector.load %arg14[%c0_95, %c0_96] : memref<1x32xf32, #tpu.memory_space<vmem>>, vector<1x32xf32>
    %cst_97 = arith.constant dense<0.000000e+00> : vector<8xf32>
    %158 = vector.multi_reduction <add>, %155, %cst_97 [1] : vector<8x32xf32> to vector<8xf32>
    %159 = vector.shape_cast %158 : vector<8xf32> to vector<8x1xf32>
    %cst_98 = arith.constant 3.200000e+01 : f32
    %160 = vector.broadcast %cst_98 : f32 to vector<8x1xf32>
    %161 = arith.divf %159, %160 : vector<8x1xf32>
    %162 = vector.broadcast %161 : vector<8x1xf32> to vector<8x32xf32>
    %163 = arith.subf %155, %162 : vector<8x32xf32>
    %164 = arith.mulf %163, %163 : vector<8x32xf32>
    %cst_99 = arith.constant dense<0.000000e+00> : vector<8xf32>
    %165 = vector.multi_reduction <add>, %164, %cst_99 [1] : vector<8x32xf32> to vector<8xf32>
    %166 = vector.shape_cast %165 : vector<8xf32> to vector<8x1xf32>
    %cst_100 = arith.constant 3.100000e+01 : f32
    %167 = vector.broadcast %cst_100 : f32 to vector<8x1xf32>
    %168 = arith.divf %166, %167 : vector<8x1xf32>
    %169 = math.sqrt %168 : vector<8x1xf32>
    %170 = vector.broadcast %161 : vector<8x1xf32> to vector<8x32xf32>
    %171 = arith.subf %155, %170 : vector<8x32xf32>
    %cst_101 = arith.constant 9.99999997E-7 : f32
    %172 = vector.broadcast %cst_101 : f32 to vector<8x1xf32>
    %173 = arith.addf %169, %172 : vector<8x1xf32>
    %174 = vector.broadcast %173 : vector<8x1xf32> to vector<8x32xf32>
    %175 = arith.divf %171, %174 : vector<8x32xf32>
    %176 = vector.broadcast %156 : vector<1x32xf32> to vector<8x32xf32>
    %177 = arith.mulf %175, %176 : vector<8x32xf32>
    %178 = vector.broadcast %157 : vector<1x32xf32> to vector<8x32xf32>
    %179 = arith.addf %177, %178 : vector<8x32xf32>
    %180 = arith.truncf %179 : vector<8x32xf32> to vector<8x32xbf16>
    %cst_102 = arith.constant 0.000000e+00 : f32
    %181 = vector.broadcast %cst_102 : f32 to vector<8x32xf32>
    %c0_103 = arith.constant 0 : index
    %c0_104 = arith.constant 0 : index
    %182 = vector.load %arg15[%c0_103, %c0_104] : memref<32x2048xbf16, #tpu.memory_space<vmem>>, vector<32x512xbf16>
    %cst_105 = arith.constant dense<0.000000e+00> : vector<8x512xf32>
    %183 = tpu.matmul %180, %182, %cst_105 {dimension_numbers = #tpu.dot_dimension_numbers<[1], [0], [0], [1], [0, 0, 1, 1], [], []>} : vector<8x32xbf16>, vector<32x512xbf16>, vector<8x512xf32> -> vector<8x512xf32>
    %c0_106 = arith.constant 0 : index
    %c0_107 = arith.constant 0 : index
    %184 = vector.load %arg16[%c0_106, %c0_107] : memref<1x2048xf32, #tpu.memory_space<vmem>>, vector<1x512xf32>
    %185 = vector.broadcast %184 : vector<1x512xf32> to vector<8x512xf32>
    %186 = arith.addf %183, %185 : vector<8x512xf32>
    %cst_108 = arith.constant 0.000000e+00 : f32
    %187 = vector.broadcast %cst_108 : f32 to vector<8x512xf32>
    %188 = arith.maximumf %186, %187 : vector<8x512xf32>
    %189 = arith.truncf %188 : vector<8x512xf32> to vector<8x512xbf16>
    %c0_109 = arith.constant 0 : index
    %c0_110 = arith.constant 0 : index
    %190 = vector.load %arg17[%c0_109, %c0_110] : memref<2048x32xbf16, #tpu.memory_space<vmem>>, vector<512x32xbf16>
    %cst_111 = arith.constant dense<0.000000e+00> : vector<8x32xf32>
    %191 = tpu.matmul %189, %190, %cst_111 {dimension_numbers = #tpu.dot_dimension_numbers<[1], [0], [0], [1], [0, 0, 1, 1], [], []>} : vector<8x512xbf16>, vector<512x32xbf16>, vector<8x32xf32> -> vector<8x32xf32>
    %192 = arith.addf %181, %191 : vector<8x32xf32>
    %c0_112 = arith.constant 0 : index
    %c512 = arith.constant 512 : index
    %193 = vector.load %arg15[%c0_112, %c512] : memref<32x2048xbf16, #tpu.memory_space<vmem>>, vector<32x512xbf16>
    %cst_113 = arith.constant dense<0.000000e+00> : vector<8x512xf32>
    %194 = tpu.matmul %180, %193, %cst_113 {dimension_numbers = #tpu.dot_dimension_numbers<[1], [0], [0], [1], [0, 0, 1, 1], [], []>} : vector<8x32xbf16>, vector<32x512xbf16>, vector<8x512xf32> -> vector<8x512xf32>
    %c0_114 = arith.constant 0 : index
    %c512_115 = arith.constant 512 : index
    %195 = vector.load %arg16[%c0_114, %c512_115] : memref<1x2048xf32, #tpu.memory_space<vmem>>, vector<1x512xf32>
    %196 = vector.broadcast %195 : vector<1x512xf32> to vector<8x512xf32>
    %197 = arith.addf %194, %196 : vector<8x512xf32>
    %cst_116 = arith.constant 0.000000e+00 : f32
    %198 = vector.broadcast %cst_116 : f32 to vector<8x512xf32>
    %199 = arith.maximumf %197, %198 : vector<8x512xf32>
    %200 = arith.truncf %199 : vector<8x512xf32> to vector<8x512xbf16>
    %c512_117 = arith.constant 512 : index
    %c0_118 = arith.constant 0 : index
    %201 = vector.load %arg17[%c512_117, %c0_118] : memref<2048x32xbf16, #tpu.memory_space<vmem>>, vector<512x32xbf16>
    %cst_119 = arith.constant dense<0.000000e+00> : vector<8x32xf32>
    %202 = tpu.matmul %200, %201, %cst_119 {dimension_numbers = #tpu.dot_dimension_numbers<[1], [0], [0], [1], [0, 0, 1, 1], [], []>} : vector<8x512xbf16>, vector<512x32xbf16>, vector<8x32xf32> -> vector<8x32xf32>
    %203 = arith.addf %192, %202 : vector<8x32xf32>
    %c0_120 = arith.constant 0 : index
    %c1024 = arith.constant 1024 : index
    %204 = vector.load %arg15[%c0_120, %c1024] : memref<32x2048xbf16, #tpu.memory_space<vmem>>, vector<32x512xbf16>
    %cst_121 = arith.constant dense<0.000000e+00> : vector<8x512xf32>
    %205 = tpu.matmul %180, %204, %cst_121 {dimension_numbers = #tpu.dot_dimension_numbers<[1], [0], [0], [1], [0, 0, 1, 1], [], []>} : vector<8x32xbf16>, vector<32x512xbf16>, vector<8x512xf32> -> vector<8x512xf32>
    %c0_122 = arith.constant 0 : index
    %c1024_123 = arith.constant 1024 : index
    %206 = vector.load %arg16[%c0_122, %c1024_123] : memref<1x2048xf32, #tpu.memory_space<vmem>>, vector<1x512xf32>
    %207 = vector.broadcast %206 : vector<1x512xf32> to vector<8x512xf32>
    %208 = arith.addf %205, %207 : vector<8x512xf32>
    %cst_124 = arith.constant 0.000000e+00 : f32
    %209 = vector.broadcast %cst_124 : f32 to vector<8x512xf32>
    %210 = arith.maximumf %208, %209 : vector<8x512xf32>
    %211 = arith.truncf %210 : vector<8x512xf32> to vector<8x512xbf16>
    %c1024_125 = arith.constant 1024 : index
    %c0_126 = arith.constant 0 : index
    %212 = vector.load %arg17[%c1024_125, %c0_126] : memref<2048x32xbf16, #tpu.memory_space<vmem>>, vector<512x32xbf16>
    %cst_127 = arith.constant dense<0.000000e+00> : vector<8x32xf32>
    %213 = tpu.matmul %211, %212, %cst_127 {dimension_numbers = #tpu.dot_dimension_numbers<[1], [0], [0], [1], [0, 0, 1, 1], [], []>} : vector<8x512xbf16>, vector<512x32xbf16>, vector<8x32xf32> -> vector<8x32xf32>
    %214 = arith.addf %203, %213 : vector<8x32xf32>
    %c0_128 = arith.constant 0 : index
    %c1536 = arith.constant 1536 : index
    %215 = vector.load %arg15[%c0_128, %c1536] : memref<32x2048xbf16, #tpu.memory_space<vmem>>, vector<32x512xbf16>
    %cst_129 = arith.constant dense<0.000000e+00> : vector<8x512xf32>
    %216 = tpu.matmul %180, %215, %cst_129 {dimension_numbers = #tpu.dot_dimension_numbers<[1], [0], [0], [1], [0, 0, 1, 1], [], []>} : vector<8x32xbf16>, vector<32x512xbf16>, vector<8x512xf32> -> vector<8x512xf32>
    %c0_130 = arith.constant 0 : index
    %c1536_131 = arith.constant 1536 : index
    %217 = vector.load %arg16[%c0_130, %c1536_131] : memref<1x2048xf32, #tpu.memory_space<vmem>>, vector<1x512xf32>
    %218 = vector.broadcast %217 : vector<1x512xf32> to vector<8x512xf32>
    %219 = arith.addf %216, %218 : vector<8x512xf32>
    %cst_132 = arith.constant 0.000000e+00 : f32
    %220 = vector.broadcast %cst_132 : f32 to vector<8x512xf32>
    %221 = arith.maximumf %219, %220 : vector<8x512xf32>
    %222 = arith.truncf %221 : vector<8x512xf32> to vector<8x512xbf16>
    %c1536_133 = arith.constant 1536 : index
    %c0_134 = arith.constant 0 : index
    %223 = vector.load %arg17[%c1536_133, %c0_134] : memref<2048x32xbf16, #tpu.memory_space<vmem>>, vector<512x32xbf16>
    %cst_135 = arith.constant dense<0.000000e+00> : vector<8x32xf32>
    %224 = tpu.matmul %222, %223, %cst_135 {dimension_numbers = #tpu.dot_dimension_numbers<[1], [0], [0], [1], [0, 0, 1, 1], [], []>} : vector<8x512xbf16>, vector<512x32xbf16>, vector<8x32xf32> -> vector<8x32xf32>
    %225 = arith.addf %214, %224 : vector<8x32xf32>
    %226 = arith.addf %155, %225 : vector<8x32xf32>
    %c0_136 = arith.constant 0 : index
    %c0_137 = arith.constant 0 : index
    %227 = vector.load %arg18[%c0_136, %c0_137] : memref<1x32xf32, #tpu.memory_space<vmem>>, vector<1x32xf32>
    %228 = vector.broadcast %227 : vector<1x32xf32> to vector<8x32xf32>
    %229 = arith.addf %226, %228 : vector<8x32xf32>
    %c1_i32 = arith.constant 1 : i32
    %230 = arith.cmpi eq, %arg1, %c1_i32 : i32
    %231 = arith.extui %230 : i1 to i32
    %c0_i32_138 = arith.constant 0 : i32
    %232 = arith.cmpi ne, %231, %c0_i32_138 : i32
    scf.if %232 {
      %cst_141 = arith.constant dense<0.000000e+00> : vector<8xf32>
      %236 = vector.multi_reduction <add>, %229, %cst_141 [1] : vector<8x32xf32> to vector<8xf32>
      %237 = vector.shape_cast %236 : vector<8xf32> to vector<8x1xf32>
      %cst_142 = arith.constant 3.200000e+01 : f32
      %238 = vector.broadcast %cst_142 : f32 to vector<8x1xf32>
      %239 = arith.divf %237, %238 : vector<8x1xf32>
      %240 = vector.broadcast %239 : vector<8x1xf32> to vector<8x32xf32>
      %241 = arith.subf %229, %240 : vector<8x32xf32>
      %242 = arith.mulf %241, %241 : vector<8x32xf32>
      %cst_143 = arith.constant dense<0.000000e+00> : vector<8xf32>
      %243 = vector.multi_reduction <add>, %242, %cst_143 [1] : vector<8x32xf32> to vector<8xf32>
      %244 = vector.shape_cast %243 : vector<8xf32> to vector<8x1xf32>
      %cst_144 = arith.constant 3.100000e+01 : f32
      %245 = vector.broadcast %cst_144 : f32 to vector<8x1xf32>
      %246 = arith.divf %244, %245 : vector<8x1xf32>
      %247 = math.sqrt %246 : vector<8x1xf32>
      %248 = vector.broadcast %239 : vector<8x1xf32> to vector<8x32xf32>
      %249 = arith.subf %229, %248 : vector<8x32xf32>
      %cst_145 = arith.constant 9.99999997E-7 : f32
      %250 = vector.broadcast %cst_145 : f32 to vector<8x1xf32>
      %251 = arith.addf %247, %250 : vector<8x1xf32>
      %252 = vector.broadcast %251 : vector<8x1xf32> to vector<8x32xf32>
      %253 = arith.divf %249, %252 : vector<8x32xf32>
      %254 = vector.broadcast %3 : vector<1x32xf32> to vector<8x32xf32>
      %255 = arith.mulf %253, %254 : vector<8x32xf32>
      %256 = vector.broadcast %4 : vector<1x32xf32> to vector<8x32xf32>
      %257 = arith.addf %255, %256 : vector<8x32xf32>
      %258 = vector.shape_cast %257 : vector<8x32xf32> to vector<1x8x32xf32>
      %c0_146 = arith.constant 0 : index
      %c0_147 = arith.constant 0 : index
      %c0_148 = arith.constant 0 : index
      %259 = vector.load %arg19[%c0_146, %c0_147, %c0_148] : memref<1x8x32xf32, #tpu.memory_space<vmem>>, vector<1x8x32xf32>
      tpu.vector_store %arg19[%c0_146, %c0_147, %c0_148], %258 {strides = array<i32>} : memref<1x8x32xf32, #tpu.memory_space<vmem>>, vector<1x8x32xf32>,
    } else {
    }
    %c1_i32_139 = arith.constant 1 : i32
    %233 = arith.cmpi ne, %arg1, %c1_i32_139 : i32
    %234 = arith.extui %233 : i1 to i32
    %c0_i32_140 = arith.constant 0 : i32
    %235 = arith.cmpi ne, %234, %c0_i32_140 : i32
    scf.if %235 {
      %236 = vector.shape_cast %229 : vector<8x32xf32> to vector<1x8x32xf32>
      %c0_141 = arith.constant 0 : index
      %c0_142 = arith.constant 0 : index
      %c0_143 = arith.constant 0 : index
      %237 = vector.load %arg19[%c0_141, %c0_142, %c0_143] : memref<1x8x32xf32, #tpu.memory_space<vmem>>, vector<1x8x32xf32>
      tpu.vector_store %arg19[%c0_141, %c0_142, %c0_143], %236 {strides = array<i32>} : memref<1x8x32xf32, #tpu.memory_space<vmem>>, vector<1x8x32xf32>,
    } else {
    }
    return
  }
  func.func @transform_0(%arg0: i32, %arg1: i32) -> (i32, i32, i32) {
    %c0_i32 = arith.constant 0 : i32
    %c0_i32_0 = arith.constant 0 : i32
    %c0_i32_1 = arith.constant 0 : i32
    return %arg0, %c0_i32, %c0_i32_0 : i32, i32, i32
  }
  func.func @transform_1(%arg0: i32, %arg1: i32) -> (i32, i32, i32) {
    %c0_i32 = arith.constant 0 : i32
    %c0_i32_0 = arith.constant 0 : i32
    %c0_i32_1 = arith.constant 0 : i32
    return %arg1, %c0_i32, %c0_i32_0 : i32, i32, i32
  }
  func.func @transform_2(%arg0: i32, %arg1: i32) -> (i32, i32, i32) {
    %c0_i32 = arith.constant 0 : i32
    %c0_i32_0 = arith.constant 0 : i32
    %c0_i32_1 = arith.constant 0 : i32
    return %arg1, %c0_i32, %c0_i32_0 : i32, i32, i32
  }
  func.func @transform_3(%arg0: i32, %arg1: i32) -> (i32, i32, i32) {
    %c0_i32 = arith.constant 0 : i32
    %c0_i32_0 = arith.constant 0 : i32
    %c0_i32_1 = arith.constant 0 : i32
    return %arg1, %c0_i32, %c0_i32_0 : i32, i32, i32
  }
  func.func @transform_4(%arg0: i32, %arg1: i32) -> (i32, i32, i32) {
    %c0_i32 = arith.constant 0 : i32
    %c0_i32_0 = arith.constant 0 : i32
    %c0_i32_1 = arith.constant 0 : i32
    return %arg1, %c0_i32, %c0_i32_0 : i32, i32, i32
  }
  func.func @transform_5(%arg0: i32, %arg1: i32) -> (i32, i32, i32) {
    %c0_i32 = arith.constant 0 : i32
    %c0_i32_0 = arith.constant 0 : i32
    %c0_i32_1 = arith.constant 0 : i32
    return %arg1, %c0_i32, %c0_i32_0 : i32, i32, i32
  }
  func.func @transform_6(%arg0: i32, %arg1: i32) -> (i32, i32, i32) {
    %c0_i32 = arith.constant 0 : i32
    %c0_i32_0 = arith.constant 0 : i32
    %c0_i32_1 = arith.constant 0 : i32
    return %arg1, %c0_i32, %c0_i32_0 : i32, i32, i32
  }
  func.func @transform_7(%arg0: i32, %arg1: i32) -> (i32, i32, i32) {
    %c0_i32 = arith.constant 0 : i32
    %c0_i32_0 = arith.constant 0 : i32
    %c0_i32_1 = arith.constant 0 : i32
    return %arg1, %c0_i32, %c0_i32_0 : i32, i32, i32
  }
  func.func @transform_8(%arg0: i32, %arg1: i32) -> (i32, i32, i32) {
    %c0_i32 = arith.constant 0 : i32
    %c0_i32_0 = arith.constant 0 : i32
    %c0_i32_1 = arith.constant 0 : i32
    return %arg1, %c0_i32, %c0_i32_0 : i32, i32, i32
  }
  func.func @transform_9(%arg0: i32, %arg1: i32) -> (i32, i32) {
    %c0_i32 = arith.constant 0 : i32
    %c0_i32_0 = arith.constant 0 : i32
    %c0_i32_1 = arith.constant 0 : i32
    return %c0_i32, %c0_i32_0 : i32, i32
  }
  func.func @transform_10(%arg0: i32, %arg1: i32) -> (i32, i32) {
    %c0_i32 = arith.constant 0 : i32
    %c0_i32_0 = arith.constant 0 : i32
    %c0_i32_1 = arith.constant 0 : i32
    return %c0_i32, %c0_i32_0 : i32, i32
  }
  func.func @transform_11(%arg0: i32, %arg1: i32) -> (i32, i32) {
    %c0_i32 = arith.constant 0 : i32
    %c0_i32_0 = arith.constant 0 : i32
    %c0_i32_1 = arith.constant 0 : i32
    return %c0_i32, %c0_i32_0 : i32, i32
  }
  func.func @transform_12(%arg0: i32, %arg1: i32) -> (i32, i32) {
    %c0_i32 = arith.constant 0 : i32
    %c0_i32_0 = arith.constant 0 : i32
    %c0_i32_1 = arith.constant 0 : i32
    return %c0_i32, %c0_i32_0 : i32, i32
  }
  func.func @transform_13(%arg0: i32, %arg1: i32) -> (i32, i32) {
    %c0_i32 = arith.constant 0 : i32
    %c0_i32_0 = arith.constant 0 : i32
    %c0_i32_1 = arith.constant 0 : i32
    return %c0_i32, %c0_i32_0 : i32, i32
  }
  func.func @transform_14(%arg0: i32, %arg1: i32) -> (i32, i32) {
    %c0_i32 = arith.constant 0 : i32
    %c0_i32_0 = arith.constant 0 : i32
    %c0_i32_1 = arith.constant 0 : i32
    return %c0_i32, %c0_i32_0 : i32, i32
  }
  func.func @transform_15(%arg0: i32, %arg1: i32) -> (i32, i32) {
    %c0_i32 = arith.constant 0 : i32
    %c0_i32_0 = arith.constant 0 : i32
    %c0_i32_1 = arith.constant 0 : i32
    return %c0_i32, %c0_i32_0 : i32, i32
  }
  func.func @transform_16(%arg0: i32, %arg1: i32) -> (i32, i32) {
    %c0_i32 = arith.constant 0 : i32
    %c0_i32_0 = arith.constant 0 : i32
    %c0_i32_1 = arith.constant 0 : i32
    return %c0_i32, %c0_i32_0 : i32, i32
  }
  func.func @transform_17(%arg0: i32, %arg1: i32) -> (i32, i32, i32) {
    %c0_i32 = arith.constant 0 : i32
    %c0_i32_0 = arith.constant 0 : i32
    %c0_i32_1 = arith.constant 0 : i32
    return %arg0, %c0_i32, %c0_i32_0 : i32, i32, i32
  }
}

</mosaic_0001>

<llo_original>
// kernel: tpu_custom_call.1
$region0: #{tpu_custom_call.1}
  #allocation0 [shape = 'u32[]', space=smem, size = 0x4, offset = 0x4, fixed_abs, tag = 'smem constant byte address 0x4 - core index']
  #allocation1 [shape = 'u32[72,128]{1,0:T(1,128)}', space=vmem, size = 0x9000, scoped, tag = 'internal scratch']
  #allocation2 [shape = 'bf16[8,32]{1,0:T(8,128)(2,1)}', space=vmem, size = 0x800, scoped, tag = 'scratch operand']
  #allocation3 [shape = 'bf16[8,32]{1,0:T(8,128)(2,1)}', space=vmem, size = 0x800, scoped, tag = 'scratch operand']
  #allocation4 [shape = 'bf16[8,32]{1,0:T(8,128)(2,1)}', space=vmem, size = 0x800, scoped, tag = 'scratch operand']
  #allocation5 [shape = 'bf16[8,32]{1,0:T(8,128)(2,1)}', space=vmem, size = 0x800, scoped, tag = 'scratch operand']
  %s0 = inlined_call_operand.vmem [shape: f32[2,8,32], index: 0, kind: input, shape index: {}]
  %s1 = inlined_call_operand.vmem [shape: bf16[2,32,32], index: 1, kind: input, shape index: {}]
  %s2 = inlined_call_operand.vmem [shape: f32[2,1,32], index: 2, kind: input, shape index: {}]
  %s3 = inlined_call_operand.vmem [shape: bf16[2,32,32], index: 3, kind: input, shape index: {}]
  %s4 = inlined_call_operand.vmem [shape: f32[2,1,32], index: 4, kind: input, shape index: {}]
  %s5 = inlined_call_operand.vmem [shape: bf16[2,32,32], index: 5, kind: input, shape index: {}]
  %s6 = inlined_call_operand.vmem [shape: f32[2,1,32], index: 6, kind: input, shape index: {}]
  %s7 = inlined_call_operand.vmem [shape: bf16[2,32,32], index: 7, kind: input, shape index: {}]
  %s8 = inlined_call_operand.vmem [shape: f32[2,1,32], index: 8, kind: input, shape index: {}]
  %s9 = inlined_call_operand.vmem [shape: f32[1,32], index: 9, kind: input, shape index: {}]
  %s10 = inlined_call_operand.vmem [shape: f32[1,32], index: 10, kind: input, shape index: {}]
  %s11 = inlined_call_operand.vmem [shape: f32[1,32], index: 11, kind: input, shape index: {}]
  %s12 = inlined_call_operand.vmem [shape: f32[1,32], index: 12, kind: input, shape index: {}]
  %s13 = inlined_call_operand.vmem [shape: bf16[32,2048], index: 13, kind: input, shape index: {}]
  %s14 = inlined_call_operand.vmem [shape: f32[1,2048], index: 14, kind: input, shape index: {}]
  %s15 = inlined_call_operand.vmem [shape: bf16[2048,32], index: 15, kind: input, shape index: {}]
  %s16 = inlined_call_operand.vmem [shape: f32[1,32], index: 16, kind: input, shape index: {}]
  %s17 = inlined_call_operand.hbm [shape: f32[2,8,32], index: 17, kind: output, shape index: {}]
  %s18 = sld [smem:[#allocation0]]
  $region113: #{tpu_custom_call.1} parent=0
    _
  %s20 = ssub.s32 1, %s18
  %s21 = scalar_select 0, %s20, %s18
  $region1: #{tpu_custom_call.1} parent=0
    #allocation6 [shape = 'u8[4096]{0}', space=vmem, size = 0x1000, scoped, tag = 'output window, operand 0, single buffered']
    #allocation7 [shape = 's32[2]{0}', space=sflag, size = 0x8, scoped, tag = 'scoped memory for tpu_custom_call.1']
    %22 = vsyncpa [#allocation7], 0
    loop: start=0, step=1, limit=6
    $region2: #{tpu_custom_call.1} parent=1 // loop_pre_header
      _
    $region3: #{tpu_custom_call.1} parent=1 // loop_header
      %s24 = sphi 0, %s28
      %p25 = scmp.ge.s32.totalorder %s24, 6
      %s31 = sphi 0, %s43
      %s32 = sphi 0, %s39
      %s33 = sphi 0, %s31
      %s34 = sphi 0, %s32
      %s35 = sphi 0, %s33
      %s36 = sphi 0, %s34
      %s46 = sphi 0, %s48
      %s49 = sphi 0, %s46
      %s50 = sphi 0, %s49
      %s66 = sphi 0, %s50
      %s72 = sphi 0, %s74
      %s75 = sphi 0, %s72
      %s76 = sphi 0, %s75
      %s92 = sphi 0, %s76
      %s98 = sphi 0, %s100
      %s101 = sphi 0, %s98
      %s102 = sphi 0, %s101
      %s118 = sphi 0, %s102
      %s124 = sphi 0, %s126
      %s127 = sphi 0, %s124
      %s128 = sphi 0, %s127
      %s144 = sphi 0, %s128
      %s150 = sphi 0, %s152
      %s153 = sphi 0, %s150
      %s154 = sphi 0, %s153
      %s170 = sphi 0, %s154
      %s176 = sphi 0, %s178
      %s179 = sphi 0, %s176
      %s180 = sphi 0, %s179
      %s196 = sphi 0, %s180
      %s202 = sphi 0, %s204
      %s205 = sphi 0, %s202
      %s206 = sphi 0, %s205
      %s222 = sphi 0, %s206
      %s228 = sphi 0, %s230
      %s231 = sphi 0, %s228
      %s232 = sphi 0, %s231
      %s248 = sphi 0, %s232
      %s254 = sphi 0, %s256
      %s257 = sphi 0, %s254
      %s258 = sphi 0, %s257
      %s274 = sphi 0, %s258
      %s278 = sphi 0, %s278
      %s280 = sphi 0, %s278
      %s281 = sphi 0, %s280
      %s295 = sphi 0, %s281
      %s299 = sphi 0, %s299
      %s301 = sphi 0, %s299
      %s302 = sphi 0, %s301
      %s316 = sphi 0, %s302
      %s320 = sphi 0, %s320
      %s322 = sphi 0, %s320
      %s323 = sphi 0, %s322
      %s337 = sphi 0, %s323
      %s341 = sphi 0, %s341
      %s343 = sphi 0, %s341
      %s344 = sphi 0, %s343
      %s358 = sphi 0, %s344
      %s362 = sphi 0, %s362
      %s364 = sphi 0, %s362
      %s365 = sphi 0, %s364
      %s379 = sphi 0, %s365
      %s383 = sphi 0, %s383
      %s385 = sphi 0, %s383
      %s386 = sphi 0, %s385
      %s400 = sphi 0, %s386
      %s404 = sphi 0, %s404
      %s406 = sphi 0, %s404
      %s407 = sphi 0, %s406
      %s421 = sphi 0, %s407
      %s425 = sphi 0, %s425
      %s427 = sphi 0, %s425
      %s428 = sphi 0, %s427
      %s442 = sphi 0, %s428
      %s448 = sphi 0, %s450
      %s451 = sphi 0, %s448
      %s452 = sphi 0, %s451
      %s468 = sphi 0, %s452
    $region4: #{tpu_custom_call.1} parent=1 // loop_header_branch
      %27 = sbr.rel (%p25) target = $region8
    $region5: #{tpu_custom_call.1} parent=1 // loop_body
      %s29 = ssub.s32 %s24, 1
      %s30 = ssub.s32 %s24, 2
      %s37 = sadd.s32 1, %s32
      %p38 = scmp.ge.s32.totalorder %s37, 2
      %s39 = scalar_select %p38, 0, %s37
      %s40 = sadd.s32 1, %s31
      %s41 = scalar_select %p38, %s40, %s31
      %p42 = scmp.ge.s32.totalorder %s41, 2
      %s43 = scalar_select %p42, 0, %s41
      %s44 = ssub.s32 %s31, %s43
      %p45 = scmp.eq.s32.totalorder %s44, 0
      %s47 = sadd.s32 %s46, 1
      %s48 = scalar_select %p45, %s46, %s47
      %p51 = pneg %p45
      %p52 = scmp.eq.s32.totalorder %s24, 3
      %p53 = por %p51, %p52
      %p54 = scmp.ne.s32.totalorder %s46, %s49
      %p55 = scmp.eq.s32.totalorder %s24, 0
      %p56 = por %p54, %p55
      %p57 = scmp.ne.s32.totalorder %s46, %s49
      %p58 = scmp.eq.s32.totalorder %s29, 3
      %p59 = por %p57, %p58
      %p60 = scmp.ne.s32.totalorder %s49, %s50
      %p61 = scmp.eq.s32.totalorder %s29, 0
      %p62 = por %p60, %p61
      %p63 = scmp.ne.s32.totalorder %s49, %s50
      %p64 = scmp.eq.s32.totalorder %s30, 3
      %p65 = por %p63, %p64
      %p67 = scmp.ne.s32.totalorder %s50, %s66
      %p68 = scmp.eq.s32.totalorder %s30, 0
      %p69 = por %p67, %p68
      %s70 = ssub.s32 %s32, %s39
      %p71 = scmp.eq.s32.totalorder %s70, 0
      %s73 = sadd.s32 %s72, 1
      %s74 = scalar_select %p71, %s72, %s73
      %p77 = pneg %p71
      %p78 = scmp.eq.s32.totalorder %s24, 3
      %p79 = por %p77, %p78
      %p80 = scmp.ne.s32.totalorder %s72, %s75
      %p81 = scmp.eq.s32.totalorder %s24, 0
      %p82 = por %p80, %p81
      %p83 = scmp.ne.s32.totalorder %s72, %s75
      %p84 = scmp.eq.s32.totalorder %s29, 3
      %p85 = por %p83, %p84
      %p86 = scmp.ne.s32.totalorder %s75, %s76
      %p87 = scmp.eq.s32.totalorder %s29, 0
      %p88 = por %p86, %p87
      %p89 = scmp.ne.s32.totalorder %s75, %s76
      %p90 = scmp.eq.s32.totalorder %s30, 3
      %p91 = por %p89, %p90
      %p93 = scmp.ne.s32.totalorder %s76, %s92
      %p94 = scmp.eq.s32.totalorder %s30, 0
      %p95 = por %p93, %p94
      %s96 = ssub.s32 %s32, %s39
      %p97 = scmp.eq.s32.totalorder %s96, 0
      %s99 = sadd.s32 %s98, 1
      %s100 = scalar_select %p97, %s98, %s99
      %p103 = pneg %p97
      %p104 = scmp.eq.s32.totalorder %s24, 3
      %p105 = por %p103, %p104
      %p106 = scmp.ne.s32.totalorder %s98, %s101
      %p107 = scmp.eq.s32.totalorder %s24, 0
      %p108 = por %p106, %p107
      %p109 = scmp.ne.s32.totalorder %s98, %s101
      %p110 = scmp.eq.s32.totalorder %s29, 3
      %p111 = por %p109, %p110
      %p112 = scmp.ne.s32.totalorder %s101, %s102
      %p113 = scmp.eq.s32.totalorder %s29, 0
      %p114 = por %p112, %p113
      %p115 = scmp.ne.s32.totalorder %s101, %s102
      %p116 = scmp.eq.s32.totalorder %s30, 3
      %p117 = por %p115, %p116
      %p119 = scmp.ne.s32.totalorder %s102, %s118
      %p120 = scmp.eq.s32.totalorder %s30, 0
      %p121 = por %p119, %p120
      %s122 = ssub.s32 %s32, %s39
      %p123 = scmp.eq.s32.totalorder %s122, 0
      %s125 = sadd.s32 %s124, 1
      %s126 = scalar_select %p123, %s124, %s125
      %p129 = pneg %p123
      %p130 = scmp.eq.s32.totalorder %s24, 3
      %p131 = por %p129, %p130
      %p132 = scmp.ne.s32.totalorder %s124, %s127
      %p133 = scmp.eq.s32.totalorder %s24, 0
      %p134 = por %p132, %p133
      %p135 = scmp.ne.s32.totalorder %s124, %s127
      %p136 = scmp.eq.s32.totalorder %s29, 3
      %p137 = por %p135, %p136
      %p138 = scmp.ne.s32.totalorder %s127, %s128
      %p139 = scmp.eq.s32.totalorder %s29, 0
      %p140 = por %p138, %p139
      %p141 = scmp.ne.s32.totalorder %s127, %s128
      %p142 = scmp.eq.s32.totalorder %s30, 3
      %p143 = por %p141, %p142
      %p145 = scmp.ne.s32.totalorder %s128, %s144
      %p146 = scmp.eq.s32.totalorder %s30, 0
      %p147 = por %p145, %p146
      %s148 = ssub.s32 %s32, %s39
      %p149 = scmp.eq.s32.totalorder %s148, 0
      %s151 = sadd.s32 %s150, 1
      %s152 = scalar_select %p149, %s150, %s151
      %p155 = pneg %p149
      %p156 = scmp.eq.s32.totalorder %s24, 3
      %p157 = por %p155, %p156
      %p158 = scmp.ne.s32.totalorder %s150, %s153
      %p159 = scmp.eq.s32.totalorder %s24, 0
      %p160 = por %p158, %p159
      %p161 = scmp.ne.s32.totalorder %s150, %s153
      %p162 = scmp.eq.s32.totalorder %s29, 3
      %p163 = por %p161, %p162
      %p164 = scmp.ne.s32.totalorder %s153, %s154
      %p165 = scmp.eq.s32.totalorder %s29, 0
      %p166 = por %p164, %p165
      %p167 = scmp.ne.s32.totalorder %s153, %s154
      %p168 = scmp.eq.s32.totalorder %s30, 3
      %p169 = por %p167, %p168
      %p171 = scmp.ne.s32.totalorder %s154, %s170
      %p172 = scmp.eq.s32.totalorder %s30, 0
      %p173 = por %p171, %p172
      %s174 = ssub.s32 %s32, %s39
      %p175 = scmp.eq.s32.totalorder %s174, 0
      %s177 = sadd.s32 %s176, 1
      %s178 = scalar_select %p175, %s176, %s177
      %p181 = pneg %p175
      %p182 = scmp.eq.s32.totalorder %s24, 3
      %p183 = por %p181, %p182
      %p184 = scmp.ne.s32.totalorder %s176, %s179
      %p185 = scmp.eq.s32.totalorder %s24, 0
      %p186 = por %p184, %p185
      %p187 = scmp.ne.s32.totalorder %s176, %s179
      %p188 = scmp.eq.s32.totalorder %s29, 3
      %p189 = por %p187, %p188
      %p190 = scmp.ne.s32.totalorder %s179, %s180
      %p191 = scmp.eq.s32.totalorder %s29, 0
      %p192 = por %p190, %p191
      %p193 = scmp.ne.s32.totalorder %s179, %s180
      %p194 = scmp.eq.s32.totalorder %s30, 3
      %p195 = por %p193, %p194
      %p197 = scmp.ne.s32.totalorder %s180, %s196
      %p198 = scmp.eq.s32.totalorder %s30, 0
      %p199 = por %p197, %p198
      %s200 = ssub.s32 %s32, %s39
      %p201 = scmp.eq.s32.totalorder %s200, 0
      %s203 = sadd.s32 %s202, 1
      %s204 = scalar_select %p201, %s202, %s203
      %p207 = pneg %p201
      %p208 = scmp.eq.s32.totalorder %s24, 3
      %p209 = por %p207, %p208
      %p210 = scmp.ne.s32.totalorder %s202, %s205
      %p211 = scmp.eq.s32.totalorder %s24, 0
      %p212 = por %p210, %p211
      %p213 = scmp.ne.s32.totalorder %s202, %s205
      %p214 = scmp.eq.s32.totalorder %s29, 3
      %p215 = por %p213, %p214
      %p216 = scmp.ne.s32.totalorder %s205, %s206
      %p217 = scmp.eq.s32.totalorder %s29, 0
      %p218 = por %p216, %p217
      %p219 = scmp.ne.s32.totalorder %s205, %s206
      %p220 = scmp.eq.s32.totalorder %s30, 3
      %p221 = por %p219, %p220
      %p223 = scmp.ne.s32.totalorder %s206, %s222
      %p224 = scmp.eq.s32.totalorder %s30, 0
      %p225 = por %p223, %p224
      %s226 = ssub.s32 %s32, %s39
      %p227 = scmp.eq.s32.totalorder %s226, 0
      %s229 = sadd.s32 %s228, 1
      %s230 = scalar_select %p227, %s228, %s229
      %p233 = pneg %p227
      %p234 = scmp.eq.s32.totalorder %s24, 3
      %p235 = por %p233, %p234
      %p236 = scmp.ne.s32.totalorder %s228, %s231
      %p237 = scmp.eq.s32.totalorder %s24, 0
      %p238 = por %p236, %p237
      %p239 = scmp.ne.s32.totalorder %s228, %s231
      %p240 = scmp.eq.s32.totalorder %s29, 3
      %p241 = por %p239, %p240
      %p242 = scmp.ne.s32.totalorder %s231, %s232
      %p243 = scmp.eq.s32.totalorder %s29, 0
      %p244 = por %p242, %p243
      %p245 = scmp.ne.s32.totalorder %s231, %s232
      %p246 = scmp.eq.s32.totalorder %s30, 3
      %p247 = por %p245, %p246
      %p249 = scmp.ne.s32.totalorder %s232, %s248
      %p250 = scmp.eq.s32.totalorder %s30, 0
      %p251 = por %p249, %p250
      %s252 = ssub.s32 %s32, %s39
      %p253 = scmp.eq.s32.totalorder %s252, 0
      %s255 = sadd.s32 %s254, 1
      %s256 = scalar_select %p253, %s254, %s255
      %p259 = pneg %p253
      %p260 = scmp.eq.s32.totalorder %s24, 3
      %p261 = por %p259, %p260
      %p262 = scmp.ne.s32.totalorder %s254, %s257
      %p263 = scmp.eq.s32.totalorder %s24, 0
      %p264 = por %p262, %p263
      %p265 = scmp.ne.s32.totalorder %s254, %s257
      %p266 = scmp.eq.s32.totalorder %s29, 3
      %p267 = por %p265, %p266
      %p268 = scmp.ne.s32.totalorder %s257, %s258
      %p269 = scmp.eq.s32.totalorder %s29, 0
      %p270 = por %p268, %p269
      %p271 = scmp.ne.s32.totalorder %s257, %s258
      %p272 = scmp.eq.s32.totalorder %s30, 3
      %p273 = por %p271, %p272
      %p275 = scmp.ne.s32.totalorder %s258, %s274
      %p276 = scmp.eq.s32.totalorder %s30, 0
      %p277 = por %p275, %p276
      %s279 = sadd.s32 %s278, 1
      %p282 = scmp.eq.s32.totalorder %s24, 3
      %p283 = scmp.ne.s32.totalorder %s278, %s280
      %p284 = scmp.eq.s32.totalorder %s24, 0
      %p285 = por %p283, %p284
      %p286 = scmp.ne.s32.totalorder %s278, %s280
      %p287 = scmp.eq.s32.totalorder %s29, 3
      %p288 = por %p286, %p287
      %p289 = scmp.ne.s32.totalorder %s280, %s281
      %p290 = scmp.eq.s32.totalorder %s29, 0
      %p291 = por %p289, %p290
      %p292 = scmp.ne.s32.totalorder %s280, %s281
      %p293 = scmp.eq.s32.totalorder %s30, 3
      %p294 = por %p292, %p293
      %p296 = scmp.ne.s32.totalorder %s281, %s295
      %p297 = scmp.eq.s32.totalorder %s30, 0
      %p298 = por %p296, %p297
      %s300 = sadd.s32 %s299, 1
      %p303 = scmp.eq.s32.totalorder %s24, 3
      %p304 = scmp.ne.s32.totalorder %s299, %s301
      %p305 = scmp.eq.s32.totalorder %s24, 0
      %p306 = por %p304, %p305
      %p307 = scmp.ne.s32.totalorder %s299, %s301
      %p308 = scmp.eq.s32.totalorder %s29, 3
      %p309 = por %p307, %p308
      %p310 = scmp.ne.s32.totalorder %s301, %s302
      %p311 = scmp.eq.s32.totalorder %s29, 0
      %p312 = por %p310, %p311
      %p313 = scmp.ne.s32.totalorder %s301, %s302
      %p314 = scmp.eq.s32.totalorder %s30, 3
      %p315 = por %p313, %p314
      %p317 = scmp.ne.s32.totalorder %s302, %s316
      %p318 = scmp.eq.s32.totalorder %s30, 0
      %p319 = por %p317, %p318
      %s321 = sadd.s32 %s320, 1
      %p324 = scmp.eq.s32.totalorder %s24, 3
      %p325 = scmp.ne.s32.totalorder %s320, %s322
      %p326 = scmp.eq.s32.totalorder %s24, 0
      %p327 = por %p325, %p326
      %p328 = scmp.ne.s32.totalorder %s320, %s322
      %p329 = scmp.eq.s32.totalorder %s29, 3
      %p330 = por %p328, %p329
      %p331 = scmp.ne.s32.totalorder %s322, %s323
      %p332 = scmp.eq.s32.totalorder %s29, 0
      %p333 = por %p331, %p332
      %p334 = scmp.ne.s32.totalorder %s322, %s323
      %p335 = scmp.eq.s32.totalorder %s30, 3
      %p336 = por %p334, %p335
      %p338 = scmp.ne.s32.totalorder %s323, %s337
      %p339 = scmp.eq.s32.totalorder %s30, 0
      %p340 = por %p338, %p339
      %s342 = sadd.s32 %s341, 1
      %p345 = scmp.eq.s32.totalorder %s24, 3
      %p346 = scmp.ne.s32.totalorder %s341, %s343
      %p347 = scmp.eq.s32.totalorder %s24, 0
      %p348 = por %p346, %p347
      %p349 = scmp.ne.s32.totalorder %s341, %s343
      %p350 = scmp.eq.s32.totalorder %s29, 3
      %p351 = por %p349, %p350
      %p352 = scmp.ne.s32.totalorder %s343, %s344
      %p353 = scmp.eq.s32.totalorder %s29, 0
      %p354 = por %p352, %p353
      %p355 = scmp.ne.s32.totalorder %s343, %s344
      %p356 = scmp.eq.s32.totalorder %s30, 3
      %p357 = por %p355, %p356
      %p359 = scmp.ne.s32.totalorder %s344, %s358
      %p360 = scmp.eq.s32.totalorder %s30, 0
      %p361 = por %p359, %p360
      %s363 = sadd.s32 %s362, 1
      %p366 = scmp.eq.s32.totalorder %s24, 3
      %p367 = scmp.ne.s32.totalorder %s362, %s364
      %p368 = scmp.eq.s32.totalorder %s24, 0
      %p369 = por %p367, %p368
      %p370 = scmp.ne.s32.totalorder %s362, %s364
      %p371 = scmp.eq.s32.totalorder %s29, 3
      %p372 = por %p370, %p371
      %p373 = scmp.ne.s32.totalorder %s364, %s365
      %p374 = scmp.eq.s32.totalorder %s29, 0
      %p375 = por %p373, %p374
      %p376 = scmp.ne.s32.totalorder %s364, %s365
      %p377 = scmp.eq.s32.totalorder %s30, 3
      %p378 = por %p376, %p377
      %p380 = scmp.ne.s32.totalorder %s365, %s379
      %p381 = scmp.eq.s32.totalorder %s30, 0
      %p382 = por %p380, %p381
      %s384 = sadd.s32 %s383, 1
      %p387 = scmp.eq.s32.totalorder %s24, 3
      %p388 = scmp.ne.s32.totalorder %s383, %s385
      %p389 = scmp.eq.s32.totalorder %s24, 0
      %p390 = por %p388, %p389
      %p391 = scmp.ne.s32.totalorder %s383, %s385
      %p392 = scmp.eq.s32.totalorder %s29, 3
      %p393 = por %p391, %p392
      %p394 = scmp.ne.s32.totalorder %s385, %s386
      %p395 = scmp.eq.s32.totalorder %s29, 0
      %p396 = por %p394, %p395
      %p397 = scmp.ne.s32.totalorder %s385, %s386
      %p398 = scmp.eq.s32.totalorder %s30, 3
      %p399 = por %p397, %p398
      %p401 = scmp.ne.s32.totalorder %s386, %s400
      %p402 = scmp.eq.s32.totalorder %s30, 0
      %p403 = por %p401, %p402
      %s405 = sadd.s32 %s404, 1
      %p408 = scmp.eq.s32.totalorder %s24, 3
      %p409 = scmp.ne.s32.totalorder %s404, %s406
      %p410 = scmp.eq.s32.totalorder %s24, 0
      %p411 = por %p409, %p410
      %p412 = scmp.ne.s32.totalorder %s404, %s406
      %p413 = scmp.eq.s32.totalorder %s29, 3
      %p414 = por %p412, %p413
      %p415 = scmp.ne.s32.totalorder %s406, %s407
      %p416 = scmp.eq.s32.totalorder %s29, 0
      %p417 = por %p415, %p416
      %p418 = scmp.ne.s32.totalorder %s406, %s407
      %p419 = scmp.eq.s32.totalorder %s30, 3
      %p420 = por %p418, %p419
      %p422 = scmp.ne.s32.totalorder %s407, %s421
      %p423 = scmp.eq.s32.totalorder %s30, 0
      %p424 = por %p422, %p423
      %s426 = sadd.s32 %s425, 1
      %p429 = scmp.eq.s32.totalorder %s24, 3
      %p430 = scmp.ne.s32.totalorder %s425, %s427
      %p431 = scmp.eq.s32.totalorder %s24, 0
      %p432 = por %p430, %p431
      %p433 = scmp.ne.s32.totalorder %s425, %s427
      %p434 = scmp.eq.s32.totalorder %s29, 3
      %p435 = por %p433, %p434
      %p436 = scmp.ne.s32.totalorder %s427, %s428
      %p437 = scmp.eq.s32.totalorder %s29, 0
      %p438 = por %p436, %p437
      %p439 = scmp.ne.s32.totalorder %s427, %s428
      %p440 = scmp.eq.s32.totalorder %s30, 3
      %p441 = por %p439, %p440
      %p443 = scmp.ne.s32.totalorder %s428, %s442
      %p444 = scmp.eq.s32.totalorder %s30, 0
      %p445 = por %p443, %p444
      %s446 = ssub.s32 %s31, %s43
      %p447 = scmp.eq.s32.totalorder %s446, 0
      %s449 = sadd.s32 %s448, 1
      %s450 = scalar_select %p447, %s448, %s449
      %p453 = pneg %p447
      %p454 = scmp.eq.s32.totalorder %s24, 3
      %p455 = por %p453, %p454
      %p456 = scmp.ne.s32.totalorder %s448, %s451
      %p457 = scmp.eq.s32.totalorder %s24, 0
      %p458 = por %p456, %p457
      %p459 = scmp.ne.s32.totalorder %s448, %s451
      %p460 = scmp.eq.s32.totalorder %s29, 3
      %p461 = por %p459, %p460
      %p462 = scmp.ne.s32.totalorder %s451, %s452
      %p463 = scmp.eq.s32.totalorder %s29, 0
      %p464 = por %p462, %p463
      %p465 = scmp.ne.s32.totalorder %s451, %s452
      %p466 = scmp.eq.s32.totalorder %s30, 3
      %p467 = por %p465, %p466
      %p469 = scmp.ne.s32.totalorder %s452, %s468
      %p470 = scmp.eq.s32.totalorder %s30, 0
      %p471 = por %p469, %p470
      %p472 = scmp.le.s32.totalorder 1, %s24
      %p473 = scmp.lt.s32.totalorder %s24, 5
      %p474 = pnand %p472, %p473
      %p475 = pneg %p474
      // Predicated region
      $region9: #{tpu_custom_call.1} parent=5 // pred_check
        _
      $region10: #{tpu_custom_call.1} parent=5 // pred_check_branch
        %477 = sbr.rel (%p474) target = $region12
      $region11: #{tpu_custom_call.1} parent=5 // pred_region
        %s478 = ssub.s32 %s24, 1
        // Predicated region
        $region13: #{tpu_custom_call.1} parent=11 // pred_check
          %p479 = pneg %p62
        $region14: #{tpu_custom_call.1} parent=11 // pred_check_branch
          %481 = sbr.rel (%p479) target = $region16
        $region15: #{tpu_custom_call.1} parent=11 // pred_region
          %p482 = scmp.lt.s32.totalorder %s33, 1
          %s483 = scalar_select %p482, %s33, 1
          %s484 = smul.addr %s483, 8
          %s485 = scalar_lea.vmem %s0, %s484
        $region16: #{tpu_custom_call.1} parent=11 // pred_fallthru
          _
        // Predicated region
        $region17: #{tpu_custom_call.1} parent=11 // pred_check
          %p486 = pneg %p291
        $region18: #{tpu_custom_call.1} parent=11 // pred_check_branch
          %488 = sbr.rel (%p486) target = $region20
        $region19: #{tpu_custom_call.1} parent=11 // pred_region
          _
        $region20: #{tpu_custom_call.1} parent=11 // pred_fallthru
          _
        // Predicated region
        $region21: #{tpu_custom_call.1} parent=11 // pred_check
          %p489 = pneg %p312
        $region22: #{tpu_custom_call.1} parent=11 // pred_check_branch
          %491 = sbr.rel (%p489) target = $region24
        $region23: #{tpu_custom_call.1} parent=11 // pred_region
          _
        $region24: #{tpu_custom_call.1} parent=11 // pred_fallthru
          _
        // Predicated region
        $region25: #{tpu_custom_call.1} parent=11 // pred_check
          %p492 = pneg %p333
        $region26: #{tpu_custom_call.1} parent=11 // pred_check_branch
          %494 = sbr.rel (%p492) target = $region28
        $region27: #{tpu_custom_call.1} parent=11 // pred_region
          _
        $region28: #{tpu_custom_call.1} parent=11 // pred_fallthru
          _
        // Predicated region
        $region29: #{tpu_custom_call.1} parent=11 // pred_check
          %p495 = pneg %p354
        $region30: #{tpu_custom_call.1} parent=11 // pred_check_branch
          %497 = sbr.rel (%p495) target = $region32
        $region31: #{tpu_custom_call.1} parent=11 // pred_region
          _
        $region32: #{tpu_custom_call.1} parent=11 // pred_fallthru
          _
        // Predicated region
        $region33: #{tpu_custom_call.1} parent=11 // pred_check
          %p498 = pneg %p375
        $region34: #{tpu_custom_call.1} parent=11 // pred_check_branch
          %500 = sbr.rel (%p498) target = $region36
        $region35: #{tpu_custom_call.1} parent=11 // pred_region
          _
        $region36: #{tpu_custom_call.1} parent=11 // pred_fallthru
          _
        // Predicated region
        $region37: #{tpu_custom_call.1} parent=11 // pred_check
          %p501 = pneg %p396
        $region38: #{tpu_custom_call.1} parent=11 // pred_check_branch
          %503 = sbr.rel (%p501) target = $region40
        $region39: #{tpu_custom_call.1} parent=11 // pred_region
          _
        $region40: #{tpu_custom_call.1} parent=11 // pred_fallthru
          _
        // Predicated region
        $region41: #{tpu_custom_call.1} parent=11 // pred_check
          %p504 = pneg %p417
        $region42: #{tpu_custom_call.1} parent=11 // pred_check_branch
          %506 = sbr.rel (%p504) target = $region44
        $region43: #{tpu_custom_call.1} parent=11 // pred_region
          _
        $region44: #{tpu_custom_call.1} parent=11 // pred_fallthru
          _
        // Predicated region
        $region45: #{tpu_custom_call.1} parent=11 // pred_check
          %p507 = pneg %p438
        $region46: #{tpu_custom_call.1} parent=11 // pred_check_branch
          %509 = sbr.rel (%p507) target = $region48
        $region47: #{tpu_custom_call.1} parent=11 // pred_region
          _
        $region48: #{tpu_custom_call.1} parent=11 // pred_fallthru
          _
      $region12: #{tpu_custom_call.1} parent=5 // pred_fallthru
        _
      %p510 = scmp.lt.s32.totalorder %s24, 4
      // Predicated region
      $region49: #{tpu_custom_call.1} parent=5 // pred_check
        %p511 = pneg %p510
      $region50: #{tpu_custom_call.1} parent=5 // pred_check_branch
        %513 = sbr.rel (%p511) target = $region52
      $region51: #{tpu_custom_call.1} parent=5 // pred_region
        // Predicated region
        $region53: #{tpu_custom_call.1} parent=51 // pred_check
          %p514 = pneg %p82
        $region54: #{tpu_custom_call.1} parent=51 // pred_check_branch
          %516 = sbr.rel (%p514) target = $region56
        $region55: #{tpu_custom_call.1} parent=51 // pred_region
          %p517 = scmp.lt.s32.totalorder %s32, 1
          %s518 = scalar_select %p517, %s32, 1
          %s519 = smul.addr %s518, 4
          %s520 = smul.addr %s519, 4
          %s521 = scalar_lea.vmem %s1, %s520
        $region56: #{tpu_custom_call.1} parent=51 // pred_fallthru
          _
        // Predicated region
        $region57: #{tpu_custom_call.1} parent=51 // pred_check
          %p522 = pneg %p108
        $region58: #{tpu_custom_call.1} parent=51 // pred_check_branch
          %524 = sbr.rel (%p522) target = $region60
        $region59: #{tpu_custom_call.1} parent=51 // pred_region
          %p525 = scmp.lt.s32.totalorder %s32, 1
          %s526 = scalar_select %p525, %s32, 1
          %s527 = scalar_lea.vmem %s2, %s526
        $region60: #{tpu_custom_call.1} parent=51 // pred_fallthru
          _
        // Predicated region
        $region61: #{tpu_custom_call.1} parent=51 // pred_check
          %p528 = pneg %p134
        $region62: #{tpu_custom_call.1} parent=51 // pred_check_branch
          %530 = sbr.rel (%p528) target = $region64
        $region63: #{tpu_custom_call.1} parent=51 // pred_region
          %p531 = scmp.lt.s32.totalorder %s32, 1
          %s532 = scalar_select %p531, %s32, 1
          %s533 = smul.addr %s532, 4
          %s534 = smul.addr %s533, 4
          %s535 = scalar_lea.vmem %s3, %s534
        $region64: #{tpu_custom_call.1} parent=51 // pred_fallthru
          _
        // Predicated region
        $region65: #{tpu_custom_call.1} parent=51 // pred_check
          %p536 = pneg %p160
        $region66: #{tpu_custom_call.1} parent=51 // pred_check_branch
          %538 = sbr.rel (%p536) target = $region68
        $region67: #{tpu_custom_call.1} parent=51 // pred_region
          %p539 = scmp.lt.s32.totalorder %s32, 1
          %s540 = scalar_select %p539, %s32, 1
          %s541 = scalar_lea.vmem %s4, %s540
        $region68: #{tpu_custom_call.1} parent=51 // pred_fallthru
          _
        // Predicated region
        $region69: #{tpu_custom_call.1} parent=51 // pred_check
          %p542 = pneg %p186
        $region70: #{tpu_custom_call.1} parent=51 // pred_check_branch
          %544 = sbr.rel (%p542) target = $region72
        $region71: #{tpu_custom_call.1} parent=51 // pred_region
          %p545 = scmp.lt.s32.totalorder %s32, 1
          %s546 = scalar_select %p545, %s32, 1
          %s547 = smul.addr %s546, 4
          %s548 = smul.addr %s547, 4
          %s549 = scalar_lea.vmem %s5, %s548
        $region72: #{tpu_custom_call.1} parent=51 // pred_fallthru
          _
        // Predicated region
        $region73: #{tpu_custom_call.1} parent=51 // pred_check
          %p550 = pneg %p212
        $region74: #{tpu_custom_call.1} parent=51 // pred_check_branch
          %552 = sbr.rel (%p550) target = $region76
        $region75: #{tpu_custom_call.1} parent=51 // pred_region
          %p553 = scmp.lt.s32.totalorder %s32, 1
          %s554 = scalar_select %p553, %s32, 1
          %s555 = scalar_lea.vmem %s6, %s554
        $region76: #{tpu_custom_call.1} parent=51 // pred_fallthru
          _
        // Predicated region
        $region77: #{tpu_custom_call.1} parent=51 // pred_check
          %p556 = pneg %p238
        $region78: #{tpu_custom_call.1} parent=51 // pred_check_branch
          %558 = sbr.rel (%p556) target = $region80
        $region79: #{tpu_custom_call.1} parent=51 // pred_region
          %p559 = scmp.lt.s32.totalorder %s32, 1
          %s560 = scalar_select %p559, %s32, 1
          %s561 = smul.addr %s560, 4
          %s562 = smul.addr %s561, 4
          %s563 = scalar_lea.vmem %s7, %s562
        $region80: #{tpu_custom_call.1} parent=51 // pred_fallthru
          _
        // Predicated region
        $region81: #{tpu_custom_call.1} parent=51 // pred_check
          %p564 = pneg %p264
        $region82: #{tpu_custom_call.1} parent=51 // pred_check_branch
          %566 = sbr.rel (%p564) target = $region84
        $region83: #{tpu_custom_call.1} parent=51 // pred_region
          %p567 = scmp.lt.s32.totalorder %s32, 1
          %s568 = scalar_select %p567, %s32, 1
          %s569 = scalar_lea.vmem %s8, %s568
        $region84: #{tpu_custom_call.1} parent=51 // pred_fallthru
          _
      $region52: #{tpu_custom_call.1} parent=5 // pred_fallthru
        _
      %p570 = scmp.le.s32.totalorder 1, %s24
      %p571 = scmp.lt.s32.totalorder %s24, 5
      %p572 = pnand %p570, %p571
      %p573 = pneg %p572
      // Predicated region
      $region85: #{tpu_custom_call.1} parent=5 // pred_check
        _
      $region86: #{tpu_custom_call.1} parent=5 // pred_check_branch
        %575 = sbr.rel (%p572) target = $region88
      $region87: #{tpu_custom_call.1} parent=5 // pred_region
        %s576 = ssub.s32 %s24, 1
        %p577 = scmp.lt.s32.totalorder %s33, 1
        %s578 = scalar_select %p577, %s33, 1
        %s579 = smul.addr %s578, 8
        %s580 = scalar_lea.vmem %s0, %s579
        %p581 = pneg %p62
        %p582 = pneg %p59
        %p583 = scmp.lt.s32.totalorder %s34, 1
        %s584 = scalar_select %p583, %s34, 1
        %s585 = smul.addr %s584, 4
        %s586 = smul.addr %s585, 4
        %s587 = scalar_lea.vmem %s1, %s586
        %p588 = pneg %p88
        %p589 = pneg %p85
        %p590 = scmp.lt.s32.totalorder %s34, 1
        %s591 = scalar_select %p590, %s34, 1
        %s592 = scalar_lea.vmem %s2, %s591
        %p593 = pneg %p114
        %p594 = pneg %p111
        %p595 = scmp.lt.s32.totalorder %s34, 1
        %s596 = scalar_select %p595, %s34, 1
        %s597 = smul.addr %s596, 4
        %s598 = smul.addr %s597, 4
        %s599 = scalar_lea.vmem %s3, %s598
        %p600 = pneg %p140
        %p601 = pneg %p137
        %p602 = scmp.lt.s32.totalorder %s34, 1
        %s603 = scalar_select %p602, %s34, 1
        %s604 = scalar_lea.vmem %s4, %s603
        %p605 = pneg %p166
        %p606 = pneg %p163
        %p607 = scmp.lt.s32.totalorder %s34, 1
        %s608 = scalar_select %p607, %s34, 1
        %s609 = smul.addr %s608, 4
        %s610 = smul.addr %s609, 4
        %s611 = scalar_lea.vmem %s5, %s610
        %p612 = pneg %p192
        %p613 = pneg %p189
        %p614 = scmp.lt.s32.totalorder %s34, 1
        %s615 = scalar_select %p614, %s34, 1
        %s616 = scalar_lea.vmem %s6, %s615
        %p617 = pneg %p218
        %p618 = pneg %p215
        %p619 = scmp.lt.s32.totalorder %s34, 1
        %s620 = scalar_select %p619, %s34, 1
        %s621 = smul.addr %s620, 4
        %s622 = smul.addr %s621, 4
        %s623 = scalar_lea.vmem %s7, %s622
        %p624 = pneg %p244
        %p625 = pneg %p241
        %p626 = scmp.lt.s32.totalorder %s34, 1
        %s627 = scalar_select %p626, %s34, 1
        %s628 = scalar_lea.vmem %s8, %s627
        %p629 = pneg %p270
        %p630 = pneg %p267
        %p631 = pneg %p291
        %p632 = pneg %p288
        %p633 = pneg %p312
        %p634 = pneg %p309
        %p635 = pneg %p333
        %p636 = pneg %p330
        %p637 = pneg %p354
        %p638 = pneg %p351
        %p639 = pneg %p375
        %p640 = pneg %p372
        %p641 = pneg %p396
        %p642 = pneg %p393
        %p643 = pneg %p417
        %p644 = pneg %p414
        %p645 = pneg %p438
        %p646 = pneg %p435
        %p647 = pneg %p464
        %p648 = pneg %p461
        %p649 = scmp.lt.s32.totalorder %s33, 1
        %s650 = scalar_select %p649, %s33, 1
        %s651 = smul.addr %s650, 8
        %s652 = scalar_lea.vmem %s0, %s651
        %p653 = scmp.lt.s32.totalorder %s34, 1
        %s654 = scalar_select %p653, %s34, 1
        %s655 = smul.addr %s654, 4
        %s656 = smul.addr %s655, 4
        %s657 = scalar_lea.vmem %s1, %s656
        %p658 = scmp.lt.s32.totalorder %s34, 1
        %s659 = scalar_select %p658, %s34, 1
        %s660 = scalar_lea.vmem %s2, %s659
        %p661 = scmp.lt.s32.totalorder %s34, 1
        %s662 = scalar_select %p661, %s34, 1
        %s663 = smul.addr %s662, 4
        %s664 = smul.addr %s663, 4
        %s665 = scalar_lea.vmem %s3, %s664
        %p666 = scmp.lt.s32.totalorder %s34, 1
        %s667 = scalar_select %p666, %s34, 1
        %s668 = scalar_lea.vmem %s4, %s667
        %p669 = scmp.lt.s32.totalorder %s34, 1
        %s670 = scalar_select %p669, %s34, 1
        %s671 = smul.addr %s670, 4
        %s672 = smul.addr %s671, 4
        %s673 = scalar_lea.vmem %s5, %s672
        %p674 = scmp.lt.s32.totalorder %s34, 1
        %s675 = scalar_select %p674, %s34, 1
        %s676 = scalar_lea.vmem %s6, %s675
        %p677 = scmp.lt.s32.totalorder %s34, 1
        %s678 = scalar_select %p677, %s34, 1
        %s679 = smul.addr %s678, 4
        %s680 = smul.addr %s679, 4
        %s681 = scalar_lea.vmem %s7, %s680
        %p682 = scmp.lt.s32.totalorder %s34, 1
        %s683 = scalar_select %p682, %s34, 1
        %s684 = scalar_lea.vmem %s8, %s683
        %p686 = scmp.eq.s32.totalorder %s34, 0
        // Predicated region
        $region89: #{tpu_custom_call.1} parent=87 // pred_check
          %p687 = pneg %p686
        $region90: #{tpu_custom_call.1} parent=87 // pred_check_branch
          %689 = sbr.rel (%p687) target = $region92
        $region91: #{tpu_custom_call.1} parent=87 // pred_region
          %v690 = vld [vmem:[%s652] sm:$0xff]
          %vm691 = vcmask 261120
          %692 = vst.msk [vmem:[#allocation6] sm:$0xff] %vm691, %v690
        $region92: #{tpu_custom_call.1} parent=87 // pred_fallthru
          _
        %v693 = vld [vmem:[%s9] sm:$0x1]
        %v694 = vld [vmem:[%s10] sm:$0x1]
        %v695 = vld [vmem:[#allocation6] sm:$0xff]
        %vm696 = vcmask 261120
        %v697 = vsel %vm696, %v695, 0.0
        %698 = vadd.xlane.f32.xlu0 %v697
        %v699 = vpop.xlane.xlu0 %698
        %v700 = vrcp.pop 32.0
        %v701 = vmul.f32 32.0, %v700
        %v702 = vsub.f32 1.0, %v701
        %v703 = vmul.f32 %v700, %v702
        %v704 = vadd.f32 %v700, %v703
        %vm705 = vweird.f32 %v700
        %v706 = vsel %vm705, %v700, %v704
        %v707 = vmul.f32 %v699, %v706
        %v708 = vsub.f32 %v695, %v707
        %v709 = vmul.f32 %v708, %v708
        %v710 = vsel %vm696, %v709, 0.0
        %711 = vadd.xlane.f32.xlu0 %v710
        %v712 = vpop.xlane.xlu0 %711
        %v713 = vrcp.pop 31.0
        %v714 = vmul.f32 31.0, %v713
        %v715 = vsub.f32 1.0, %v714
        %v716 = vmul.f32 %v713, %v715
        %v717 = vadd.f32 %v713, %v716
        %vm718 = vweird.f32 %v713
        %v719 = vsel %vm718, %v713, %v717
        %v720 = vmul.f32 %v712, %v719
        %v721 = vrsqrt.pop %v720
        %v722 = vmul.f32 %v721, %v720
        %v723 = vmul.f32 %v722, %v721
        %v724 = vmul.f32 0.5, %v723
        %v725 = vsub.f32 1.5, %v724
        %v726 = vmul.f32 %v721, %v725
        %v727 = vmul.f32 %v720, %v726
        %vm728 = vcmp.eq.f32.partialorder %v720, inf
        %v729 = vsel %vm728, %v720, %v727
        %vm730 = vcmp.eq.f32.partialorder %v720, 0.0
        %v731 = vand.u32 %v720, 2147483648
        %v732 = vsel %vm730, %v731, %v729
        %v733 = vadd.f32 %v732, 1e-06
        %v734 = vrcp.pop %v733
        %v735 = vmul.f32 %v733, %v734
        %v736 = vsub.f32 1.0, %v735
        %v737 = vmul.f32 %v734, %v736
        %v738 = vadd.f32 %v734, %v737
        %vm739 = vweird.f32 %v733
        %vm740 = vweird.f32 %v734
        %vm741 = vmor %vm739, %vm740
        %v742 = vsel %vm741, %v734, %v738
        %v743 = vand.u32 2147483647, %v733
        %vm744 = vcmp.eq.f32.partialorder %v743, 8.507059e+37
        %v745 = vand.u32 %v733, 2147483648
        %v746 = vor.u32 1.1754944e-38, %v745
        %v747 = vsel %vm744, %v746, %v742
        %v748 = vmul.f32 %v708, %v747
        %v750 = vperm.slane %v693, 0
        %v752 = vmul.f32 %v748, %v750
        %v754 = vperm.slane %v694, 0
        %v756 = vadd.f32 %v752, %v754
        %v757 = vpack.c.bf16 %v756, %v756
        %v758 = vld [vmem:[%s657] sm:$0xf]
        %v759 = vld [vmem:[%s657 + $0x4] sm:$0xf]
        %v760 = vld [vmem:[%s657 + $0x8] sm:$0xf]
        %v761 = vld [vmem:[%s657 + $0xc] sm:$0xf]
        %v762 = vld [vmem:[%s660] sm:$0x1]
        %v764 = vperm.slane %v762, 0
        %v770 = vunpack.c.l.b16 %v758
        %v771 = vunpack.c.l.b16 %v759
        %v772 = vunpack.c.l.b16 %v760
        %v773 = vunpack.c.l.b16 %v761
        %v774 = vpack.c.b16 %v771, %v770
        %v775 = vpack.c.b16 %v773, %v772
        %v779 = vsel %vm696, %v757, 0
        %781 = vmatpush.bf16.msra.mxu0 0
        %782 = vmatpush.bf16.msra.mxu0 0
        %783 = vmatpush.bf16.msra.mxu0 0
        %784 = vmatpush.bf16.msra.mxu0 0
        %785 = vmatpush.bf16.msra.mxu0 0
        %786 = vmatpush.bf16.msra.mxu0 0
        %787 = vmatpush.bf16.msra.mxu0 %v775
        %788 = vmatpush.bf16.msra.mxu0 %v774
        %789 = vmatmul.bf16.gmra.mxu0 %v779
        %v790 = vpop.f32.mrf.mxu0
        %v791 = vadd.f32 %v764, %v790
        %v792 = vpop.f32.mrf.mxu0
        %793 = vdwg.mxu0
        %v794 = vmul.f32 %v791, 0.35355338
        %v795 = vpack.c.bf16 %v794, %v794
        %vm796 = vcmask 257024
        %797 = vst.msk [vmem:[#allocation2] sm:$0xf] %vm796, %v795
        %v798 = vld [vmem:[%s665] sm:$0xf]
        %v799 = vld [vmem:[%s665 + $0x4] sm:$0xf]
        %v800 = vld [vmem:[%s665 + $0x8] sm:$0xf]
        %v801 = vld [vmem:[%s665 + $0xc] sm:$0xf]
        %v802 = vld [vmem:[%s668] sm:$0x1]
        %v804 = vperm.slane %v802, 0
        %v810 = vunpack.c.l.b16 %v798
        %v811 = vunpack.c.l.b16 %v799
        %v812 = vunpack.c.l.b16 %v800
        %v813 = vunpack.c.l.b16 %v801
        %v814 = vpack.c.b16 %v811, %v810
        %v815 = vpack.c.b16 %v813, %v812
        %818 = vmatpush.bf16.msra.mxu0 0
        %819 = vmatpush.bf16.msra.mxu0 0
        %820 = vmatpush.bf16.msra.mxu0 0
        %821 = vmatpush.bf16.msra.mxu0 0
        %822 = vmatpush.bf16.msra.mxu0 0
        %823 = vmatpush.bf16.msra.mxu0 0
        %824 = vmatpush.bf16.msra.mxu0 %v815
        %825 = vmatpush.bf16.msra.mxu0 %v814
        %826 = vmatmul.bf16.gmra.mxu0 %v779
        %v827 = vpop.f32.mrf.mxu0
        %v828 = vadd.f32 %v804, %v827
        %v829 = vpop.f32.mrf.mxu0
        %830 = vdwg.mxu0
        %v831 = vpack.c.bf16 %v828, %v828
        %832 = vst.msk [vmem:[#allocation3] sm:$0xf] %vm796, %v831
        %v833 = vld [vmem:[%s673] sm:$0xf]
        %v834 = vld [vmem:[%s673 + $0x4] sm:$0xf]
        %v835 = vld [vmem:[%s673 + $0x8] sm:$0xf]
        %v836 = vld [vmem:[%s673 + $0xc] sm:$0xf]
        %v837 = vld [vmem:[%s676] sm:$0x1]
        %v839 = vperm.slane %v837, 0
        %v845 = vunpack.c.l.b16 %v833
        %v846 = vunpack.c.l.b16 %v834
        %v847 = vunpack.c.l.b16 %v835
        %v848 = vunpack.c.l.b16 %v836
        %v849 = vpack.c.b16 %v846, %v845
        %v850 = vpack.c.b16 %v848, %v847
        %853 = vmatpush.bf16.msra.mxu0 0
        %854 = vmatpush.bf16.msra.mxu0 0
        %855 = vmatpush.bf16.msra.mxu0 0
        %856 = vmatpush.bf16.msra.mxu0 0
        %857 = vmatpush.bf16.msra.mxu0 0
        %858 = vmatpush.bf16.msra.mxu0 0
        %859 = vmatpush.bf16.msra.mxu0 %v850
        %860 = vmatpush.bf16.msra.mxu0 %v849
        %861 = vmatmul.bf16.gmra.mxu0 %v779
        %v862 = vpop.f32.mrf.mxu0
        %v863 = vadd.f32 %v839, %v862
        %v864 = vpop.f32.mrf.mxu0
        %865 = vdwg.mxu0
        %v866 = vpack.c.bf16 %v863, %v863
        %867 = vst.msk [vmem:[#allocation4] sm:$0xf] %vm796, %v866
        %v868 = vld [vmem:[#allocation2] sm:$0xf]
        %v869 = vld [vmem:[#allocation3] sm:$0xf]
        %v870 = vld [vmem:[#allocation4] sm:$0xf]
        %vm871 = vcmask 64512
        %v873 = vsel %vm871, %v868, 0
        %v876 = vsel %vm871, %v869, 0
        %878 = vmatpush.bf16.xpose.msra.mxu0 0
        %879 = vmatpush.bf16.xpose.msra.mxu0 0
        %880 = vmatpush.bf16.xpose.msra.mxu0 0
        %881 = vmatpush.bf16.xpose.msra.mxu0 0
        %882 = vmatpush.bf16.xpose.msra.mxu0 0
        %883 = vmatpush.bf16.xpose.msra.mxu0 0
        %884 = vmatpush.bf16.xpose.msra.mxu0 0
        %885 = vmatpush.bf16.xpose.msra.mxu0 %v876
        %886 = vmatmul.bf16.gmra.mxu0 %v873
        %v887 = vpop.f32.mrf.mxu0
        %v888 = vadd.f32 0.0, %v887
        %v889 = vpop.f32.mrf.mxu0
        %890 = vdwg.mxu0
        %v891 = vsel %vm871, %v888, -inf
        %892 = vmax.xlane.f32.xlu0 %v891
        %v893 = vpop.xlane.xlu0 %892
        %v894 = vsub.f32 %v888, %v893
        %v895 = vmul.f32 %v894, 1.442695
        %v896 = vpow.pop %v895
        %v897 = vsel %vm871, %v896, 0.0
        %898 = vadd.xlane.f32.xlu0 %v897
        %v899 = vpop.xlane.xlu0 %898
        %v900 = vrcp.pop %v899
        %v901 = vmul.f32 %v896, %v900
        %v902 = vpack.c.bf16 %v901, %v901
        %v904 = vsel %vm871, %v902, 0
        %vm906 = vcmask 1043456
        %v908 = vsel %vm906, %v870, 0
        %910 = vmatpush.bf16.msra.mxu0 0
        %911 = vmatpush.bf16.msra.mxu0 0
        %912 = vmatpush.bf16.msra.mxu0 0
        %913 = vmatpush.bf16.msra.mxu0 0
        %914 = vmatpush.bf16.msra.mxu0 0
        %915 = vmatpush.bf16.msra.mxu0 0
        %916 = vmatpush.bf16.msra.mxu0 0
        %917 = vmatpush.bf16.msra.mxu0 %v908
        %918 = vmatmul.bf16.gmra.mxu0 %v904
        %v919 = vpop.f32.mrf.mxu0
        %v920 = vadd.f32 0.0, %v919
        %v921 = vpop.f32.mrf.mxu0
        %922 = vdwg.mxu0
        %v923 = vpack.c.bf16 %v920, %v920
        %vm924 = vcmask 60416
        %925 = vst.msk [vmem:[#allocation5] sm:$0xf] %vm924, %v923
        %v926 = vld [vmem:[#allocation2] sm:$0xf]
        %v927 = vld [vmem:[#allocation3] sm:$0xf]
        %v928 = vld [vmem:[#allocation4] sm:$0xf]
        %v930 = vunpack.c.l.b16 %v926
        %v931 = vpack.c.b16 %v930, %v930
        %932 = vrot.lane.b32.xlu0 %v931, 120
        %v933 = vpop.permute.xlu0 %932
        %v935 = vunpack.c.l.b16 %v927
        %v936 = vpack.c.b16 %v935, %v935
        %937 = vrot.lane.b32.xlu0 %v936, 120
        %v938 = vpop.permute.xlu0 %937
        %v940 = vsel %vm871, %v933, 0
        %v943 = vsel %vm871, %v938, 0
        %945 = vmatpush.bf16.xpose.msra.mxu0 0
        %946 = vmatpush.bf16.xpose.msra.mxu0 0
        %947 = vmatpush.bf16.xpose.msra.mxu0 0
        %948 = vmatpush.bf16.xpose.msra.mxu0 0
        %949 = vmatpush.bf16.xpose.msra.mxu0 0
        %950 = vmatpush.bf16.xpose.msra.mxu0 0
        %951 = vmatpush.bf16.xpose.msra.mxu0 0
        %952 = vmatpush.bf16.xpose.msra.mxu0 %v943
        %953 = vmatmul.bf16.gmra.mxu0 %v940
        %v954 = vpop.f32.mrf.mxu0
        %v955 = vadd.f32 0.0, %v954
        %v956 = vpop.f32.mrf.mxu0
        %957 = vdwg.mxu0
        %v958 = vsel %vm871, %v955, -inf
        %959 = vmax.xlane.f32.xlu0 %v958
        %v960 = vpop.xlane.xlu0 %959
        %v961 = vsub.f32 %v955, %v960
        %v962 = vmul.f32 %v961, 1.442695
        %v963 = vpow.pop %v962
        %v964 = vsel %vm871, %v963, 0.0
        %965 = vadd.xlane.f32.xlu0 %v964
        %v966 = vpop.xlane.xlu0 %965
        %v967 = vrcp.pop %v966
        %v968 = vmul.f32 %v963, %v967
        %v969 = vpack.c.bf16 %v968, %v968
        %v971 = vunpack.c.l.b16 %v928
        %v972 = vpack.c.b16 %v971, %v971
        %973 = vrot.lane.b32.xlu0 %v972, 120
        %v974 = vpop.permute.xlu0 %973
        %v976 = vsel %vm871, %v969, 0
        %v979 = vsel %vm906, %v974, 0
        %981 = vmatpush.bf16.msra.mxu0 0
        %982 = vmatpush.bf16.msra.mxu0 0
        %983 = vmatpush.bf16.msra.mxu0 0
        %984 = vmatpush.bf16.msra.mxu0 0
        %985 = vmatpush.bf16.msra.mxu0 0
        %986 = vmatpush.bf16.msra.mxu0 0
        %987 = vmatpush.bf16.msra.mxu0 0
        %988 = vmatpush.bf16.msra.mxu0 %v979
        %989 = vmatmul.bf16.gmra.mxu0 %v976
        %v990 = vpop.f32.mrf.mxu0
        %v991 = vadd.f32 0.0, %v990
        %v992 = vpop.f32.mrf.mxu0
        %993 = vdwg.mxu0
        %v994 = vpack.c.bf16 %v991, %v991
        %996 = vrot.lane.b32.xlu0 %v994, 8
        %v997 = vpop.permute.xlu0 %996
        %vm999 = vcmask 126016
        %1000 = vst.msk [vmem:[#allocation5] sm:$0xf] %vm999, %v997
        %v1001 = vld [vmem:[#allocation2] sm:$0xf]
        %v1002 = vld [vmem:[#allocation3] sm:$0xf]
        %v1003 = vld [vmem:[#allocation4] sm:$0xf]
        %v1005 = vunpack.c.l.b16 %v1001
        %v1006 = vpack.c.b16 %v1005, %v1005
        %1007 = vrot.lane.b32.xlu0 %v1006, 112
        %v1008 = vpop.permute.xlu0 %1007
        %v1010 = vunpack.c.l.b16 %v1002
        %v1011 = vpack.c.b16 %v1010, %v1010
        %1012 = vrot.lane.b32.xlu0 %v1011, 112
        %v1013 = vpop.permute.xlu0 %1012
        %v1015 = vsel %vm871, %v1008, 0
        %v1018 = vsel %vm871, %v1013, 0
        %1020 = vmatpush.bf16.xpose.msra.mxu0 0
        %1021 = vmatpush.bf16.xpose.msra.mxu0 0
        %1022 = vmatpush.bf16.xpose.msra.mxu0 0
        %1023 = vmatpush.bf16.xpose.msra.mxu0 0
        %1024 = vmatpush.bf16.xpose.msra.mxu0 0
        %1025 = vmatpush.bf16.xpose.msra.mxu0 0
        %1026 = vmatpush.bf16.xpose.msra.mxu0 0
        %1027 = vmatpush.bf16.xpose.msra.mxu0 %v1018
        %1028 = vmatmul.bf16.gmra.mxu0 %v1015
        %v1029 = vpop.f32.mrf.mxu0
        %v1030 = vadd.f32 0.0, %v1029
        %v1031 = vpop.f32.mrf.mxu0
        %1032 = vdwg.mxu0
        %v1033 = vsel %vm871, %v1030, -inf
        %1034 = vmax.xlane.f32.xlu0 %v1033
        %v1035 = vpop.xlane.xlu0 %1034
        %v1036 = vsub.f32 %v1030, %v1035
        %v1037 = vmul.f32 %v1036, 1.442695
        %v1038 = vpow.pop %v1037
        %v1039 = vsel %vm871, %v1038, 0.0
        %1040 = vadd.xlane.f32.xlu0 %v1039
        %v1041 = vpop.xlane.xlu0 %1040
        %v1042 = vrcp.pop %v1041
        %v1043 = vmul.f32 %v1038, %v1042
        %v1044 = vpack.c.bf16 %v1043, %v1043
        %v1046 = vunpack.c.l.b16 %v1003
        %v1047 = vpack.c.b16 %v1046, %v1046
        %1048 = vrot.lane.b32.xlu0 %v1047, 112
        %v1049 = vpop.permute.xlu0 %1048
        %v1051 = vsel %vm871, %v1044, 0
        %v1054 = vsel %vm906, %v1049, 0
        %1056 = vmatpush.bf16.msra.mxu0 0
        %1057 = vmatpush.bf16.msra.mxu0 0
        %1058 = vmatpush.bf16.msra.mxu0 0
        %1059 = vmatpush.bf16.msra.mxu0 0
        %1060 = vmatpush.bf16.msra.mxu0 0
        %1061 = vmatpush.bf16.msra.mxu0 0
        %1062 = vmatpush.bf16.msra.mxu0 0
        %1063 = vmatpush.bf16.msra.mxu0 %v1054
        %1064 = vmatmul.bf16.gmra.mxu0 %v1051
        %v1065 = vpop.f32.mrf.mxu0
        %v1066 = vadd.f32 0.0, %v1065
        %v1067 = vpop.f32.mrf.mxu0
        %1068 = vdwg.mxu0
        %v1069 = vpack.c.bf16 %v1066, %v1066
        %1071 = vrot.lane.b32.xlu0 %v1069, 16
        %v1072 = vpop.permute.xlu0 %1071
        %vm1074 = vcmask 191616
        %1075 = vst.msk [vmem:[#allocation5] sm:$0xf] %vm1074, %v1072
        %v1076 = vld [vmem:[#allocation2] sm:$0xf]
        %v1077 = vld [vmem:[#allocation3] sm:$0xf]
        %v1078 = vld [vmem:[#allocation4] sm:$0xf]
        %v1080 = vunpack.c.l.b16 %v1076
        %v1081 = vpack.c.b16 %v1080, %v1080
        %1082 = vrot.lane.b32.xlu0 %v1081, 104
        %v1083 = vpop.permute.xlu0 %1082
        %v1085 = vunpack.c.l.b16 %v1077
        %v1086 = vpack.c.b16 %v1085, %v1085
        %1087 = vrot.lane.b32.xlu0 %v1086, 104
        %v1088 = vpop.permute.xlu0 %1087
        %v1090 = vsel %vm871, %v1083, 0
        %v1093 = vsel %vm871, %v1088, 0
        %1095 = vmatpush.bf16.xpose.msra.mxu0 0
        %1096 = vmatpush.bf16.xpose.msra.mxu0 0
        %1097 = vmatpush.bf16.xpose.msra.mxu0 0
        %1098 = vmatpush.bf16.xpose.msra.mxu0 0
        %1099 = vmatpush.bf16.xpose.msra.mxu0 0
        %1100 = vmatpush.bf16.xpose.msra.mxu0 0
        %1101 = vmatpush.bf16.xpose.msra.mxu0 0
        %1102 = vmatpush.bf16.xpose.msra.mxu0 %v1093
        %1103 = vmatmul.bf16.gmra.mxu0 %v1090
        %v1104 = vpop.f32.mrf.mxu0
        %v1105 = vadd.f32 0.0, %v1104
        %v1106 = vpop.f32.mrf.mxu0
        %1107 = vdwg.mxu0
        %v1108 = vsel %vm871, %v1105, -inf
        %1109 = vmax.xlane.f32.xlu0 %v1108
        %v1110 = vpop.xlane.xlu0 %1109
        %v1111 = vsub.f32 %v1105, %v1110
        %v1112 = vmul.f32 %v1111, 1.442695
        %v1113 = vpow.pop %v1112
        %v1114 = vsel %vm871, %v1113, 0.0
        %1115 = vadd.xlane.f32.xlu0 %v1114
        %v1116 = vpop.xlane.xlu0 %1115
        %v1117 = vrcp.pop %v1116
        %v1118 = vmul.f32 %v1113, %v1117
        %v1119 = vpack.c.bf16 %v1118, %v1118
        %v1121 = vunpack.c.l.b16 %v1078
        %v1122 = vpack.c.b16 %v1121, %v1121
        %1123 = vrot.lane.b32.xlu0 %v1122, 104
        %v1124 = vpop.permute.xlu0 %1123
        %v1126 = vsel %vm871, %v1119, 0
        %v1129 = vsel %vm906, %v1124, 0
        %1131 = vmatpush.bf16.msra.mxu0 0
        %1132 = vmatpush.bf16.msra.mxu0 0
        %1133 = vmatpush.bf16.msra.mxu0 0
        %1134 = vmatpush.bf16.msra.mxu0 0
        %1135 = vmatpush.bf16.msra.mxu0 0
        %1136 = vmatpush.bf16.msra.mxu0 0
        %1137 = vmatpush.bf16.msra.mxu0 0
        %1138 = vmatpush.bf16.msra.mxu0 %v1129
        %1139 = vmatmul.bf16.gmra.mxu0 %v1126
        %v1140 = vpop.f32.mrf.mxu0
        %v1141 = vadd.f32 0.0, %v1140
        %v1142 = vpop.f32.mrf.mxu0
        %1143 = vdwg.mxu0
        %v1144 = vpack.c.bf16 %v1141, %v1141
        %1146 = vrot.lane.b32.xlu0 %v1144, 24
        %v1147 = vpop.permute.xlu0 %1146
        %vm1149 = vcmask 257216
        %1150 = vst.msk [vmem:[#allocation5] sm:$0xf] %vm1149, %v1147
        %v1151 = vld [vmem:[#allocation5] sm:$0xf]
        %v1152 = vld [vmem:[%s681] sm:$0xf]
        %v1153 = vld [vmem:[%s681 + $0x4] sm:$0xf]
        %v1154 = vld [vmem:[%s681 + $0x8] sm:$0xf]
        %v1155 = vld [vmem:[%s681 + $0xc] sm:$0xf]
        %v1156 = vld [vmem:[%s684] sm:$0x1]
        %v1158 = vperm.slane %v1156, 0
        %v1164 = vunpack.c.l.b16 %v1152
        %v1165 = vunpack.c.l.b16 %v1153
        %v1166 = vunpack.c.l.b16 %v1154
        %v1167 = vunpack.c.l.b16 %v1155
        %v1168 = vpack.c.b16 %v1165, %v1164
        %v1169 = vpack.c.b16 %v1167, %v1166
        %v1173 = vsel %vm696, %v1151, 0
        %1175 = vmatpush.bf16.msra.mxu0 0
        %1176 = vmatpush.bf16.msra.mxu0 0
        %1177 = vmatpush.bf16.msra.mxu0 0
        %1178 = vmatpush.bf16.msra.mxu0 0
        %1179 = vmatpush.bf16.msra.mxu0 0
        %1180 = vmatpush.bf16.msra.mxu0 0
        %1181 = vmatpush.bf16.msra.mxu0 %v1169
        %1182 = vmatpush.bf16.msra.mxu0 %v1168
        %1183 = vmatmul.bf16.gmra.mxu0 %v1173
        %v1184 = vpop.f32.mrf.mxu0
        %v1185 = vadd.f32 %v1158, %v1184
        %v1186 = vpop.f32.mrf.mxu0
        %1187 = vdwg.mxu0
        %v1188 = vadd.f32 %v695, %v1185
        %v1189 = vld [vmem:[%s11] sm:$0x1]
        %v1190 = vld [vmem:[%s12] sm:$0x1]
        %v1191 = vsel %vm696, %v1188, 0.0
        %1192 = vadd.xlane.f32.xlu0 %v1191
        %v1193 = vpop.xlane.xlu0 %1192
        %v1194 = vmul.f32 %v1193, %v706
        %v1195 = vsub.f32 %v1188, %v1194
        %v1196 = vmul.f32 %v1195, %v1195
        %v1197 = vsel %vm696, %v1196, 0.0
        %1198 = vadd.xlane.f32.xlu0 %v1197
        %v1199 = vpop.xlane.xlu0 %1198
        %v1200 = vmul.f32 %v1199, %v719
        %v1201 = vrsqrt.pop %v1200
        %v1202 = vmul.f32 %v1201, %v1200
        %v1203 = vmul.f32 %v1202, %v1201
        %v1204 = vmul.f32 0.5, %v1203
        %v1205 = vsub.f32 1.5, %v1204
        %v1206 = vmul.f32 %v1201, %v1205
        %v1207 = vmul.f32 %v1200, %v1206
        %vm1208 = vcmp.eq.f32.partialorder %v1200, inf
        %v1209 = vsel %vm1208, %v1200, %v1207
        %vm1210 = vcmp.eq.f32.partialorder %v1200, 0.0
        %v1211 = vand.u32 %v1200, 2147483648
        %v1212 = vsel %vm1210, %v1211, %v1209
        %v1213 = vadd.f32 %v1212, 1e-06
        %v1214 = vrcp.pop %v1213
        %v1215 = vmul.f32 %v1213, %v1214
        %v1216 = vsub.f32 1.0, %v1215
        %v1217 = vmul.f32 %v1214, %v1216
        %v1218 = vadd.f32 %v1214, %v1217
        %vm1219 = vweird.f32 %v1213
        %vm1220 = vweird.f32 %v1214
        %vm1221 = vmor %vm1219, %vm1220
        %v1222 = vsel %vm1221, %v1214, %v1218
        %v1223 = vand.u32 2147483647, %v1213
        %vm1224 = vcmp.eq.f32.partialorder %v1223, 8.507059e+37
        %v1225 = vand.u32 %v1213, 2147483648
        %v1226 = vor.u32 1.1754944e-38, %v1225
        %v1227 = vsel %vm1224, %v1226, %v1222
        %v1228 = vmul.f32 %v1195, %v1227
        %v1230 = vperm.slane %v1189, 0
        %v1232 = vmul.f32 %v1228, %v1230
        %v1234 = vperm.slane %v1190, 0
        %v1236 = vadd.f32 %v1232, %v1234
        %v1237 = vpack.c.bf16 %v1236, %v1236
        %v1238 = vld [vmem:[%s13] sm:$0xff]
        %v1239 = vld [vmem:[%s13 + $0x8] sm:$0xff]
        %v1240 = vld [vmem:[%s13 + $0x40] sm:$0xff]
        %v1241 = vld [vmem:[%s13 + $0x48] sm:$0xff]
        %v1242 = vld [vmem:[%s13 + $0x80] sm:$0xff]
        %v1243 = vld [vmem:[%s13 + $0x88] sm:$0xff]
        %v1244 = vld [vmem:[%s13 + $0xc0] sm:$0xff]
        %v1245 = vld [vmem:[%s13 + $0xc8] sm:$0xff]
        %v1246 = vld [vmem:[%s14] sm:$0xf]
        %v1248 = vperm.slane %v1246, 0
        %v1249 = vperm.slane %v1246, 1
        %v1250 = vperm.slane %v1246, 2
        %v1251 = vperm.slane %v1246, 3
        %v1264 = vunpack.c.l.b16 %v1238
        %v1265 = vunpack.c.h.b16 %v1238
        %v1266 = vunpack.c.l.b16 %v1239
        %v1267 = vunpack.c.h.b16 %v1239
        %v1268 = vunpack.c.l.b16 %v1240
        %v1269 = vunpack.c.h.b16 %v1240
        %v1270 = vunpack.c.l.b16 %v1241
        %v1271 = vunpack.c.h.b16 %v1241
        %v1272 = vunpack.c.l.b16 %v1242
        %v1273 = vunpack.c.h.b16 %v1242
        %v1274 = vunpack.c.l.b16 %v1243
        %v1275 = vunpack.c.h.b16 %v1243
        %v1276 = vunpack.c.l.b16 %v1244
        %v1277 = vunpack.c.h.b16 %v1244
        %v1278 = vunpack.c.l.b16 %v1245
        %v1279 = vunpack.c.h.b16 %v1245
        %v1280 = vpack.c.b16 %v1268, %v1264
        %v1281 = vpack.c.b16 %v1269, %v1265
        %v1282 = vpack.c.b16 %v1270, %v1266
        %v1283 = vpack.c.b16 %v1271, %v1267
        %v1284 = vpack.c.b16 %v1276, %v1272
        %v1285 = vpack.c.b16 %v1277, %v1273
        %v1286 = vpack.c.b16 %v1278, %v1274
        %v1287 = vpack.c.b16 %v1279, %v1275
        %v1297 = vsel %vm696, %v1237, 0
        %1299 = vmatpush.bf16.msra.mxu0 0
        %1300 = vmatpush.bf16.msra.mxu0 0
        %1301 = vmatpush.bf16.msra.mxu0 0
        %1302 = vmatpush.bf16.msra.mxu0 0
        %1303 = vmatpush.bf16.msra.mxu0 0
        %1304 = vmatpush.bf16.msra.mxu0 0
        %1305 = vmatpush.bf16.msra.mxu0 %v1284
        %1306 = vmatpush.bf16.msra.mxu0 %v1280
        %1307 = vmatmul.bf16.gmra.mxu0 %v1297
        %v1308 = vpop.f32.mrf.mxu0
        %v1309 = vadd.f32 %v1248, %v1308
        %v1310 = vpop.f32.mrf.mxu0
        %1311 = vdwg.mxu0
        %1312 = vmatpush.bf16.msra.mxu0 0
        %1313 = vmatpush.bf16.msra.mxu0 0
        %1314 = vmatpush.bf16.msra.mxu0 0
        %1315 = vmatpush.bf16.msra.mxu0 0
        %1316 = vmatpush.bf16.msra.mxu0 0
        %1317 = vmatpush.bf16.msra.mxu0 0
        %1318 = vmatpush.bf16.msra.mxu0 %v1285
        %1319 = vmatpush.bf16.msra.mxu0 %v1281
        %1320 = vmatmul.bf16.gmra.mxu0 %v1297
        %v1321 = vpop.f32.mrf.mxu0
        %v1322 = vadd.f32 %v1249, %v1321
        %v1323 = vpop.f32.mrf.mxu0
        %1324 = vdwg.mxu0
        %1325 = vmatpush.bf16.msra.mxu0 0
        %1326 = vmatpush.bf16.msra.mxu0 0
        %1327 = vmatpush.bf16.msra.mxu0 0
        %1328 = vmatpush.bf16.msra.mxu0 0
        %1329 = vmatpush.bf16.msra.mxu0 0
        %1330 = vmatpush.bf16.msra.mxu0 0
        %1331 = vmatpush.bf16.msra.mxu0 %v1286
        %1332 = vmatpush.bf16.msra.mxu0 %v1282
        %1333 = vmatmul.bf16.gmra.mxu0 %v1297
        %v1334 = vpop.f32.mrf.mxu0
        %v1335 = vadd.f32 %v1250, %v1334
        %v1336 = vpop.f32.mrf.mxu0
        %1337 = vdwg.mxu0
        %1338 = vmatpush.bf16.msra.mxu0 0
        %1339 = vmatpush.bf16.msra.mxu0 0
        %1340 = vmatpush.bf16.msra.mxu0 0
        %1341 = vmatpush.bf16.msra.mxu0 0
        %1342 = vmatpush.bf16.msra.mxu0 0
        %1343 = vmatpush.bf16.msra.mxu0 0
        %1344 = vmatpush.bf16.msra.mxu0 %v1287
        %1345 = vmatpush.bf16.msra.mxu0 %v1283
        %1346 = vmatmul.bf16.gmra.mxu0 %v1297
        %v1347 = vpop.f32.mrf.mxu0
        %v1348 = vadd.f32 %v1251, %v1347
        %v1349 = vpop.f32.mrf.mxu0
        %1350 = vdwg.mxu0
        %v1351 = vmax.f32 %v1309, 0.0
        %v1352 = vmax.f32 %v1322, 0.0
        %v1353 = vmax.f32 %v1335, 0.0
        %v1354 = vmax.f32 %v1348, 0.0
        %v1355 = vpack.c.bf16 %v1351, %v1351
        %v1356 = vpack.c.bf16 %v1352, %v1352
        %v1357 = vpack.c.bf16 %v1353, %v1353
        %v1358 = vpack.c.bf16 %v1354, %v1354
        %v1359 = vld [vmem:[%s15] sm:$0xf]
        %v1360 = vld [vmem:[%s15 + $0x4] sm:$0xf]
        %v1361 = vld [vmem:[%s15 + $0x8] sm:$0xf]
        %v1362 = vld [vmem:[%s15 + $0xc] sm:$0xf]
        %v1363 = vld [vmem:[%s15 + $0x10] sm:$0xf]
        %v1364 = vld [vmem:[%s15 + $0x14] sm:$0xf]
        %v1365 = vld [vmem:[%s15 + $0x18] sm:$0xf]
        %v1366 = vld [vmem:[%s15 + $0x1c] sm:$0xf]
        %v1367 = vld [vmem:[%s15 + $0x20] sm:$0xf]
        %v1368 = vld [vmem:[%s15 + $0x24] sm:$0xf]
        %v1369 = vld [vmem:[%s15 + $0x28] sm:$0xf]
        %v1370 = vld [vmem:[%s15 + $0x2c] sm:$0xf]
        %v1371 = vld [vmem:[%s15 + $0x30] sm:$0xf]
        %v1372 = vld [vmem:[%s15 + $0x34] sm:$0xf]
        %v1373 = vld [vmem:[%s15 + $0x38] sm:$0xf]
        %v1374 = vld [vmem:[%s15 + $0x3c] sm:$0xf]
        %v1375 = vld [vmem:[%s15 + $0x40] sm:$0xf]
        %v1376 = vld [vmem:[%s15 + $0x44] sm:$0xf]
        %v1377 = vld [vmem:[%s15 + $0x48] sm:$0xf]
        %v1378 = vld [vmem:[%s15 + $0x4c] sm:$0xf]
        %v1379 = vld [vmem:[%s15 + $0x50] sm:$0xf]
        %v1380 = vld [vmem:[%s15 + $0x54] sm:$0xf]
        %v1381 = vld [vmem:[%s15 + $0x58] sm:$0xf]
        %v1382 = vld [vmem:[%s15 + $0x5c] sm:$0xf]
        %v1383 = vld [vmem:[%s15 + $0x60] sm:$0xf]
        %v1384 = vld [vmem:[%s15 + $0x64] sm:$0xf]
        %v1385 = vld [vmem:[%s15 + $0x68] sm:$0xf]
        %v1386 = vld [vmem:[%s15 + $0x6c] sm:$0xf]
        %v1387 = vld [vmem:[%s15 + $0x70] sm:$0xf]
        %v1388 = vld [vmem:[%s15 + $0x74] sm:$0xf]
        %v1389 = vld [vmem:[%s15 + $0x78] sm:$0xf]
        %v1390 = vld [vmem:[%s15 + $0x7c] sm:$0xf]
        %v1391 = vld [vmem:[%s15 + $0x80] sm:$0xf]
        %v1392 = vld [vmem:[%s15 + $0x84] sm:$0xf]
        %v1393 = vld [vmem:[%s15 + $0x88] sm:$0xf]
        %v1394 = vld [vmem:[%s15 + $0x8c] sm:$0xf]
        %v1395 = vld [vmem:[%s15 + $0x90] sm:$0xf]
        %v1396 = vld [vmem:[%s15 + $0x94] sm:$0xf]
        %v1397 = vld [vmem:[%s15 + $0x98] sm:$0xf]
        %v1398 = vld [vmem:[%s15 + $0x9c] sm:$0xf]
        %v1399 = vld [vmem:[%s15 + $0xa0] sm:$0xf]
        %v1400 = vld [vmem:[%s15 + $0xa4] sm:$0xf]
        %v1401 = vld [vmem:[%s15 + $0xa8] sm:$0xf]
        %v1402 = vld [vmem:[%s15 + $0xac] sm:$0xf]
        %v1403 = vld [vmem:[%s15 + $0xb0] sm:$0xf]
        %v1404 = vld [vmem:[%s15 + $0xb4] sm:$0xf]
        %v1405 = vld [vmem:[%s15 + $0xb8] sm:$0xf]
        %v1406 = vld [vmem:[%s15 + $0xbc] sm:$0xf]
        %v1407 = vld [vmem:[%s15 + $0xc0] sm:$0xf]
        %v1408 = vld [vmem:[%s15 + $0xc4] sm:$0xf]
        %v1409 = vld [vmem:[%s15 + $0xc8] sm:$0xf]
        %v1410 = vld [vmem:[%s15 + $0xcc] sm:$0xf]
        %v1411 = vld [vmem:[%s15 + $0xd0] sm:$0xf]
        %v1412 = vld [vmem:[%s15 + $0xd4] sm:$0xf]
        %v1413 = vld [vmem:[%s15 + $0xd8] sm:$0xf]
        %v1414 = vld [vmem:[%s15 + $0xdc] sm:$0xf]
        %v1415 = vld [vmem:[%s15 + $0xe0] sm:$0xf]
        %v1416 = vld [vmem:[%s15 + $0xe4] sm:$0xf]
        %v1417 = vld [vmem:[%s15 + $0xe8] sm:$0xf]
        %v1418 = vld [vmem:[%s15 + $0xec] sm:$0xf]
        %v1419 = vld [vmem:[%s15 + $0xf0] sm:$0xf]
        %v1420 = vld [vmem:[%s15 + $0xf4] sm:$0xf]
        %v1421 = vld [vmem:[%s15 + $0xf8] sm:$0xf]
        %v1422 = vld [vmem:[%s15 + $0xfc] sm:$0xf]
        %v1423 = vld [vmem:[%s13 + $0x10] sm:$0xff]
        %v1424 = vld [vmem:[%s13 + $0x18] sm:$0xff]
        %v1425 = vld [vmem:[%s13 + $0x50] sm:$0xff]
        %v1426 = vld [vmem:[%s13 + $0x58] sm:$0xff]
        %v1427 = vld [vmem:[%s13 + $0x90] sm:$0xff]
        %v1428 = vld [vmem:[%s13 + $0x98] sm:$0xff]
        %v1429 = vld [vmem:[%s13 + $0xd0] sm:$0xff]
        %v1430 = vld [vmem:[%s13 + $0xd8] sm:$0xff]
        %v1431 = vld [vmem:[%s14 + $0x4] sm:$0xf]
        %v1433 = vperm.slane %v1431, 0
        %v1434 = vperm.slane %v1431, 1
        %v1435 = vperm.slane %v1431, 2
        %v1436 = vperm.slane %v1431, 3
        %v1449 = vunpack.c.l.b16 %v1423
        %v1450 = vunpack.c.h.b16 %v1423
        %v1451 = vunpack.c.l.b16 %v1424
        %v1452 = vunpack.c.h.b16 %v1424
        %v1453 = vunpack.c.l.b16 %v1425
        %v1454 = vunpack.c.h.b16 %v1425
        %v1455 = vunpack.c.l.b16 %v1426
        %v1456 = vunpack.c.h.b16 %v1426
        %v1457 = vunpack.c.l.b16 %v1427
        %v1458 = vunpack.c.h.b16 %v1427
        %v1459 = vunpack.c.l.b16 %v1428
        %v1460 = vunpack.c.h.b16 %v1428
        %v1461 = vunpack.c.l.b16 %v1429
        %v1462 = vunpack.c.h.b16 %v1429
        %v1463 = vunpack.c.l.b16 %v1430
        %v1464 = vunpack.c.h.b16 %v1430
        %v1465 = vpack.c.b16 %v1453, %v1449
        %v1466 = vpack.c.b16 %v1454, %v1450
        %v1467 = vpack.c.b16 %v1455, %v1451
        %v1468 = vpack.c.b16 %v1456, %v1452
        %v1469 = vpack.c.b16 %v1461, %v1457
        %v1470 = vpack.c.b16 %v1462, %v1458
        %v1471 = vpack.c.b16 %v1463, %v1459
        %v1472 = vpack.c.b16 %v1464, %v1460
        %1481 = vmatpush.bf16.msra.mxu0 0
        %1482 = vmatpush.bf16.msra.mxu0 0
        %1483 = vmatpush.bf16.msra.mxu0 0
        %1484 = vmatpush.bf16.msra.mxu0 0
        %1485 = vmatpush.bf16.msra.mxu0 0
        %1486 = vmatpush.bf16.msra.mxu0 0
        %1487 = vmatpush.bf16.msra.mxu0 %v1469
        %1488 = vmatpush.bf16.msra.mxu0 %v1465
        %1489 = vmatmul.bf16.gmra.mxu0 %v1297
        %v1490 = vpop.f32.mrf.mxu0
        %v1491 = vadd.f32 %v1433, %v1490
        %v1492 = vpop.f32.mrf.mxu0
        %1493 = vdwg.mxu0
        %1494 = vmatpush.bf16.msra.mxu0 0
        %1495 = vmatpush.bf16.msra.mxu0 0
        %1496 = vmatpush.bf16.msra.mxu0 0
        %1497 = vmatpush.bf16.msra.mxu0 0
        %1498 = vmatpush.bf16.msra.mxu0 0
        %1499 = vmatpush.bf16.msra.mxu0 0
        %1500 = vmatpush.bf16.msra.mxu0 %v1470
        %1501 = vmatpush.bf16.msra.mxu0 %v1466
        %1502 = vmatmul.bf16.gmra.mxu0 %v1297
        %v1503 = vpop.f32.mrf.mxu0
        %v1504 = vadd.f32 %v1434, %v1503
        %v1505 = vpop.f32.mrf.mxu0
        %1506 = vdwg.mxu0
        %1507 = vmatpush.bf16.msra.mxu0 0
        %1508 = vmatpush.bf16.msra.mxu0 0
        %1509 = vmatpush.bf16.msra.mxu0 0
        %1510 = vmatpush.bf16.msra.mxu0 0
        %1511 = vmatpush.bf16.msra.mxu0 0
        %1512 = vmatpush.bf16.msra.mxu0 0
        %1513 = vmatpush.bf16.msra.mxu0 %v1471
        %1514 = vmatpush.bf16.msra.mxu0 %v1467
        %1515 = vmatmul.bf16.gmra.mxu0 %v1297
        %v1516 = vpop.f32.mrf.mxu0
        %v1517 = vadd.f32 %v1435, %v1516
        %v1518 = vpop.f32.mrf.mxu0
        %1519 = vdwg.mxu0
        %1520 = vmatpush.bf16.msra.mxu0 0
        %1521 = vmatpush.bf16.msra.mxu0 0
        %1522 = vmatpush.bf16.msra.mxu0 0
        %1523 = vmatpush.bf16.msra.mxu0 0
        %1524 = vmatpush.bf16.msra.mxu0 0
        %1525 = vmatpush.bf16.msra.mxu0 0
        %1526 = vmatpush.bf16.msra.mxu0 %v1472
        %1527 = vmatpush.bf16.msra.mxu0 %v1468
        %1528 = vmatmul.bf16.gmra.mxu0 %v1297
        %v1529 = vpop.f32.mrf.mxu0
        %v1530 = vadd.f32 %v1436, %v1529
        %v1531 = vpop.f32.mrf.mxu0
        %1532 = vdwg.mxu0
        %v1533 = vmax.f32 %v1491, 0.0
        %v1534 = vmax.f32 %v1504, 0.0
        %v1535 = vmax.f32 %v1517, 0.0
        %v1536 = vmax.f32 %v1530, 0.0
        %v1537 = vpack.c.bf16 %v1533, %v1533
        %v1538 = vpack.c.bf16 %v1534, %v1534
        %v1539 = vpack.c.bf16 %v1535, %v1535
        %v1540 = vpack.c.bf16 %v1536, %v1536
        %v1541 = vld [vmem:[%s15 + $0x100] sm:$0xf]
        %v1542 = vld [vmem:[%s15 + $0x104] sm:$0xf]
        %v1543 = vld [vmem:[%s15 + $0x108] sm:$0xf]
        %v1544 = vld [vmem:[%s15 + $0x10c] sm:$0xf]
        %v1545 = vld [vmem:[%s15 + $0x110] sm:$0xf]
        %v1546 = vld [vmem:[%s15 + $0x114] sm:$0xf]
        %v1547 = vld [vmem:[%s15 + $0x118] sm:$0xf]
        %v1548 = vld [vmem:[%s15 + $0x11c] sm:$0xf]
        %v1549 = vld [vmem:[%s15 + $0x120] sm:$0xf]
        %v1550 = vld [vmem:[%s15 + $0x124] sm:$0xf]
        %v1551 = vld [vmem:[%s15 + $0x128] sm:$0xf]
        %v1552 = vld [vmem:[%s15 + $0x12c] sm:$0xf]
        %v1553 = vld [vmem:[%s15 + $0x130] sm:$0xf]
        %v1554 = vld [vmem:[%s15 + $0x134] sm:$0xf]
        %v1555 = vld [vmem:[%s15 + $0x138] sm:$0xf]
        %v1556 = vld [vmem:[%s15 + $0x13c] sm:$0xf]
        %v1557 = vld [vmem:[%s15 + $0x140] sm:$0xf]
        %v1558 = vld [vmem:[%s15 + $0x144] sm:$0xf]
        %v1559 = vld [vmem:[%s15 + $0x148] sm:$0xf]
        %v1560 = vld [vmem:[%s15 + $0x14c] sm:$0xf]
        %v1561 = vld [vmem:[%s15 + $0x150] sm:$0xf]
        %v1562 = vld [vmem:[%s15 + $0x154] sm:$0xf]
        %v1563 = vld [vmem:[%s15 + $0x158] sm:$0xf]
        %v1564 = vld [vmem:[%s15 + $0x15c] sm:$0xf]
        %v1565 = vld [vmem:[%s15 + $0x160] sm:$0xf]
        %v1566 = vld [vmem:[%s15 + $0x164] sm:$0xf]
        %v1567 = vld [vmem:[%s15 + $0x168] sm:$0xf]
        %v1568 = vld [vmem:[%s15 + $0x16c] sm:$0xf]
        %v1569 = vld [vmem:[%s15 + $0x170] sm:$0xf]
        %v1570 = vld [vmem:[%s15 + $0x174] sm:$0xf]
        %v1571 = vld [vmem:[%s15 + $0x178] sm:$0xf]
        %v1572 = vld [vmem:[%s15 + $0x17c] sm:$0xf]
        %v1573 = vld [vmem:[%s15 + $0x180] sm:$0xf]
        %v1574 = vld [vmem:[%s15 + $0x184] sm:$0xf]
        %v1575 = vld [vmem:[%s15 + $0x188] sm:$0xf]
        %v1576 = vld [vmem:[%s15 + $0x18c] sm:$0xf]
        %v1577 = vld [vmem:[%s15 + $0x190] sm:$0xf]
        %v1578 = vld [vmem:[%s15 + $0x194] sm:$0xf]
        %v1579 = vld [vmem:[%s15 + $0x198] sm:$0xf]
        %v1580 = vld [vmem:[%s15 + $0x19c] sm:$0xf]
        %v1581 = vld [vmem:[%s15 + $0x1a0] sm:$0xf]
        %v1582 = vld [vmem:[%s15 + $0x1a4] sm:$0xf]
        %v1583 = vld [vmem:[%s15 + $0x1a8] sm:$0xf]
        %v1584 = vld [vmem:[%s15 + $0x1ac] sm:$0xf]
        %v1585 = vld [vmem:[%s15 + $0x1b0] sm:$0xf]
        %v1586 = vld [vmem:[%s15 + $0x1b4] sm:$0xf]
        %v1587 = vld [vmem:[%s15 + $0x1b8] sm:$0xf]
        %v1588 = vld [vmem:[%s15 + $0x1bc] sm:$0xf]
        %v1589 = vld [vmem:[%s15 + $0x1c0] sm:$0xf]
        %v1590 = vld [vmem:[%s15 + $0x1c4] sm:$0xf]
        %v1591 = vld [vmem:[%s15 + $0x1c8] sm:$0xf]
        %v1592 = vld [vmem:[%s15 + $0x1cc] sm:$0xf]
        %v1593 = vld [vmem:[%s15 + $0x1d0] sm:$0xf]
        %v1594 = vld [vmem:[%s15 + $0x1d4] sm:$0xf]
        %v1595 = vld [vmem:[%s15 + $0x1d8] sm:$0xf]
        %v1596 = vld [vmem:[%s15 + $0x1dc] sm:$0xf]
        %v1597 = vld [vmem:[%s15 + $0x1e0] sm:$0xf]
        %v1598 = vld [vmem:[%s15 + $0x1e4] sm:$0xf]
        %v1599 = vld [vmem:[%s15 + $0x1e8] sm:$0xf]
        %v1600 = vld [vmem:[%s15 + $0x1ec] sm:$0xf]
        %v1601 = vld [vmem:[%s15 + $0x1f0] sm:$0xf]
        %v1602 = vld [vmem:[%s15 + $0x1f4] sm:$0xf]
        %v1603 = vld [vmem:[%s15 + $0x1f8] sm:$0xf]
        %v1604 = vld [vmem:[%s15 + $0x1fc] sm:$0xf]
        %v1669 = vunpack.c.l.b16 %v1541
        %v1670 = vunpack.c.l.b16 %v1542
        %v1671 = vunpack.c.l.b16 %v1543
        %v1672 = vunpack.c.l.b16 %v1544
        %v1673 = vunpack.c.l.b16 %v1545
        %v1674 = vunpack.c.l.b16 %v1546
        %v1675 = vunpack.c.l.b16 %v1547
        %v1676 = vunpack.c.l.b16 %v1548
        %v1677 = vunpack.c.l.b16 %v1549
        %v1678 = vunpack.c.l.b16 %v1550
        %v1679 = vunpack.c.l.b16 %v1551
        %v1680 = vunpack.c.l.b16 %v1552
        %v1681 = vunpack.c.l.b16 %v1553
        %v1682 = vunpack.c.l.b16 %v1554
        %v1683 = vunpack.c.l.b16 %v1555
        %v1684 = vunpack.c.l.b16 %v1556
        %v1685 = vunpack.c.l.b16 %v1557
        %v1686 = vunpack.c.l.b16 %v1558
        %v1687 = vunpack.c.l.b16 %v1559
        %v1688 = vunpack.c.l.b16 %v1560
        %v1689 = vunpack.c.l.b16 %v1561
        %v1690 = vunpack.c.l.b16 %v1562
        %v1691 = vunpack.c.l.b16 %v1563
        %v1692 = vunpack.c.l.b16 %v1564
        %v1693 = vunpack.c.l.b16 %v1565
        %v1694 = vunpack.c.l.b16 %v1566
        %v1695 = vunpack.c.l.b16 %v1567
        %v1696 = vunpack.c.l.b16 %v1568
        %v1697 = vunpack.c.l.b16 %v1569
        %v1698 = vunpack.c.l.b16 %v1570
        %v1699 = vunpack.c.l.b16 %v1571
        %v1700 = vunpack.c.l.b16 %v1572
        %v1701 = vunpack.c.l.b16 %v1573
        %v1702 = vunpack.c.l.b16 %v1574
        %v1703 = vunpack.c.l.b16 %v1575
        %v1704 = vunpack.c.l.b16 %v1576
        %v1705 = vunpack.c.l.b16 %v1577
        %v1706 = vunpack.c.l.b16 %v1578
        %v1707 = vunpack.c.l.b16 %v1579
        %v1708 = vunpack.c.l.b16 %v1580
        %v1709 = vunpack.c.l.b16 %v1581
        %v1710 = vunpack.c.l.b16 %v1582
        %v1711 = vunpack.c.l.b16 %v1583
        %v1712 = vunpack.c.l.b16 %v1584
        %v1713 = vunpack.c.l.b16 %v1585
        %v1714 = vunpack.c.l.b16 %v1586
        %v1715 = vunpack.c.l.b16 %v1587
        %v1716 = vunpack.c.l.b16 %v1588
        %v1717 = vunpack.c.l.b16 %v1589
        %v1718 = vunpack.c.l.b16 %v1590
        %v1719 = vunpack.c.l.b16 %v1591
        %v1720 = vunpack.c.l.b16 %v1592
        %v1721 = vunpack.c.l.b16 %v1593
        %v1722 = vunpack.c.l.b16 %v1594
        %v1723 = vunpack.c.l.b16 %v1595
        %v1724 = vunpack.c.l.b16 %v1596
        %v1725 = vunpack.c.l.b16 %v1597
        %v1726 = vunpack.c.l.b16 %v1598
        %v1727 = vunpack.c.l.b16 %v1599
        %v1728 = vunpack.c.l.b16 %v1600
        %v1729 = vunpack.c.l.b16 %v1601
        %v1730 = vunpack.c.l.b16 %v1602
        %v1731 = vunpack.c.l.b16 %v1603
        %v1732 = vunpack.c.l.b16 %v1604
        %v1733 = vpack.c.b16 %v1670, %v1669
        %v1734 = vpack.c.b16 %v1672, %v1671
        %v1735 = vpack.c.b16 %v1674, %v1673
        %v1736 = vpack.c.b16 %v1676, %v1675
        %v1737 = vpack.c.b16 %v1678, %v1677
        %v1738 = vpack.c.b16 %v1680, %v1679
        %v1739 = vpack.c.b16 %v1682, %v1681
        %v1740 = vpack.c.b16 %v1684, %v1683
        %v1741 = vpack.c.b16 %v1686, %v1685
        %v1742 = vpack.c.b16 %v1688, %v1687
        %v1743 = vpack.c.b16 %v1690, %v1689
        %v1744 = vpack.c.b16 %v1692, %v1691
        %v1745 = vpack.c.b16 %v1694, %v1693
        %v1746 = vpack.c.b16 %v1696, %v1695
        %v1747 = vpack.c.b16 %v1698, %v1697
        %v1748 = vpack.c.b16 %v1700, %v1699
        %v1749 = vpack.c.b16 %v1702, %v1701
        %v1750 = vpack.c.b16 %v1704, %v1703
        %v1751 = vpack.c.b16 %v1706, %v1705
        %v1752 = vpack.c.b16 %v1708, %v1707
        %v1753 = vpack.c.b16 %v1710, %v1709
        %v1754 = vpack.c.b16 %v1712, %v1711
        %v1755 = vpack.c.b16 %v1714, %v1713
        %v1756 = vpack.c.b16 %v1716, %v1715
        %v1757 = vpack.c.b16 %v1718, %v1717
        %v1758 = vpack.c.b16 %v1720, %v1719
        %v1759 = vpack.c.b16 %v1722, %v1721
        %v1760 = vpack.c.b16 %v1724, %v1723
        %v1761 = vpack.c.b16 %v1726, %v1725
        %v1762 = vpack.c.b16 %v1728, %v1727
        %v1763 = vpack.c.b16 %v1730, %v1729
        %v1764 = vpack.c.b16 %v1732, %v1731
        %1797 = vmatpush.bf16.msra.mxu0 %v1740
        %1798 = vmatpush.bf16.msra.mxu0 %v1739
        %1799 = vmatpush.bf16.msra.mxu0 %v1738
        %1800 = vmatpush.bf16.msra.mxu0 %v1737
        %1801 = vmatpush.bf16.msra.mxu0 %v1736
        %1802 = vmatpush.bf16.msra.mxu0 %v1735
        %1803 = vmatpush.bf16.msra.mxu0 %v1734
        %1804 = vmatpush.bf16.msra.mxu0 %v1733
        %1805 = vmatmul.bf16.gmra.mxu0 %v1537
        %v1806 = vpop.f32.mrf.mxu0
        %v1807 = vadd.f32 0.0, %v1806
        %v1808 = vpop.f32.mrf.mxu0
        %1809 = vdwg.mxu0
        %1810 = vmatpush.bf16.msra.mxu0 %v1748
        %1811 = vmatpush.bf16.msra.mxu0 %v1747
        %1812 = vmatpush.bf16.msra.mxu0 %v1746
        %1813 = vmatpush.bf16.msra.mxu0 %v1745
        %1814 = vmatpush.bf16.msra.mxu0 %v1744
        %1815 = vmatpush.bf16.msra.mxu0 %v1743
        %1816 = vmatpush.bf16.msra.mxu0 %v1742
        %1817 = vmatpush.bf16.msra.mxu0 %v1741
        %1818 = vmatmul.bf16.gmra.mxu0 %v1538
        %v1819 = vpop.f32.mrf.mxu0
        %v1820 = vadd.f32 %v1807, %v1819
        %v1821 = vpop.f32.mrf.mxu0
        %1822 = vdwg.mxu0
        %1823 = vmatpush.bf16.msra.mxu0 %v1756
        %1824 = vmatpush.bf16.msra.mxu0 %v1755
        %1825 = vmatpush.bf16.msra.mxu0 %v1754
        %1826 = vmatpush.bf16.msra.mxu0 %v1753
        %1827 = vmatpush.bf16.msra.mxu0 %v1752
        %1828 = vmatpush.bf16.msra.mxu0 %v1751
        %1829 = vmatpush.bf16.msra.mxu0 %v1750
        %1830 = vmatpush.bf16.msra.mxu0 %v1749
        %1831 = vmatmul.bf16.gmra.mxu0 %v1539
        %v1832 = vpop.f32.mrf.mxu0
        %v1833 = vadd.f32 %v1820, %v1832
        %v1834 = vpop.f32.mrf.mxu0
        %1835 = vdwg.mxu0
        %1836 = vmatpush.bf16.msra.mxu0 %v1764
        %1837 = vmatpush.bf16.msra.mxu0 %v1763
        %1838 = vmatpush.bf16.msra.mxu0 %v1762
        %1839 = vmatpush.bf16.msra.mxu0 %v1761
        %1840 = vmatpush.bf16.msra.mxu0 %v1760
        %1841 = vmatpush.bf16.msra.mxu0 %v1759
        %1842 = vmatpush.bf16.msra.mxu0 %v1758
        %1843 = vmatpush.bf16.msra.mxu0 %v1757
        %1844 = vmatmul.bf16.gmra.mxu0 %v1540
        %v1845 = vpop.f32.mrf.mxu0
        %v1846 = vadd.f32 %v1833, %v1845
        %v1847 = vpop.f32.mrf.mxu0
        %1848 = vdwg.mxu0
        %v1913 = vunpack.c.l.b16 %v1359
        %v1914 = vunpack.c.l.b16 %v1360
        %v1915 = vunpack.c.l.b16 %v1361
        %v1916 = vunpack.c.l.b16 %v1362
        %v1917 = vunpack.c.l.b16 %v1363
        %v1918 = vunpack.c.l.b16 %v1364
        %v1919 = vunpack.c.l.b16 %v1365
        %v1920 = vunpack.c.l.b16 %v1366
        %v1921 = vunpack.c.l.b16 %v1367
        %v1922 = vunpack.c.l.b16 %v1368
        %v1923 = vunpack.c.l.b16 %v1369
        %v1924 = vunpack.c.l.b16 %v1370
        %v1925 = vunpack.c.l.b16 %v1371
        %v1926 = vunpack.c.l.b16 %v1372
        %v1927 = vunpack.c.l.b16 %v1373
        %v1928 = vunpack.c.l.b16 %v1374
        %v1929 = vunpack.c.l.b16 %v1375
        %v1930 = vunpack.c.l.b16 %v1376
        %v1931 = vunpack.c.l.b16 %v1377
        %v1932 = vunpack.c.l.b16 %v1378
        %v1933 = vunpack.c.l.b16 %v1379
        %v1934 = vunpack.c.l.b16 %v1380
        %v1935 = vunpack.c.l.b16 %v1381
        %v1936 = vunpack.c.l.b16 %v1382
        %v1937 = vunpack.c.l.b16 %v1383
        %v1938 = vunpack.c.l.b16 %v1384
        %v1939 = vunpack.c.l.b16 %v1385
        %v1940 = vunpack.c.l.b16 %v1386
        %v1941 = vunpack.c.l.b16 %v1387
        %v1942 = vunpack.c.l.b16 %v1388
        %v1943 = vunpack.c.l.b16 %v1389
        %v1944 = vunpack.c.l.b16 %v1390
        %v1945 = vunpack.c.l.b16 %v1391
        %v1946 = vunpack.c.l.b16 %v1392
        %v1947 = vunpack.c.l.b16 %v1393
        %v1948 = vunpack.c.l.b16 %v1394
        %v1949 = vunpack.c.l.b16 %v1395
        %v1950 = vunpack.c.l.b16 %v1396
        %v1951 = vunpack.c.l.b16 %v1397
        %v1952 = vunpack.c.l.b16 %v1398
        %v1953 = vunpack.c.l.b16 %v1399
        %v1954 = vunpack.c.l.b16 %v1400
        %v1955 = vunpack.c.l.b16 %v1401
        %v1956 = vunpack.c.l.b16 %v1402
        %v1957 = vunpack.c.l.b16 %v1403
        %v1958 = vunpack.c.l.b16 %v1404
        %v1959 = vunpack.c.l.b16 %v1405
        %v1960 = vunpack.c.l.b16 %v1406
        %v1961 = vunpack.c.l.b16 %v1407
        %v1962 = vunpack.c.l.b16 %v1408
        %v1963 = vunpack.c.l.b16 %v1409
        %v1964 = vunpack.c.l.b16 %v1410
        %v1965 = vunpack.c.l.b16 %v1411
        %v1966 = vunpack.c.l.b16 %v1412
        %v1967 = vunpack.c.l.b16 %v1413
        %v1968 = vunpack.c.l.b16 %v1414
        %v1969 = vunpack.c.l.b16 %v1415
        %v1970 = vunpack.c.l.b16 %v1416
        %v1971 = vunpack.c.l.b16 %v1417
        %v1972 = vunpack.c.l.b16 %v1418
        %v1973 = vunpack.c.l.b16 %v1419
        %v1974 = vunpack.c.l.b16 %v1420
        %v1975 = vunpack.c.l.b16 %v1421
        %v1976 = vunpack.c.l.b16 %v1422
        %v1977 = vpack.c.b16 %v1914, %v1913
        %v1978 = vpack.c.b16 %v1916, %v1915
        %v1979 = vpack.c.b16 %v1918, %v1917
        %v1980 = vpack.c.b16 %v1920, %v1919
        %v1981 = vpack.c.b16 %v1922, %v1921
        %v1982 = vpack.c.b16 %v1924, %v1923
        %v1983 = vpack.c.b16 %v1926, %v1925
        %v1984 = vpack.c.b16 %v1928, %v1927
        %v1985 = vpack.c.b16 %v1930, %v1929
        %v1986 = vpack.c.b16 %v1932, %v1931
        %v1987 = vpack.c.b16 %v1934, %v1933
        %v1988 = vpack.c.b16 %v1936, %v1935
        %v1989 = vpack.c.b16 %v1938, %v1937
        %v1990 = vpack.c.b16 %v1940, %v1939
        %v1991 = vpack.c.b16 %v1942, %v1941
        %v1992 = vpack.c.b16 %v1944, %v1943
        %v1993 = vpack.c.b16 %v1946, %v1945
        %v1994 = vpack.c.b16 %v1948, %v1947
        %v1995 = vpack.c.b16 %v1950, %v1949
        %v1996 = vpack.c.b16 %v1952, %v1951
        %v1997 = vpack.c.b16 %v1954, %v1953
        %v1998 = vpack.c.b16 %v1956, %v1955
        %v1999 = vpack.c.b16 %v1958, %v1957
        %v2000 = vpack.c.b16 %v1960, %v1959
        %v2001 = vpack.c.b16 %v1962, %v1961
        %v2002 = vpack.c.b16 %v1964, %v1963
        %v2003 = vpack.c.b16 %v1966, %v1965
        %v2004 = vpack.c.b16 %v1968, %v1967
        %v2005 = vpack.c.b16 %v1970, %v1969
        %v2006 = vpack.c.b16 %v1972, %v1971
        %v2007 = vpack.c.b16 %v1974, %v1973
        %v2008 = vpack.c.b16 %v1976, %v1975
        %2041 = vmatpush.bf16.msra.mxu0 %v1984
        %2042 = vmatpush.bf16.msra.mxu0 %v1983
        %2043 = vmatpush.bf16.msra.mxu0 %v1982
        %2044 = vmatpush.bf16.msra.mxu0 %v1981
        %2045 = vmatpush.bf16.msra.mxu0 %v1980
        %2046 = vmatpush.bf16.msra.mxu0 %v1979
        %2047 = vmatpush.bf16.msra.mxu0 %v1978
        %2048 = vmatpush.bf16.msra.mxu0 %v1977
        %2049 = vmatmul.bf16.gmra.mxu0 %v1355
        %v2050 = vpop.f32.mrf.mxu0
        %v2051 = vadd.f32 %v1846, %v2050
        %v2052 = vpop.f32.mrf.mxu0
        %2053 = vdwg.mxu0
        %2054 = vmatpush.bf16.msra.mxu0 %v1992
        %2055 = vmatpush.bf16.msra.mxu0 %v1991
        %2056 = vmatpush.bf16.msra.mxu0 %v1990
        %2057 = vmatpush.bf16.msra.mxu0 %v1989
        %2058 = vmatpush.bf16.msra.mxu0 %v1988
        %2059 = vmatpush.bf16.msra.mxu0 %v1987
        %2060 = vmatpush.bf16.msra.mxu0 %v1986
        %2061 = vmatpush.bf16.msra.mxu0 %v1985
        %2062 = vmatmul.bf16.gmra.mxu0 %v1356
        %v2063 = vpop.f32.mrf.mxu0
        %v2064 = vadd.f32 %v2051, %v2063
        %v2065 = vpop.f32.mrf.mxu0
        %2066 = vdwg.mxu0
        %2067 = vmatpush.bf16.msra.mxu0 %v2000
        %2068 = vmatpush.bf16.msra.mxu0 %v1999
        %2069 = vmatpush.bf16.msra.mxu0 %v1998
        %2070 = vmatpush.bf16.msra.mxu0 %v1997
        %2071 = vmatpush.bf16.msra.mxu0 %v1996
        %2072 = vmatpush.bf16.msra.mxu0 %v1995
        %2073 = vmatpush.bf16.msra.mxu0 %v1994
        %2074 = vmatpush.bf16.msra.mxu0 %v1993
        %2075 = vmatmul.bf16.gmra.mxu0 %v1357
        %v2076 = vpop.f32.mrf.mxu0
        %v2077 = vadd.f32 %v2064, %v2076
        %v2078 = vpop.f32.mrf.mxu0
        %2079 = vdwg.mxu0
        %2080 = vmatpush.bf16.msra.mxu0 %v2008
        %2081 = vmatpush.bf16.msra.mxu0 %v2007
        %2082 = vmatpush.bf16.msra.mxu0 %v2006
        %2083 = vmatpush.bf16.msra.mxu0 %v2005
        %2084 = vmatpush.bf16.msra.mxu0 %v2004
        %2085 = vmatpush.bf16.msra.mxu0 %v2003
        %2086 = vmatpush.bf16.msra.mxu0 %v2002
        %2087 = vmatpush.bf16.msra.mxu0 %v2001
        %2088 = vmatmul.bf16.gmra.mxu0 %v1358
        %v2089 = vpop.f32.mrf.mxu0
        %v2090 = vadd.f32 %v2077, %v2089
        %v2091 = vpop.f32.mrf.mxu0
        %2092 = vdwg.mxu0
        %v2093 = vld [vmem:[%s13 + $0x20] sm:$0xff]
        %v2094 = vld [vmem:[%s13 + $0x28] sm:$0xff]
        %v2095 = vld [vmem:[%s13 + $0x60] sm:$0xff]
        %v2096 = vld [vmem:[%s13 + $0x68] sm:$0xff]
        %v2097 = vld [vmem:[%s13 + $0xa0] sm:$0xff]
        %v2098 = vld [vmem:[%s13 + $0xa8] sm:$0xff]
        %v2099 = vld [vmem:[%s13 + $0xe0] sm:$0xff]
        %v2100 = vld [vmem:[%s13 + $0xe8] sm:$0xff]
        %v2101 = vld [vmem:[%s14 + $0x8] sm:$0xf]
        %v2103 = vperm.slane %v2101, 0
        %v2104 = vperm.slane %v2101, 1
        %v2105 = vperm.slane %v2101, 2
        %v2106 = vperm.slane %v2101, 3
        %v2119 = vunpack.c.l.b16 %v2093
        %v2120 = vunpack.c.h.b16 %v2093
        %v2121 = vunpack.c.l.b16 %v2094
        %v2122 = vunpack.c.h.b16 %v2094
        %v2123 = vunpack.c.l.b16 %v2095
        %v2124 = vunpack.c.h.b16 %v2095
        %v2125 = vunpack.c.l.b16 %v2096
        %v2126 = vunpack.c.h.b16 %v2096
        %v2127 = vunpack.c.l.b16 %v2097
        %v2128 = vunpack.c.h.b16 %v2097
        %v2129 = vunpack.c.l.b16 %v2098
        %v2130 = vunpack.c.h.b16 %v2098
        %v2131 = vunpack.c.l.b16 %v2099
        %v2132 = vunpack.c.h.b16 %v2099
        %v2133 = vunpack.c.l.b16 %v2100
        %v2134 = vunpack.c.h.b16 %v2100
        %v2135 = vpack.c.b16 %v2123, %v2119
        %v2136 = vpack.c.b16 %v2124, %v2120
        %v2137 = vpack.c.b16 %v2125, %v2121
        %v2138 = vpack.c.b16 %v2126, %v2122
        %v2139 = vpack.c.b16 %v2131, %v2127
        %v2140 = vpack.c.b16 %v2132, %v2128
        %v2141 = vpack.c.b16 %v2133, %v2129
        %v2142 = vpack.c.b16 %v2134, %v2130
        %2151 = vmatpush.bf16.msra.mxu0 0
        %2152 = vmatpush.bf16.msra.mxu0 0
        %2153 = vmatpush.bf16.msra.mxu0 0
        %2154 = vmatpush.bf16.msra.mxu0 0
        %2155 = vmatpush.bf16.msra.mxu0 0
        %2156 = vmatpush.bf16.msra.mxu0 0
        %2157 = vmatpush.bf16.msra.mxu0 %v2139
        %2158 = vmatpush.bf16.msra.mxu0 %v2135
        %2159 = vmatmul.bf16.gmra.mxu0 %v1297
        %v2160 = vpop.f32.mrf.mxu0
        %v2161 = vadd.f32 %v2103, %v2160
        %v2162 = vpop.f32.mrf.mxu0
        %2163 = vdwg.mxu0
        %2164 = vmatpush.bf16.msra.mxu0 0
        %2165 = vmatpush.bf16.msra.mxu0 0
        %2166 = vmatpush.bf16.msra.mxu0 0
        %2167 = vmatpush.bf16.msra.mxu0 0
        %2168 = vmatpush.bf16.msra.mxu0 0
        %2169 = vmatpush.bf16.msra.mxu0 0
        %2170 = vmatpush.bf16.msra.mxu0 %v2140
        %2171 = vmatpush.bf16.msra.mxu0 %v2136
        %2172 = vmatmul.bf16.gmra.mxu0 %v1297
        %v2173 = vpop.f32.mrf.mxu0
        %v2174 = vadd.f32 %v2104, %v2173
        %v2175 = vpop.f32.mrf.mxu0
        %2176 = vdwg.mxu0
        %2177 = vmatpush.bf16.msra.mxu0 0
        %2178 = vmatpush.bf16.msra.mxu0 0
        %2179 = vmatpush.bf16.msra.mxu0 0
        %2180 = vmatpush.bf16.msra.mxu0 0
        %2181 = vmatpush.bf16.msra.mxu0 0
        %2182 = vmatpush.bf16.msra.mxu0 0
        %2183 = vmatpush.bf16.msra.mxu0 %v2141
        %2184 = vmatpush.bf16.msra.mxu0 %v2137
        %2185 = vmatmul.bf16.gmra.mxu0 %v1297
        %v2186 = vpop.f32.mrf.mxu0
        %v2187 = vadd.f32 %v2105, %v2186
        %v2188 = vpop.f32.mrf.mxu0
        %2189 = vdwg.mxu0
        %2190 = vmatpush.bf16.msra.mxu0 0
        %2191 = vmatpush.bf16.msra.mxu0 0
        %2192 = vmatpush.bf16.msra.mxu0 0
        %2193 = vmatpush.bf16.msra.mxu0 0
        %2194 = vmatpush.bf16.msra.mxu0 0
        %2195 = vmatpush.bf16.msra.mxu0 0
        %2196 = vmatpush.bf16.msra.mxu0 %v2142
        %2197 = vmatpush.bf16.msra.mxu0 %v2138
        %2198 = vmatmul.bf16.gmra.mxu0 %v1297
        %v2199 = vpop.f32.mrf.mxu0
        %v2200 = vadd.f32 %v2106, %v2199
        %v2201 = vpop.f32.mrf.mxu0
        %2202 = vdwg.mxu0
        %v2203 = vmax.f32 %v2161, 0.0
        %v2204 = vmax.f32 %v2174, 0.0
        %v2205 = vmax.f32 %v2187, 0.0
        %v2206 = vmax.f32 %v2200, 0.0
        %v2207 = vpack.c.bf16 %v2203, %v2203
        %v2208 = vpack.c.bf16 %v2204, %v2204
        %v2209 = vpack.c.bf16 %v2205, %v2205
        %v2210 = vpack.c.bf16 %v2206, %v2206
        %v2211 = vld [vmem:[%s15 + $0x200] sm:$0xf]
        %v2212 = vld [vmem:[%s15 + $0x204] sm:$0xf]
        %v2213 = vld [vmem:[%s15 + $0x208] sm:$0xf]
        %v2214 = vld [vmem:[%s15 + $0x20c] sm:$0xf]
        %v2215 = vld [vmem:[%s15 + $0x210] sm:$0xf]
        %v2216 = vld [vmem:[%s15 + $0x214] sm:$0xf]
        %v2217 = vld [vmem:[%s15 + $0x218] sm:$0xf]
        %v2218 = vld [vmem:[%s15 + $0x21c] sm:$0xf]
        %v2219 = vld [vmem:[%s15 + $0x220] sm:$0xf]
        %v2220 = vld [vmem:[%s15 + $0x224] sm:$0xf]
        %v2221 = vld [vmem:[%s15 + $0x228] sm:$0xf]
        %v2222 = vld [vmem:[%s15 + $0x22c] sm:$0xf]
        %v2223 = vld [vmem:[%s15 + $0x230] sm:$0xf]
        %v2224 = vld [vmem:[%s15 + $0x234] sm:$0xf]
        %v2225 = vld [vmem:[%s15 + $0x238] sm:$0xf]
        %v2226 = vld [vmem:[%s15 + $0x23c] sm:$0xf]
        %v2227 = vld [vmem:[%s15 + $0x240] sm:$0xf]
        %v2228 = vld [vmem:[%s15 + $0x244] sm:$0xf]
        %v2229 = vld [vmem:[%s15 + $0x248] sm:$0xf]
        %v2230 = vld [vmem:[%s15 + $0x24c] sm:$0xf]
        %v2231 = vld [vmem:[%s15 + $0x250] sm:$0xf]
        %v2232 = vld [vmem:[%s15 + $0x254] sm:$0xf]
        %v2233 = vld [vmem:[%s15 + $0x258] sm:$0xf]
        %v2234 = vld [vmem:[%s15 + $0x25c] sm:$0xf]
        %v2235 = vld [vmem:[%s15 + $0x260] sm:$0xf]
        %v2236 = vld [vmem:[%s15 + $0x264] sm:$0xf]
        %v2237 = vld [vmem:[%s15 + $0x268] sm:$0xf]
        %v2238 = vld [vmem:[%s15 + $0x26c] sm:$0xf]
        %v2239 = vld [vmem:[%s15 + $0x270] sm:$0xf]
        %v2240 = vld [vmem:[%s15 + $0x274] sm:$0xf]
        %v2241 = vld [vmem:[%s15 + $0x278] sm:$0xf]
        %v2242 = vld [vmem:[%s15 + $0x27c] sm:$0xf]
        %v2243 = vld [vmem:[%s15 + $0x280] sm:$0xf]
        %v2244 = vld [vmem:[%s15 + $0x284] sm:$0xf]
        %v2245 = vld [vmem:[%s15 + $0x288] sm:$0xf]
        %v2246 = vld [vmem:[%s15 + $0x28c] sm:$0xf]
        %v2247 = vld [vmem:[%s15 + $0x290] sm:$0xf]
        %v2248 = vld [vmem:[%s15 + $0x294] sm:$0xf]
        %v2249 = vld [vmem:[%s15 + $0x298] sm:$0xf]
        %v2250 = vld [vmem:[%s15 + $0x29c] sm:$0xf]
        %v2251 = vld [vmem:[%s15 + $0x2a0] sm:$0xf]
        %v2252 = vld [vmem:[%s15 + $0x2a4] sm:$0xf]
        %v2253 = vld [vmem:[%s15 + $0x2a8] sm:$0xf]
        %v2254 = vld [vmem:[%s15 + $0x2ac] sm:$0xf]
        %v2255 = vld [vmem:[%s15 + $0x2b0] sm:$0xf]
        %v2256 = vld [vmem:[%s15 + $0x2b4] sm:$0xf]
        %v2257 = vld [vmem:[%s15 + $0x2b8] sm:$0xf]
        %v2258 = vld [vmem:[%s15 + $0x2bc] sm:$0xf]
        %v2259 = vld [vmem:[%s15 + $0x2c0] sm:$0xf]
        %v2260 = vld [vmem:[%s15 + $0x2c4] sm:$0xf]
        %v2261 = vld [vmem:[%s15 + $0x2c8] sm:$0xf]
        %v2262 = vld [vmem:[%s15 + $0x2cc] sm:$0xf]
        %v2263 = vld [vmem:[%s15 + $0x2d0] sm:$0xf]
        %v2264 = vld [vmem:[%s15 + $0x2d4] sm:$0xf]
        %v2265 = vld [vmem:[%s15 + $0x2d8] sm:$0xf]
        %v2266 = vld [vmem:[%s15 + $0x2dc] sm:$0xf]
        %v2267 = vld [vmem:[%s15 + $0x2e0] sm:$0xf]
        %v2268 = vld [vmem:[%s15 + $0x2e4] sm:$0xf]
        %v2269 = vld [vmem:[%s15 + $0x2e8] sm:$0xf]
        %v2270 = vld [vmem:[%s15 + $0x2ec] sm:$0xf]
        %v2271 = vld [vmem:[%s15 + $0x2f0] sm:$0xf]
        %v2272 = vld [vmem:[%s15 + $0x2f4] sm:$0xf]
        %v2273 = vld [vmem:[%s15 + $0x2f8] sm:$0xf]
        %v2274 = vld [vmem:[%s15 + $0x2fc] sm:$0xf]
        %v2339 = vunpack.c.l.b16 %v2211
        %v2340 = vunpack.c.l.b16 %v2212
        %v2341 = vunpack.c.l.b16 %v2213
        %v2342 = vunpack.c.l.b16 %v2214
        %v2343 = vunpack.c.l.b16 %v2215
        %v2344 = vunpack.c.l.b16 %v2216
        %v2345 = vunpack.c.l.b16 %v2217
        %v2346 = vunpack.c.l.b16 %v2218
        %v2347 = vunpack.c.l.b16 %v2219
        %v2348 = vunpack.c.l.b16 %v2220
        %v2349 = vunpack.c.l.b16 %v2221
        %v2350 = vunpack.c.l.b16 %v2222
        %v2351 = vunpack.c.l.b16 %v2223
        %v2352 = vunpack.c.l.b16 %v2224
        %v2353 = vunpack.c.l.b16 %v2225
        %v2354 = vunpack.c.l.b16 %v2226
        %v2355 = vunpack.c.l.b16 %v2227
        %v2356 = vunpack.c.l.b16 %v2228
        %v2357 = vunpack.c.l.b16 %v2229
        %v2358 = vunpack.c.l.b16 %v2230
        %v2359 = vunpack.c.l.b16 %v2231
        %v2360 = vunpack.c.l.b16 %v2232
        %v2361 = vunpack.c.l.b16 %v2233
        %v2362 = vunpack.c.l.b16 %v2234
        %v2363 = vunpack.c.l.b16 %v2235
        %v2364 = vunpack.c.l.b16 %v2236
        %v2365 = vunpack.c.l.b16 %v2237
        %v2366 = vunpack.c.l.b16 %v2238
        %v2367 = vunpack.c.l.b16 %v2239
        %v2368 = vunpack.c.l.b16 %v2240
        %v2369 = vunpack.c.l.b16 %v2241
        %v2370 = vunpack.c.l.b16 %v2242
        %v2371 = vunpack.c.l.b16 %v2243
        %v2372 = vunpack.c.l.b16 %v2244
        %v2373 = vunpack.c.l.b16 %v2245
        %v2374 = vunpack.c.l.b16 %v2246
        %v2375 = vunpack.c.l.b16 %v2247
        %v2376 = vunpack.c.l.b16 %v2248
        %v2377 = vunpack.c.l.b16 %v2249
        %v2378 = vunpack.c.l.b16 %v2250
        %v2379 = vunpack.c.l.b16 %v2251
        %v2380 = vunpack.c.l.b16 %v2252
        %v2381 = vunpack.c.l.b16 %v2253
        %v2382 = vunpack.c.l.b16 %v2254
        %v2383 = vunpack.c.l.b16 %v2255
        %v2384 = vunpack.c.l.b16 %v2256
        %v2385 = vunpack.c.l.b16 %v2257
        %v2386 = vunpack.c.l.b16 %v2258
        %v2387 = vunpack.c.l.b16 %v2259
        %v2388 = vunpack.c.l.b16 %v2260
        %v2389 = vunpack.c.l.b16 %v2261
        %v2390 = vunpack.c.l.b16 %v2262
        %v2391 = vunpack.c.l.b16 %v2263
        %v2392 = vunpack.c.l.b16 %v2264
        %v2393 = vunpack.c.l.b16 %v2265
        %v2394 = vunpack.c.l.b16 %v2266
        %v2395 = vunpack.c.l.b16 %v2267
        %v2396 = vunpack.c.l.b16 %v2268
        %v2397 = vunpack.c.l.b16 %v2269
        %v2398 = vunpack.c.l.b16 %v2270
        %v2399 = vunpack.c.l.b16 %v2271
        %v2400 = vunpack.c.l.b16 %v2272
        %v2401 = vunpack.c.l.b16 %v2273
        %v2402 = vunpack.c.l.b16 %v2274
        %v2403 = vpack.c.b16 %v2340, %v2339
        %v2404 = vpack.c.b16 %v2342, %v2341
        %v2405 = vpack.c.b16 %v2344, %v2343
        %v2406 = vpack.c.b16 %v2346, %v2345
        %v2407 = vpack.c.b16 %v2348, %v2347
        %v2408 = vpack.c.b16 %v2350, %v2349
        %v2409 = vpack.c.b16 %v2352, %v2351
        %v2410 = vpack.c.b16 %v2354, %v2353
        %v2411 = vpack.c.b16 %v2356, %v2355
        %v2412 = vpack.c.b16 %v2358, %v2357
        %v2413 = vpack.c.b16 %v2360, %v2359
        %v2414 = vpack.c.b16 %v2362, %v2361
        %v2415 = vpack.c.b16 %v2364, %v2363
        %v2416 = vpack.c.b16 %v2366, %v2365
        %v2417 = vpack.c.b16 %v2368, %v2367
        %v2418 = vpack.c.b16 %v2370, %v2369
        %v2419 = vpack.c.b16 %v2372, %v2371
        %v2420 = vpack.c.b16 %v2374, %v2373
        %v2421 = vpack.c.b16 %v2376, %v2375
        %v2422 = vpack.c.b16 %v2378, %v2377
        %v2423 = vpack.c.b16 %v2380, %v2379
        %v2424 = vpack.c.b16 %v2382, %v2381
        %v2425 = vpack.c.b16 %v2384, %v2383
        %v2426 = vpack.c.b16 %v2386, %v2385
        %v2427 = vpack.c.b16 %v2388, %v2387
        %v2428 = vpack.c.b16 %v2390, %v2389
        %v2429 = vpack.c.b16 %v2392, %v2391
        %v2430 = vpack.c.b16 %v2394, %v2393
        %v2431 = vpack.c.b16 %v2396, %v2395
        %v2432 = vpack.c.b16 %v2398, %v2397
        %v2433 = vpack.c.b16 %v2400, %v2399
        %v2434 = vpack.c.b16 %v2402, %v2401
        %2467 = vmatpush.bf16.msra.mxu0 %v2410
        %2468 = vmatpush.bf16.msra.mxu0 %v2409
        %2469 = vmatpush.bf16.msra.mxu0 %v2408
        %2470 = vmatpush.bf16.msra.mxu0 %v2407
        %2471 = vmatpush.bf16.msra.mxu0 %v2406
        %2472 = vmatpush.bf16.msra.mxu0 %v2405
        %2473 = vmatpush.bf16.msra.mxu0 %v2404
        %2474 = vmatpush.bf16.msra.mxu0 %v2403
        %2475 = vmatmul.bf16.gmra.mxu0 %v2207
        %v2476 = vpop.f32.mrf.mxu0
        %v2477 = vadd.f32 0.0, %v2476
        %v2478 = vpop.f32.mrf.mxu0
        %2479 = vdwg.mxu0
        %2480 = vmatpush.bf16.msra.mxu0 %v2418
        %2481 = vmatpush.bf16.msra.mxu0 %v2417
        %2482 = vmatpush.bf16.msra.mxu0 %v2416
        %2483 = vmatpush.bf16.msra.mxu0 %v2415
        %2484 = vmatpush.bf16.msra.mxu0 %v2414
        %2485 = vmatpush.bf16.msra.mxu0 %v2413
        %2486 = vmatpush.bf16.msra.mxu0 %v2412
        %2487 = vmatpush.bf16.msra.mxu0 %v2411
        %2488 = vmatmul.bf16.gmra.mxu0 %v2208
        %v2489 = vpop.f32.mrf.mxu0
        %v2490 = vadd.f32 %v2477, %v2489
        %v2491 = vpop.f32.mrf.mxu0
        %2492 = vdwg.mxu0
        %2493 = vmatpush.bf16.msra.mxu0 %v2426
        %2494 = vmatpush.bf16.msra.mxu0 %v2425
        %2495 = vmatpush.bf16.msra.mxu0 %v2424
        %2496 = vmatpush.bf16.msra.mxu0 %v2423
        %2497 = vmatpush.bf16.msra.mxu0 %v2422
        %2498 = vmatpush.bf16.msra.mxu0 %v2421
        %2499 = vmatpush.bf16.msra.mxu0 %v2420
        %2500 = vmatpush.bf16.msra.mxu0 %v2419
        %2501 = vmatmul.bf16.gmra.mxu0 %v2209
        %v2502 = vpop.f32.mrf.mxu0
        %v2503 = vadd.f32 %v2490, %v2502
        %v2504 = vpop.f32.mrf.mxu0
        %2505 = vdwg.mxu0
        %2506 = vmatpush.bf16.msra.mxu0 %v2434
        %2507 = vmatpush.bf16.msra.mxu0 %v2433
        %2508 = vmatpush.bf16.msra.mxu0 %v2432
        %2509 = vmatpush.bf16.msra.mxu0 %v2431
        %2510 = vmatpush.bf16.msra.mxu0 %v2430
        %2511 = vmatpush.bf16.msra.mxu0 %v2429
        %2512 = vmatpush.bf16.msra.mxu0 %v2428
        %2513 = vmatpush.bf16.msra.mxu0 %v2427
        %2514 = vmatmul.bf16.gmra.mxu0 %v2210
        %v2515 = vpop.f32.mrf.mxu0
        %v2516 = vadd.f32 %v2503, %v2515
        %v2517 = vpop.f32.mrf.mxu0
        %2518 = vdwg.mxu0
        %v2519 = vadd.f32 %v2090, %v2516
        %v2520 = vld [vmem:[%s13 + $0x30] sm:$0xff]
        %v2521 = vld [vmem:[%s13 + $0x38] sm:$0xff]
        %v2522 = vld [vmem:[%s13 + $0x70] sm:$0xff]
        %v2523 = vld [vmem:[%s13 + $0x78] sm:$0xff]
        %v2524 = vld [vmem:[%s13 + $0xb0] sm:$0xff]
        %v2525 = vld [vmem:[%s13 + $0xb8] sm:$0xff]
        %v2526 = vld [vmem:[%s13 + $0xf0] sm:$0xff]
        %v2527 = vld [vmem:[%s13 + $0xf8] sm:$0xff]
        %v2528 = vld [vmem:[%s14 + $0xc] sm:$0xf]
        %v2530 = vperm.slane %v2528, 0
        %v2531 = vperm.slane %v2528, 1
        %v2532 = vperm.slane %v2528, 2
        %v2533 = vperm.slane %v2528, 3
        %v2546 = vunpack.c.l.b16 %v2520
        %v2547 = vunpack.c.h.b16 %v2520
        %v2548 = vunpack.c.l.b16 %v2521
        %v2549 = vunpack.c.h.b16 %v2521
        %v2550 = vunpack.c.l.b16 %v2522
        %v2551 = vunpack.c.h.b16 %v2522
        %v2552 = vunpack.c.l.b16 %v2523
        %v2553 = vunpack.c.h.b16 %v2523
        %v2554 = vunpack.c.l.b16 %v2524
        %v2555 = vunpack.c.h.b16 %v2524
        %v2556 = vunpack.c.l.b16 %v2525
        %v2557 = vunpack.c.h.b16 %v2525
        %v2558 = vunpack.c.l.b16 %v2526
        %v2559 = vunpack.c.h.b16 %v2526
        %v2560 = vunpack.c.l.b16 %v2527
        %v2561 = vunpack.c.h.b16 %v2527
        %v2562 = vpack.c.b16 %v2550, %v2546
        %v2563 = vpack.c.b16 %v2551, %v2547
        %v2564 = vpack.c.b16 %v2552, %v2548
        %v2565 = vpack.c.b16 %v2553, %v2549
        %v2566 = vpack.c.b16 %v2558, %v2554
        %v2567 = vpack.c.b16 %v2559, %v2555
        %v2568 = vpack.c.b16 %v2560, %v2556
        %v2569 = vpack.c.b16 %v2561, %v2557
        %2578 = vmatpush.bf16.msra.mxu0 0
        %2579 = vmatpush.bf16.msra.mxu0 0
        %2580 = vmatpush.bf16.msra.mxu0 0
        %2581 = vmatpush.bf16.msra.mxu0 0
        %2582 = vmatpush.bf16.msra.mxu0 0
        %2583 = vmatpush.bf16.msra.mxu0 0
        %2584 = vmatpush.bf16.msra.mxu0 %v2566
        %2585 = vmatpush.bf16.msra.mxu0 %v2562
        %2586 = vmatmul.bf16.gmra.mxu0 %v1297
        %v2587 = vpop.f32.mrf.mxu0
        %v2588 = vadd.f32 %v2530, %v2587
        %v2589 = vpop.f32.mrf.mxu0
        %2590 = vdwg.mxu0
        %2591 = vmatpush.bf16.msra.mxu0 0
        %2592 = vmatpush.bf16.msra.mxu0 0
        %2593 = vmatpush.bf16.msra.mxu0 0
        %2594 = vmatpush.bf16.msra.mxu0 0
        %2595 = vmatpush.bf16.msra.mxu0 0
        %2596 = vmatpush.bf16.msra.mxu0 0
        %2597 = vmatpush.bf16.msra.mxu0 %v2567
        %2598 = vmatpush.bf16.msra.mxu0 %v2563
        %2599 = vmatmul.bf16.gmra.mxu0 %v1297
        %v2600 = vpop.f32.mrf.mxu0
        %v2601 = vadd.f32 %v2531, %v2600
        %v2602 = vpop.f32.mrf.mxu0
        %2603 = vdwg.mxu0
        %2604 = vmatpush.bf16.msra.mxu0 0
        %2605 = vmatpush.bf16.msra.mxu0 0
        %2606 = vmatpush.bf16.msra.mxu0 0
        %2607 = vmatpush.bf16.msra.mxu0 0
        %2608 = vmatpush.bf16.msra.mxu0 0
        %2609 = vmatpush.bf16.msra.mxu0 0
        %2610 = vmatpush.bf16.msra.mxu0 %v2568
        %2611 = vmatpush.bf16.msra.mxu0 %v2564
        %2612 = vmatmul.bf16.gmra.mxu0 %v1297
        %v2613 = vpop.f32.mrf.mxu0
        %v2614 = vadd.f32 %v2532, %v2613
        %v2615 = vpop.f32.mrf.mxu0
        %2616 = vdwg.mxu0
        %2617 = vmatpush.bf16.msra.mxu0 0
        %2618 = vmatpush.bf16.msra.mxu0 0
        %2619 = vmatpush.bf16.msra.mxu0 0
        %2620 = vmatpush.bf16.msra.mxu0 0
        %2621 = vmatpush.bf16.msra.mxu0 0
        %2622 = vmatpush.bf16.msra.mxu0 0
        %2623 = vmatpush.bf16.msra.mxu0 %v2569
        %2624 = vmatpush.bf16.msra.mxu0 %v2565
        %2625 = vmatmul.bf16.gmra.mxu0 %v1297
        %v2626 = vpop.f32.mrf.mxu0
        %v2627 = vadd.f32 %v2533, %v2626
        %v2628 = vpop.f32.mrf.mxu0
        %2629 = vdwg.mxu0
        %v2630 = vmax.f32 %v2588, 0.0
        %v2631 = vmax.f32 %v2601, 0.0
        %v2632 = vmax.f32 %v2614, 0.0
        %v2633 = vmax.f32 %v2627, 0.0
        %v2634 = vpack.c.bf16 %v2630, %v2630
        %v2635 = vpack.c.bf16 %v2631, %v2631
        %v2636 = vpack.c.bf16 %v2632, %v2632
        %v2637 = vpack.c.bf16 %v2633, %v2633
        %v2638 = vld [vmem:[%s15 + $0x300] sm:$0xf]
        %v2639 = vld [vmem:[%s15 + $0x304] sm:$0xf]
        %v2640 = vld [vmem:[%s15 + $0x308] sm:$0xf]
        %v2641 = vld [vmem:[%s15 + $0x30c] sm:$0xf]
        %v2642 = vld [vmem:[%s15 + $0x310] sm:$0xf]
        %v2643 = vld [vmem:[%s15 + $0x314] sm:$0xf]
        %v2644 = vld [vmem:[%s15 + $0x318] sm:$0xf]
        %v2645 = vld [vmem:[%s15 + $0x31c] sm:$0xf]
        %v2646 = vld [vmem:[%s15 + $0x320] sm:$0xf]
        %v2647 = vld [vmem:[%s15 + $0x324] sm:$0xf]
        %v2648 = vld [vmem:[%s15 + $0x328] sm:$0xf]
        %v2649 = vld [vmem:[%s15 + $0x32c] sm:$0xf]
        %v2650 = vld [vmem:[%s15 + $0x330] sm:$0xf]
        %v2651 = vld [vmem:[%s15 + $0x334] sm:$0xf]
        %v2652 = vld [vmem:[%s15 + $0x338] sm:$0xf]
        %v2653 = vld [vmem:[%s15 + $0x33c] sm:$0xf]
        %v2654 = vld [vmem:[%s15 + $0x340] sm:$0xf]
        %v2655 = vld [vmem:[%s15 + $0x344] sm:$0xf]
        %v2656 = vld [vmem:[%s15 + $0x348] sm:$0xf]
        %v2657 = vld [vmem:[%s15 + $0x34c] sm:$0xf]
        %v2658 = vld [vmem:[%s15 + $0x350] sm:$0xf]
        %v2659 = vld [vmem:[%s15 + $0x354] sm:$0xf]
        %v2660 = vld [vmem:[%s15 + $0x358] sm:$0xf]
        %v2661 = vld [vmem:[%s15 + $0x35c] sm:$0xf]
        %v2662 = vld [vmem:[%s15 + $0x360] sm:$0xf]
        %v2663 = vld [vmem:[%s15 + $0x364] sm:$0xf]
        %v2664 = vld [vmem:[%s15 + $0x368] sm:$0xf]
        %v2665 = vld [vmem:[%s15 + $0x36c] sm:$0xf]
        %v2666 = vld [vmem:[%s15 + $0x370] sm:$0xf]
        %v2667 = vld [vmem:[%s15 + $0x374] sm:$0xf]
        %v2668 = vld [vmem:[%s15 + $0x378] sm:$0xf]
        %v2669 = vld [vmem:[%s15 + $0x37c] sm:$0xf]
        %v2670 = vld [vmem:[%s15 + $0x380] sm:$0xf]
        %v2671 = vld [vmem:[%s15 + $0x384] sm:$0xf]
        %v2672 = vld [vmem:[%s15 + $0x388] sm:$0xf]
        %v2673 = vld [vmem:[%s15 + $0x38c] sm:$0xf]
        %v2674 = vld [vmem:[%s15 + $0x390] sm:$0xf]
        %v2675 = vld [vmem:[%s15 + $0x394] sm:$0xf]
        %v2676 = vld [vmem:[%s15 + $0x398] sm:$0xf]
        %v2677 = vld [vmem:[%s15 + $0x39c] sm:$0xf]
        %v2678 = vld [vmem:[%s15 + $0x3a0] sm:$0xf]
        %v2679 = vld [vmem:[%s15 + $0x3a4] sm:$0xf]
        %v2680 = vld [vmem:[%s15 + $0x3a8] sm:$0xf]
        %v2681 = vld [vmem:[%s15 + $0x3ac] sm:$0xf]
        %v2682 = vld [vmem:[%s15 + $0x3b0] sm:$0xf]
        %v2683 = vld [vmem:[%s15 + $0x3b4] sm:$0xf]
        %v2684 = vld [vmem:[%s15 + $0x3b8] sm:$0xf]
        %v2685 = vld [vmem:[%s15 + $0x3bc] sm:$0xf]
        %v2686 = vld [vmem:[%s15 + $0x3c0] sm:$0xf]
        %v2687 = vld [vmem:[%s15 + $0x3c4] sm:$0xf]
        %v2688 = vld [vmem:[%s15 + $0x3c8] sm:$0xf]
        %v2689 = vld [vmem:[%s15 + $0x3cc] sm:$0xf]
        %v2690 = vld [vmem:[%s15 + $0x3d0] sm:$0xf]
        %v2691 = vld [vmem:[%s15 + $0x3d4] sm:$0xf]
        %v2692 = vld [vmem:[%s15 + $0x3d8] sm:$0xf]
        %v2693 = vld [vmem:[%s15 + $0x3dc] sm:$0xf]
        %v2694 = vld [vmem:[%s15 + $0x3e0] sm:$0xf]
        %v2695 = vld [vmem:[%s15 + $0x3e4] sm:$0xf]
        %v2696 = vld [vmem:[%s15 + $0x3e8] sm:$0xf]
        %v2697 = vld [vmem:[%s15 + $0x3ec] sm:$0xf]
        %v2698 = vld [vmem:[%s15 + $0x3f0] sm:$0xf]
        %v2699 = vld [vmem:[%s15 + $0x3f4] sm:$0xf]
        %v2700 = vld [vmem:[%s15 + $0x3f8] sm:$0xf]
        %v2701 = vld [vmem:[%s15 + $0x3fc] sm:$0xf]
        %v2766 = vunpack.c.l.b16 %v2638
        %v2767 = vunpack.c.l.b16 %v2639
        %v2768 = vunpack.c.l.b16 %v2640
        %v2769 = vunpack.c.l.b16 %v2641
        %v2770 = vunpack.c.l.b16 %v2642
        %v2771 = vunpack.c.l.b16 %v2643
        %v2772 = vunpack.c.l.b16 %v2644
        %v2773 = vunpack.c.l.b16 %v2645
        %v2774 = vunpack.c.l.b16 %v2646
        %v2775 = vunpack.c.l.b16 %v2647
        %v2776 = vunpack.c.l.b16 %v2648
        %v2777 = vunpack.c.l.b16 %v2649
        %v2778 = vunpack.c.l.b16 %v2650
        %v2779 = vunpack.c.l.b16 %v2651
        %v2780 = vunpack.c.l.b16 %v2652
        %v2781 = vunpack.c.l.b16 %v2653
        %v2782 = vunpack.c.l.b16 %v2654
        %v2783 = vunpack.c.l.b16 %v2655
        %v2784 = vunpack.c.l.b16 %v2656
        %v2785 = vunpack.c.l.b16 %v2657
        %v2786 = vunpack.c.l.b16 %v2658
        %v2787 = vunpack.c.l.b16 %v2659
        %v2788 = vunpack.c.l.b16 %v2660
        %v2789 = vunpack.c.l.b16 %v2661
        %v2790 = vunpack.c.l.b16 %v2662
        %v2791 = vunpack.c.l.b16 %v2663
        %v2792 = vunpack.c.l.b16 %v2664
        %v2793 = vunpack.c.l.b16 %v2665
        %v2794 = vunpack.c.l.b16 %v2666
        %v2795 = vunpack.c.l.b16 %v2667
        %v2796 = vunpack.c.l.b16 %v2668
        %v2797 = vunpack.c.l.b16 %v2669
        %v2798 = vunpack.c.l.b16 %v2670
        %v2799 = vunpack.c.l.b16 %v2671
        %v2800 = vunpack.c.l.b16 %v2672
        %v2801 = vunpack.c.l.b16 %v2673
        %v2802 = vunpack.c.l.b16 %v2674
        %v2803 = vunpack.c.l.b16 %v2675
        %v2804 = vunpack.c.l.b16 %v2676
        %v2805 = vunpack.c.l.b16 %v2677
        %v2806 = vunpack.c.l.b16 %v2678
        %v2807 = vunpack.c.l.b16 %v2679
        %v2808 = vunpack.c.l.b16 %v2680
        %v2809 = vunpack.c.l.b16 %v2681
        %v2810 = vunpack.c.l.b16 %v2682
        %v2811 = vunpack.c.l.b16 %v2683
        %v2812 = vunpack.c.l.b16 %v2684
        %v2813 = vunpack.c.l.b16 %v2685
        %v2814 = vunpack.c.l.b16 %v2686
        %v2815 = vunpack.c.l.b16 %v2687
        %v2816 = vunpack.c.l.b16 %v2688
        %v2817 = vunpack.c.l.b16 %v2689
        %v2818 = vunpack.c.l.b16 %v2690
        %v2819 = vunpack.c.l.b16 %v2691
        %v2820 = vunpack.c.l.b16 %v2692
        %v2821 = vunpack.c.l.b16 %v2693
        %v2822 = vunpack.c.l.b16 %v2694
        %v2823 = vunpack.c.l.b16 %v2695
        %v2824 = vunpack.c.l.b16 %v2696
        %v2825 = vunpack.c.l.b16 %v2697
        %v2826 = vunpack.c.l.b16 %v2698
        %v2827 = vunpack.c.l.b16 %v2699
        %v2828 = vunpack.c.l.b16 %v2700
        %v2829 = vunpack.c.l.b16 %v2701
        %v2830 = vpack.c.b16 %v2767, %v2766
        %v2831 = vpack.c.b16 %v2769, %v2768
        %v2832 = vpack.c.b16 %v2771, %v2770
        %v2833 = vpack.c.b16 %v2773, %v2772
        %v2834 = vpack.c.b16 %v2775, %v2774
        %v2835 = vpack.c.b16 %v2777, %v2776
        %v2836 = vpack.c.b16 %v2779, %v2778
        %v2837 = vpack.c.b16 %v2781, %v2780
        %v2838 = vpack.c.b16 %v2783, %v2782
        %v2839 = vpack.c.b16 %v2785, %v2784
        %v2840 = vpack.c.b16 %v2787, %v2786
        %v2841 = vpack.c.b16 %v2789, %v2788
        %v2842 = vpack.c.b16 %v2791, %v2790
        %v2843 = vpack.c.b16 %v2793, %v2792
        %v2844 = vpack.c.b16 %v2795, %v2794
        %v2845 = vpack.c.b16 %v2797, %v2796
        %v2846 = vpack.c.b16 %v2799, %v2798
        %v2847 = vpack.c.b16 %v2801, %v2800
        %v2848 = vpack.c.b16 %v2803, %v2802
        %v2849 = vpack.c.b16 %v2805, %v2804
        %v2850 = vpack.c.b16 %v2807, %v2806
        %v2851 = vpack.c.b16 %v2809, %v2808
        %v2852 = vpack.c.b16 %v2811, %v2810
        %v2853 = vpack.c.b16 %v2813, %v2812
        %v2854 = vpack.c.b16 %v2815, %v2814
        %v2855 = vpack.c.b16 %v2817, %v2816
        %v2856 = vpack.c.b16 %v2819, %v2818
        %v2857 = vpack.c.b16 %v2821, %v2820
        %v2858 = vpack.c.b16 %v2823, %v2822
        %v2859 = vpack.c.b16 %v2825, %v2824
        %v2860 = vpack.c.b16 %v2827, %v2826
        %v2861 = vpack.c.b16 %v2829, %v2828
        %2894 = vmatpush.bf16.msra.mxu0 %v2837
        %2895 = vmatpush.bf16.msra.mxu0 %v2836
        %2896 = vmatpush.bf16.msra.mxu0 %v2835
        %2897 = vmatpush.bf16.msra.mxu0 %v2834
        %2898 = vmatpush.bf16.msra.mxu0 %v2833
        %2899 = vmatpush.bf16.msra.mxu0 %v2832
        %2900 = vmatpush.bf16.msra.mxu0 %v2831
        %2901 = vmatpush.bf16.msra.mxu0 %v2830
        %2902 = vmatmul.bf16.gmra.mxu0 %v2634
        %v2903 = vpop.f32.mrf.mxu0
        %v2904 = vadd.f32 0.0, %v2903
        %v2905 = vpop.f32.mrf.mxu0
        %2906 = vdwg.mxu0
        %2907 = vmatpush.bf16.msra.mxu0 %v2845
        %2908 = vmatpush.bf16.msra.mxu0 %v2844
        %2909 = vmatpush.bf16.msra.mxu0 %v2843
        %2910 = vmatpush.bf16.msra.mxu0 %v2842
        %2911 = vmatpush.bf16.msra.mxu0 %v2841
        %2912 = vmatpush.bf16.msra.mxu0 %v2840
        %2913 = vmatpush.bf16.msra.mxu0 %v2839
        %2914 = vmatpush.bf16.msra.mxu0 %v2838
        %2915 = vmatmul.bf16.gmra.mxu0 %v2635
        %v2916 = vpop.f32.mrf.mxu0
        %v2917 = vadd.f32 %v2904, %v2916
        %v2918 = vpop.f32.mrf.mxu0
        %2919 = vdwg.mxu0
        %2920 = vmatpush.bf16.msra.mxu0 %v2853
        %2921 = vmatpush.bf16.msra.mxu0 %v2852
        %2922 = vmatpush.bf16.msra.mxu0 %v2851
        %2923 = vmatpush.bf16.msra.mxu0 %v2850
        %2924 = vmatpush.bf16.msra.mxu0 %v2849
        %2925 = vmatpush.bf16.msra.mxu0 %v2848
        %2926 = vmatpush.bf16.msra.mxu0 %v2847
        %2927 = vmatpush.bf16.msra.mxu0 %v2846
        %2928 = vmatmul.bf16.gmra.mxu0 %v2636
        %v2929 = vpop.f32.mrf.mxu0
        %v2930 = vadd.f32 %v2917, %v2929
        %v2931 = vpop.f32.mrf.mxu0
        %2932 = vdwg.mxu0
        %2933 = vmatpush.bf16.msra.mxu0 %v2861
        %2934 = vmatpush.bf16.msra.mxu0 %v2860
        %2935 = vmatpush.bf16.msra.mxu0 %v2859
        %2936 = vmatpush.bf16.msra.mxu0 %v2858
        %2937 = vmatpush.bf16.msra.mxu0 %v2857
        %2938 = vmatpush.bf16.msra.mxu0 %v2856
        %2939 = vmatpush.bf16.msra.mxu0 %v2855
        %2940 = vmatpush.bf16.msra.mxu0 %v2854
        %2941 = vmatmul.bf16.gmra.mxu0 %v2637
        %v2942 = vpop.f32.mrf.mxu0
        %v2943 = vadd.f32 %v2930, %v2942
        %v2944 = vpop.f32.mrf.mxu0
        %2945 = vdwg.mxu0
        %v2946 = vadd.f32 %v2519, %v2943
        %v2947 = vadd.f32 %v1188, %v2946
        %v2948 = vld [vmem:[%s16] sm:$0x1]
        %v2950 = vperm.slane %v2948, 0
        %v2952 = vadd.f32 %v2947, %v2950
        %p2953 = scmp.eq.s32.totalorder %s34, 1
        // Predicated region
        $region93: #{tpu_custom_call.1} parent=87 // pred_check
          %p2954 = pneg %p2953
        $region94: #{tpu_custom_call.1} parent=87 // pred_check_branch
          %2956 = sbr.rel (%p2954) target = $region96
        $region95: #{tpu_custom_call.1} parent=87 // pred_region
          %v2957 = vsel %vm696, %v2952, 0.0
          %2958 = vadd.xlane.f32.xlu0 %v2957
          %v2959 = vpop.xlane.xlu0 %2958
          %v2960 = vmul.f32 %v2959, %v706
          %v2961 = vsub.f32 %v2952, %v2960
          %v2962 = vmul.f32 %v2961, %v2961
          %v2963 = vsel %vm696, %v2962, 0.0
          %2964 = vadd.xlane.f32.xlu0 %v2963
          %v2965 = vpop.xlane.xlu0 %2964
          %v2966 = vmul.f32 %v2965, %v719
          %v2967 = vrsqrt.pop %v2966
          %v2968 = vmul.f32 %v2967, %v2966
          %v2969 = vmul.f32 %v2968, %v2967
          %v2970 = vmul.f32 0.5, %v2969
          %v2971 = vsub.f32 1.5, %v2970
          %v2972 = vmul.f32 %v2967, %v2971
          %v2973 = vmul.f32 %v2966, %v2972
          %vm2974 = vcmp.eq.f32.partialorder %v2966, inf
          %v2975 = vsel %vm2974, %v2966, %v2973
          %vm2976 = vcmp.eq.f32.partialorder %v2966, 0.0
          %v2977 = vand.u32 %v2966, 2147483648
          %v2978 = vsel %vm2976, %v2977, %v2975
          %v2979 = vadd.f32 %v2978, 1e-06
          %v2980 = vrcp.pop %v2979
          %v2981 = vmul.f32 %v2979, %v2980
          %v2982 = vsub.f32 1.0, %v2981
          %v2983 = vmul.f32 %v2980, %v2982
          %v2984 = vadd.f32 %v2980, %v2983
          %vm2985 = vweird.f32 %v2979
          %vm2986 = vweird.f32 %v2980
          %vm2987 = vmor %vm2985, %vm2986
          %v2988 = vsel %vm2987, %v2980, %v2984
          %v2989 = vand.u32 2147483647, %v2979
          %vm2990 = vcmp.eq.f32.partialorder %v2989, 8.507059e+37
          %v2991 = vand.u32 %v2979, 2147483648
          %v2992 = vor.u32 1.1754944e-38, %v2991
          %v2993 = vsel %vm2990, %v2992, %v2988
          %v2994 = vmul.f32 %v2961, %v2993
          %v2995 = vmul.f32 %v2994, %v750
          %v2996 = vadd.f32 %v2995, %v754
          %2997 = vst.msk [vmem:[#allocation6] sm:$0xff] %vm696, %v2996
        $region96: #{tpu_custom_call.1} parent=87 // pred_fallthru
          _
        %p2998 = scmp.ne.s32.totalorder %s34, 1
        // Predicated region
        $region97: #{tpu_custom_call.1} parent=87 // pred_check
          %p2999 = pneg %p2998
        $region98: #{tpu_custom_call.1} parent=87 // pred_check_branch
          %3001 = sbr.rel (%p2999) target = $region100
        $region99: #{tpu_custom_call.1} parent=87 // pred_region
          %3002 = vst.msk [vmem:[#allocation6] sm:$0xff] %vm696, %v2952
        $region100: #{tpu_custom_call.1} parent=87 // pred_fallthru
          _
        // Predicated region
        $region101: #{tpu_custom_call.1} parent=87 // pred_check
          %p3003 = pneg %p461
        $region102: #{tpu_custom_call.1} parent=87 // pred_check_branch
          %3005 = sbr.rel (%p3003) target = $region104
        $region103: #{tpu_custom_call.1} parent=87 // pred_region
          %3007 = vsyncadd [#allocation7], 0
          %s3008 = smul.addr %s33, 8
          %s3009 = scalar_lea.hbm %s17, %s3008
          %s3011 = sshll.u32 [#allocation6], 4
          %s3012 = int_to_ptr.vmem [resolvable:$true] %s3011
          %s3013 = sshll.u32 %s3009, 4
          %s3014 = int_to_ptr.hbm [resolvable:$true] %s3013
          %3016 = dma.vmem_to_hbm [thread:$0]  %s3012, 128, %s3014, [#allocation7]
        $region104: #{tpu_custom_call.1} parent=87 // pred_fallthru
          _
        // Predicated region
        $region105: #{tpu_custom_call.1} parent=87 // pred_check
          %p3017 = pneg %p461
        $region106: #{tpu_custom_call.1} parent=87 // pred_check_branch
          %3019 = sbr.rel (%p3017) target = $region108
        $region107: #{tpu_custom_call.1} parent=87 // pred_region
          %3021 = dma.done [#allocation7], 128
        $region108: #{tpu_custom_call.1} parent=87 // pred_fallthru
          _
      $region88: #{tpu_custom_call.1} parent=5 // pred_fallthru
        _
      %p3022 = scmp.le.s32.totalorder 2, %s24
      // Predicated region
      $region109: #{tpu_custom_call.1} parent=5 // pred_check
        %p3023 = pneg %p3022
      $region110: #{tpu_custom_call.1} parent=5 // pred_check_branch
        %3025 = sbr.rel (%p3023) target = $region112
      $region111: #{tpu_custom_call.1} parent=5 // pred_region
        %s3026 = ssub.s32 %s24, 2
      $region112: #{tpu_custom_call.1} parent=5 // pred_fallthru
        _
    $region6: #{tpu_custom_call.1} parent=1 // loop_footer
      %s28 = sadd.s32 1, %s24
    $region7: #{tpu_custom_call.1} parent=1 // loop_footer_branch
      %23 = sbr.rel target = $region3
    $region8: #{tpu_custom_call.1} parent=1 // loop_exit
      _
    %3027 = vsyncpa [#allocation7], 1
    %s3028 = scalar_lea.sflag [#allocation7], 1
    %3029 = vsyncpa %s3028, 1

// kernel: tpu_custom_call.1
$region0: #{tpu_custom_call.1}
  #allocation0 [shape = 'u32[]', space=smem, size = 0x4, offset = 0x4, fixed_abs, tag = 'smem constant byte address 0x4 - core index']
  #allocation1 [shape = 'u32[72,128]{1,0:T(1,128)}', space=vmem, size = 0x9000, scoped, tag = 'internal scratch']
  #allocation2 [shape = 'bf16[8,32]{1,0:T(8,128)(2,1)}', space=vmem, size = 0x800, scoped, tag = 'scratch operand']
  #allocation3 [shape = 'bf16[8,32]{1,0:T(8,128)(2,1)}', space=vmem, size = 0x800, scoped, tag = 'scratch operand']
  #allocation4 [shape = 'bf16[8,32]{1,0:T(8,128)(2,1)}', space=vmem, size = 0x800, scoped, tag = 'scratch operand']
  #allocation5 [shape = 'bf16[8,32]{1,0:T(8,128)(2,1)}', space=vmem, size = 0x800, scoped, tag = 'scratch operand']
  %s0 = inlined_call_operand.vmem [shape: f32[2,8,32], index: 0, kind: input, shape index: {}]
  %s1 = inlined_call_operand.vmem [shape: bf16[2,32,32], index: 1, kind: input, shape index: {}]
  %s2 = inlined_call_operand.vmem [shape: f32[2,1,32], index: 2, kind: input, shape index: {}]
  %s3 = inlined_call_operand.vmem [shape: bf16[2,32,32], index: 3, kind: input, shape index: {}]
  %s4 = inlined_call_operand.vmem [shape: f32[2,1,32], index: 4, kind: input, shape index: {}]
  %s5 = inlined_call_operand.vmem [shape: bf16[2,32,32], index: 5, kind: input, shape index: {}]
  %s6 = inlined_call_operand.vmem [shape: f32[2,1,32], index: 6, kind: input, shape index: {}]
  %s7 = inlined_call_operand.vmem [shape: bf16[2,32,32], index: 7, kind: input, shape index: {}]
  %s8 = inlined_call_operand.vmem [shape: f32[2,1,32], index: 8, kind: input, shape index: {}]
  %s9 = inlined_call_operand.vmem [shape: f32[1,32], index: 9, kind: input, shape index: {}]
  %s10 = inlined_call_operand.vmem [shape: f32[1,32], index: 10, kind: input, shape index: {}]
  %s11 = inlined_call_operand.vmem [shape: f32[1,32], index: 11, kind: input, shape index: {}]
  %s12 = inlined_call_operand.vmem [shape: f32[1,32], index: 12, kind: input, shape index: {}]
  %s13 = inlined_call_operand.vmem [shape: bf16[32,2048], index: 13, kind: input, shape index: {}]
  %s14 = inlined_call_operand.vmem [shape: f32[1,2048], index: 14, kind: input, shape index: {}]
  %s15 = inlined_call_operand.vmem [shape: bf16[2048,32], index: 15, kind: input, shape index: {}]
  %s16 = inlined_call_operand.vmem [shape: f32[1,32], index: 16, kind: input, shape index: {}]
  %s17 = inlined_call_operand.hbm [shape: f32[2,8,32], index: 17, kind: output, shape index: {}]
  %s18 = sld [smem:[#allocation0]]
  $region113: #{tpu_custom_call.1} parent=0
    _
  %s20 = ssub.s32 1, %s18
  %s21 = scalar_select 0, %s20, %s18
  $region1: #{tpu_custom_call.1} parent=0
    #allocation6 [shape = 'u8[8192]{0}', space=vmem, size = 0x2000, scoped, tag = 'output window, operand 0']
    #allocation7 [shape = 's32[2]{0}', space=sflag, size = 0x8, scoped, tag = 'scoped memory for tpu_custom_call.1']
    %22 = vsyncpa [#allocation7], 0
    %s23 = scalar_lea.sflag [#allocation7], 1
    %24 = vsyncpa %s23, 0
    loop: start=0, step=1, limit=6
    $region2: #{tpu_custom_call.1} parent=1 // loop_pre_header
      _
    $region3: #{tpu_custom_call.1} parent=1 // loop_header
      %s26 = sphi 0, %s30
      %p27 = scmp.ge.s32.totalorder %s26, 6
      %s33 = sphi 0, %s45
      %s34 = sphi 0, %s41
      %s35 = sphi 0, %s33
      %s36 = sphi 0, %s34
      %s37 = sphi 0, %s35
      %s38 = sphi 0, %s36
      %s48 = sphi 0, %s50
      %s51 = sphi 0, %s48
      %s52 = sphi 0, %s51
      %s68 = sphi 0, %s52
      %s74 = sphi 0, %s76
      %s77 = sphi 0, %s74
      %s78 = sphi 0, %s77
      %s94 = sphi 0, %s78
      %s100 = sphi 0, %s102
      %s103 = sphi 0, %s100
      %s104 = sphi 0, %s103
      %s120 = sphi 0, %s104
      %s126 = sphi 0, %s128
      %s129 = sphi 0, %s126
      %s130 = sphi 0, %s129
      %s146 = sphi 0, %s130
      %s152 = sphi 0, %s154
      %s155 = sphi 0, %s152
      %s156 = sphi 0, %s155
      %s172 = sphi 0, %s156
      %s178 = sphi 0, %s180
      %s181 = sphi 0, %s178
      %s182 = sphi 0, %s181
      %s198 = sphi 0, %s182
      %s204 = sphi 0, %s206
      %s207 = sphi 0, %s204
      %s208 = sphi 0, %s207
      %s224 = sphi 0, %s208
      %s230 = sphi 0, %s232
      %s233 = sphi 0, %s230
      %s234 = sphi 0, %s233
      %s250 = sphi 0, %s234
      %s256 = sphi 0, %s258
      %s259 = sphi 0, %s256
      %s260 = sphi 0, %s259
      %s276 = sphi 0, %s260
      %s280 = sphi 0, %s280
      %s282 = sphi 0, %s280
      %s283 = sphi 0, %s282
      %s297 = sphi 0, %s283
      %s301 = sphi 0, %s301
      %s303 = sphi 0, %s301
      %s304 = sphi 0, %s303
      %s318 = sphi 0, %s304
      %s322 = sphi 0, %s322
      %s324 = sphi 0, %s322
      %s325 = sphi 0, %s324
      %s339 = sphi 0, %s325
      %s343 = sphi 0, %s343
      %s345 = sphi 0, %s343
      %s346 = sphi 0, %s345
      %s360 = sphi 0, %s346
      %s364 = sphi 0, %s364
      %s366 = sphi 0, %s364
      %s367 = sphi 0, %s366
      %s381 = sphi 0, %s367
      %s385 = sphi 0, %s385
      %s387 = sphi 0, %s385
      %s388 = sphi 0, %s387
      %s402 = sphi 0, %s388
      %s406 = sphi 0, %s406
      %s408 = sphi 0, %s406
      %s409 = sphi 0, %s408
      %s423 = sphi 0, %s409
      %s427 = sphi 0, %s427
      %s429 = sphi 0, %s427
      %s430 = sphi 0, %s429
      %s444 = sphi 0, %s430
      %s450 = sphi 0, %s452
      %s453 = sphi 0, %s450
      %s454 = sphi 0, %s453
      %s470 = sphi 0, %s454
    $region4: #{tpu_custom_call.1} parent=1 // loop_header_branch
      %29 = sbr.rel (%p27) target = $region8
    $region5: #{tpu_custom_call.1} parent=1 // loop_body
      %s31 = ssub.s32 %s26, 1
      %s32 = ssub.s32 %s26, 2
      %s39 = sadd.s32 1, %s34
      %p40 = scmp.ge.s32.totalorder %s39, 2
      %s41 = scalar_select %p40, 0, %s39
      %s42 = sadd.s32 1, %s33
      %s43 = scalar_select %p40, %s42, %s33
      %p44 = scmp.ge.s32.totalorder %s43, 2
      %s45 = scalar_select %p44, 0, %s43
      %s46 = ssub.s32 %s33, %s45
      %p47 = scmp.eq.s32.totalorder %s46, 0
      %s49 = sadd.s32 %s48, 1
      %s50 = scalar_select %p47, %s48, %s49
      %p53 = pneg %p47
      %p54 = scmp.eq.s32.totalorder %s26, 3
      %p55 = por %p53, %p54
      %p56 = scmp.ne.s32.totalorder %s48, %s51
      %p57 = scmp.eq.s32.totalorder %s26, 0
      %p58 = por %p56, %p57
      %p59 = scmp.ne.s32.totalorder %s48, %s51
      %p60 = scmp.eq.s32.totalorder %s31, 3
      %p61 = por %p59, %p60
      %p62 = scmp.ne.s32.totalorder %s51, %s52
      %p63 = scmp.eq.s32.totalorder %s31, 0
      %p64 = por %p62, %p63
      %p65 = scmp.ne.s32.totalorder %s51, %s52
      %p66 = scmp.eq.s32.totalorder %s32, 3
      %p67 = por %p65, %p66
      %p69 = scmp.ne.s32.totalorder %s52, %s68
      %p70 = scmp.eq.s32.totalorder %s32, 0
      %p71 = por %p69, %p70
      %s72 = ssub.s32 %s34, %s41
      %p73 = scmp.eq.s32.totalorder %s72, 0
      %s75 = sadd.s32 %s74, 1
      %s76 = scalar_select %p73, %s74, %s75
      %p79 = pneg %p73
      %p80 = scmp.eq.s32.totalorder %s26, 3
      %p81 = por %p79, %p80
      %p82 = scmp.ne.s32.totalorder %s74, %s77
      %p83 = scmp.eq.s32.totalorder %s26, 0
      %p84 = por %p82, %p83
      %p85 = scmp.ne.s32.totalorder %s74, %s77
      %p86 = scmp.eq.s32.totalorder %s31, 3
      %p87 = por %p85, %p86
      %p88 = scmp.ne.s32.totalorder %s77, %s78
      %p89 = scmp.eq.s32.totalorder %s31, 0
      %p90 = por %p88, %p89
      %p91 = scmp.ne.s32.totalorder %s77, %s78
      %p92 = scmp.eq.s32.totalorder %s32, 3
      %p93 = por %p91, %p92
      %p95 = scmp.ne.s32.totalorder %s78, %s94
      %p96 = scmp.eq.s32.totalorder %s32, 0
      %p97 = por %p95, %p96
      %s98 = ssub.s32 %s34, %s41
      %p99 = scmp.eq.s32.totalorder %s98, 0
      %s101 = sadd.s32 %s100, 1
      %s102 = scalar_select %p99, %s100, %s101
      %p105 = pneg %p99
      %p106 = scmp.eq.s32.totalorder %s26, 3
      %p107 = por %p105, %p106
      %p108 = scmp.ne.s32.totalorder %s100, %s103
      %p109 = scmp.eq.s32.totalorder %s26, 0
      %p110 = por %p108, %p109
      %p111 = scmp.ne.s32.totalorder %s100, %s103
      %p112 = scmp.eq.s32.totalorder %s31, 3
      %p113 = por %p111, %p112
      %p114 = scmp.ne.s32.totalorder %s103, %s104
      %p115 = scmp.eq.s32.totalorder %s31, 0
      %p116 = por %p114, %p115
      %p117 = scmp.ne.s32.totalorder %s103, %s104
      %p118 = scmp.eq.s32.totalorder %s32, 3
      %p119 = por %p117, %p118
      %p121 = scmp.ne.s32.totalorder %s104, %s120
      %p122 = scmp.eq.s32.totalorder %s32, 0
      %p123 = por %p121, %p122
      %s124 = ssub.s32 %s34, %s41
      %p125 = scmp.eq.s32.totalorder %s124, 0
      %s127 = sadd.s32 %s126, 1
      %s128 = scalar_select %p125, %s126, %s127
      %p131 = pneg %p125
      %p132 = scmp.eq.s32.totalorder %s26, 3
      %p133 = por %p131, %p132
      %p134 = scmp.ne.s32.totalorder %s126, %s129
      %p135 = scmp.eq.s32.totalorder %s26, 0
      %p136 = por %p134, %p135
      %p137 = scmp.ne.s32.totalorder %s126, %s129
      %p138 = scmp.eq.s32.totalorder %s31, 3
      %p139 = por %p137, %p138
      %p140 = scmp.ne.s32.totalorder %s129, %s130
      %p141 = scmp.eq.s32.totalorder %s31, 0
      %p142 = por %p140, %p141
      %p143 = scmp.ne.s32.totalorder %s129, %s130
      %p144 = scmp.eq.s32.totalorder %s32, 3
      %p145 = por %p143, %p144
      %p147 = scmp.ne.s32.totalorder %s130, %s146
      %p148 = scmp.eq.s32.totalorder %s32, 0
      %p149 = por %p147, %p148
      %s150 = ssub.s32 %s34, %s41
      %p151 = scmp.eq.s32.totalorder %s150, 0
      %s153 = sadd.s32 %s152, 1
      %s154 = scalar_select %p151, %s152, %s153
      %p157 = pneg %p151
      %p158 = scmp.eq.s32.totalorder %s26, 3
      %p159 = por %p157, %p158
      %p160 = scmp.ne.s32.totalorder %s152, %s155
      %p161 = scmp.eq.s32.totalorder %s26, 0
      %p162 = por %p160, %p161
      %p163 = scmp.ne.s32.totalorder %s152, %s155
      %p164 = scmp.eq.s32.totalorder %s31, 3
      %p165 = por %p163, %p164
      %p166 = scmp.ne.s32.totalorder %s155, %s156
      %p167 = scmp.eq.s32.totalorder %s31, 0
      %p168 = por %p166, %p167
      %p169 = scmp.ne.s32.totalorder %s155, %s156
      %p170 = scmp.eq.s32.totalorder %s32, 3
      %p171 = por %p169, %p170
      %p173 = scmp.ne.s32.totalorder %s156, %s172
      %p174 = scmp.eq.s32.totalorder %s32, 0
      %p175 = por %p173, %p174
      %s176 = ssub.s32 %s34, %s41
      %p177 = scmp.eq.s32.totalorder %s176, 0
      %s179 = sadd.s32 %s178, 1
      %s180 = scalar_select %p177, %s178, %s179
      %p183 = pneg %p177
      %p184 = scmp.eq.s32.totalorder %s26, 3
      %p185 = por %p183, %p184
      %p186 = scmp.ne.s32.totalorder %s178, %s181
      %p187 = scmp.eq.s32.totalorder %s26, 0
      %p188 = por %p186, %p187
      %p189 = scmp.ne.s32.totalorder %s178, %s181
      %p190 = scmp.eq.s32.totalorder %s31, 3
      %p191 = por %p189, %p190
      %p192 = scmp.ne.s32.totalorder %s181, %s182
      %p193 = scmp.eq.s32.totalorder %s31, 0
      %p194 = por %p192, %p193
      %p195 = scmp.ne.s32.totalorder %s181, %s182
      %p196 = scmp.eq.s32.totalorder %s32, 3
      %p197 = por %p195, %p196
      %p199 = scmp.ne.s32.totalorder %s182, %s198
      %p200 = scmp.eq.s32.totalorder %s32, 0
      %p201 = por %p199, %p200
      %s202 = ssub.s32 %s34, %s41
      %p203 = scmp.eq.s32.totalorder %s202, 0
      %s205 = sadd.s32 %s204, 1
      %s206 = scalar_select %p203, %s204, %s205
      %p209 = pneg %p203
      %p210 = scmp.eq.s32.totalorder %s26, 3
      %p211 = por %p209, %p210
      %p212 = scmp.ne.s32.totalorder %s204, %s207
      %p213 = scmp.eq.s32.totalorder %s26, 0
      %p214 = por %p212, %p213
      %p215 = scmp.ne.s32.totalorder %s204, %s207
      %p216 = scmp.eq.s32.totalorder %s31, 3
      %p217 = por %p215, %p216
      %p218 = scmp.ne.s32.totalorder %s207, %s208
      %p219 = scmp.eq.s32.totalorder %s31, 0
      %p220 = por %p218, %p219
      %p221 = scmp.ne.s32.totalorder %s207, %s208
      %p222 = scmp.eq.s32.totalorder %s32, 3
      %p223 = por %p221, %p222
      %p225 = scmp.ne.s32.totalorder %s208, %s224
      %p226 = scmp.eq.s32.totalorder %s32, 0
      %p227 = por %p225, %p226
      %s228 = ssub.s32 %s34, %s41
      %p229 = scmp.eq.s32.totalorder %s228, 0
      %s231 = sadd.s32 %s230, 1
      %s232 = scalar_select %p229, %s230, %s231
      %p235 = pneg %p229
      %p236 = scmp.eq.s32.totalorder %s26, 3
      %p237 = por %p235, %p236
      %p238 = scmp.ne.s32.totalorder %s230, %s233
      %p239 = scmp.eq.s32.totalorder %s26, 0
      %p240 = por %p238, %p239
      %p241 = scmp.ne.s32.totalorder %s230, %s233
      %p242 = scmp.eq.s32.totalorder %s31, 3
      %p243 = por %p241, %p242
      %p244 = scmp.ne.s32.totalorder %s233, %s234
      %p245 = scmp.eq.s32.totalorder %s31, 0
      %p246 = por %p244, %p245
      %p247 = scmp.ne.s32.totalorder %s233, %s234
      %p248 = scmp.eq.s32.totalorder %s32, 3
      %p249 = por %p247, %p248
      %p251 = scmp.ne.s32.totalorder %s234, %s250
      %p252 = scmp.eq.s32.totalorder %s32, 0
      %p253 = por %p251, %p252
      %s254 = ssub.s32 %s34, %s41
      %p255 = scmp.eq.s32.totalorder %s254, 0
      %s257 = sadd.s32 %s256, 1
      %s258 = scalar_select %p255, %s256, %s257
      %p261 = pneg %p255
      %p262 = scmp.eq.s32.totalorder %s26, 3
      %p263 = por %p261, %p262
      %p264 = scmp.ne.s32.totalorder %s256, %s259
      %p265 = scmp.eq.s32.totalorder %s26, 0
      %p266 = por %p264, %p265
      %p267 = scmp.ne.s32.totalorder %s256, %s259
      %p268 = scmp.eq.s32.totalorder %s31, 3
      %p269 = por %p267, %p268
      %p270 = scmp.ne.s32.totalorder %s259, %s260
      %p271 = scmp.eq.s32.totalorder %s31, 0
      %p272 = por %p270, %p271
      %p273 = scmp.ne.s32.totalorder %s259, %s260
      %p274 = scmp.eq.s32.totalorder %s32, 3
      %p275 = por %p273, %p274
      %p277 = scmp.ne.s32.totalorder %s260, %s276
      %p278 = scmp.eq.s32.totalorder %s32, 0
      %p279 = por %p277, %p278
      %s281 = sadd.s32 %s280, 1
      %p284 = scmp.eq.s32.totalorder %s26, 3
      %p285 = scmp.ne.s32.totalorder %s280, %s282
      %p286 = scmp.eq.s32.totalorder %s26, 0
      %p287 = por %p285, %p286
      %p288 = scmp.ne.s32.totalorder %s280, %s282
      %p289 = scmp.eq.s32.totalorder %s31, 3
      %p290 = por %p288, %p289
      %p291 = scmp.ne.s32.totalorder %s282, %s283
      %p292 = scmp.eq.s32.totalorder %s31, 0
      %p293 = por %p291, %p292
      %p294 = scmp.ne.s32.totalorder %s282, %s283
      %p295 = scmp.eq.s32.totalorder %s32, 3
      %p296 = por %p294, %p295
      %p298 = scmp.ne.s32.totalorder %s283, %s297
      %p299 = scmp.eq.s32.totalorder %s32, 0
      %p300 = por %p298, %p299
      %s302 = sadd.s32 %s301, 1
      %p305 = scmp.eq.s32.totalorder %s26, 3
      %p306 = scmp.ne.s32.totalorder %s301, %s303
      %p307 = scmp.eq.s32.totalorder %s26, 0
      %p308 = por %p306, %p307
      %p309 = scmp.ne.s32.totalorder %s301, %s303
      %p310 = scmp.eq.s32.totalorder %s31, 3
      %p311 = por %p309, %p310
      %p312 = scmp.ne.s32.totalorder %s303, %s304
      %p313 = scmp.eq.s32.totalorder %s31, 0
      %p314 = por %p312, %p313
      %p315 = scmp.ne.s32.totalorder %s303, %s304
      %p316 = scmp.eq.s32.totalorder %s32, 3
      %p317 = por %p315, %p316
      %p319 = scmp.ne.s32.totalorder %s304, %s318
      %p320 = scmp.eq.s32.totalorder %s32, 0
      %p321 = por %p319, %p320
      %s323 = sadd.s32 %s322, 1
      %p326 = scmp.eq.s32.totalorder %s26, 3
      %p327 = scmp.ne.s32.totalorder %s322, %s324
      %p328 = scmp.eq.s32.totalorder %s26, 0
      %p329 = por %p327, %p328
      %p330 = scmp.ne.s32.totalorder %s322, %s324
      %p331 = scmp.eq.s32.totalorder %s31, 3
      %p332 = por %p330, %p331
      %p333 = scmp.ne.s32.totalorder %s324, %s325
      %p334 = scmp.eq.s32.totalorder %s31, 0
      %p335 = por %p333, %p334
      %p336 = scmp.ne.s32.totalorder %s324, %s325
      %p337 = scmp.eq.s32.totalorder %s32, 3
      %p338 = por %p336, %p337
      %p340 = scmp.ne.s32.totalorder %s325, %s339
      %p341 = scmp.eq.s32.totalorder %s32, 0
      %p342 = por %p340, %p341
      %s344 = sadd.s32 %s343, 1
      %p347 = scmp.eq.s32.totalorder %s26, 3
      %p348 = scmp.ne.s32.totalorder %s343, %s345
      %p349 = scmp.eq.s32.totalorder %s26, 0
      %p350 = por %p348, %p349
      %p351 = scmp.ne.s32.totalorder %s343, %s345
      %p352 = scmp.eq.s32.totalorder %s31, 3
      %p353 = por %p351, %p352
      %p354 = scmp.ne.s32.totalorder %s345, %s346
      %p355 = scmp.eq.s32.totalorder %s31, 0
      %p356 = por %p354, %p355
      %p357 = scmp.ne.s32.totalorder %s345, %s346
      %p358 = scmp.eq.s32.totalorder %s32, 3
      %p359 = por %p357, %p358
      %p361 = scmp.ne.s32.totalorder %s346, %s360
      %p362 = scmp.eq.s32.totalorder %s32, 0
      %p363 = por %p361, %p362
      %s365 = sadd.s32 %s364, 1
      %p368 = scmp.eq.s32.totalorder %s26, 3
      %p369 = scmp.ne.s32.totalorder %s364, %s366
      %p370 = scmp.eq.s32.totalorder %s26, 0
      %p371 = por %p369, %p370
      %p372 = scmp.ne.s32.totalorder %s364, %s366
      %p373 = scmp.eq.s32.totalorder %s31, 3
      %p374 = por %p372, %p373
      %p375 = scmp.ne.s32.totalorder %s366, %s367
      %p376 = scmp.eq.s32.totalorder %s31, 0
      %p377 = por %p375, %p376
      %p378 = scmp.ne.s32.totalorder %s366, %s367
      %p379 = scmp.eq.s32.totalorder %s32, 3
      %p380 = por %p378, %p379
      %p382 = scmp.ne.s32.totalorder %s367, %s381
      %p383 = scmp.eq.s32.totalorder %s32, 0
      %p384 = por %p382, %p383
      %s386 = sadd.s32 %s385, 1
      %p389 = scmp.eq.s32.totalorder %s26, 3
      %p390 = scmp.ne.s32.totalorder %s385, %s387
      %p391 = scmp.eq.s32.totalorder %s26, 0
      %p392 = por %p390, %p391
      %p393 = scmp.ne.s32.totalorder %s385, %s387
      %p394 = scmp.eq.s32.totalorder %s31, 3
      %p395 = por %p393, %p394
      %p396 = scmp.ne.s32.totalorder %s387, %s388
      %p397 = scmp.eq.s32.totalorder %s31, 0
      %p398 = por %p396, %p397
      %p399 = scmp.ne.s32.totalorder %s387, %s388
      %p400 = scmp.eq.s32.totalorder %s32, 3
      %p401 = por %p399, %p400
      %p403 = scmp.ne.s32.totalorder %s388, %s402
      %p404 = scmp.eq.s32.totalorder %s32, 0
      %p405 = por %p403, %p404
      %s407 = sadd.s32 %s406, 1
      %p410 = scmp.eq.s32.totalorder %s26, 3
      %p411 = scmp.ne.s32.totalorder %s406, %s408
      %p412 = scmp.eq.s32.totalorder %s26, 0
      %p413 = por %p411, %p412
      %p414 = scmp.ne.s32.totalorder %s406, %s408
      %p415 = scmp.eq.s32.totalorder %s31, 3
      %p416 = por %p414, %p415
      %p417 = scmp.ne.s32.totalorder %s408, %s409
      %p418 = scmp.eq.s32.totalorder %s31, 0
      %p419 = por %p417, %p418
      %p420 = scmp.ne.s32.totalorder %s408, %s409
      %p421 = scmp.eq.s32.totalorder %s32, 3
      %p422 = por %p420, %p421
      %p424 = scmp.ne.s32.totalorder %s409, %s423
      %p425 = scmp.eq.s32.totalorder %s32, 0
      %p426 = por %p424, %p425
      %s428 = sadd.s32 %s427, 1
      %p431 = scmp.eq.s32.totalorder %s26, 3
      %p432 = scmp.ne.s32.totalorder %s427, %s429
      %p433 = scmp.eq.s32.totalorder %s26, 0
      %p434 = por %p432, %p433
      %p435 = scmp.ne.s32.totalorder %s427, %s429
      %p436 = scmp.eq.s32.totalorder %s31, 3
      %p437 = por %p435, %p436
      %p438 = scmp.ne.s32.totalorder %s429, %s430
      %p439 = scmp.eq.s32.totalorder %s31, 0
      %p440 = por %p438, %p439
      %p441 = scmp.ne.s32.totalorder %s429, %s430
      %p442 = scmp.eq.s32.totalorder %s32, 3
      %p443 = por %p441, %p442
      %p445 = scmp.ne.s32.totalorder %s430, %s444
      %p446 = scmp.eq.s32.totalorder %s32, 0
      %p447 = por %p445, %p446
      %s448 = ssub.s32 %s33, %s45
      %p449 = scmp.eq.s32.totalorder %s448, 0
      %s451 = sadd.s32 %s450, 1
      %s452 = scalar_select %p449, %s450, %s451
      %p455 = pneg %p449
      %p456 = scmp.eq.s32.totalorder %s26, 3
      %p457 = por %p455, %p456
      %p458 = scmp.ne.s32.totalorder %s450, %s453
      %p459 = scmp.eq.s32.totalorder %s26, 0
      %p460 = por %p458, %p459
      %p461 = scmp.ne.s32.totalorder %s450, %s453
      %p462 = scmp.eq.s32.totalorder %s31, 3
      %p463 = por %p461, %p462
      %p464 = scmp.ne.s32.totalorder %s453, %s454
      %p465 = scmp.eq.s32.totalorder %s31, 0
      %p466 = por %p464, %p465
      %p467 = scmp.ne.s32.totalorder %s453, %s454
      %p468 = scmp.eq.s32.totalorder %s32, 3
      %p469 = por %p467, %p468
      %p471 = scmp.ne.s32.totalorder %s454, %s470
      %p472 = scmp.eq.s32.totalorder %s32, 0
      %p473 = por %p471, %p472
      %p474 = scmp.le.s32.totalorder 1, %s26
      %p475 = scmp.lt.s32.totalorder %s26, 5
      %p476 = pnand %p474, %p475
      %p477 = pneg %p476
      // Predicated region
      $region9: #{tpu_custom_call.1} parent=5 // pred_check
        _
      $region10: #{tpu_custom_call.1} parent=5 // pred_check_branch
        %479 = sbr.rel (%p476) target = $region12
      $region11: #{tpu_custom_call.1} parent=5 // pred_region
        %s480 = ssub.s32 %s26, 1
        // Predicated region
        $region13: #{tpu_custom_call.1} parent=11 // pred_check
          %p481 = pneg %p293
        $region14: #{tpu_custom_call.1} parent=11 // pred_check_branch
          %483 = sbr.rel (%p481) target = $region16
        $region15: #{tpu_custom_call.1} parent=11 // pred_region
          _
        $region16: #{tpu_custom_call.1} parent=11 // pred_fallthru
          _
        // Predicated region
        $region17: #{tpu_custom_call.1} parent=11 // pred_check
          %p484 = pneg %p314
        $region18: #{tpu_custom_call.1} parent=11 // pred_check_branch
          %486 = sbr.rel (%p484) target = $region20
        $region19: #{tpu_custom_call.1} parent=11 // pred_region
          _
        $region20: #{tpu_custom_call.1} parent=11 // pred_fallthru
          _
        // Predicated region
        $region21: #{tpu_custom_call.1} parent=11 // pred_check
          %p487 = pneg %p335
        $region22: #{tpu_custom_call.1} parent=11 // pred_check_branch
          %489 = sbr.rel (%p487) target = $region24
        $region23: #{tpu_custom_call.1} parent=11 // pred_region
          _
        $region24: #{tpu_custom_call.1} parent=11 // pred_fallthru
          _
        // Predicated region
        $region25: #{tpu_custom_call.1} parent=11 // pred_check
          %p490 = pneg %p356
        $region26: #{tpu_custom_call.1} parent=11 // pred_check_branch
          %492 = sbr.rel (%p490) target = $region28
        $region27: #{tpu_custom_call.1} parent=11 // pred_region
          _
        $region28: #{tpu_custom_call.1} parent=11 // pred_fallthru
          _
        // Predicated region
        $region29: #{tpu_custom_call.1} parent=11 // pred_check
          %p493 = pneg %p377
        $region30: #{tpu_custom_call.1} parent=11 // pred_check_branch
          %495 = sbr.rel (%p493) target = $region32
        $region31: #{tpu_custom_call.1} parent=11 // pred_region
          _
        $region32: #{tpu_custom_call.1} parent=11 // pred_fallthru
          _
        // Predicated region
        $region33: #{tpu_custom_call.1} parent=11 // pred_check
          %p496 = pneg %p398
        $region34: #{tpu_custom_call.1} parent=11 // pred_check_branch
          %498 = sbr.rel (%p496) target = $region36
        $region35: #{tpu_custom_call.1} parent=11 // pred_region
          _
        $region36: #{tpu_custom_call.1} parent=11 // pred_fallthru
          _
        // Predicated region
        $region37: #{tpu_custom_call.1} parent=11 // pred_check
          %p499 = pneg %p419
        $region38: #{tpu_custom_call.1} parent=11 // pred_check_branch
          %501 = sbr.rel (%p499) target = $region40
        $region39: #{tpu_custom_call.1} parent=11 // pred_region
          _
        $region40: #{tpu_custom_call.1} parent=11 // pred_fallthru
          _
        // Predicated region
        $region41: #{tpu_custom_call.1} parent=11 // pred_check
          %p502 = pneg %p440
        $region42: #{tpu_custom_call.1} parent=11 // pred_check_branch
          %504 = sbr.rel (%p502) target = $region44
        $region43: #{tpu_custom_call.1} parent=11 // pred_region
          _
        $region44: #{tpu_custom_call.1} parent=11 // pred_fallthru
          _
      $region12: #{tpu_custom_call.1} parent=5 // pred_fallthru
        _
      %p505 = scmp.lt.s32.totalorder %s26, 4
      // Predicated region
      $region45: #{tpu_custom_call.1} parent=5 // pred_check
        %p506 = pneg %p505
      $region46: #{tpu_custom_call.1} parent=5 // pred_check_branch
        %508 = sbr.rel (%p506) target = $region48
      $region47: #{tpu_custom_call.1} parent=5 // pred_region
        // Predicated region
        $region49: #{tpu_custom_call.1} parent=47 // pred_check
          %p509 = pneg %p58
        $region50: #{tpu_custom_call.1} parent=47 // pred_check_branch
          %511 = sbr.rel (%p509) target = $region52
        $region51: #{tpu_custom_call.1} parent=47 // pred_region
          %p512 = scmp.lt.s32.totalorder %s33, 1
          %s513 = scalar_select %p512, %s33, 1
          %s514 = smul.addr %s513, 8
          %s515 = scalar_lea.vmem %s0, %s514
        $region52: #{tpu_custom_call.1} parent=47 // pred_fallthru
          _
        // Predicated region
        $region53: #{tpu_custom_call.1} parent=47 // pred_check
          %p516 = pneg %p84
        $region54: #{tpu_custom_call.1} parent=47 // pred_check_branch
          %518 = sbr.rel (%p516) target = $region56
        $region55: #{tpu_custom_call.1} parent=47 // pred_region
          %p519 = scmp.lt.s32.totalorder %s34, 1
          %s520 = scalar_select %p519, %s34, 1
          %s521 = smul.addr %s520, 4
          %s522 = smul.addr %s521, 4
          %s523 = scalar_lea.vmem %s1, %s522
        $region56: #{tpu_custom_call.1} parent=47 // pred_fallthru
          _
        // Predicated region
        $region57: #{tpu_custom_call.1} parent=47 // pred_check
          %p524 = pneg %p110
        $region58: #{tpu_custom_call.1} parent=47 // pred_check_branch
          %526 = sbr.rel (%p524) target = $region60
        $region59: #{tpu_custom_call.1} parent=47 // pred_region
          %p527 = scmp.lt.s32.totalorder %s34, 1
          %s528 = scalar_select %p527, %s34, 1
          %s529 = scalar_lea.vmem %s2, %s528
        $region60: #{tpu_custom_call.1} parent=47 // pred_fallthru
          _
        // Predicated region
        $region61: #{tpu_custom_call.1} parent=47 // pred_check
          %p530 = pneg %p136
        $region62: #{tpu_custom_call.1} parent=47 // pred_check_branch
          %532 = sbr.rel (%p530) target = $region64
        $region63: #{tpu_custom_call.1} parent=47 // pred_region
          %p533 = scmp.lt.s32.totalorder %s34, 1
          %s534 = scalar_select %p533, %s34, 1
          %s535 = smul.addr %s534, 4
          %s536 = smul.addr %s535, 4
          %s537 = scalar_lea.vmem %s3, %s536
        $region64: #{tpu_custom_call.1} parent=47 // pred_fallthru
          _
        // Predicated region
        $region65: #{tpu_custom_call.1} parent=47 // pred_check
          %p538 = pneg %p162
        $region66: #{tpu_custom_call.1} parent=47 // pred_check_branch
          %540 = sbr.rel (%p538) target = $region68
        $region67: #{tpu_custom_call.1} parent=47 // pred_region
          %p541 = scmp.lt.s32.totalorder %s34, 1
          %s542 = scalar_select %p541, %s34, 1
          %s543 = scalar_lea.vmem %s4, %s542
        $region68: #{tpu_custom_call.1} parent=47 // pred_fallthru
          _
        // Predicated region
        $region69: #{tpu_custom_call.1} parent=47 // pred_check
          %p544 = pneg %p188
        $region70: #{tpu_custom_call.1} parent=47 // pred_check_branch
          %546 = sbr.rel (%p544) target = $region72
        $region71: #{tpu_custom_call.1} parent=47 // pred_region
          %p547 = scmp.lt.s32.totalorder %s34, 1
          %s548 = scalar_select %p547, %s34, 1
          %s549 = smul.addr %s548, 4
          %s550 = smul.addr %s549, 4
          %s551 = scalar_lea.vmem %s5, %s550
        $region72: #{tpu_custom_call.1} parent=47 // pred_fallthru
          _
        // Predicated region
        $region73: #{tpu_custom_call.1} parent=47 // pred_check
          %p552 = pneg %p214
        $region74: #{tpu_custom_call.1} parent=47 // pred_check_branch
          %554 = sbr.rel (%p552) target = $region76
        $region75: #{tpu_custom_call.1} parent=47 // pred_region
          %p555 = scmp.lt.s32.totalorder %s34, 1
          %s556 = scalar_select %p555, %s34, 1
          %s557 = scalar_lea.vmem %s6, %s556
        $region76: #{tpu_custom_call.1} parent=47 // pred_fallthru
          _
        // Predicated region
        $region77: #{tpu_custom_call.1} parent=47 // pred_check
          %p558 = pneg %p240
        $region78: #{tpu_custom_call.1} parent=47 // pred_check_branch
          %560 = sbr.rel (%p558) target = $region80
        $region79: #{tpu_custom_call.1} parent=47 // pred_region
          %p561 = scmp.lt.s32.totalorder %s34, 1
          %s562 = scalar_select %p561, %s34, 1
          %s563 = smul.addr %s562, 4
          %s564 = smul.addr %s563, 4
          %s565 = scalar_lea.vmem %s7, %s564
        $region80: #{tpu_custom_call.1} parent=47 // pred_fallthru
          _
        // Predicated region
        $region81: #{tpu_custom_call.1} parent=47 // pred_check
          %p566 = pneg %p266
        $region82: #{tpu_custom_call.1} parent=47 // pred_check_branch
          %568 = sbr.rel (%p566) target = $region84
        $region83: #{tpu_custom_call.1} parent=47 // pred_region
          %p569 = scmp.lt.s32.totalorder %s34, 1
          %s570 = scalar_select %p569, %s34, 1
          %s571 = scalar_lea.vmem %s8, %s570
        $region84: #{tpu_custom_call.1} parent=47 // pred_fallthru
          _
      $region48: #{tpu_custom_call.1} parent=5 // pred_fallthru
        _
      %p572 = scmp.le.s32.totalorder 1, %s26
      %p573 = scmp.lt.s32.totalorder %s26, 5
      %p574 = pnand %p572, %p573
      %p575 = pneg %p574
      // Predicated region
      $region85: #{tpu_custom_call.1} parent=5 // pred_check
        _
      $region86: #{tpu_custom_call.1} parent=5 // pred_check_branch
        %577 = sbr.rel (%p574) target = $region88
      $region87: #{tpu_custom_call.1} parent=5 // pred_region
        %s578 = ssub.s32 %s26, 1
        %p579 = scmp.lt.s32.totalorder %s35, 1
        %s580 = scalar_select %p579, %s35, 1
        %s581 = smul.addr %s580, 8
        %s582 = scalar_lea.vmem %s0, %s581
        %p583 = pneg %p64
        %p584 = pneg %p61
        %p585 = scmp.lt.s32.totalorder %s36, 1
        %s586 = scalar_select %p585, %s36, 1
        %s587 = smul.addr %s586, 4
        %s588 = smul.addr %s587, 4
        %s589 = scalar_lea.vmem %s1, %s588
        %p590 = pneg %p90
        %p591 = pneg %p87
        %p592 = scmp.lt.s32.totalorder %s36, 1
        %s593 = scalar_select %p592, %s36, 1
        %s594 = scalar_lea.vmem %s2, %s593
        %p595 = pneg %p116
        %p596 = pneg %p113
        %p597 = scmp.lt.s32.totalorder %s36, 1
        %s598 = scalar_select %p597, %s36, 1
        %s599 = smul.addr %s598, 4
        %s600 = smul.addr %s599, 4
        %s601 = scalar_lea.vmem %s3, %s600
        %p602 = pneg %p142
        %p603 = pneg %p139
        %p604 = scmp.lt.s32.totalorder %s36, 1
        %s605 = scalar_select %p604, %s36, 1
        %s606 = scalar_lea.vmem %s4, %s605
        %p607 = pneg %p168
        %p608 = pneg %p165
        %p609 = scmp.lt.s32.totalorder %s36, 1
        %s610 = scalar_select %p609, %s36, 1
        %s611 = smul.addr %s610, 4
        %s612 = smul.addr %s611, 4
        %s613 = scalar_lea.vmem %s5, %s612
        %p614 = pneg %p194
        %p615 = pneg %p191
        %p616 = scmp.lt.s32.totalorder %s36, 1
        %s617 = scalar_select %p616, %s36, 1
        %s618 = scalar_lea.vmem %s6, %s617
        %p619 = pneg %p220
        %p620 = pneg %p217
        %p621 = scmp.lt.s32.totalorder %s36, 1
        %s622 = scalar_select %p621, %s36, 1
        %s623 = smul.addr %s622, 4
        %s624 = smul.addr %s623, 4
        %s625 = scalar_lea.vmem %s7, %s624
        %p626 = pneg %p246
        %p627 = pneg %p243
        %p628 = scmp.lt.s32.totalorder %s36, 1
        %s629 = scalar_select %p628, %s36, 1
        %s630 = scalar_lea.vmem %s8, %s629
        %p631 = pneg %p272
        %p632 = pneg %p269
        %p633 = pneg %p293
        %p634 = pneg %p290
        %p635 = pneg %p314
        %p636 = pneg %p311
        %p637 = pneg %p335
        %p638 = pneg %p332
        %p639 = pneg %p356
        %p640 = pneg %p353
        %p641 = pneg %p377
        %p642 = pneg %p374
        %p643 = pneg %p398
        %p644 = pneg %p395
        %p645 = pneg %p419
        %p646 = pneg %p416
        %p647 = pneg %p440
        %p648 = pneg %p437
        %p649 = pneg %p466
        %p650 = pneg %p463
        %s651 = sand.u32 %s453, 1
        %s652 = scalar_lea.sflag [#allocation7], %s651
        %s653 = sand.u32 %s453, 1
        %s654 = smul.addr %s653, 8
        %s655 = scalar_lea.vmem [#allocation6], %s654
        %p656 = scmp.lt.s32.totalorder %s35, 1
        %s657 = scalar_select %p656, %s35, 1
        %s658 = smul.addr %s657, 8
        %s659 = scalar_lea.vmem %s0, %s658
        %p660 = scmp.lt.s32.totalorder %s36, 1
        %s661 = scalar_select %p660, %s36, 1
        %s662 = smul.addr %s661, 4
        %s663 = smul.addr %s662, 4
        %s664 = scalar_lea.vmem %s1, %s663
        %p665 = scmp.lt.s32.totalorder %s36, 1
        %s666 = scalar_select %p665, %s36, 1
        %s667 = scalar_lea.vmem %s2, %s666
        %p668 = scmp.lt.s32.totalorder %s36, 1
        %s669 = scalar_select %p668, %s36, 1
        %s670 = smul.addr %s669, 4
        %s671 = smul.addr %s670, 4
        %s672 = scalar_lea.vmem %s3, %s671
        %p673 = scmp.lt.s32.totalorder %s36, 1
        %s674 = scalar_select %p673, %s36, 1
        %s675 = scalar_lea.vmem %s4, %s674
        %p676 = scmp.lt.s32.totalorder %s36, 1
        %s677 = scalar_select %p676, %s36, 1
        %s678 = smul.addr %s677, 4
        %s679 = smul.addr %s678, 4
        %s680 = scalar_lea.vmem %s5, %s679
        %p681 = scmp.lt.s32.totalorder %s36, 1
        %s682 = scalar_select %p681, %s36, 1
        %s683 = scalar_lea.vmem %s6, %s682
        %p684 = scmp.lt.s32.totalorder %s36, 1
        %s685 = scalar_select %p684, %s36, 1
        %s686 = smul.addr %s685, 4
        %s687 = smul.addr %s686, 4
        %s688 = scalar_lea.vmem %s7, %s687
        %p689 = scmp.lt.s32.totalorder %s36, 1
        %s690 = scalar_select %p689, %s36, 1
        %s691 = scalar_lea.vmem %s8, %s690
        %p693 = scmp.eq.s32.totalorder %s36, 0
        // Predicated region
        $region89: #{tpu_custom_call.1} parent=87 // pred_check
          %p694 = pneg %p693
        $region90: #{tpu_custom_call.1} parent=87 // pred_check_branch
          %696 = sbr.rel (%p694) target = $region92
        $region91: #{tpu_custom_call.1} parent=87 // pred_region
          %v697 = vld [vmem:[%s659] sm:$0xff]
          %vm698 = vcmask 261120
          %699 = vst.msk [vmem:[%s655] sm:$0xff] %vm698, %v697
        $region92: #{tpu_custom_call.1} parent=87 // pred_fallthru
          _
        %v700 = vld [vmem:[%s9] sm:$0x1]
        %v701 = vld [vmem:[%s10] sm:$0x1]
        %v702 = vld [vmem:[%s655] sm:$0xff]
        %vm703 = vcmask 261120
        %v704 = vsel %vm703, %v702, 0.0
        %705 = vadd.xlane.f32.xlu0 %v704
        %v706 = vpop.xlane.xlu0 %705
        %v707 = vrcp.pop 32.0
        %v708 = vmul.f32 32.0, %v707
        %v709 = vsub.f32 1.0, %v708
        %v710 = vmul.f32 %v707, %v709
        %v711 = vadd.f32 %v707, %v710
        %vm712 = vweird.f32 %v707
        %v713 = vsel %vm712, %v707, %v711
        %v714 = vmul.f32 %v706, %v713
        %v715 = vsub.f32 %v702, %v714
        %v716 = vmul.f32 %v715, %v715
        %v717 = vsel %vm703, %v716, 0.0
        %718 = vadd.xlane.f32.xlu0 %v717
        %v719 = vpop.xlane.xlu0 %718
        %v720 = vrcp.pop 31.0
        %v721 = vmul.f32 31.0, %v720
        %v722 = vsub.f32 1.0, %v721
        %v723 = vmul.f32 %v720, %v722
        %v724 = vadd.f32 %v720, %v723
        %vm725 = vweird.f32 %v720
        %v726 = vsel %vm725, %v720, %v724
        %v727 = vmul.f32 %v719, %v726
        %v728 = vrsqrt.pop %v727
        %v729 = vmul.f32 %v728, %v727
        %v730 = vmul.f32 %v729, %v728
        %v731 = vmul.f32 0.5, %v730
        %v732 = vsub.f32 1.5, %v731
        %v733 = vmul.f32 %v728, %v732
        %v734 = vmul.f32 %v727, %v733
        %vm735 = vcmp.eq.f32.partialorder %v727, inf
        %v736 = vsel %vm735, %v727, %v734
        %vm737 = vcmp.eq.f32.partialorder %v727, 0.0
        %v738 = vand.u32 %v727, 2147483648
        %v739 = vsel %vm737, %v738, %v736
        %v740 = vadd.f32 %v739, 1e-06
        %v741 = vrcp.pop %v740
        %v742 = vmul.f32 %v740, %v741
        %v743 = vsub.f32 1.0, %v742
        %v744 = vmul.f32 %v741, %v743
        %v745 = vadd.f32 %v741, %v744
        %vm746 = vweird.f32 %v740
        %vm747 = vweird.f32 %v741
        %vm748 = vmor %vm746, %vm747
        %v749 = vsel %vm748, %v741, %v745
        %v750 = vand.u32 2147483647, %v740
        %vm751 = vcmp.eq.f32.partialorder %v750, 8.507059e+37
        %v752 = vand.u32 %v740, 2147483648
        %v753 = vor.u32 1.1754944e-38, %v752
        %v754 = vsel %vm751, %v753, %v749
        %v755 = vmul.f32 %v715, %v754
        %v757 = vperm.slane %v700, 0
        %v759 = vmul.f32 %v755, %v757
        %v761 = vperm.slane %v701, 0
        %v763 = vadd.f32 %v759, %v761
        %v764 = vpack.c.bf16 %v763, %v763
        %v765 = vld [vmem:[%s664] sm:$0xf]
        %v766 = vld [vmem:[%s664 + $0x4] sm:$0xf]
        %v767 = vld [vmem:[%s664 + $0x8] sm:$0xf]
        %v768 = vld [vmem:[%s664 + $0xc] sm:$0xf]
        %v769 = vld [vmem:[%s667] sm:$0x1]
        %v771 = vperm.slane %v769, 0
        %v777 = vunpack.c.l.b16 %v765
        %v778 = vunpack.c.l.b16 %v766
        %v779 = vunpack.c.l.b16 %v767
        %v780 = vunpack.c.l.b16 %v768
        %v781 = vpack.c.b16 %v778, %v777
        %v782 = vpack.c.b16 %v780, %v779
        %v786 = vsel %vm703, %v764, 0
        %788 = vmatpush.bf16.msra.mxu0 0
        %789 = vmatpush.bf16.msra.mxu0 0
        %790 = vmatpush.bf16.msra.mxu0 0
        %791 = vmatpush.bf16.msra.mxu0 0
        %792 = vmatpush.bf16.msra.mxu0 0
        %793 = vmatpush.bf16.msra.mxu0 0
        %794 = vmatpush.bf16.msra.mxu0 %v782
        %795 = vmatpush.bf16.msra.mxu0 %v781
        %796 = vmatmul.bf16.gmra.mxu0 %v786
        %v797 = vpop.f32.mrf.mxu0
        %v798 = vadd.f32 %v771, %v797
        %v799 = vpop.f32.mrf.mxu0
        %800 = vdwg.mxu0
        %v801 = vmul.f32 %v798, 0.35355338
        %v802 = vpack.c.bf16 %v801, %v801
        %vm803 = vcmask 257024
        %804 = vst.msk [vmem:[#allocation2] sm:$0xf] %vm803, %v802
        %v805 = vld [vmem:[%s672] sm:$0xf]
        %v806 = vld [vmem:[%s672 + $0x4] sm:$0xf]
        %v807 = vld [vmem:[%s672 + $0x8] sm:$0xf]
        %v808 = vld [vmem:[%s672 + $0xc] sm:$0xf]
        %v809 = vld [vmem:[%s675] sm:$0x1]
        %v811 = vperm.slane %v809, 0
        %v817 = vunpack.c.l.b16 %v805
        %v818 = vunpack.c.l.b16 %v806
        %v819 = vunpack.c.l.b16 %v807
        %v820 = vunpack.c.l.b16 %v808
        %v821 = vpack.c.b16 %v818, %v817
        %v822 = vpack.c.b16 %v820, %v819
        %825 = vmatpush.bf16.msra.mxu0 0
        %826 = vmatpush.bf16.msra.mxu0 0
        %827 = vmatpush.bf16.msra.mxu0 0
        %828 = vmatpush.bf16.msra.mxu0 0
        %829 = vmatpush.bf16.msra.mxu0 0
        %830 = vmatpush.bf16.msra.mxu0 0
        %831 = vmatpush.bf16.msra.mxu0 %v822
        %832 = vmatpush.bf16.msra.mxu0 %v821
        %833 = vmatmul.bf16.gmra.mxu0 %v786
        %v834 = vpop.f32.mrf.mxu0
        %v835 = vadd.f32 %v811, %v834
        %v836 = vpop.f32.mrf.mxu0
        %837 = vdwg.mxu0
        %v838 = vpack.c.bf16 %v835, %v835
        %839 = vst.msk [vmem:[#allocation3] sm:$0xf] %vm803, %v838
        %v840 = vld [vmem:[%s680] sm:$0xf]
        %v841 = vld [vmem:[%s680 + $0x4] sm:$0xf]
        %v842 = vld [vmem:[%s680 + $0x8] sm:$0xf]
        %v843 = vld [vmem:[%s680 + $0xc] sm:$0xf]
        %v844 = vld [vmem:[%s683] sm:$0x1]
        %v846 = vperm.slane %v844, 0
        %v852 = vunpack.c.l.b16 %v840
        %v853 = vunpack.c.l.b16 %v841
        %v854 = vunpack.c.l.b16 %v842
        %v855 = vunpack.c.l.b16 %v843
        %v856 = vpack.c.b16 %v853, %v852
        %v857 = vpack.c.b16 %v855, %v854
        %860 = vmatpush.bf16.msra.mxu0 0
        %861 = vmatpush.bf16.msra.mxu0 0
        %862 = vmatpush.bf16.msra.mxu0 0
        %863 = vmatpush.bf16.msra.mxu0 0
        %864 = vmatpush.bf16.msra.mxu0 0
        %865 = vmatpush.bf16.msra.mxu0 0
        %866 = vmatpush.bf16.msra.mxu0 %v857
        %867 = vmatpush.bf16.msra.mxu0 %v856
        %868 = vmatmul.bf16.gmra.mxu0 %v786
        %v869 = vpop.f32.mrf.mxu0
        %v870 = vadd.f32 %v846, %v869
        %v871 = vpop.f32.mrf.mxu0
        %872 = vdwg.mxu0
        %v873 = vpack.c.bf16 %v870, %v870
        %874 = vst.msk [vmem:[#allocation4] sm:$0xf] %vm803, %v873
        %v875 = vld [vmem:[#allocation2] sm:$0xf]
        %v876 = vld [vmem:[#allocation3] sm:$0xf]
        %v877 = vld [vmem:[#allocation4] sm:$0xf]
        %vm878 = vcmask 64512
        %v880 = vsel %vm878, %v875, 0
        %v883 = vsel %vm878, %v876, 0
        %885 = vmatpush.bf16.xpose.msra.mxu0 0
        %886 = vmatpush.bf16.xpose.msra.mxu0 0
        %887 = vmatpush.bf16.xpose.msra.mxu0 0
        %888 = vmatpush.bf16.xpose.msra.mxu0 0
        %889 = vmatpush.bf16.xpose.msra.mxu0 0
        %890 = vmatpush.bf16.xpose.msra.mxu0 0
        %891 = vmatpush.bf16.xpose.msra.mxu0 0
        %892 = vmatpush.bf16.xpose.msra.mxu0 %v883
        %893 = vmatmul.bf16.gmra.mxu0 %v880
        %v894 = vpop.f32.mrf.mxu0
        %v895 = vadd.f32 0.0, %v894
        %v896 = vpop.f32.mrf.mxu0
        %897 = vdwg.mxu0
        %v898 = vsel %vm878, %v895, -inf
        %899 = vmax.xlane.f32.xlu0 %v898
        %v900 = vpop.xlane.xlu0 %899
        %v901 = vsub.f32 %v895, %v900
        %v902 = vmul.f32 %v901, 1.442695
        %v903 = vpow.pop %v902
        %v904 = vsel %vm878, %v903, 0.0
        %905 = vadd.xlane.f32.xlu0 %v904
        %v906 = vpop.xlane.xlu0 %905
        %v907 = vrcp.pop %v906
        %v908 = vmul.f32 %v903, %v907
        %v909 = vpack.c.bf16 %v908, %v908
        %v911 = vsel %vm878, %v909, 0
        %vm913 = vcmask 1043456
        %v915 = vsel %vm913, %v877, 0
        %917 = vmatpush.bf16.msra.mxu0 0
        %918 = vmatpush.bf16.msra.mxu0 0
        %919 = vmatpush.bf16.msra.mxu0 0
        %920 = vmatpush.bf16.msra.mxu0 0
        %921 = vmatpush.bf16.msra.mxu0 0
        %922 = vmatpush.bf16.msra.mxu0 0
        %923 = vmatpush.bf16.msra.mxu0 0
        %924 = vmatpush.bf16.msra.mxu0 %v915
        %925 = vmatmul.bf16.gmra.mxu0 %v911
        %v926 = vpop.f32.mrf.mxu0
        %v927 = vadd.f32 0.0, %v926
        %v928 = vpop.f32.mrf.mxu0
        %929 = vdwg.mxu0
        %v930 = vpack.c.bf16 %v927, %v927
        %vm931 = vcmask 60416
        %932 = vst.msk [vmem:[#allocation5] sm:$0xf] %vm931, %v930
        %v933 = vld [vmem:[#allocation2] sm:$0xf]
        %v934 = vld [vmem:[#allocation3] sm:$0xf]
        %v935 = vld [vmem:[#allocation4] sm:$0xf]
        %v937 = vunpack.c.l.b16 %v933
        %v938 = vpack.c.b16 %v937, %v937
        %939 = vrot.lane.b32.xlu0 %v938, 120
        %v940 = vpop.permute.xlu0 %939
        %v942 = vunpack.c.l.b16 %v934
        %v943 = vpack.c.b16 %v942, %v942
        %944 = vrot.lane.b32.xlu0 %v943, 120
        %v945 = vpop.permute.xlu0 %944
        %v947 = vsel %vm878, %v940, 0
        %v950 = vsel %vm878, %v945, 0
        %952 = vmatpush.bf16.xpose.msra.mxu0 0
        %953 = vmatpush.bf16.xpose.msra.mxu0 0
        %954 = vmatpush.bf16.xpose.msra.mxu0 0
        %955 = vmatpush.bf16.xpose.msra.mxu0 0
        %956 = vmatpush.bf16.xpose.msra.mxu0 0
        %957 = vmatpush.bf16.xpose.msra.mxu0 0
        %958 = vmatpush.bf16.xpose.msra.mxu0 0
        %959 = vmatpush.bf16.xpose.msra.mxu0 %v950
        %960 = vmatmul.bf16.gmra.mxu0 %v947
        %v961 = vpop.f32.mrf.mxu0
        %v962 = vadd.f32 0.0, %v961
        %v963 = vpop.f32.mrf.mxu0
        %964 = vdwg.mxu0
        %v965 = vsel %vm878, %v962, -inf
        %966 = vmax.xlane.f32.xlu0 %v965
        %v967 = vpop.xlane.xlu0 %966
        %v968 = vsub.f32 %v962, %v967
        %v969 = vmul.f32 %v968, 1.442695
        %v970 = vpow.pop %v969
        %v971 = vsel %vm878, %v970, 0.0
        %972 = vadd.xlane.f32.xlu0 %v971
        %v973 = vpop.xlane.xlu0 %972
        %v974 = vrcp.pop %v973
        %v975 = vmul.f32 %v970, %v974
        %v976 = vpack.c.bf16 %v975, %v975
        %v978 = vunpack.c.l.b16 %v935
        %v979 = vpack.c.b16 %v978, %v978
        %980 = vrot.lane.b32.xlu0 %v979, 120
        %v981 = vpop.permute.xlu0 %980
        %v983 = vsel %vm878, %v976, 0
        %v986 = vsel %vm913, %v981, 0
        %988 = vmatpush.bf16.msra.mxu0 0
        %989 = vmatpush.bf16.msra.mxu0 0
        %990 = vmatpush.bf16.msra.mxu0 0
        %991 = vmatpush.bf16.msra.mxu0 0
        %992 = vmatpush.bf16.msra.mxu0 0
        %993 = vmatpush.bf16.msra.mxu0 0
        %994 = vmatpush.bf16.msra.mxu0 0
        %995 = vmatpush.bf16.msra.mxu0 %v986
        %996 = vmatmul.bf16.gmra.mxu0 %v983
        %v997 = vpop.f32.mrf.mxu0
        %v998 = vadd.f32 0.0, %v997
        %v999 = vpop.f32.mrf.mxu0
        %1000 = vdwg.mxu0
        %v1001 = vpack.c.bf16 %v998, %v998
        %1003 = vrot.lane.b32.xlu0 %v1001, 8
        %v1004 = vpop.permute.xlu0 %1003
        %vm1006 = vcmask 126016
        %1007 = vst.msk [vmem:[#allocation5] sm:$0xf] %vm1006, %v1004
        %v1008 = vld [vmem:[#allocation2] sm:$0xf]
        %v1009 = vld [vmem:[#allocation3] sm:$0xf]
        %v1010 = vld [vmem:[#allocation4] sm:$0xf]
        %v1012 = vunpack.c.l.b16 %v1008
        %v1013 = vpack.c.b16 %v1012, %v1012
        %1014 = vrot.lane.b32.xlu0 %v1013, 112
        %v1015 = vpop.permute.xlu0 %1014
        %v1017 = vunpack.c.l.b16 %v1009
        %v1018 = vpack.c.b16 %v1017, %v1017
        %1019 = vrot.lane.b32.xlu0 %v1018, 112
        %v1020 = vpop.permute.xlu0 %1019
        %v1022 = vsel %vm878, %v1015, 0
        %v1025 = vsel %vm878, %v1020, 0
        %1027 = vmatpush.bf16.xpose.msra.mxu0 0
        %1028 = vmatpush.bf16.xpose.msra.mxu0 0
        %1029 = vmatpush.bf16.xpose.msra.mxu0 0
        %1030 = vmatpush.bf16.xpose.msra.mxu0 0
        %1031 = vmatpush.bf16.xpose.msra.mxu0 0
        %1032 = vmatpush.bf16.xpose.msra.mxu0 0
        %1033 = vmatpush.bf16.xpose.msra.mxu0 0
        %1034 = vmatpush.bf16.xpose.msra.mxu0 %v1025
        %1035 = vmatmul.bf16.gmra.mxu0 %v1022
        %v1036 = vpop.f32.mrf.mxu0
        %v1037 = vadd.f32 0.0, %v1036
        %v1038 = vpop.f32.mrf.mxu0
        %1039 = vdwg.mxu0
        %v1040 = vsel %vm878, %v1037, -inf
        %1041 = vmax.xlane.f32.xlu0 %v1040
        %v1042 = vpop.xlane.xlu0 %1041
        %v1043 = vsub.f32 %v1037, %v1042
        %v1044 = vmul.f32 %v1043, 1.442695
        %v1045 = vpow.pop %v1044
        %v1046 = vsel %vm878, %v1045, 0.0
        %1047 = vadd.xlane.f32.xlu0 %v1046
        %v1048 = vpop.xlane.xlu0 %1047
        %v1049 = vrcp.pop %v1048
        %v1050 = vmul.f32 %v1045, %v1049
        %v1051 = vpack.c.bf16 %v1050, %v1050
        %v1053 = vunpack.c.l.b16 %v1010
        %v1054 = vpack.c.b16 %v1053, %v1053
        %1055 = vrot.lane.b32.xlu0 %v1054, 112
        %v1056 = vpop.permute.xlu0 %1055
        %v1058 = vsel %vm878, %v1051, 0
        %v1061 = vsel %vm913, %v1056, 0
        %1063 = vmatpush.bf16.msra.mxu0 0
        %1064 = vmatpush.bf16.msra.mxu0 0
        %1065 = vmatpush.bf16.msra.mxu0 0
        %1066 = vmatpush.bf16.msra.mxu0 0
        %1067 = vmatpush.bf16.msra.mxu0 0
        %1068 = vmatpush.bf16.msra.mxu0 0
        %1069 = vmatpush.bf16.msra.mxu0 0
        %1070 = vmatpush.bf16.msra.mxu0 %v1061
        %1071 = vmatmul.bf16.gmra.mxu0 %v1058
        %v1072 = vpop.f32.mrf.mxu0
        %v1073 = vadd.f32 0.0, %v1072
        %v1074 = vpop.f32.mrf.mxu0
        %1075 = vdwg.mxu0
        %v1076 = vpack.c.bf16 %v1073, %v1073
        %1078 = vrot.lane.b32.xlu0 %v1076, 16
        %v1079 = vpop.permute.xlu0 %1078
        %vm1081 = vcmask 191616
        %1082 = vst.msk [vmem:[#allocation5] sm:$0xf] %vm1081, %v1079
        %v1083 = vld [vmem:[#allocation2] sm:$0xf]
        %v1084 = vld [vmem:[#allocation3] sm:$0xf]
        %v1085 = vld [vmem:[#allocation4] sm:$0xf]
        %v1087 = vunpack.c.l.b16 %v1083
        %v1088 = vpack.c.b16 %v1087, %v1087
        %1089 = vrot.lane.b32.xlu0 %v1088, 104
        %v1090 = vpop.permute.xlu0 %1089
        %v1092 = vunpack.c.l.b16 %v1084
        %v1093 = vpack.c.b16 %v1092, %v1092
        %1094 = vrot.lane.b32.xlu0 %v1093, 104
        %v1095 = vpop.permute.xlu0 %1094
        %v1097 = vsel %vm878, %v1090, 0
        %v1100 = vsel %vm878, %v1095, 0
        %1102 = vmatpush.bf16.xpose.msra.mxu0 0
        %1103 = vmatpush.bf16.xpose.msra.mxu0 0
        %1104 = vmatpush.bf16.xpose.msra.mxu0 0
        %1105 = vmatpush.bf16.xpose.msra.mxu0 0
        %1106 = vmatpush.bf16.xpose.msra.mxu0 0
        %1107 = vmatpush.bf16.xpose.msra.mxu0 0
        %1108 = vmatpush.bf16.xpose.msra.mxu0 0
        %1109 = vmatpush.bf16.xpose.msra.mxu0 %v1100
        %1110 = vmatmul.bf16.gmra.mxu0 %v1097
        %v1111 = vpop.f32.mrf.mxu0
        %v1112 = vadd.f32 0.0, %v1111
        %v1113 = vpop.f32.mrf.mxu0
        %1114 = vdwg.mxu0
        %v1115 = vsel %vm878, %v1112, -inf
        %1116 = vmax.xlane.f32.xlu0 %v1115
        %v1117 = vpop.xlane.xlu0 %1116
        %v1118 = vsub.f32 %v1112, %v1117
        %v1119 = vmul.f32 %v1118, 1.442695
        %v1120 = vpow.pop %v1119
        %v1121 = vsel %vm878, %v1120, 0.0
        %1122 = vadd.xlane.f32.xlu0 %v1121
        %v1123 = vpop.xlane.xlu0 %1122
        %v1124 = vrcp.pop %v1123
        %v1125 = vmul.f32 %v1120, %v1124
        %v1126 = vpack.c.bf16 %v1125, %v1125
        %v1128 = vunpack.c.l.b16 %v1085
        %v1129 = vpack.c.b16 %v1128, %v1128
        %1130 = vrot.lane.b32.xlu0 %v1129, 104
        %v1131 = vpop.permute.xlu0 %1130
        %v1133 = vsel %vm878, %v1126, 0
        %v1136 = vsel %vm913, %v1131, 0
        %1138 = vmatpush.bf16.msra.mxu0 0
        %1139 = vmatpush.bf16.msra.mxu0 0
        %1140 = vmatpush.bf16.msra.mxu0 0
        %1141 = vmatpush.bf16.msra.mxu0 0
        %1142 = vmatpush.bf16.msra.mxu0 0
        %1143 = vmatpush.bf16.msra.mxu0 0
        %1144 = vmatpush.bf16.msra.mxu0 0
        %1145 = vmatpush.bf16.msra.mxu0 %v1136
        %1146 = vmatmul.bf16.gmra.mxu0 %v1133
        %v1147 = vpop.f32.mrf.mxu0
        %v1148 = vadd.f32 0.0, %v1147
        %v1149 = vpop.f32.mrf.mxu0
        %1150 = vdwg.mxu0
        %v1151 = vpack.c.bf16 %v1148, %v1148
        %1153 = vrot.lane.b32.xlu0 %v1151, 24
        %v1154 = vpop.permute.xlu0 %1153
        %vm1156 = vcmask 257216
        %1157 = vst.msk [vmem:[#allocation5] sm:$0xf] %vm1156, %v1154
        %v1158 = vld [vmem:[#allocation5] sm:$0xf]
        %v1159 = vld [vmem:[%s688] sm:$0xf]
        %v1160 = vld [vmem:[%s688 + $0x4] sm:$0xf]
        %v1161 = vld [vmem:[%s688 + $0x8] sm:$0xf]
        %v1162 = vld [vmem:[%s688 + $0xc] sm:$0xf]
        %v1163 = vld [vmem:[%s691] sm:$0x1]
        %v1165 = vperm.slane %v1163, 0
        %v1171 = vunpack.c.l.b16 %v1159
        %v1172 = vunpack.c.l.b16 %v1160
        %v1173 = vunpack.c.l.b16 %v1161
        %v1174 = vunpack.c.l.b16 %v1162
        %v1175 = vpack.c.b16 %v1172, %v1171
        %v1176 = vpack.c.b16 %v1174, %v1173
        %v1180 = vsel %vm703, %v1158, 0
        %1182 = vmatpush.bf16.msra.mxu0 0
        %1183 = vmatpush.bf16.msra.mxu0 0
        %1184 = vmatpush.bf16.msra.mxu0 0
        %1185 = vmatpush.bf16.msra.mxu0 0
        %1186 = vmatpush.bf16.msra.mxu0 0
        %1187 = vmatpush.bf16.msra.mxu0 0
        %1188 = vmatpush.bf16.msra.mxu0 %v1176
        %1189 = vmatpush.bf16.msra.mxu0 %v1175
        %1190 = vmatmul.bf16.gmra.mxu0 %v1180
        %v1191 = vpop.f32.mrf.mxu0
        %v1192 = vadd.f32 %v1165, %v1191
        %v1193 = vpop.f32.mrf.mxu0
        %1194 = vdwg.mxu0
        %v1195 = vadd.f32 %v702, %v1192
        %v1196 = vld [vmem:[%s11] sm:$0x1]
        %v1197 = vld [vmem:[%s12] sm:$0x1]
        %v1198 = vsel %vm703, %v1195, 0.0
        %1199 = vadd.xlane.f32.xlu0 %v1198
        %v1200 = vpop.xlane.xlu0 %1199
        %v1201 = vmul.f32 %v1200, %v713
        %v1202 = vsub.f32 %v1195, %v1201
        %v1203 = vmul.f32 %v1202, %v1202
        %v1204 = vsel %vm703, %v1203, 0.0
        %1205 = vadd.xlane.f32.xlu0 %v1204
        %v1206 = vpop.xlane.xlu0 %1205
        %v1207 = vmul.f32 %v1206, %v726
        %v1208 = vrsqrt.pop %v1207
        %v1209 = vmul.f32 %v1208, %v1207
        %v1210 = vmul.f32 %v1209, %v1208
        %v1211 = vmul.f32 0.5, %v1210
        %v1212 = vsub.f32 1.5, %v1211
        %v1213 = vmul.f32 %v1208, %v1212
        %v1214 = vmul.f32 %v1207, %v1213
        %vm1215 = vcmp.eq.f32.partialorder %v1207, inf
        %v1216 = vsel %vm1215, %v1207, %v1214
        %vm1217 = vcmp.eq.f32.partialorder %v1207, 0.0
        %v1218 = vand.u32 %v1207, 2147483648
        %v1219 = vsel %vm1217, %v1218, %v1216
        %v1220 = vadd.f32 %v1219, 1e-06
        %v1221 = vrcp.pop %v1220
        %v1222 = vmul.f32 %v1220, %v1221
        %v1223 = vsub.f32 1.0, %v1222
        %v1224 = vmul.f32 %v1221, %v1223
        %v1225 = vadd.f32 %v1221, %v1224
        %vm1226 = vweird.f32 %v1220
        %vm1227 = vweird.f32 %v1221
        %vm1228 = vmor %vm1226, %vm1227
        %v1229 = vsel %vm1228, %v1221, %v1225
        %v1230 = vand.u32 2147483647, %v1220
        %vm1231 = vcmp.eq.f32.partialorder %v1230, 8.507059e+37
        %v1232 = vand.u32 %v1220, 2147483648
        %v1233 = vor.u32 1.1754944e-38, %v1232
        %v1234 = vsel %vm1231, %v1233, %v1229
        %v1235 = vmul.f32 %v1202, %v1234
        %v1237 = vperm.slane %v1196, 0
        %v1239 = vmul.f32 %v1235, %v1237
        %v1241 = vperm.slane %v1197, 0
        %v1243 = vadd.f32 %v1239, %v1241
        %v1244 = vpack.c.bf16 %v1243, %v1243
        %v1245 = vld [vmem:[%s13] sm:$0xff]
        %v1246 = vld [vmem:[%s13 + $0x8] sm:$0xff]
        %v1247 = vld [vmem:[%s13 + $0x40] sm:$0xff]
        %v1248 = vld [vmem:[%s13 + $0x48] sm:$0xff]
        %v1249 = vld [vmem:[%s13 + $0x80] sm:$0xff]
        %v1250 = vld [vmem:[%s13 + $0x88] sm:$0xff]
        %v1251 = vld [vmem:[%s13 + $0xc0] sm:$0xff]
        %v1252 = vld [vmem:[%s13 + $0xc8] sm:$0xff]
        %v1253 = vld [vmem:[%s14] sm:$0xf]
        %v1255 = vperm.slane %v1253, 0
        %v1256 = vperm.slane %v1253, 1
        %v1257 = vperm.slane %v1253, 2
        %v1258 = vperm.slane %v1253, 3
        %v1271 = vunpack.c.l.b16 %v1245
        %v1272 = vunpack.c.h.b16 %v1245
        %v1273 = vunpack.c.l.b16 %v1246
        %v1274 = vunpack.c.h.b16 %v1246
        %v1275 = vunpack.c.l.b16 %v1247
        %v1276 = vunpack.c.h.b16 %v1247
        %v1277 = vunpack.c.l.b16 %v1248
        %v1278 = vunpack.c.h.b16 %v1248
        %v1279 = vunpack.c.l.b16 %v1249
        %v1280 = vunpack.c.h.b16 %v1249
        %v1281 = vunpack.c.l.b16 %v1250
        %v1282 = vunpack.c.h.b16 %v1250
        %v1283 = vunpack.c.l.b16 %v1251
        %v1284 = vunpack.c.h.b16 %v1251
        %v1285 = vunpack.c.l.b16 %v1252
        %v1286 = vunpack.c.h.b16 %v1252
        %v1287 = vpack.c.b16 %v1275, %v1271
        %v1288 = vpack.c.b16 %v1276, %v1272
        %v1289 = vpack.c.b16 %v1277, %v1273
        %v1290 = vpack.c.b16 %v1278, %v1274
        %v1291 = vpack.c.b16 %v1283, %v1279
        %v1292 = vpack.c.b16 %v1284, %v1280
        %v1293 = vpack.c.b16 %v1285, %v1281
        %v1294 = vpack.c.b16 %v1286, %v1282
        %v1304 = vsel %vm703, %v1244, 0
        %1306 = vmatpush.bf16.msra.mxu0 0
        %1307 = vmatpush.bf16.msra.mxu0 0
        %1308 = vmatpush.bf16.msra.mxu0 0
        %1309 = vmatpush.bf16.msra.mxu0 0
        %1310 = vmatpush.bf16.msra.mxu0 0
        %1311 = vmatpush.bf16.msra.mxu0 0
        %1312 = vmatpush.bf16.msra.mxu0 %v1291
        %1313 = vmatpush.bf16.msra.mxu0 %v1287
        %1314 = vmatmul.bf16.gmra.mxu0 %v1304
        %v1315 = vpop.f32.mrf.mxu0
        %v1316 = vadd.f32 %v1255, %v1315
        %v1317 = vpop.f32.mrf.mxu0
        %1318 = vdwg.mxu0
        %1319 = vmatpush.bf16.msra.mxu0 0
        %1320 = vmatpush.bf16.msra.mxu0 0
        %1321 = vmatpush.bf16.msra.mxu0 0
        %1322 = vmatpush.bf16.msra.mxu0 0
        %1323 = vmatpush.bf16.msra.mxu0 0
        %1324 = vmatpush.bf16.msra.mxu0 0
        %1325 = vmatpush.bf16.msra.mxu0 %v1292
        %1326 = vmatpush.bf16.msra.mxu0 %v1288
        %1327 = vmatmul.bf16.gmra.mxu0 %v1304
        %v1328 = vpop.f32.mrf.mxu0
        %v1329 = vadd.f32 %v1256, %v1328
        %v1330 = vpop.f32.mrf.mxu0
        %1331 = vdwg.mxu0
        %1332 = vmatpush.bf16.msra.mxu0 0
        %1333 = vmatpush.bf16.msra.mxu0 0
        %1334 = vmatpush.bf16.msra.mxu0 0
        %1335 = vmatpush.bf16.msra.mxu0 0
        %1336 = vmatpush.bf16.msra.mxu0 0
        %1337 = vmatpush.bf16.msra.mxu0 0
        %1338 = vmatpush.bf16.msra.mxu0 %v1293
        %1339 = vmatpush.bf16.msra.mxu0 %v1289
        %1340 = vmatmul.bf16.gmra.mxu0 %v1304
        %v1341 = vpop.f32.mrf.mxu0
        %v1342 = vadd.f32 %v1257, %v1341
        %v1343 = vpop.f32.mrf.mxu0
        %1344 = vdwg.mxu0
        %1345 = vmatpush.bf16.msra.mxu0 0
        %1346 = vmatpush.bf16.msra.mxu0 0
        %1347 = vmatpush.bf16.msra.mxu0 0
        %1348 = vmatpush.bf16.msra.mxu0 0
        %1349 = vmatpush.bf16.msra.mxu0 0
        %1350 = vmatpush.bf16.msra.mxu0 0
        %1351 = vmatpush.bf16.msra.mxu0 %v1294
        %1352 = vmatpush.bf16.msra.mxu0 %v1290
        %1353 = vmatmul.bf16.gmra.mxu0 %v1304
        %v1354 = vpop.f32.mrf.mxu0
        %v1355 = vadd.f32 %v1258, %v1354
        %v1356 = vpop.f32.mrf.mxu0
        %1357 = vdwg.mxu0
        %v1358 = vmax.f32 %v1316, 0.0
        %v1359 = vmax.f32 %v1329, 0.0
        %v1360 = vmax.f32 %v1342, 0.0
        %v1361 = vmax.f32 %v1355, 0.0
        %v1362 = vpack.c.bf16 %v1358, %v1358
        %v1363 = vpack.c.bf16 %v1359, %v1359
        %v1364 = vpack.c.bf16 %v1360, %v1360
        %v1365 = vpack.c.bf16 %v1361, %v1361
        %v1366 = vld [vmem:[%s15] sm:$0xf]
        %v1367 = vld [vmem:[%s15 + $0x4] sm:$0xf]
        %v1368 = vld [vmem:[%s15 + $0x8] sm:$0xf]
        %v1369 = vld [vmem:[%s15 + $0xc] sm:$0xf]
        %v1370 = vld [vmem:[%s15 + $0x10] sm:$0xf]
        %v1371 = vld [vmem:[%s15 + $0x14] sm:$0xf]
        %v1372 = vld [vmem:[%s15 + $0x18] sm:$0xf]
        %v1373 = vld [vmem:[%s15 + $0x1c] sm:$0xf]
        %v1374 = vld [vmem:[%s15 + $0x20] sm:$0xf]
        %v1375 = vld [vmem:[%s15 + $0x24] sm:$0xf]
        %v1376 = vld [vmem:[%s15 + $0x28] sm:$0xf]
        %v1377 = vld [vmem:[%s15 + $0x2c] sm:$0xf]
        %v1378 = vld [vmem:[%s15 + $0x30] sm:$0xf]
        %v1379 = vld [vmem:[%s15 + $0x34] sm:$0xf]
        %v1380 = vld [vmem:[%s15 + $0x38] sm:$0xf]
        %v1381 = vld [vmem:[%s15 + $0x3c] sm:$0xf]
        %v1382 = vld [vmem:[%s15 + $0x40] sm:$0xf]
        %v1383 = vld [vmem:[%s15 + $0x44] sm:$0xf]
        %v1384 = vld [vmem:[%s15 + $0x48] sm:$0xf]
        %v1385 = vld [vmem:[%s15 + $0x4c] sm:$0xf]
        %v1386 = vld [vmem:[%s15 + $0x50] sm:$0xf]
        %v1387 = vld [vmem:[%s15 + $0x54] sm:$0xf]
        %v1388 = vld [vmem:[%s15 + $0x58] sm:$0xf]
        %v1389 = vld [vmem:[%s15 + $0x5c] sm:$0xf]
        %v1390 = vld [vmem:[%s15 + $0x60] sm:$0xf]
        %v1391 = vld [vmem:[%s15 + $0x64] sm:$0xf]
        %v1392 = vld [vmem:[%s15 + $0x68] sm:$0xf]
        %v1393 = vld [vmem:[%s15 + $0x6c] sm:$0xf]
        %v1394 = vld [vmem:[%s15 + $0x70] sm:$0xf]
        %v1395 = vld [vmem:[%s15 + $0x74] sm:$0xf]
        %v1396 = vld [vmem:[%s15 + $0x78] sm:$0xf]
        %v1397 = vld [vmem:[%s15 + $0x7c] sm:$0xf]
        %v1398 = vld [vmem:[%s15 + $0x80] sm:$0xf]
        %v1399 = vld [vmem:[%s15 + $0x84] sm:$0xf]
        %v1400 = vld [vmem:[%s15 + $0x88] sm:$0xf]
        %v1401 = vld [vmem:[%s15 + $0x8c] sm:$0xf]
        %v1402 = vld [vmem:[%s15 + $0x90] sm:$0xf]
        %v1403 = vld [vmem:[%s15 + $0x94] sm:$0xf]
        %v1404 = vld [vmem:[%s15 + $0x98] sm:$0xf]
        %v1405 = vld [vmem:[%s15 + $0x9c] sm:$0xf]
        %v1406 = vld [vmem:[%s15 + $0xa0] sm:$0xf]
        %v1407 = vld [vmem:[%s15 + $0xa4] sm:$0xf]
        %v1408 = vld [vmem:[%s15 + $0xa8] sm:$0xf]
        %v1409 = vld [vmem:[%s15 + $0xac] sm:$0xf]
        %v1410 = vld [vmem:[%s15 + $0xb0] sm:$0xf]
        %v1411 = vld [vmem:[%s15 + $0xb4] sm:$0xf]
        %v1412 = vld [vmem:[%s15 + $0xb8] sm:$0xf]
        %v1413 = vld [vmem:[%s15 + $0xbc] sm:$0xf]
        %v1414 = vld [vmem:[%s15 + $0xc0] sm:$0xf]
        %v1415 = vld [vmem:[%s15 + $0xc4] sm:$0xf]
        %v1416 = vld [vmem:[%s15 + $0xc8] sm:$0xf]
        %v1417 = vld [vmem:[%s15 + $0xcc] sm:$0xf]
        %v1418 = vld [vmem:[%s15 + $0xd0] sm:$0xf]
        %v1419 = vld [vmem:[%s15 + $0xd4] sm:$0xf]
        %v1420 = vld [vmem:[%s15 + $0xd8] sm:$0xf]
        %v1421 = vld [vmem:[%s15 + $0xdc] sm:$0xf]
        %v1422 = vld [vmem:[%s15 + $0xe0] sm:$0xf]
        %v1423 = vld [vmem:[%s15 + $0xe4] sm:$0xf]
        %v1424 = vld [vmem:[%s15 + $0xe8] sm:$0xf]
        %v1425 = vld [vmem:[%s15 + $0xec] sm:$0xf]
        %v1426 = vld [vmem:[%s15 + $0xf0] sm:$0xf]
        %v1427 = vld [vmem:[%s15 + $0xf4] sm:$0xf]
        %v1428 = vld [vmem:[%s15 + $0xf8] sm:$0xf]
        %v1429 = vld [vmem:[%s15 + $0xfc] sm:$0xf]
        %v1430 = vld [vmem:[%s13 + $0x10] sm:$0xff]
        %v1431 = vld [vmem:[%s13 + $0x18] sm:$0xff]
        %v1432 = vld [vmem:[%s13 + $0x50] sm:$0xff]
        %v1433 = vld [vmem:[%s13 + $0x58] sm:$0xff]
        %v1434 = vld [vmem:[%s13 + $0x90] sm:$0xff]
        %v1435 = vld [vmem:[%s13 + $0x98] sm:$0xff]
        %v1436 = vld [vmem:[%s13 + $0xd0] sm:$0xff]
        %v1437 = vld [vmem:[%s13 + $0xd8] sm:$0xff]
        %v1438 = vld [vmem:[%s14 + $0x4] sm:$0xf]
        %v1440 = vperm.slane %v1438, 0
        %v1441 = vperm.slane %v1438, 1
        %v1442 = vperm.slane %v1438, 2
        %v1443 = vperm.slane %v1438, 3
        %v1456 = vunpack.c.l.b16 %v1430
        %v1457 = vunpack.c.h.b16 %v1430
        %v1458 = vunpack.c.l.b16 %v1431
        %v1459 = vunpack.c.h.b16 %v1431
        %v1460 = vunpack.c.l.b16 %v1432
        %v1461 = vunpack.c.h.b16 %v1432
        %v1462 = vunpack.c.l.b16 %v1433
        %v1463 = vunpack.c.h.b16 %v1433
        %v1464 = vunpack.c.l.b16 %v1434
        %v1465 = vunpack.c.h.b16 %v1434
        %v1466 = vunpack.c.l.b16 %v1435
        %v1467 = vunpack.c.h.b16 %v1435
        %v1468 = vunpack.c.l.b16 %v1436
        %v1469 = vunpack.c.h.b16 %v1436
        %v1470 = vunpack.c.l.b16 %v1437
        %v1471 = vunpack.c.h.b16 %v1437
        %v1472 = vpack.c.b16 %v1460, %v1456
        %v1473 = vpack.c.b16 %v1461, %v1457
        %v1474 = vpack.c.b16 %v1462, %v1458
        %v1475 = vpack.c.b16 %v1463, %v1459
        %v1476 = vpack.c.b16 %v1468, %v1464
        %v1477 = vpack.c.b16 %v1469, %v1465
        %v1478 = vpack.c.b16 %v1470, %v1466
        %v1479 = vpack.c.b16 %v1471, %v1467
        %1488 = vmatpush.bf16.msra.mxu0 0
        %1489 = vmatpush.bf16.msra.mxu0 0
        %1490 = vmatpush.bf16.msra.mxu0 0
        %1491 = vmatpush.bf16.msra.mxu0 0
        %1492 = vmatpush.bf16.msra.mxu0 0
        %1493 = vmatpush.bf16.msra.mxu0 0
        %1494 = vmatpush.bf16.msra.mxu0 %v1476
        %1495 = vmatpush.bf16.msra.mxu0 %v1472
        %1496 = vmatmul.bf16.gmra.mxu0 %v1304
        %v1497 = vpop.f32.mrf.mxu0
        %v1498 = vadd.f32 %v1440, %v1497
        %v1499 = vpop.f32.mrf.mxu0
        %1500 = vdwg.mxu0
        %1501 = vmatpush.bf16.msra.mxu0 0
        %1502 = vmatpush.bf16.msra.mxu0 0
        %1503 = vmatpush.bf16.msra.mxu0 0
        %1504 = vmatpush.bf16.msra.mxu0 0
        %1505 = vmatpush.bf16.msra.mxu0 0
        %1506 = vmatpush.bf16.msra.mxu0 0
        %1507 = vmatpush.bf16.msra.mxu0 %v1477
        %1508 = vmatpush.bf16.msra.mxu0 %v1473
        %1509 = vmatmul.bf16.gmra.mxu0 %v1304
        %v1510 = vpop.f32.mrf.mxu0
        %v1511 = vadd.f32 %v1441, %v1510
        %v1512 = vpop.f32.mrf.mxu0
        %1513 = vdwg.mxu0
        %1514 = vmatpush.bf16.msra.mxu0 0
        %1515 = vmatpush.bf16.msra.mxu0 0
        %1516 = vmatpush.bf16.msra.mxu0 0
        %1517 = vmatpush.bf16.msra.mxu0 0
        %1518 = vmatpush.bf16.msra.mxu0 0
        %1519 = vmatpush.bf16.msra.mxu0 0
        %1520 = vmatpush.bf16.msra.mxu0 %v1478
        %1521 = vmatpush.bf16.msra.mxu0 %v1474
        %1522 = vmatmul.bf16.gmra.mxu0 %v1304
        %v1523 = vpop.f32.mrf.mxu0
        %v1524 = vadd.f32 %v1442, %v1523
        %v1525 = vpop.f32.mrf.mxu0
        %1526 = vdwg.mxu0
        %1527 = vmatpush.bf16.msra.mxu0 0
        %1528 = vmatpush.bf16.msra.mxu0 0
        %1529 = vmatpush.bf16.msra.mxu0 0
        %1530 = vmatpush.bf16.msra.mxu0 0
        %1531 = vmatpush.bf16.msra.mxu0 0
        %1532 = vmatpush.bf16.msra.mxu0 0
        %1533 = vmatpush.bf16.msra.mxu0 %v1479
        %1534 = vmatpush.bf16.msra.mxu0 %v1475
        %1535 = vmatmul.bf16.gmra.mxu0 %v1304
        %v1536 = vpop.f32.mrf.mxu0
        %v1537 = vadd.f32 %v1443, %v1536
        %v1538 = vpop.f32.mrf.mxu0
        %1539 = vdwg.mxu0
        %v1540 = vmax.f32 %v1498, 0.0
        %v1541 = vmax.f32 %v1511, 0.0
        %v1542 = vmax.f32 %v1524, 0.0
        %v1543 = vmax.f32 %v1537, 0.0
        %v1544 = vpack.c.bf16 %v1540, %v1540
        %v1545 = vpack.c.bf16 %v1541, %v1541
        %v1546 = vpack.c.bf16 %v1542, %v1542
        %v1547 = vpack.c.bf16 %v1543, %v1543
        %v1548 = vld [vmem:[%s15 + $0x100] sm:$0xf]
        %v1549 = vld [vmem:[%s15 + $0x104] sm:$0xf]
        %v1550 = vld [vmem:[%s15 + $0x108] sm:$0xf]
        %v1551 = vld [vmem:[%s15 + $0x10c] sm:$0xf]
        %v1552 = vld [vmem:[%s15 + $0x110] sm:$0xf]
        %v1553 = vld [vmem:[%s15 + $0x114] sm:$0xf]
        %v1554 = vld [vmem:[%s15 + $0x118] sm:$0xf]
        %v1555 = vld [vmem:[%s15 + $0x11c] sm:$0xf]
        %v1556 = vld [vmem:[%s15 + $0x120] sm:$0xf]
        %v1557 = vld [vmem:[%s15 + $0x124] sm:$0xf]
        %v1558 = vld [vmem:[%s15 + $0x128] sm:$0xf]
        %v1559 = vld [vmem:[%s15 + $0x12c] sm:$0xf]
        %v1560 = vld [vmem:[%s15 + $0x130] sm:$0xf]
        %v1561 = vld [vmem:[%s15 + $0x134] sm:$0xf]
        %v1562 = vld [vmem:[%s15 + $0x138] sm:$0xf]
        %v1563 = vld [vmem:[%s15 + $0x13c] sm:$0xf]
        %v1564 = vld [vmem:[%s15 + $0x140] sm:$0xf]
        %v1565 = vld [vmem:[%s15 + $0x144] sm:$0xf]
        %v1566 = vld [vmem:[%s15 + $0x148] sm:$0xf]
        %v1567 = vld [vmem:[%s15 + $0x14c] sm:$0xf]
        %v1568 = vld [vmem:[%s15 + $0x150] sm:$0xf]
        %v1569 = vld [vmem:[%s15 + $0x154] sm:$0xf]
        %v1570 = vld [vmem:[%s15 + $0x158] sm:$0xf]
        %v1571 = vld [vmem:[%s15 + $0x15c] sm:$0xf]
        %v1572 = vld [vmem:[%s15 + $0x160] sm:$0xf]
        %v1573 = vld [vmem:[%s15 + $0x164] sm:$0xf]
        %v1574 = vld [vmem:[%s15 + $0x168] sm:$0xf]
        %v1575 = vld [vmem:[%s15 + $0x16c] sm:$0xf]
        %v1576 = vld [vmem:[%s15 + $0x170] sm:$0xf]
        %v1577 = vld [vmem:[%s15 + $0x174] sm:$0xf]
        %v1578 = vld [vmem:[%s15 + $0x178] sm:$0xf]
        %v1579 = vld [vmem:[%s15 + $0x17c] sm:$0xf]
        %v1580 = vld [vmem:[%s15 + $0x180] sm:$0xf]
        %v1581 = vld [vmem:[%s15 + $0x184] sm:$0xf]
        %v1582 = vld [vmem:[%s15 + $0x188] sm:$0xf]
        %v1583 = vld [vmem:[%s15 + $0x18c] sm:$0xf]
        %v1584 = vld [vmem:[%s15 + $0x190] sm:$0xf]
        %v1585 = vld [vmem:[%s15 + $0x194] sm:$0xf]
        %v1586 = vld [vmem:[%s15 + $0x198] sm:$0xf]
        %v1587 = vld [vmem:[%s15 + $0x19c] sm:$0xf]
        %v1588 = vld [vmem:[%s15 + $0x1a0] sm:$0xf]
        %v1589 = vld [vmem:[%s15 + $0x1a4] sm:$0xf]
        %v1590 = vld [vmem:[%s15 + $0x1a8] sm:$0xf]
        %v1591 = vld [vmem:[%s15 + $0x1ac] sm:$0xf]
        %v1592 = vld [vmem:[%s15 + $0x1b0] sm:$0xf]
        %v1593 = vld [vmem:[%s15 + $0x1b4] sm:$0xf]
        %v1594 = vld [vmem:[%s15 + $0x1b8] sm:$0xf]
        %v1595 = vld [vmem:[%s15 + $0x1bc] sm:$0xf]
        %v1596 = vld [vmem:[%s15 + $0x1c0] sm:$0xf]
        %v1597 = vld [vmem:[%s15 + $0x1c4] sm:$0xf]
        %v1598 = vld [vmem:[%s15 + $0x1c8] sm:$0xf]
        %v1599 = vld [vmem:[%s15 + $0x1cc] sm:$0xf]
        %v1600 = vld [vmem:[%s15 + $0x1d0] sm:$0xf]
        %v1601 = vld [vmem:[%s15 + $0x1d4] sm:$0xf]
        %v1602 = vld [vmem:[%s15 + $0x1d8] sm:$0xf]
        %v1603 = vld [vmem:[%s15 + $0x1dc] sm:$0xf]
        %v1604 = vld [vmem:[%s15 + $0x1e0] sm:$0xf]
        %v1605 = vld [vmem:[%s15 + $0x1e4] sm:$0xf]
        %v1606 = vld [vmem:[%s15 + $0x1e8] sm:$0xf]
        %v1607 = vld [vmem:[%s15 + $0x1ec] sm:$0xf]
        %v1608 = vld [vmem:[%s15 + $0x1f0] sm:$0xf]
        %v1609 = vld [vmem:[%s15 + $0x1f4] sm:$0xf]
        %v1610 = vld [vmem:[%s15 + $0x1f8] sm:$0xf]
        %v1611 = vld [vmem:[%s15 + $0x1fc] sm:$0xf]
        %v1676 = vunpack.c.l.b16 %v1548
        %v1677 = vunpack.c.l.b16 %v1549
        %v1678 = vunpack.c.l.b16 %v1550
        %v1679 = vunpack.c.l.b16 %v1551
        %v1680 = vunpack.c.l.b16 %v1552
        %v1681 = vunpack.c.l.b16 %v1553
        %v1682 = vunpack.c.l.b16 %v1554
        %v1683 = vunpack.c.l.b16 %v1555
        %v1684 = vunpack.c.l.b16 %v1556
        %v1685 = vunpack.c.l.b16 %v1557
        %v1686 = vunpack.c.l.b16 %v1558
        %v1687 = vunpack.c.l.b16 %v1559
        %v1688 = vunpack.c.l.b16 %v1560
        %v1689 = vunpack.c.l.b16 %v1561
        %v1690 = vunpack.c.l.b16 %v1562
        %v1691 = vunpack.c.l.b16 %v1563
        %v1692 = vunpack.c.l.b16 %v1564
        %v1693 = vunpack.c.l.b16 %v1565
        %v1694 = vunpack.c.l.b16 %v1566
        %v1695 = vunpack.c.l.b16 %v1567
        %v1696 = vunpack.c.l.b16 %v1568
        %v1697 = vunpack.c.l.b16 %v1569
        %v1698 = vunpack.c.l.b16 %v1570
        %v1699 = vunpack.c.l.b16 %v1571
        %v1700 = vunpack.c.l.b16 %v1572
        %v1701 = vunpack.c.l.b16 %v1573
        %v1702 = vunpack.c.l.b16 %v1574
        %v1703 = vunpack.c.l.b16 %v1575
        %v1704 = vunpack.c.l.b16 %v1576
        %v1705 = vunpack.c.l.b16 %v1577
        %v1706 = vunpack.c.l.b16 %v1578
        %v1707 = vunpack.c.l.b16 %v1579
        %v1708 = vunpack.c.l.b16 %v1580
        %v1709 = vunpack.c.l.b16 %v1581
        %v1710 = vunpack.c.l.b16 %v1582
        %v1711 = vunpack.c.l.b16 %v1583
        %v1712 = vunpack.c.l.b16 %v1584
        %v1713 = vunpack.c.l.b16 %v1585
        %v1714 = vunpack.c.l.b16 %v1586
        %v1715 = vunpack.c.l.b16 %v1587
        %v1716 = vunpack.c.l.b16 %v1588
        %v1717 = vunpack.c.l.b16 %v1589
        %v1718 = vunpack.c.l.b16 %v1590
        %v1719 = vunpack.c.l.b16 %v1591
        %v1720 = vunpack.c.l.b16 %v1592
        %v1721 = vunpack.c.l.b16 %v1593
        %v1722 = vunpack.c.l.b16 %v1594
        %v1723 = vunpack.c.l.b16 %v1595
        %v1724 = vunpack.c.l.b16 %v1596
        %v1725 = vunpack.c.l.b16 %v1597
        %v1726 = vunpack.c.l.b16 %v1598
        %v1727 = vunpack.c.l.b16 %v1599
        %v1728 = vunpack.c.l.b16 %v1600
        %v1729 = vunpack.c.l.b16 %v1601
        %v1730 = vunpack.c.l.b16 %v1602
        %v1731 = vunpack.c.l.b16 %v1603
        %v1732 = vunpack.c.l.b16 %v1604
        %v1733 = vunpack.c.l.b16 %v1605
        %v1734 = vunpack.c.l.b16 %v1606
        %v1735 = vunpack.c.l.b16 %v1607
        %v1736 = vunpack.c.l.b16 %v1608
        %v1737 = vunpack.c.l.b16 %v1609
        %v1738 = vunpack.c.l.b16 %v1610
        %v1739 = vunpack.c.l.b16 %v1611
        %v1740 = vpack.c.b16 %v1677, %v1676
        %v1741 = vpack.c.b16 %v1679, %v1678
        %v1742 = vpack.c.b16 %v1681, %v1680
        %v1743 = vpack.c.b16 %v1683, %v1682
        %v1744 = vpack.c.b16 %v1685, %v1684
        %v1745 = vpack.c.b16 %v1687, %v1686
        %v1746 = vpack.c.b16 %v1689, %v1688
        %v1747 = vpack.c.b16 %v1691, %v1690
        %v1748 = vpack.c.b16 %v1693, %v1692
        %v1749 = vpack.c.b16 %v1695, %v1694
        %v1750 = vpack.c.b16 %v1697, %v1696
        %v1751 = vpack.c.b16 %v1699, %v1698
        %v1752 = vpack.c.b16 %v1701, %v1700
        %v1753 = vpack.c.b16 %v1703, %v1702
        %v1754 = vpack.c.b16 %v1705, %v1704
        %v1755 = vpack.c.b16 %v1707, %v1706
        %v1756 = vpack.c.b16 %v1709, %v1708
        %v1757 = vpack.c.b16 %v1711, %v1710
        %v1758 = vpack.c.b16 %v1713, %v1712
        %v1759 = vpack.c.b16 %v1715, %v1714
        %v1760 = vpack.c.b16 %v1717, %v1716
        %v1761 = vpack.c.b16 %v1719, %v1718
        %v1762 = vpack.c.b16 %v1721, %v1720
        %v1763 = vpack.c.b16 %v1723, %v1722
        %v1764 = vpack.c.b16 %v1725, %v1724
        %v1765 = vpack.c.b16 %v1727, %v1726
        %v1766 = vpack.c.b16 %v1729, %v1728
        %v1767 = vpack.c.b16 %v1731, %v1730
        %v1768 = vpack.c.b16 %v1733, %v1732
        %v1769 = vpack.c.b16 %v1735, %v1734
        %v1770 = vpack.c.b16 %v1737, %v1736
        %v1771 = vpack.c.b16 %v1739, %v1738
        %1804 = vmatpush.bf16.msra.mxu0 %v1747
        %1805 = vmatpush.bf16.msra.mxu0 %v1746
        %1806 = vmatpush.bf16.msra.mxu0 %v1745
        %1807 = vmatpush.bf16.msra.mxu0 %v1744
        %1808 = vmatpush.bf16.msra.mxu0 %v1743
        %1809 = vmatpush.bf16.msra.mxu0 %v1742
        %1810 = vmatpush.bf16.msra.mxu0 %v1741
        %1811 = vmatpush.bf16.msra.mxu0 %v1740
        %1812 = vmatmul.bf16.gmra.mxu0 %v1544
        %v1813 = vpop.f32.mrf.mxu0
        %v1814 = vadd.f32 0.0, %v1813
        %v1815 = vpop.f32.mrf.mxu0
        %1816 = vdwg.mxu0
        %1817 = vmatpush.bf16.msra.mxu0 %v1755
        %1818 = vmatpush.bf16.msra.mxu0 %v1754
        %1819 = vmatpush.bf16.msra.mxu0 %v1753
        %1820 = vmatpush.bf16.msra.mxu0 %v1752
        %1821 = vmatpush.bf16.msra.mxu0 %v1751
        %1822 = vmatpush.bf16.msra.mxu0 %v1750
        %1823 = vmatpush.bf16.msra.mxu0 %v1749
        %1824 = vmatpush.bf16.msra.mxu0 %v1748
        %1825 = vmatmul.bf16.gmra.mxu0 %v1545
        %v1826 = vpop.f32.mrf.mxu0
        %v1827 = vadd.f32 %v1814, %v1826
        %v1828 = vpop.f32.mrf.mxu0
        %1829 = vdwg.mxu0
        %1830 = vmatpush.bf16.msra.mxu0 %v1763
        %1831 = vmatpush.bf16.msra.mxu0 %v1762
        %1832 = vmatpush.bf16.msra.mxu0 %v1761
        %1833 = vmatpush.bf16.msra.mxu0 %v1760
        %1834 = vmatpush.bf16.msra.mxu0 %v1759
        %1835 = vmatpush.bf16.msra.mxu0 %v1758
        %1836 = vmatpush.bf16.msra.mxu0 %v1757
        %1837 = vmatpush.bf16.msra.mxu0 %v1756
        %1838 = vmatmul.bf16.gmra.mxu0 %v1546
        %v1839 = vpop.f32.mrf.mxu0
        %v1840 = vadd.f32 %v1827, %v1839
        %v1841 = vpop.f32.mrf.mxu0
        %1842 = vdwg.mxu0
        %1843 = vmatpush.bf16.msra.mxu0 %v1771
        %1844 = vmatpush.bf16.msra.mxu0 %v1770
        %1845 = vmatpush.bf16.msra.mxu0 %v1769
        %1846 = vmatpush.bf16.msra.mxu0 %v1768
        %1847 = vmatpush.bf16.msra.mxu0 %v1767
        %1848 = vmatpush.bf16.msra.mxu0 %v1766
        %1849 = vmatpush.bf16.msra.mxu0 %v1765
        %1850 = vmatpush.bf16.msra.mxu0 %v1764
        %1851 = vmatmul.bf16.gmra.mxu0 %v1547
        %v1852 = vpop.f32.mrf.mxu0
        %v1853 = vadd.f32 %v1840, %v1852
        %v1854 = vpop.f32.mrf.mxu0
        %1855 = vdwg.mxu0
        %v1920 = vunpack.c.l.b16 %v1366
        %v1921 = vunpack.c.l.b16 %v1367
        %v1922 = vunpack.c.l.b16 %v1368
        %v1923 = vunpack.c.l.b16 %v1369
        %v1924 = vunpack.c.l.b16 %v1370
        %v1925 = vunpack.c.l.b16 %v1371
        %v1926 = vunpack.c.l.b16 %v1372
        %v1927 = vunpack.c.l.b16 %v1373
        %v1928 = vunpack.c.l.b16 %v1374
        %v1929 = vunpack.c.l.b16 %v1375
        %v1930 = vunpack.c.l.b16 %v1376
        %v1931 = vunpack.c.l.b16 %v1377
        %v1932 = vunpack.c.l.b16 %v1378
        %v1933 = vunpack.c.l.b16 %v1379
        %v1934 = vunpack.c.l.b16 %v1380
        %v1935 = vunpack.c.l.b16 %v1381
        %v1936 = vunpack.c.l.b16 %v1382
        %v1937 = vunpack.c.l.b16 %v1383
        %v1938 = vunpack.c.l.b16 %v1384
        %v1939 = vunpack.c.l.b16 %v1385
        %v1940 = vunpack.c.l.b16 %v1386
        %v1941 = vunpack.c.l.b16 %v1387
        %v1942 = vunpack.c.l.b16 %v1388
        %v1943 = vunpack.c.l.b16 %v1389
        %v1944 = vunpack.c.l.b16 %v1390
        %v1945 = vunpack.c.l.b16 %v1391
        %v1946 = vunpack.c.l.b16 %v1392
        %v1947 = vunpack.c.l.b16 %v1393
        %v1948 = vunpack.c.l.b16 %v1394
        %v1949 = vunpack.c.l.b16 %v1395
        %v1950 = vunpack.c.l.b16 %v1396
        %v1951 = vunpack.c.l.b16 %v1397
        %v1952 = vunpack.c.l.b16 %v1398
        %v1953 = vunpack.c.l.b16 %v1399
        %v1954 = vunpack.c.l.b16 %v1400
        %v1955 = vunpack.c.l.b16 %v1401
        %v1956 = vunpack.c.l.b16 %v1402
        %v1957 = vunpack.c.l.b16 %v1403
        %v1958 = vunpack.c.l.b16 %v1404
        %v1959 = vunpack.c.l.b16 %v1405
        %v1960 = vunpack.c.l.b16 %v1406
        %v1961 = vunpack.c.l.b16 %v1407
        %v1962 = vunpack.c.l.b16 %v1408
        %v1963 = vunpack.c.l.b16 %v1409
        %v1964 = vunpack.c.l.b16 %v1410
        %v1965 = vunpack.c.l.b16 %v1411
        %v1966 = vunpack.c.l.b16 %v1412
        %v1967 = vunpack.c.l.b16 %v1413
        %v1968 = vunpack.c.l.b16 %v1414
        %v1969 = vunpack.c.l.b16 %v1415
        %v1970 = vunpack.c.l.b16 %v1416
        %v1971 = vunpack.c.l.b16 %v1417
        %v1972 = vunpack.c.l.b16 %v1418
        %v1973 = vunpack.c.l.b16 %v1419
        %v1974 = vunpack.c.l.b16 %v1420
        %v1975 = vunpack.c.l.b16 %v1421
        %v1976 = vunpack.c.l.b16 %v1422
        %v1977 = vunpack.c.l.b16 %v1423
        %v1978 = vunpack.c.l.b16 %v1424
        %v1979 = vunpack.c.l.b16 %v1425
        %v1980 = vunpack.c.l.b16 %v1426
        %v1981 = vunpack.c.l.b16 %v1427
        %v1982 = vunpack.c.l.b16 %v1428
        %v1983 = vunpack.c.l.b16 %v1429
        %v1984 = vpack.c.b16 %v1921, %v1920
        %v1985 = vpack.c.b16 %v1923, %v1922
        %v1986 = vpack.c.b16 %v1925, %v1924
        %v1987 = vpack.c.b16 %v1927, %v1926
        %v1988 = vpack.c.b16 %v1929, %v1928
        %v1989 = vpack.c.b16 %v1931, %v1930
        %v1990 = vpack.c.b16 %v1933, %v1932
        %v1991 = vpack.c.b16 %v1935, %v1934
        %v1992 = vpack.c.b16 %v1937, %v1936
        %v1993 = vpack.c.b16 %v1939, %v1938
        %v1994 = vpack.c.b16 %v1941, %v1940
        %v1995 = vpack.c.b16 %v1943, %v1942
        %v1996 = vpack.c.b16 %v1945, %v1944
        %v1997 = vpack.c.b16 %v1947, %v1946
        %v1998 = vpack.c.b16 %v1949, %v1948
        %v1999 = vpack.c.b16 %v1951, %v1950
        %v2000 = vpack.c.b16 %v1953, %v1952
        %v2001 = vpack.c.b16 %v1955, %v1954
        %v2002 = vpack.c.b16 %v1957, %v1956
        %v2003 = vpack.c.b16 %v1959, %v1958
        %v2004 = vpack.c.b16 %v1961, %v1960
        %v2005 = vpack.c.b16 %v1963, %v1962
        %v2006 = vpack.c.b16 %v1965, %v1964
        %v2007 = vpack.c.b16 %v1967, %v1966
        %v2008 = vpack.c.b16 %v1969, %v1968
        %v2009 = vpack.c.b16 %v1971, %v1970
        %v2010 = vpack.c.b16 %v1973, %v1972
        %v2011 = vpack.c.b16 %v1975, %v1974
        %v2012 = vpack.c.b16 %v1977, %v1976
        %v2013 = vpack.c.b16 %v1979, %v1978
        %v2014 = vpack.c.b16 %v1981, %v1980
        %v2015 = vpack.c.b16 %v1983, %v1982
        %2048 = vmatpush.bf16.msra.mxu0 %v1991
        %2049 = vmatpush.bf16.msra.mxu0 %v1990
        %2050 = vmatpush.bf16.msra.mxu0 %v1989
        %2051 = vmatpush.bf16.msra.mxu0 %v1988
        %2052 = vmatpush.bf16.msra.mxu0 %v1987
        %2053 = vmatpush.bf16.msra.mxu0 %v1986
        %2054 = vmatpush.bf16.msra.mxu0 %v1985
        %2055 = vmatpush.bf16.msra.mxu0 %v1984
        %2056 = vmatmul.bf16.gmra.mxu0 %v1362
        %v2057 = vpop.f32.mrf.mxu0
        %v2058 = vadd.f32 %v1853, %v2057
        %v2059 = vpop.f32.mrf.mxu0
        %2060 = vdwg.mxu0
        %2061 = vmatpush.bf16.msra.mxu0 %v1999
        %2062 = vmatpush.bf16.msra.mxu0 %v1998
        %2063 = vmatpush.bf16.msra.mxu0 %v1997
        %2064 = vmatpush.bf16.msra.mxu0 %v1996
        %2065 = vmatpush.bf16.msra.mxu0 %v1995
        %2066 = vmatpush.bf16.msra.mxu0 %v1994
        %2067 = vmatpush.bf16.msra.mxu0 %v1993
        %2068 = vmatpush.bf16.msra.mxu0 %v1992
        %2069 = vmatmul.bf16.gmra.mxu0 %v1363
        %v2070 = vpop.f32.mrf.mxu0
        %v2071 = vadd.f32 %v2058, %v2070
        %v2072 = vpop.f32.mrf.mxu0
        %2073 = vdwg.mxu0
        %2074 = vmatpush.bf16.msra.mxu0 %v2007
        %2075 = vmatpush.bf16.msra.mxu0 %v2006
        %2076 = vmatpush.bf16.msra.mxu0 %v2005
        %2077 = vmatpush.bf16.msra.mxu0 %v2004
        %2078 = vmatpush.bf16.msra.mxu0 %v2003
        %2079 = vmatpush.bf16.msra.mxu0 %v2002
        %2080 = vmatpush.bf16.msra.mxu0 %v2001
        %2081 = vmatpush.bf16.msra.mxu0 %v2000
        %2082 = vmatmul.bf16.gmra.mxu0 %v1364
        %v2083 = vpop.f32.mrf.mxu0
        %v2084 = vadd.f32 %v2071, %v2083
        %v2085 = vpop.f32.mrf.mxu0
        %2086 = vdwg.mxu0
        %2087 = vmatpush.bf16.msra.mxu0 %v2015
        %2088 = vmatpush.bf16.msra.mxu0 %v2014
        %2089 = vmatpush.bf16.msra.mxu0 %v2013
        %2090 = vmatpush.bf16.msra.mxu0 %v2012
        %2091 = vmatpush.bf16.msra.mxu0 %v2011
        %2092 = vmatpush.bf16.msra.mxu0 %v2010
        %2093 = vmatpush.bf16.msra.mxu0 %v2009
        %2094 = vmatpush.bf16.msra.mxu0 %v2008
        %2095 = vmatmul.bf16.gmra.mxu0 %v1365
        %v2096 = vpop.f32.mrf.mxu0
        %v2097 = vadd.f32 %v2084, %v2096
        %v2098 = vpop.f32.mrf.mxu0
        %2099 = vdwg.mxu0
        %v2100 = vld [vmem:[%s13 + $0x20] sm:$0xff]
        %v2101 = vld [vmem:[%s13 + $0x28] sm:$0xff]
        %v2102 = vld [vmem:[%s13 + $0x60] sm:$0xff]
        %v2103 = vld [vmem:[%s13 + $0x68] sm:$0xff]
        %v2104 = vld [vmem:[%s13 + $0xa0] sm:$0xff]
        %v2105 = vld [vmem:[%s13 + $0xa8] sm:$0xff]
        %v2106 = vld [vmem:[%s13 + $0xe0] sm:$0xff]
        %v2107 = vld [vmem:[%s13 + $0xe8] sm:$0xff]
        %v2108 = vld [vmem:[%s14 + $0x8] sm:$0xf]
        %v2110 = vperm.slane %v2108, 0
        %v2111 = vperm.slane %v2108, 1
        %v2112 = vperm.slane %v2108, 2
        %v2113 = vperm.slane %v2108, 3
        %v2126 = vunpack.c.l.b16 %v2100
        %v2127 = vunpack.c.h.b16 %v2100
        %v2128 = vunpack.c.l.b16 %v2101
        %v2129 = vunpack.c.h.b16 %v2101
        %v2130 = vunpack.c.l.b16 %v2102
        %v2131 = vunpack.c.h.b16 %v2102
        %v2132 = vunpack.c.l.b16 %v2103
        %v2133 = vunpack.c.h.b16 %v2103
        %v2134 = vunpack.c.l.b16 %v2104
        %v2135 = vunpack.c.h.b16 %v2104
        %v2136 = vunpack.c.l.b16 %v2105
        %v2137 = vunpack.c.h.b16 %v2105
        %v2138 = vunpack.c.l.b16 %v2106
        %v2139 = vunpack.c.h.b16 %v2106
        %v2140 = vunpack.c.l.b16 %v2107
        %v2141 = vunpack.c.h.b16 %v2107
        %v2142 = vpack.c.b16 %v2130, %v2126
        %v2143 = vpack.c.b16 %v2131, %v2127
        %v2144 = vpack.c.b16 %v2132, %v2128
        %v2145 = vpack.c.b16 %v2133, %v2129
        %v2146 = vpack.c.b16 %v2138, %v2134
        %v2147 = vpack.c.b16 %v2139, %v2135
        %v2148 = vpack.c.b16 %v2140, %v2136
        %v2149 = vpack.c.b16 %v2141, %v2137
        %2158 = vmatpush.bf16.msra.mxu0 0
        %2159 = vmatpush.bf16.msra.mxu0 0
        %2160 = vmatpush.bf16.msra.mxu0 0
        %2161 = vmatpush.bf16.msra.mxu0 0
        %2162 = vmatpush.bf16.msra.mxu0 0
        %2163 = vmatpush.bf16.msra.mxu0 0
        %2164 = vmatpush.bf16.msra.mxu0 %v2146
        %2165 = vmatpush.bf16.msra.mxu0 %v2142
        %2166 = vmatmul.bf16.gmra.mxu0 %v1304
        %v2167 = vpop.f32.mrf.mxu0
        %v2168 = vadd.f32 %v2110, %v2167
        %v2169 = vpop.f32.mrf.mxu0
        %2170 = vdwg.mxu0
        %2171 = vmatpush.bf16.msra.mxu0 0
        %2172 = vmatpush.bf16.msra.mxu0 0
        %2173 = vmatpush.bf16.msra.mxu0 0
        %2174 = vmatpush.bf16.msra.mxu0 0
        %2175 = vmatpush.bf16.msra.mxu0 0
        %2176 = vmatpush.bf16.msra.mxu0 0
        %2177 = vmatpush.bf16.msra.mxu0 %v2147
        %2178 = vmatpush.bf16.msra.mxu0 %v2143
        %2179 = vmatmul.bf16.gmra.mxu0 %v1304
        %v2180 = vpop.f32.mrf.mxu0
        %v2181 = vadd.f32 %v2111, %v2180
        %v2182 = vpop.f32.mrf.mxu0
        %2183 = vdwg.mxu0
        %2184 = vmatpush.bf16.msra.mxu0 0
        %2185 = vmatpush.bf16.msra.mxu0 0
        %2186 = vmatpush.bf16.msra.mxu0 0
        %2187 = vmatpush.bf16.msra.mxu0 0
        %2188 = vmatpush.bf16.msra.mxu0 0
        %2189 = vmatpush.bf16.msra.mxu0 0
        %2190 = vmatpush.bf16.msra.mxu0 %v2148
        %2191 = vmatpush.bf16.msra.mxu0 %v2144
        %2192 = vmatmul.bf16.gmra.mxu0 %v1304
        %v2193 = vpop.f32.mrf.mxu0
        %v2194 = vadd.f32 %v2112, %v2193
        %v2195 = vpop.f32.mrf.mxu0
        %2196 = vdwg.mxu0
        %2197 = vmatpush.bf16.msra.mxu0 0
        %2198 = vmatpush.bf16.msra.mxu0 0
        %2199 = vmatpush.bf16.msra.mxu0 0
        %2200 = vmatpush.bf16.msra.mxu0 0
        %2201 = vmatpush.bf16.msra.mxu0 0
        %2202 = vmatpush.bf16.msra.mxu0 0
        %2203 = vmatpush.bf16.msra.mxu0 %v2149
        %2204 = vmatpush.bf16.msra.mxu0 %v2145
        %2205 = vmatmul.bf16.gmra.mxu0 %v1304
        %v2206 = vpop.f32.mrf.mxu0
        %v2207 = vadd.f32 %v2113, %v2206
        %v2208 = vpop.f32.mrf.mxu0
        %2209 = vdwg.mxu0
        %v2210 = vmax.f32 %v2168, 0.0
        %v2211 = vmax.f32 %v2181, 0.0
        %v2212 = vmax.f32 %v2194, 0.0
        %v2213 = vmax.f32 %v2207, 0.0
        %v2214 = vpack.c.bf16 %v2210, %v2210
        %v2215 = vpack.c.bf16 %v2211, %v2211
        %v2216 = vpack.c.bf16 %v2212, %v2212
        %v2217 = vpack.c.bf16 %v2213, %v2213
        %v2218 = vld [vmem:[%s15 + $0x200] sm:$0xf]
        %v2219 = vld [vmem:[%s15 + $0x204] sm:$0xf]
        %v2220 = vld [vmem:[%s15 + $0x208] sm:$0xf]
        %v2221 = vld [vmem:[%s15 + $0x20c] sm:$0xf]
        %v2222 = vld [vmem:[%s15 + $0x210] sm:$0xf]
        %v2223 = vld [vmem:[%s15 + $0x214] sm:$0xf]
        %v2224 = vld [vmem:[%s15 + $0x218] sm:$0xf]
        %v2225 = vld [vmem:[%s15 + $0x21c] sm:$0xf]
        %v2226 = vld [vmem:[%s15 + $0x220] sm:$0xf]
        %v2227 = vld [vmem:[%s15 + $0x224] sm:$0xf]
        %v2228 = vld [vmem:[%s15 + $0x228] sm:$0xf]
        %v2229 = vld [vmem:[%s15 + $0x22c] sm:$0xf]
        %v2230 = vld [vmem:[%s15 + $0x230] sm:$0xf]
        %v2231 = vld [vmem:[%s15 + $0x234] sm:$0xf]
        %v2232 = vld [vmem:[%s15 + $0x238] sm:$0xf]
        %v2233 = vld [vmem:[%s15 + $0x23c] sm:$0xf]
        %v2234 = vld [vmem:[%s15 + $0x240] sm:$0xf]
        %v2235 = vld [vmem:[%s15 + $0x244] sm:$0xf]
        %v2236 = vld [vmem:[%s15 + $0x248] sm:$0xf]
        %v2237 = vld [vmem:[%s15 + $0x24c] sm:$0xf]
        %v2238 = vld [vmem:[%s15 + $0x250] sm:$0xf]
        %v2239 = vld [vmem:[%s15 + $0x254] sm:$0xf]
        %v2240 = vld [vmem:[%s15 + $0x258] sm:$0xf]
        %v2241 = vld [vmem:[%s15 + $0x25c] sm:$0xf]
        %v2242 = vld [vmem:[%s15 + $0x260] sm:$0xf]
        %v2243 = vld [vmem:[%s15 + $0x264] sm:$0xf]
        %v2244 = vld [vmem:[%s15 + $0x268] sm:$0xf]
        %v2245 = vld [vmem:[%s15 + $0x26c] sm:$0xf]
        %v2246 = vld [vmem:[%s15 + $0x270] sm:$0xf]
        %v2247 = vld [vmem:[%s15 + $0x274] sm:$0xf]
        %v2248 = vld [vmem:[%s15 + $0x278] sm:$0xf]
        %v2249 = vld [vmem:[%s15 + $0x27c] sm:$0xf]
        %v2250 = vld [vmem:[%s15 + $0x280] sm:$0xf]
        %v2251 = vld [vmem:[%s15 + $0x284] sm:$0xf]
        %v2252 = vld [vmem:[%s15 + $0x288] sm:$0xf]
        %v2253 = vld [vmem:[%s15 + $0x28c] sm:$0xf]
        %v2254 = vld [vmem:[%s15 + $0x290] sm:$0xf]
        %v2255 = vld [vmem:[%s15 + $0x294] sm:$0xf]
        %v2256 = vld [vmem:[%s15 + $0x298] sm:$0xf]
        %v2257 = vld [vmem:[%s15 + $0x29c] sm:$0xf]
        %v2258 = vld [vmem:[%s15 + $0x2a0] sm:$0xf]
        %v2259 = vld [vmem:[%s15 + $0x2a4] sm:$0xf]
        %v2260 = vld [vmem:[%s15 + $0x2a8] sm:$0xf]
        %v2261 = vld [vmem:[%s15 + $0x2ac] sm:$0xf]
        %v2262 = vld [vmem:[%s15 + $0x2b0] sm:$0xf]
        %v2263 = vld [vmem:[%s15 + $0x2b4] sm:$0xf]
        %v2264 = vld [vmem:[%s15 + $0x2b8] sm:$0xf]
        %v2265 = vld [vmem:[%s15 + $0x2bc] sm:$0xf]
        %v2266 = vld [vmem:[%s15 + $0x2c0] sm:$0xf]
        %v2267 = vld [vmem:[%s15 + $0x2c4] sm:$0xf]
        %v2268 = vld [vmem:[%s15 + $0x2c8] sm:$0xf]
        %v2269 = vld [vmem:[%s15 + $0x2cc] sm:$0xf]
        %v2270 = vld [vmem:[%s15 + $0x2d0] sm:$0xf]
        %v2271 = vld [vmem:[%s15 + $0x2d4] sm:$0xf]
        %v2272 = vld [vmem:[%s15 + $0x2d8] sm:$0xf]
        %v2273 = vld [vmem:[%s15 + $0x2dc] sm:$0xf]
        %v2274 = vld [vmem:[%s15 + $0x2e0] sm:$0xf]
        %v2275 = vld [vmem:[%s15 + $0x2e4] sm:$0xf]
        %v2276 = vld [vmem:[%s15 + $0x2e8] sm:$0xf]
        %v2277 = vld [vmem:[%s15 + $0x2ec] sm:$0xf]
        %v2278 = vld [vmem:[%s15 + $0x2f0] sm:$0xf]
        %v2279 = vld [vmem:[%s15 + $0x2f4] sm:$0xf]
        %v2280 = vld [vmem:[%s15 + $0x2f8] sm:$0xf]
        %v2281 = vld [vmem:[%s15 + $0x2fc] sm:$0xf]
        %v2346 = vunpack.c.l.b16 %v2218
        %v2347 = vunpack.c.l.b16 %v2219
        %v2348 = vunpack.c.l.b16 %v2220
        %v2349 = vunpack.c.l.b16 %v2221
        %v2350 = vunpack.c.l.b16 %v2222
        %v2351 = vunpack.c.l.b16 %v2223
        %v2352 = vunpack.c.l.b16 %v2224
        %v2353 = vunpack.c.l.b16 %v2225
        %v2354 = vunpack.c.l.b16 %v2226
        %v2355 = vunpack.c.l.b16 %v2227
        %v2356 = vunpack.c.l.b16 %v2228
        %v2357 = vunpack.c.l.b16 %v2229
        %v2358 = vunpack.c.l.b16 %v2230
        %v2359 = vunpack.c.l.b16 %v2231
        %v2360 = vunpack.c.l.b16 %v2232
        %v2361 = vunpack.c.l.b16 %v2233
        %v2362 = vunpack.c.l.b16 %v2234
        %v2363 = vunpack.c.l.b16 %v2235
        %v2364 = vunpack.c.l.b16 %v2236
        %v2365 = vunpack.c.l.b16 %v2237
        %v2366 = vunpack.c.l.b16 %v2238
        %v2367 = vunpack.c.l.b16 %v2239
        %v2368 = vunpack.c.l.b16 %v2240
        %v2369 = vunpack.c.l.b16 %v2241
        %v2370 = vunpack.c.l.b16 %v2242
        %v2371 = vunpack.c.l.b16 %v2243
        %v2372 = vunpack.c.l.b16 %v2244
        %v2373 = vunpack.c.l.b16 %v2245
        %v2374 = vunpack.c.l.b16 %v2246
        %v2375 = vunpack.c.l.b16 %v2247
        %v2376 = vunpack.c.l.b16 %v2248
        %v2377 = vunpack.c.l.b16 %v2249
        %v2378 = vunpack.c.l.b16 %v2250
        %v2379 = vunpack.c.l.b16 %v2251
        %v2380 = vunpack.c.l.b16 %v2252
        %v2381 = vunpack.c.l.b16 %v2253
        %v2382 = vunpack.c.l.b16 %v2254
        %v2383 = vunpack.c.l.b16 %v2255
        %v2384 = vunpack.c.l.b16 %v2256
        %v2385 = vunpack.c.l.b16 %v2257
        %v2386 = vunpack.c.l.b16 %v2258
        %v2387 = vunpack.c.l.b16 %v2259
        %v2388 = vunpack.c.l.b16 %v2260
        %v2389 = vunpack.c.l.b16 %v2261
        %v2390 = vunpack.c.l.b16 %v2262
        %v2391 = vunpack.c.l.b16 %v2263
        %v2392 = vunpack.c.l.b16 %v2264
        %v2393 = vunpack.c.l.b16 %v2265
        %v2394 = vunpack.c.l.b16 %v2266
        %v2395 = vunpack.c.l.b16 %v2267
        %v2396 = vunpack.c.l.b16 %v2268
        %v2397 = vunpack.c.l.b16 %v2269
        %v2398 = vunpack.c.l.b16 %v2270
        %v2399 = vunpack.c.l.b16 %v2271
        %v2400 = vunpack.c.l.b16 %v2272
        %v2401 = vunpack.c.l.b16 %v2273
        %v2402 = vunpack.c.l.b16 %v2274
        %v2403 = vunpack.c.l.b16 %v2275
        %v2404 = vunpack.c.l.b16 %v2276
        %v2405 = vunpack.c.l.b16 %v2277
        %v2406 = vunpack.c.l.b16 %v2278
        %v2407 = vunpack.c.l.b16 %v2279
        %v2408 = vunpack.c.l.b16 %v2280
        %v2409 = vunpack.c.l.b16 %v2281
        %v2410 = vpack.c.b16 %v2347, %v2346
        %v2411 = vpack.c.b16 %v2349, %v2348
        %v2412 = vpack.c.b16 %v2351, %v2350
        %v2413 = vpack.c.b16 %v2353, %v2352
        %v2414 = vpack.c.b16 %v2355, %v2354
        %v2415 = vpack.c.b16 %v2357, %v2356
        %v2416 = vpack.c.b16 %v2359, %v2358
        %v2417 = vpack.c.b16 %v2361, %v2360
        %v2418 = vpack.c.b16 %v2363, %v2362
        %v2419 = vpack.c.b16 %v2365, %v2364
        %v2420 = vpack.c.b16 %v2367, %v2366
        %v2421 = vpack.c.b16 %v2369, %v2368
        %v2422 = vpack.c.b16 %v2371, %v2370
        %v2423 = vpack.c.b16 %v2373, %v2372
        %v2424 = vpack.c.b16 %v2375, %v2374
        %v2425 = vpack.c.b16 %v2377, %v2376
        %v2426 = vpack.c.b16 %v2379, %v2378
        %v2427 = vpack.c.b16 %v2381, %v2380
        %v2428 = vpack.c.b16 %v2383, %v2382
        %v2429 = vpack.c.b16 %v2385, %v2384
        %v2430 = vpack.c.b16 %v2387, %v2386
        %v2431 = vpack.c.b16 %v2389, %v2388
        %v2432 = vpack.c.b16 %v2391, %v2390
        %v2433 = vpack.c.b16 %v2393, %v2392
        %v2434 = vpack.c.b16 %v2395, %v2394
        %v2435 = vpack.c.b16 %v2397, %v2396
        %v2436 = vpack.c.b16 %v2399, %v2398
        %v2437 = vpack.c.b16 %v2401, %v2400
        %v2438 = vpack.c.b16 %v2403, %v2402
        %v2439 = vpack.c.b16 %v2405, %v2404
        %v2440 = vpack.c.b16 %v2407, %v2406
        %v2441 = vpack.c.b16 %v2409, %v2408
        %2474 = vmatpush.bf16.msra.mxu0 %v2417
        %2475 = vmatpush.bf16.msra.mxu0 %v2416
        %2476 = vmatpush.bf16.msra.mxu0 %v2415
        %2477 = vmatpush.bf16.msra.mxu0 %v2414
        %2478 = vmatpush.bf16.msra.mxu0 %v2413
        %2479 = vmatpush.bf16.msra.mxu0 %v2412
        %2480 = vmatpush.bf16.msra.mxu0 %v2411
        %2481 = vmatpush.bf16.msra.mxu0 %v2410
        %2482 = vmatmul.bf16.gmra.mxu0 %v2214
        %v2483 = vpop.f32.mrf.mxu0
        %v2484 = vadd.f32 0.0, %v2483
        %v2485 = vpop.f32.mrf.mxu0
        %2486 = vdwg.mxu0
        %2487 = vmatpush.bf16.msra.mxu0 %v2425
        %2488 = vmatpush.bf16.msra.mxu0 %v2424
        %2489 = vmatpush.bf16.msra.mxu0 %v2423
        %2490 = vmatpush.bf16.msra.mxu0 %v2422
        %2491 = vmatpush.bf16.msra.mxu0 %v2421
        %2492 = vmatpush.bf16.msra.mxu0 %v2420
        %2493 = vmatpush.bf16.msra.mxu0 %v2419
        %2494 = vmatpush.bf16.msra.mxu0 %v2418
        %2495 = vmatmul.bf16.gmra.mxu0 %v2215
        %v2496 = vpop.f32.mrf.mxu0
        %v2497 = vadd.f32 %v2484, %v2496
        %v2498 = vpop.f32.mrf.mxu0
        %2499 = vdwg.mxu0
        %2500 = vmatpush.bf16.msra.mxu0 %v2433
        %2501 = vmatpush.bf16.msra.mxu0 %v2432
        %2502 = vmatpush.bf16.msra.mxu0 %v2431
        %2503 = vmatpush.bf16.msra.mxu0 %v2430
        %2504 = vmatpush.bf16.msra.mxu0 %v2429
        %2505 = vmatpush.bf16.msra.mxu0 %v2428
        %2506 = vmatpush.bf16.msra.mxu0 %v2427
        %2507 = vmatpush.bf16.msra.mxu0 %v2426
        %2508 = vmatmul.bf16.gmra.mxu0 %v2216
        %v2509 = vpop.f32.mrf.mxu0
        %v2510 = vadd.f32 %v2497, %v2509
        %v2511 = vpop.f32.mrf.mxu0
        %2512 = vdwg.mxu0
        %2513 = vmatpush.bf16.msra.mxu0 %v2441
        %2514 = vmatpush.bf16.msra.mxu0 %v2440
        %2515 = vmatpush.bf16.msra.mxu0 %v2439
        %2516 = vmatpush.bf16.msra.mxu0 %v2438
        %2517 = vmatpush.bf16.msra.mxu0 %v2437
        %2518 = vmatpush.bf16.msra.mxu0 %v2436
        %2519 = vmatpush.bf16.msra.mxu0 %v2435
        %2520 = vmatpush.bf16.msra.mxu0 %v2434
        %2521 = vmatmul.bf16.gmra.mxu0 %v2217
        %v2522 = vpop.f32.mrf.mxu0
        %v2523 = vadd.f32 %v2510, %v2522
        %v2524 = vpop.f32.mrf.mxu0
        %2525 = vdwg.mxu0
        %v2526 = vadd.f32 %v2097, %v2523
        %v2527 = vld [vmem:[%s13 + $0x30] sm:$0xff]
        %v2528 = vld [vmem:[%s13 + $0x38] sm:$0xff]
        %v2529 = vld [vmem:[%s13 + $0x70] sm:$0xff]
        %v2530 = vld [vmem:[%s13 + $0x78] sm:$0xff]
        %v2531 = vld [vmem:[%s13 + $0xb0] sm:$0xff]
        %v2532 = vld [vmem:[%s13 + $0xb8] sm:$0xff]
        %v2533 = vld [vmem:[%s13 + $0xf0] sm:$0xff]
        %v2534 = vld [vmem:[%s13 + $0xf8] sm:$0xff]
        %v2535 = vld [vmem:[%s14 + $0xc] sm:$0xf]
        %v2537 = vperm.slane %v2535, 0
        %v2538 = vperm.slane %v2535, 1
        %v2539 = vperm.slane %v2535, 2
        %v2540 = vperm.slane %v2535, 3
        %v2553 = vunpack.c.l.b16 %v2527
        %v2554 = vunpack.c.h.b16 %v2527
        %v2555 = vunpack.c.l.b16 %v2528
        %v2556 = vunpack.c.h.b16 %v2528
        %v2557 = vunpack.c.l.b16 %v2529
        %v2558 = vunpack.c.h.b16 %v2529
        %v2559 = vunpack.c.l.b16 %v2530
        %v2560 = vunpack.c.h.b16 %v2530
        %v2561 = vunpack.c.l.b16 %v2531
        %v2562 = vunpack.c.h.b16 %v2531
        %v2563 = vunpack.c.l.b16 %v2532
        %v2564 = vunpack.c.h.b16 %v2532
        %v2565 = vunpack.c.l.b16 %v2533
        %v2566 = vunpack.c.h.b16 %v2533
        %v2567 = vunpack.c.l.b16 %v2534
        %v2568 = vunpack.c.h.b16 %v2534
        %v2569 = vpack.c.b16 %v2557, %v2553
        %v2570 = vpack.c.b16 %v2558, %v2554
        %v2571 = vpack.c.b16 %v2559, %v2555
        %v2572 = vpack.c.b16 %v2560, %v2556
        %v2573 = vpack.c.b16 %v2565, %v2561
        %v2574 = vpack.c.b16 %v2566, %v2562
        %v2575 = vpack.c.b16 %v2567, %v2563
        %v2576 = vpack.c.b16 %v2568, %v2564
        %2585 = vmatpush.bf16.msra.mxu0 0
        %2586 = vmatpush.bf16.msra.mxu0 0
        %2587 = vmatpush.bf16.msra.mxu0 0
        %2588 = vmatpush.bf16.msra.mxu0 0
        %2589 = vmatpush.bf16.msra.mxu0 0
        %2590 = vmatpush.bf16.msra.mxu0 0
        %2591 = vmatpush.bf16.msra.mxu0 %v2573
        %2592 = vmatpush.bf16.msra.mxu0 %v2569
        %2593 = vmatmul.bf16.gmra.mxu0 %v1304
        %v2594 = vpop.f32.mrf.mxu0
        %v2595 = vadd.f32 %v2537, %v2594
        %v2596 = vpop.f32.mrf.mxu0
        %2597 = vdwg.mxu0
        %2598 = vmatpush.bf16.msra.mxu0 0
        %2599 = vmatpush.bf16.msra.mxu0 0
        %2600 = vmatpush.bf16.msra.mxu0 0
        %2601 = vmatpush.bf16.msra.mxu0 0
        %2602 = vmatpush.bf16.msra.mxu0 0
        %2603 = vmatpush.bf16.msra.mxu0 0
        %2604 = vmatpush.bf16.msra.mxu0 %v2574
        %2605 = vmatpush.bf16.msra.mxu0 %v2570
        %2606 = vmatmul.bf16.gmra.mxu0 %v1304
        %v2607 = vpop.f32.mrf.mxu0
        %v2608 = vadd.f32 %v2538, %v2607
        %v2609 = vpop.f32.mrf.mxu0
        %2610 = vdwg.mxu0
        %2611 = vmatpush.bf16.msra.mxu0 0
        %2612 = vmatpush.bf16.msra.mxu0 0
        %2613 = vmatpush.bf16.msra.mxu0 0
        %2614 = vmatpush.bf16.msra.mxu0 0
        %2615 = vmatpush.bf16.msra.mxu0 0
        %2616 = vmatpush.bf16.msra.mxu0 0
        %2617 = vmatpush.bf16.msra.mxu0 %v2575
        %2618 = vmatpush.bf16.msra.mxu0 %v2571
        %2619 = vmatmul.bf16.gmra.mxu0 %v1304
        %v2620 = vpop.f32.mrf.mxu0
        %v2621 = vadd.f32 %v2539, %v2620
        %v2622 = vpop.f32.mrf.mxu0
        %2623 = vdwg.mxu0
        %2624 = vmatpush.bf16.msra.mxu0 0
        %2625 = vmatpush.bf16.msra.mxu0 0
        %2626 = vmatpush.bf16.msra.mxu0 0
        %2627 = vmatpush.bf16.msra.mxu0 0
        %2628 = vmatpush.bf16.msra.mxu0 0
        %2629 = vmatpush.bf16.msra.mxu0 0
        %2630 = vmatpush.bf16.msra.mxu0 %v2576
        %2631 = vmatpush.bf16.msra.mxu0 %v2572
        %2632 = vmatmul.bf16.gmra.mxu0 %v1304
        %v2633 = vpop.f32.mrf.mxu0
        %v2634 = vadd.f32 %v2540, %v2633
        %v2635 = vpop.f32.mrf.mxu0
        %2636 = vdwg.mxu0
        %v2637 = vmax.f32 %v2595, 0.0
        %v2638 = vmax.f32 %v2608, 0.0
        %v2639 = vmax.f32 %v2621, 0.0
        %v2640 = vmax.f32 %v2634, 0.0
        %v2641 = vpack.c.bf16 %v2637, %v2637
        %v2642 = vpack.c.bf16 %v2638, %v2638
        %v2643 = vpack.c.bf16 %v2639, %v2639
        %v2644 = vpack.c.bf16 %v2640, %v2640
        %v2645 = vld [vmem:[%s15 + $0x300] sm:$0xf]
        %v2646 = vld [vmem:[%s15 + $0x304] sm:$0xf]
        %v2647 = vld [vmem:[%s15 + $0x308] sm:$0xf]
        %v2648 = vld [vmem:[%s15 + $0x30c] sm:$0xf]
        %v2649 = vld [vmem:[%s15 + $0x310] sm:$0xf]
        %v2650 = vld [vmem:[%s15 + $0x314] sm:$0xf]
        %v2651 = vld [vmem:[%s15 + $0x318] sm:$0xf]
        %v2652 = vld [vmem:[%s15 + $0x31c] sm:$0xf]
        %v2653 = vld [vmem:[%s15 + $0x320] sm:$0xf]
        %v2654 = vld [vmem:[%s15 + $0x324] sm:$0xf]
        %v2655 = vld [vmem:[%s15 + $0x328] sm:$0xf]
        %v2656 = vld [vmem:[%s15 + $0x32c] sm:$0xf]
        %v2657 = vld [vmem:[%s15 + $0x330] sm:$0xf]
        %v2658 = vld [vmem:[%s15 + $0x334] sm:$0xf]
        %v2659 = vld [vmem:[%s15 + $0x338] sm:$0xf]
        %v2660 = vld [vmem:[%s15 + $0x33c] sm:$0xf]
        %v2661 = vld [vmem:[%s15 + $0x340] sm:$0xf]
        %v2662 = vld [vmem:[%s15 + $0x344] sm:$0xf]
        %v2663 = vld [vmem:[%s15 + $0x348] sm:$0xf]
        %v2664 = vld [vmem:[%s15 + $0x34c] sm:$0xf]
        %v2665 = vld [vmem:[%s15 + $0x350] sm:$0xf]
        %v2666 = vld [vmem:[%s15 + $0x354] sm:$0xf]
        %v2667 = vld [vmem:[%s15 + $0x358] sm:$0xf]
        %v2668 = vld [vmem:[%s15 + $0x35c] sm:$0xf]
        %v2669 = vld [vmem:[%s15 + $0x360] sm:$0xf]
        %v2670 = vld [vmem:[%s15 + $0x364] sm:$0xf]
        %v2671 = vld [vmem:[%s15 + $0x368] sm:$0xf]
        %v2672 = vld [vmem:[%s15 + $0x36c] sm:$0xf]
        %v2673 = vld [vmem:[%s15 + $0x370] sm:$0xf]
        %v2674 = vld [vmem:[%s15 + $0x374] sm:$0xf]
        %v2675 = vld [vmem:[%s15 + $0x378] sm:$0xf]
        %v2676 = vld [vmem:[%s15 + $0x37c] sm:$0xf]
        %v2677 = vld [vmem:[%s15 + $0x380] sm:$0xf]
        %v2678 = vld [vmem:[%s15 + $0x384] sm:$0xf]
        %v2679 = vld [vmem:[%s15 + $0x388] sm:$0xf]
        %v2680 = vld [vmem:[%s15 + $0x38c] sm:$0xf]
        %v2681 = vld [vmem:[%s15 + $0x390] sm:$0xf]
        %v2682 = vld [vmem:[%s15 + $0x394] sm:$0xf]
        %v2683 = vld [vmem:[%s15 + $0x398] sm:$0xf]
        %v2684 = vld [vmem:[%s15 + $0x39c] sm:$0xf]
        %v2685 = vld [vmem:[%s15 + $0x3a0] sm:$0xf]
        %v2686 = vld [vmem:[%s15 + $0x3a4] sm:$0xf]
        %v2687 = vld [vmem:[%s15 + $0x3a8] sm:$0xf]
        %v2688 = vld [vmem:[%s15 + $0x3ac] sm:$0xf]
        %v2689 = vld [vmem:[%s15 + $0x3b0] sm:$0xf]
        %v2690 = vld [vmem:[%s15 + $0x3b4] sm:$0xf]
        %v2691 = vld [vmem:[%s15 + $0x3b8] sm:$0xf]
        %v2692 = vld [vmem:[%s15 + $0x3bc] sm:$0xf]
        %v2693 = vld [vmem:[%s15 + $0x3c0] sm:$0xf]
        %v2694 = vld [vmem:[%s15 + $0x3c4] sm:$0xf]
        %v2695 = vld [vmem:[%s15 + $0x3c8] sm:$0xf]
        %v2696 = vld [vmem:[%s15 + $0x3cc] sm:$0xf]
        %v2697 = vld [vmem:[%s15 + $0x3d0] sm:$0xf]
        %v2698 = vld [vmem:[%s15 + $0x3d4] sm:$0xf]
        %v2699 = vld [vmem:[%s15 + $0x3d8] sm:$0xf]
        %v2700 = vld [vmem:[%s15 + $0x3dc] sm:$0xf]
        %v2701 = vld [vmem:[%s15 + $0x3e0] sm:$0xf]
        %v2702 = vld [vmem:[%s15 + $0x3e4] sm:$0xf]
        %v2703 = vld [vmem:[%s15 + $0x3e8] sm:$0xf]
        %v2704 = vld [vmem:[%s15 + $0x3ec] sm:$0xf]
        %v2705 = vld [vmem:[%s15 + $0x3f0] sm:$0xf]
        %v2706 = vld [vmem:[%s15 + $0x3f4] sm:$0xf]
        %v2707 = vld [vmem:[%s15 + $0x3f8] sm:$0xf]
        %v2708 = vld [vmem:[%s15 + $0x3fc] sm:$0xf]
        %v2773 = vunpack.c.l.b16 %v2645
        %v2774 = vunpack.c.l.b16 %v2646
        %v2775 = vunpack.c.l.b16 %v2647
        %v2776 = vunpack.c.l.b16 %v2648
        %v2777 = vunpack.c.l.b16 %v2649
        %v2778 = vunpack.c.l.b16 %v2650
        %v2779 = vunpack.c.l.b16 %v2651
        %v2780 = vunpack.c.l.b16 %v2652
        %v2781 = vunpack.c.l.b16 %v2653
        %v2782 = vunpack.c.l.b16 %v2654
        %v2783 = vunpack.c.l.b16 %v2655
        %v2784 = vunpack.c.l.b16 %v2656
        %v2785 = vunpack.c.l.b16 %v2657
        %v2786 = vunpack.c.l.b16 %v2658
        %v2787 = vunpack.c.l.b16 %v2659
        %v2788 = vunpack.c.l.b16 %v2660
        %v2789 = vunpack.c.l.b16 %v2661
        %v2790 = vunpack.c.l.b16 %v2662
        %v2791 = vunpack.c.l.b16 %v2663
        %v2792 = vunpack.c.l.b16 %v2664
        %v2793 = vunpack.c.l.b16 %v2665
        %v2794 = vunpack.c.l.b16 %v2666
        %v2795 = vunpack.c.l.b16 %v2667
        %v2796 = vunpack.c.l.b16 %v2668
        %v2797 = vunpack.c.l.b16 %v2669
        %v2798 = vunpack.c.l.b16 %v2670
        %v2799 = vunpack.c.l.b16 %v2671
        %v2800 = vunpack.c.l.b16 %v2672
        %v2801 = vunpack.c.l.b16 %v2673
        %v2802 = vunpack.c.l.b16 %v2674
        %v2803 = vunpack.c.l.b16 %v2675
        %v2804 = vunpack.c.l.b16 %v2676
        %v2805 = vunpack.c.l.b16 %v2677
        %v2806 = vunpack.c.l.b16 %v2678
        %v2807 = vunpack.c.l.b16 %v2679
        %v2808 = vunpack.c.l.b16 %v2680
        %v2809 = vunpack.c.l.b16 %v2681
        %v2810 = vunpack.c.l.b16 %v2682
        %v2811 = vunpack.c.l.b16 %v2683
        %v2812 = vunpack.c.l.b16 %v2684
        %v2813 = vunpack.c.l.b16 %v2685
        %v2814 = vunpack.c.l.b16 %v2686
        %v2815 = vunpack.c.l.b16 %v2687
        %v2816 = vunpack.c.l.b16 %v2688
        %v2817 = vunpack.c.l.b16 %v2689
        %v2818 = vunpack.c.l.b16 %v2690
        %v2819 = vunpack.c.l.b16 %v2691
        %v2820 = vunpack.c.l.b16 %v2692
        %v2821 = vunpack.c.l.b16 %v2693
        %v2822 = vunpack.c.l.b16 %v2694
        %v2823 = vunpack.c.l.b16 %v2695
        %v2824 = vunpack.c.l.b16 %v2696
        %v2825 = vunpack.c.l.b16 %v2697
        %v2826 = vunpack.c.l.b16 %v2698
        %v2827 = vunpack.c.l.b16 %v2699
        %v2828 = vunpack.c.l.b16 %v2700
        %v2829 = vunpack.c.l.b16 %v2701
        %v2830 = vunpack.c.l.b16 %v2702
        %v2831 = vunpack.c.l.b16 %v2703
        %v2832 = vunpack.c.l.b16 %v2704
        %v2833 = vunpack.c.l.b16 %v2705
        %v2834 = vunpack.c.l.b16 %v2706
        %v2835 = vunpack.c.l.b16 %v2707
        %v2836 = vunpack.c.l.b16 %v2708
        %v2837 = vpack.c.b16 %v2774, %v2773
        %v2838 = vpack.c.b16 %v2776, %v2775
        %v2839 = vpack.c.b16 %v2778, %v2777
        %v2840 = vpack.c.b16 %v2780, %v2779
        %v2841 = vpack.c.b16 %v2782, %v2781
        %v2842 = vpack.c.b16 %v2784, %v2783
        %v2843 = vpack.c.b16 %v2786, %v2785
        %v2844 = vpack.c.b16 %v2788, %v2787
        %v2845 = vpack.c.b16 %v2790, %v2789
        %v2846 = vpack.c.b16 %v2792, %v2791
        %v2847 = vpack.c.b16 %v2794, %v2793
        %v2848 = vpack.c.b16 %v2796, %v2795
        %v2849 = vpack.c.b16 %v2798, %v2797
        %v2850 = vpack.c.b16 %v2800, %v2799
        %v2851 = vpack.c.b16 %v2802, %v2801
        %v2852 = vpack.c.b16 %v2804, %v2803
        %v2853 = vpack.c.b16 %v2806, %v2805
        %v2854 = vpack.c.b16 %v2808, %v2807
        %v2855 = vpack.c.b16 %v2810, %v2809
        %v2856 = vpack.c.b16 %v2812, %v2811
        %v2857 = vpack.c.b16 %v2814, %v2813
        %v2858 = vpack.c.b16 %v2816, %v2815
        %v2859 = vpack.c.b16 %v2818, %v2817
        %v2860 = vpack.c.b16 %v2820, %v2819
        %v2861 = vpack.c.b16 %v2822, %v2821
        %v2862 = vpack.c.b16 %v2824, %v2823
        %v2863 = vpack.c.b16 %v2826, %v2825
        %v2864 = vpack.c.b16 %v2828, %v2827
        %v2865 = vpack.c.b16 %v2830, %v2829
        %v2866 = vpack.c.b16 %v2832, %v2831
        %v2867 = vpack.c.b16 %v2834, %v2833
        %v2868 = vpack.c.b16 %v2836, %v2835
        %2901 = vmatpush.bf16.msra.mxu0 %v2844
        %2902 = vmatpush.bf16.msra.mxu0 %v2843
        %2903 = vmatpush.bf16.msra.mxu0 %v2842
        %2904 = vmatpush.bf16.msra.mxu0 %v2841
        %2905 = vmatpush.bf16.msra.mxu0 %v2840
        %2906 = vmatpush.bf16.msra.mxu0 %v2839
        %2907 = vmatpush.bf16.msra.mxu0 %v2838
        %2908 = vmatpush.bf16.msra.mxu0 %v2837
        %2909 = vmatmul.bf16.gmra.mxu0 %v2641
        %v2910 = vpop.f32.mrf.mxu0
        %v2911 = vadd.f32 0.0, %v2910
        %v2912 = vpop.f32.mrf.mxu0
        %2913 = vdwg.mxu0
        %2914 = vmatpush.bf16.msra.mxu0 %v2852
        %2915 = vmatpush.bf16.msra.mxu0 %v2851
        %2916 = vmatpush.bf16.msra.mxu0 %v2850
        %2917 = vmatpush.bf16.msra.mxu0 %v2849
        %2918 = vmatpush.bf16.msra.mxu0 %v2848
        %2919 = vmatpush.bf16.msra.mxu0 %v2847
        %2920 = vmatpush.bf16.msra.mxu0 %v2846
        %2921 = vmatpush.bf16.msra.mxu0 %v2845
        %2922 = vmatmul.bf16.gmra.mxu0 %v2642
        %v2923 = vpop.f32.mrf.mxu0
        %v2924 = vadd.f32 %v2911, %v2923
        %v2925 = vpop.f32.mrf.mxu0
        %2926 = vdwg.mxu0
        %2927 = vmatpush.bf16.msra.mxu0 %v2860
        %2928 = vmatpush.bf16.msra.mxu0 %v2859
        %2929 = vmatpush.bf16.msra.mxu0 %v2858
        %2930 = vmatpush.bf16.msra.mxu0 %v2857
        %2931 = vmatpush.bf16.msra.mxu0 %v2856
        %2932 = vmatpush.bf16.msra.mxu0 %v2855
        %2933 = vmatpush.bf16.msra.mxu0 %v2854
        %2934 = vmatpush.bf16.msra.mxu0 %v2853
        %2935 = vmatmul.bf16.gmra.mxu0 %v2643
        %v2936 = vpop.f32.mrf.mxu0
        %v2937 = vadd.f32 %v2924, %v2936
        %v2938 = vpop.f32.mrf.mxu0
        %2939 = vdwg.mxu0
        %2940 = vmatpush.bf16.msra.mxu0 %v2868
        %2941 = vmatpush.bf16.msra.mxu0 %v2867
        %2942 = vmatpush.bf16.msra.mxu0 %v2866
        %2943 = vmatpush.bf16.msra.mxu0 %v2865
        %2944 = vmatpush.bf16.msra.mxu0 %v2864
        %2945 = vmatpush.bf16.msra.mxu0 %v2863
        %2946 = vmatpush.bf16.msra.mxu0 %v2862
        %2947 = vmatpush.bf16.msra.mxu0 %v2861
        %2948 = vmatmul.bf16.gmra.mxu0 %v2644
        %v2949 = vpop.f32.mrf.mxu0
        %v2950 = vadd.f32 %v2937, %v2949
        %v2951 = vpop.f32.mrf.mxu0
        %2952 = vdwg.mxu0
        %v2953 = vadd.f32 %v2526, %v2950
        %v2954 = vadd.f32 %v1195, %v2953
        %v2955 = vld [vmem:[%s16] sm:$0x1]
        %v2957 = vperm.slane %v2955, 0
        %v2959 = vadd.f32 %v2954, %v2957
        %p2960 = scmp.eq.s32.totalorder %s36, 1
        // Predicated region
        $region93: #{tpu_custom_call.1} parent=87 // pred_check
          %p2961 = pneg %p2960
        $region94: #{tpu_custom_call.1} parent=87 // pred_check_branch
          %2963 = sbr.rel (%p2961) target = $region96
        $region95: #{tpu_custom_call.1} parent=87 // pred_region
          %v2964 = vsel %vm703, %v2959, 0.0
          %2965 = vadd.xlane.f32.xlu0 %v2964
          %v2966 = vpop.xlane.xlu0 %2965
          %v2967 = vmul.f32 %v2966, %v713
          %v2968 = vsub.f32 %v2959, %v2967
          %v2969 = vmul.f32 %v2968, %v2968
          %v2970 = vsel %vm703, %v2969, 0.0
          %2971 = vadd.xlane.f32.xlu0 %v2970
          %v2972 = vpop.xlane.xlu0 %2971
          %v2973 = vmul.f32 %v2972, %v726
          %v2974 = vrsqrt.pop %v2973
          %v2975 = vmul.f32 %v2974, %v2973
          %v2976 = vmul.f32 %v2975, %v2974
          %v2977 = vmul.f32 0.5, %v2976
          %v2978 = vsub.f32 1.5, %v2977
          %v2979 = vmul.f32 %v2974, %v2978
          %v2980 = vmul.f32 %v2973, %v2979
          %vm2981 = vcmp.eq.f32.partialorder %v2973, inf
          %v2982 = vsel %vm2981, %v2973, %v2980
          %vm2983 = vcmp.eq.f32.partialorder %v2973, 0.0
          %v2984 = vand.u32 %v2973, 2147483648
          %v2985 = vsel %vm2983, %v2984, %v2982
          %v2986 = vadd.f32 %v2985, 1e-06
          %v2987 = vrcp.pop %v2986
          %v2988 = vmul.f32 %v2986, %v2987
          %v2989 = vsub.f32 1.0, %v2988
          %v2990 = vmul.f32 %v2987, %v2989
          %v2991 = vadd.f32 %v2987, %v2990
          %vm2992 = vweird.f32 %v2986
          %vm2993 = vweird.f32 %v2987
          %vm2994 = vmor %vm2992, %vm2993
          %v2995 = vsel %vm2994, %v2987, %v2991
          %v2996 = vand.u32 2147483647, %v2986
          %vm2997 = vcmp.eq.f32.partialorder %v2996, 8.507059e+37
          %v2998 = vand.u32 %v2986, 2147483648
          %v2999 = vor.u32 1.1754944e-38, %v2998
          %v3000 = vsel %vm2997, %v2999, %v2995
          %v3001 = vmul.f32 %v2968, %v3000
          %v3002 = vmul.f32 %v3001, %v757
          %v3003 = vadd.f32 %v3002, %v761
          %3004 = vst.msk [vmem:[%s655] sm:$0xff] %vm703, %v3003
        $region96: #{tpu_custom_call.1} parent=87 // pred_fallthru
          _
        %p3005 = scmp.ne.s32.totalorder %s36, 1
        // Predicated region
        $region97: #{tpu_custom_call.1} parent=87 // pred_check
          %p3006 = pneg %p3005
        $region98: #{tpu_custom_call.1} parent=87 // pred_check_branch
          %3008 = sbr.rel (%p3006) target = $region100
        $region99: #{tpu_custom_call.1} parent=87 // pred_region
          %3009 = vst.msk [vmem:[%s655] sm:$0xff] %vm703, %v2959
        $region100: #{tpu_custom_call.1} parent=87 // pred_fallthru
          _
        %s3010 = sand.u32 %s453, 1
        %s3011 = scalar_lea.sflag [#allocation7], %s3010
        %s3012 = sand.u32 %s453, 1
        %s3013 = smul.addr %s3012, 8
        %s3014 = scalar_lea.vmem [#allocation6], %s3013
        // Predicated region
        $region101: #{tpu_custom_call.1} parent=87 // pred_check
          %p3015 = pneg %p463
        $region102: #{tpu_custom_call.1} parent=87 // pred_check_branch
          %3017 = sbr.rel (%p3015) target = $region104
        $region103: #{tpu_custom_call.1} parent=87 // pred_region
          %3019 = vsyncadd %s3011, 0
          %s3020 = smul.addr %s35, 8
          %s3021 = scalar_lea.hbm %s17, %s3020
          %s3023 = sshll.u32 %s3014, 4
          %s3024 = int_to_ptr.vmem [resolvable:$true] %s3023
          %s3025 = sshll.u32 %s3021, 4
          %s3026 = int_to_ptr.hbm [resolvable:$true] %s3025
          %3028 = dma.vmem_to_hbm [thread:$0]  %s3024, 128, %s3026, %s3011
        $region104: #{tpu_custom_call.1} parent=87 // pred_fallthru
          _
      $region88: #{tpu_custom_call.1} parent=5 // pred_fallthru
        _
      %p3029 = scmp.le.s32.totalorder 2, %s26
      // Predicated region
      $region105: #{tpu_custom_call.1} parent=5 // pred_check
        %p3030 = pneg %p3029
      $region106: #{tpu_custom_call.1} parent=5 // pred_check_branch
        %3032 = sbr.rel (%p3030) target = $region108
      $region107: #{tpu_custom_call.1} parent=5 // pred_region
        %s3033 = ssub.s32 %s26, 2
        // Predicated region
        $region109: #{tpu_custom_call.1} parent=107 // pred_check
          %p3034 = pneg %p469
        $region110: #{tpu_custom_call.1} parent=107 // pred_check_branch
          %3036 = sbr.rel (%p3034) target = $region112
        $region111: #{tpu_custom_call.1} parent=107 // pred_region
          %s3037 = sand.u32 %s454, 1
          %s3038 = scalar_lea.sflag [#allocation7], %s3037
          %s3039 = sand.u32 %s454, 1
          %s3040 = smul.addr %s3039, 8
          %s3041 = scalar_lea.vmem [#allocation6], %s3040
          %3043 = dma.done %s3038, 128
        $region112: #{tpu_custom_call.1} parent=107 // pred_fallthru
          _
      $region108: #{tpu_custom_call.1} parent=5 // pred_fallthru
        _
    $region6: #{tpu_custom_call.1} parent=1 // loop_footer
      %s30 = sadd.s32 1, %s26
    $region7: #{tpu_custom_call.1} parent=1 // loop_footer_branch
      %25 = sbr.rel target = $region3
    $region8: #{tpu_custom_call.1} parent=1 // loop_exit
      _
    %3044 = vsyncpa [#allocation7], 1
    %s3045 = scalar_lea.sflag [#allocation7], 1
    %3046 = vsyncpa %s3045, 1

</llo_original>
